<compile_context>
chip_gen: v6e
topology: v6e:2x2x1
jax: 0.10.0
libtpu: 0.0.40
codegen_flags: <defaults>
</compile_context>

<pallas_src>
import functools

import jax
import jax.numpy as jnp
from jax.experimental import pallas as pl
from jax.experimental.pallas import tpu as pltpu

_EPS = 1e-5
_LANE = 128


# ----------------------------------------------------------------------------
# Pallas kernel: fused 4-layer MLP with BN folded into the epilogue.
# Per grid step (one encoder):
#   x_ref : (1, B, 784)  bf16
#   per layer l: w_ref (1, K, N) bf16, s_ref (1, 1, N) f32, b_ref (1, 1, N) f32
#   o_ref : (1, B, N_last_padded) f32
# ----------------------------------------------------------------------------
def _dual_encoder_kernel(x_ref, *refs):
    *layer_refs, o_ref = refs
    n_layers = len(layer_refs) // 3

    h = x_ref[0]  # (B, K0) bf16
    for l in range(n_layers):
        w_ref = layer_refs[3 * l]
        s_ref = layer_refs[3 * l + 1]
        b_ref = layer_refs[3 * l + 2]
        # MXU matmul with f32 accumulation.
        y = jnp.dot(h, w_ref[0], preferred_element_type=jnp.float32)
        # BatchNorm (folded) + ReLU epilogue on the VPU.
        y = jnp.maximum(y * s_ref[0] + b_ref[0], 0.0)
        if l + 1 < n_layers:
            h = y.astype(jnp.bfloat16)  # stays on-chip; never hits HBM
        else:
            o_ref[0] = y.astype(o_ref.dtype)


def fused_dual_encoder(x_stacked, layer_params):
    """x_stacked: (2, B, K0) bf16; layer_params: list of (w, scale, bias)."""
    n_enc, B, K0 = x_stacked.shape
    n_out = layer_params[-1][0].shape[-1]

    in_specs = [pl.BlockSpec((1, B, K0), lambda e: (e, 0, 0))]
    args = [x_stacked]
    for (w, s, b) in layer_params:
        _, K, N = w.shape
        in_specs.append(pl.BlockSpec((1, K, N), lambda e: (e, 0, 0)))
        in_specs.append(pl.BlockSpec((1, 1, N), lambda e: (e, 0, 0)))
        in_specs.append(pl.BlockSpec((1, 1, N), lambda e: (e, 0, 0)))
        args.extend([w, s, b])

    return pl.pallas_call(
        _dual_encoder_kernel,
        out_shape=jax.ShapeDtypeStruct((n_enc, B, n_out), jnp.float32),
        grid_spec=pltpu.PrefetchScalarGridSpec(
            num_scalar_prefetch=0,
            grid=(n_enc,),  # one grid step per encoder / view
            in_specs=in_specs,
            out_specs=pl.BlockSpec((1, B, n_out), lambda e: (e, 0, 0)),
        ),
        compiler_params=pltpu.CompilerParams(
            dimension_semantics=("parallel",),   # v7x: encoder0 on TC0, encoder1 on TC1
            vmem_limit_bytes=32 << 20,
        ),
    )(*args)


# ----------------------------------------------------------------------------
# Parameter construction (deterministic stand-in for PyTorch init) and the
# one-time inference-parameter preparation (BN scale/bias, bf16 cast, padding).
# ----------------------------------------------------------------------------
def _init_linear_bn(key, in_dim, out_dim):
    kw, kb, kg, kbe, km, kv = jax.random.split(key, 6)
    bound = 1.0 / jnp.sqrt(in_dim)
    w = jax.random.uniform(kw, (in_dim, out_dim), jnp.float32, -bound, bound)
    b = jax.random.uniform(kb, (out_dim,), jnp.float32, -bound, bound)
    gamma = 1.0 + 0.1 * jax.random.normal(kg, (out_dim,), jnp.float32)
    beta = 0.1 * jax.random.normal(kbe, (out_dim,), jnp.float32)
    run_mean = 0.1 * jax.random.normal(km, (out_dim,), jnp.float32)
    run_var = jax.random.uniform(kv, (out_dim,), jnp.float32, 0.5, 1.5)
    return dict(w=w, b=b, gamma=gamma, beta=beta, mean=run_mean, var=run_var)


def make_encoder_params(key, output_dim=64):
    dims = [(784, 1024), (1024, 1024), (1024, 1024), (1024, output_dim)]
    keys = jax.random.split(key, len(dims))
    return [_init_linear_bn(k, i, o) for k, (i, o) in zip(keys, dims)]


def prepare_inference_params(encoder_param_list):
    """Stack the two encoders' per-layer params; fold BN into scale/bias once;
    cast weights to bf16; pad the last layer's output dim to a lane multiple."""
    n_layers = len(encoder_param_list[0])
    out = []
    for l in range(n_layers):
        ws, ss, bs = [], [], []
        for params in encoder_param_list:
            p = params[l]
            scale = p["gamma"] / jnp.sqrt(p["var"] + _EPS)
            b_eff = (p["b"] - p["mean"]) * scale + p["beta"]
            ws.append(p["w"])
            ss.append(scale)
            bs.append(b_eff)
        w = jnp.stack(ws, 0)                 # (2, K, N) f32
        s = jnp.stack(ss, 0)[:, None, :]     # (2, 1, N) f32
        b = jnp.stack(bs, 0)[:, None, :]     # (2, 1, N) f32
        N = w.shape[-1]
        n_pad = (-N) % _LANE                 # only the 64-wide last layer pads
        if n_pad:
            w = jnp.pad(w, ((0, 0), (0, 0), (0, n_pad)))
            s = jnp.pad(s, ((0, 0), (0, 0), (0, n_pad)), constant_values=1.0)
            b = jnp.pad(b, ((0, 0), (0, 0), (0, n_pad)))
        out.append((w.astype(jnp.bfloat16), s, b))
    return out


# ----------------------------------------------------------------------------
# Model forward
# ----------------------------------------------------------------------------
def dpgmm_forward(h):
    # TODO(synk): DirichletGaussianLayer definition not provided; placeholder.
    lobo = jnp.zeros((h.shape[0],), dtype=h.dtype)
    z = h
    return lobo, z


@functools.partial(jax.jit, static_argnames=("output_dim",))
def mvcln_forward(infer_params, x0, x1, *, output_dim=64):
    x = jnp.stack([x0, x1], axis=0).astype(jnp.bfloat16)    # (2, B, 784)
    h_pad = fused_dual_encoder(x, infer_params)              # (2, B, 128) f32
    h0 = h_pad[0, :, :output_dim]
    h1 = h_pad[1, :, :output_dim]
    lobo0, z0 = dpgmm_forward(h0)
    lobo1, z1 = dpgmm_forward(h1)
    return h0, h1, lobo0, lobo1, z0, z1


# ----------------------------------------------------------------------------
# Pure-JAX reference (same bf16 quantization as the kernel path)
# ----------------------------------------------------------------------------
def encoder_forward_ref(params, x):
    h = x.astype(jnp.bfloat16).astype(jnp.float32)
    n = len(params)
    for l, p in enumerate(params):
        scale = p["gamma"] / jnp.sqrt(p["var"] + _EPS)
        b_eff = (p["b"] - p["mean"]) * scale + p["beta"]
        w = p["w"].astype(jnp.bfloat16).astype(jnp.float32)
        h = jnp.maximum((h @ w) * scale + b_eff, 0.0)
        if l + 1 < n:
            h = h.astype(jnp.bfloat16).astype(jnp.float32)
    return h


if __name__ == "__main__":
    key = jax.random.PRNGKey(0)
    k_x0, k_x1, k_e0, k_e1 = jax.random.split(key, 4)

    batch = 8
    output_dim = 64
    x0 = jax.random.normal(k_x0, (batch, 784), jnp.float32)
    x1 = jax.random.normal(k_x1, (batch, 784), jnp.float32)

    enc0_params = make_encoder_params(k_e0, output_dim=output_dim)
    enc1_params = make_encoder_params(k_e1, output_dim=output_dim)
    infer_params = prepare_inference_params([enc0_params, enc1_params])

    outs = mvcln_forward(infer_params, x0, x1, output_dim=output_dim)
    outs = jax.block_until_ready(outs)
    h0, h1, lobo0, lobo1, z0, z1 = outs

    # Correctness check against a pure-JAX reference with matching bf16 quantization.
    h0_ref = encoder_forward_ref(enc0_params, x0)
    h1_ref = encoder_forward_ref(enc1_params, x1)
    assert h0.shape == (batch, output_dim) and h1.shape == (batch, output_dim)
    assert jnp.allclose(h0, h0_ref, rtol=1e-2, atol=1e-2)
    assert jnp.allclose(h1, h1_ref, rtol=1e-2, atol=1e-2)
    assert lobo0.shape == (batch,) and z0.shape == (batch, output_dim)
    assert lobo1.shape == (batch,) and z1.shape == (batch, output_dim)

    print("KERNEL_OK")
</pallas_src>

<mosaic_0001>
module attributes {stable_mosaic.version = 11 : i64} {
  func.func @_dual_encoder_kernel(%arg0: i32, %arg1: memref<1x8x784xbf16, #tpu.memory_space<vmem>>, %arg2: memref<1x784x1024xbf16, #tpu.memory_space<vmem>>, %arg3: memref<1x1x1024xf32, #tpu.memory_space<vmem>>, %arg4: memref<1x1x1024xf32, #tpu.memory_space<vmem>>, %arg5: memref<1x1024x1024xbf16, #tpu.memory_space<vmem>>, %arg6: memref<1x1x1024xf32, #tpu.memory_space<vmem>>, %arg7: memref<1x1x1024xf32, #tpu.memory_space<vmem>>, %arg8: memref<1x1024x1024xbf16, #tpu.memory_space<vmem>>, %arg9: memref<1x1x1024xf32, #tpu.memory_space<vmem>>, %arg10: memref<1x1x1024xf32, #tpu.memory_space<vmem>>, %arg11: memref<1x1024x128xbf16, #tpu.memory_space<vmem>>, %arg12: memref<1x1x128xf32, #tpu.memory_space<vmem>>, %arg13: memref<1x1x128xf32, #tpu.memory_space<vmem>>, %arg14: memref<1x8x128xf32, #tpu.memory_space<vmem>>) attributes {dimension_semantics = [#tpu.dimension_semantics<parallel>], iteration_bounds = array<i64: 2>, scalar_prefetch = 0 : i64, scratch_operands = 0 : i64, tpu.core_type = #tpu.core_type<tc>, window_params = [{transform_indices = @transform_0, window_bounds = array<i64: 1, 8, 784>}, {transform_indices = @transform_1, window_bounds = array<i64: 1, 784, 1024>}, {transform_indices = @transform_2, window_bounds = array<i64: 1, 1, 1024>}, {transform_indices = @transform_3, window_bounds = array<i64: 1, 1, 1024>}, {transform_indices = @transform_4, window_bounds = array<i64: 1, 1024, 1024>}, {transform_indices = @transform_5, window_bounds = array<i64: 1, 1, 1024>}, {transform_indices = @transform_6, window_bounds = array<i64: 1, 1, 1024>}, {transform_indices = @transform_7, window_bounds = array<i64: 1, 1024, 1024>}, {transform_indices = @transform_8, window_bounds = array<i64: 1, 1, 1024>}, {transform_indices = @transform_9, window_bounds = array<i64: 1, 1, 1024>}, {transform_indices = @transform_10, window_bounds = array<i64: 1, 1024, 128>}, {transform_indices = @transform_11, window_bounds = array<i64: 1, 1, 128>}, {transform_indices = @transform_12, window_bounds = array<i64: 1, 1, 128>}, {transform_indices = @transform_13, window_bounds = array<i64: 1, 8, 128>}]} {
    %c0 = arith.constant 0 : index
    %c0_0 = arith.constant 0 : index
    %c0_1 = arith.constant 0 : index
    %0 = vector.load %arg1[%c0, %c0_0, %c0_1] : memref<1x8x784xbf16, #tpu.memory_space<vmem>>, vector<1x8x784xbf16>
    %1 = vector.shape_cast %0 : vector<1x8x784xbf16> to vector<8x784xbf16>
    %c0_2 = arith.constant 0 : index
    %c0_3 = arith.constant 0 : index
    %c0_4 = arith.constant 0 : index
    %2 = vector.load %arg2[%c0_2, %c0_3, %c0_4] : memref<1x784x1024xbf16, #tpu.memory_space<vmem>>, vector<1x784x1024xbf16>
    %3 = vector.shape_cast %2 : vector<1x784x1024xbf16> to vector<784x1024xbf16>
    %cst = arith.constant dense<0.000000e+00> : vector<8x1024xf32>
    %4 = tpu.matmul %1, %3, %cst {dimension_numbers = #tpu.dot_dimension_numbers<[1], [0], [0], [1], [0, 0, 1, 1], [], []>} : vector<8x784xbf16>, vector<784x1024xbf16>, vector<8x1024xf32> -> vector<8x1024xf32>
    %c0_5 = arith.constant 0 : index
    %c0_6 = arith.constant 0 : index
    %c0_7 = arith.constant 0 : index
    %5 = vector.load %arg3[%c0_5, %c0_6, %c0_7] : memref<1x1x1024xf32, #tpu.memory_space<vmem>>, vector<1x1x1024xf32>
    %6 = vector.shape_cast %5 : vector<1x1x1024xf32> to vector<1x1024xf32>
    %7 = vector.broadcast %6 : vector<1x1024xf32> to vector<8x1024xf32>
    %8 = arith.mulf %4, %7 : vector<8x1024xf32>
    %c0_8 = arith.constant 0 : index
    %c0_9 = arith.constant 0 : index
    %c0_10 = arith.constant 0 : index
    %9 = vector.load %arg4[%c0_8, %c0_9, %c0_10] : memref<1x1x1024xf32, #tpu.memory_space<vmem>>, vector<1x1x1024xf32>
    %10 = vector.shape_cast %9 : vector<1x1x1024xf32> to vector<1x1024xf32>
    %11 = vector.broadcast %10 : vector<1x1024xf32> to vector<8x1024xf32>
    %12 = arith.addf %8, %11 : vector<8x1024xf32>
    %cst_11 = arith.constant 0.000000e+00 : f32
    %13 = vector.broadcast %cst_11 : f32 to vector<8x1024xf32>
    %14 = arith.maximumf %12, %13 : vector<8x1024xf32>
    %15 = arith.truncf %14 : vector<8x1024xf32> to vector<8x1024xbf16>
    %c0_12 = arith.constant 0 : index
    %c0_13 = arith.constant 0 : index
    %c0_14 = arith.constant 0 : index
    %16 = vector.load %arg5[%c0_12, %c0_13, %c0_14] : memref<1x1024x1024xbf16, #tpu.memory_space<vmem>>, vector<1x1024x1024xbf16>
    %17 = vector.shape_cast %16 : vector<1x1024x1024xbf16> to vector<1024x1024xbf16>
    %cst_15 = arith.constant dense<0.000000e+00> : vector<8x1024xf32>
    %18 = tpu.matmul %15, %17, %cst_15 {dimension_numbers = #tpu.dot_dimension_numbers<[1], [0], [0], [1], [0, 0, 1, 1], [], []>} : vector<8x1024xbf16>, vector<1024x1024xbf16>, vector<8x1024xf32> -> vector<8x1024xf32>
    %c0_16 = arith.constant 0 : index
    %c0_17 = arith.constant 0 : index
    %c0_18 = arith.constant 0 : index
    %19 = vector.load %arg6[%c0_16, %c0_17, %c0_18] : memref<1x1x1024xf32, #tpu.memory_space<vmem>>, vector<1x1x1024xf32>
    %20 = vector.shape_cast %19 : vector<1x1x1024xf32> to vector<1x1024xf32>
    %21 = vector.broadcast %20 : vector<1x1024xf32> to vector<8x1024xf32>
    %22 = arith.mulf %18, %21 : vector<8x1024xf32>
    %c0_19 = arith.constant 0 : index
    %c0_20 = arith.constant 0 : index
    %c0_21 = arith.constant 0 : index
    %23 = vector.load %arg7[%c0_19, %c0_20, %c0_21] : memref<1x1x1024xf32, #tpu.memory_space<vmem>>, vector<1x1x1024xf32>
    %24 = vector.shape_cast %23 : vector<1x1x1024xf32> to vector<1x1024xf32>
    %25 = vector.broadcast %24 : vector<1x1024xf32> to vector<8x1024xf32>
    %26 = arith.addf %22, %25 : vector<8x1024xf32>
    %cst_22 = arith.constant 0.000000e+00 : f32
    %27 = vector.broadcast %cst_22 : f32 to vector<8x1024xf32>
    %28 = arith.maximumf %26, %27 : vector<8x1024xf32>
    %29 = arith.truncf %28 : vector<8x1024xf32> to vector<8x1024xbf16>
    %c0_23 = arith.constant 0 : index
    %c0_24 = arith.constant 0 : index
    %c0_25 = arith.constant 0 : index
    %30 = vector.load %arg8[%c0_23, %c0_24, %c0_25] : memref<1x1024x1024xbf16, #tpu.memory_space<vmem>>, vector<1x1024x1024xbf16>
    %31 = vector.shape_cast %30 : vector<1x1024x1024xbf16> to vector<1024x1024xbf16>
    %cst_26 = arith.constant dense<0.000000e+00> : vector<8x1024xf32>
    %32 = tpu.matmul %29, %31, %cst_26 {dimension_numbers = #tpu.dot_dimension_numbers<[1], [0], [0], [1], [0, 0, 1, 1], [], []>} : vector<8x1024xbf16>, vector<1024x1024xbf16>, vector<8x1024xf32> -> vector<8x1024xf32>
    %c0_27 = arith.constant 0 : index
    %c0_28 = arith.constant 0 : index
    %c0_29 = arith.constant 0 : index
    %33 = vector.load %arg9[%c0_27, %c0_28, %c0_29] : memref<1x1x1024xf32, #tpu.memory_space<vmem>>, vector<1x1x1024xf32>
    %34 = vector.shape_cast %33 : vector<1x1x1024xf32> to vector<1x1024xf32>
    %35 = vector.broadcast %34 : vector<1x1024xf32> to vector<8x1024xf32>
    %36 = arith.mulf %32, %35 : vector<8x1024xf32>
    %c0_30 = arith.constant 0 : index
    %c0_31 = arith.constant 0 : index
    %c0_32 = arith.constant 0 : index
    %37 = vector.load %arg10[%c0_30, %c0_31, %c0_32] : memref<1x1x1024xf32, #tpu.memory_space<vmem>>, vector<1x1x1024xf32>
    %38 = vector.shape_cast %37 : vector<1x1x1024xf32> to vector<1x1024xf32>
    %39 = vector.broadcast %38 : vector<1x1024xf32> to vector<8x1024xf32>
    %40 = arith.addf %36, %39 : vector<8x1024xf32>
    %cst_33 = arith.constant 0.000000e+00 : f32
    %41 = vector.broadcast %cst_33 : f32 to vector<8x1024xf32>
    %42 = arith.maximumf %40, %41 : vector<8x1024xf32>
    %43 = arith.truncf %42 : vector<8x1024xf32> to vector<8x1024xbf16>
    %c0_34 = arith.constant 0 : index
    %c0_35 = arith.constant 0 : index
    %c0_36 = arith.constant 0 : index
    %44 = vector.load %arg11[%c0_34, %c0_35, %c0_36] : memref<1x1024x128xbf16, #tpu.memory_space<vmem>>, vector<1x1024x128xbf16>
    %45 = vector.shape_cast %44 : vector<1x1024x128xbf16> to vector<1024x128xbf16>
    %cst_37 = arith.constant dense<0.000000e+00> : vector<8x128xf32>
    %46 = tpu.matmul %43, %45, %cst_37 {dimension_numbers = #tpu.dot_dimension_numbers<[1], [0], [0], [1], [0, 0, 1, 1], [], []>} : vector<8x1024xbf16>, vector<1024x128xbf16>, vector<8x128xf32> -> vector<8x128xf32>
    %c0_38 = arith.constant 0 : index
    %c0_39 = arith.constant 0 : index
    %c0_40 = arith.constant 0 : index
    %47 = vector.load %arg12[%c0_38, %c0_39, %c0_40] : memref<1x1x128xf32, #tpu.memory_space<vmem>>, vector<1x1x128xf32>
    %48 = vector.shape_cast %47 : vector<1x1x128xf32> to vector<1x128xf32>
    %49 = vector.broadcast %48 : vector<1x128xf32> to vector<8x128xf32>
    %50 = arith.mulf %46, %49 : vector<8x128xf32>
    %c0_41 = arith.constant 0 : index
    %c0_42 = arith.constant 0 : index
    %c0_43 = arith.constant 0 : index
    %51 = vector.load %arg13[%c0_41, %c0_42, %c0_43] : memref<1x1x128xf32, #tpu.memory_space<vmem>>, vector<1x1x128xf32>
    %52 = vector.shape_cast %51 : vector<1x1x128xf32> to vector<1x128xf32>
    %53 = vector.broadcast %52 : vector<1x128xf32> to vector<8x128xf32>
    %54 = arith.addf %50, %53 : vector<8x128xf32>
    %cst_44 = arith.constant 0.000000e+00 : f32
    %55 = vector.broadcast %cst_44 : f32 to vector<8x128xf32>
    %56 = arith.maximumf %54, %55 : vector<8x128xf32>
    %c0_45 = arith.constant 0 : index
    %c0_46 = arith.constant 0 : index
    %c0_47 = arith.constant 0 : index
    %57 = vector.load %arg14[%c0_45, %c0_46, %c0_47] : memref<1x8x128xf32, #tpu.memory_space<vmem>>, vector<1x8x128xf32>
    %58 = vector.shape_cast %57 : vector<1x8x128xf32> to vector<8x128xf32>
    %59 = vector.shape_cast %56 : vector<8x128xf32> to vector<1x8x128xf32>
    tpu.vector_store %arg14[%c0_45, %c0_46, %c0_47], %59 {strides = array<i32>} : memref<1x8x128xf32, #tpu.memory_space<vmem>>, vector<1x8x128xf32>,
    return
  }
  func.func @transform_0(%arg0: i32) -> (i32, i32, i32) {
    %c0_i32 = arith.constant 0 : i32
    %c0_i32_0 = arith.constant 0 : i32
    %c0_i32_1 = arith.constant 0 : i32
    return %arg0, %c0_i32, %c0_i32_0 : i32, i32, i32
  }
  func.func @transform_1(%arg0: i32) -> (i32, i32, i32) {
    %c0_i32 = arith.constant 0 : i32
    %c0_i32_0 = arith.constant 0 : i32
    %c0_i32_1 = arith.constant 0 : i32
    return %arg0, %c0_i32, %c0_i32_0 : i32, i32, i32
  }
  func.func @transform_2(%arg0: i32) -> (i32, i32, i32) {
    %c0_i32 = arith.constant 0 : i32
    %c0_i32_0 = arith.constant 0 : i32
    %c0_i32_1 = arith.constant 0 : i32
    return %arg0, %c0_i32, %c0_i32_0 : i32, i32, i32
  }
  func.func @transform_3(%arg0: i32) -> (i32, i32, i32) {
    %c0_i32 = arith.constant 0 : i32
    %c0_i32_0 = arith.constant 0 : i32
    %c0_i32_1 = arith.constant 0 : i32
    return %arg0, %c0_i32, %c0_i32_0 : i32, i32, i32
  }
  func.func @transform_4(%arg0: i32) -> (i32, i32, i32) {
    %c0_i32 = arith.constant 0 : i32
    %c0_i32_0 = arith.constant 0 : i32
    %c0_i32_1 = arith.constant 0 : i32
    return %arg0, %c0_i32, %c0_i32_0 : i32, i32, i32
  }
  func.func @transform_5(%arg0: i32) -> (i32, i32, i32) {
    %c0_i32 = arith.constant 0 : i32
    %c0_i32_0 = arith.constant 0 : i32
    %c0_i32_1 = arith.constant 0 : i32
    return %arg0, %c0_i32, %c0_i32_0 : i32, i32, i32
  }
  func.func @transform_6(%arg0: i32) -> (i32, i32, i32) {
    %c0_i32 = arith.constant 0 : i32
    %c0_i32_0 = arith.constant 0 : i32
    %c0_i32_1 = arith.constant 0 : i32
    return %arg0, %c0_i32, %c0_i32_0 : i32, i32, i32
  }
  func.func @transform_7(%arg0: i32) -> (i32, i32, i32) {
    %c0_i32 = arith.constant 0 : i32
    %c0_i32_0 = arith.constant 0 : i32
    %c0_i32_1 = arith.constant 0 : i32
    return %arg0, %c0_i32, %c0_i32_0 : i32, i32, i32
  }
  func.func @transform_8(%arg0: i32) -> (i32, i32, i32) {
    %c0_i32 = arith.constant 0 : i32
    %c0_i32_0 = arith.constant 0 : i32
    %c0_i32_1 = arith.constant 0 : i32
    return %arg0, %c0_i32, %c0_i32_0 : i32, i32, i32
  }
  func.func @transform_9(%arg0: i32) -> (i32, i32, i32) {
    %c0_i32 = arith.constant 0 : i32
    %c0_i32_0 = arith.constant 0 : i32
    %c0_i32_1 = arith.constant 0 : i32
    return %arg0, %c0_i32, %c0_i32_0 : i32, i32, i32
  }
  func.func @transform_10(%arg0: i32) -> (i32, i32, i32) {
    %c0_i32 = arith.constant 0 : i32
    %c0_i32_0 = arith.constant 0 : i32
    %c0_i32_1 = arith.constant 0 : i32
    return %arg0, %c0_i32, %c0_i32_0 : i32, i32, i32
  }
  func.func @transform_11(%arg0: i32) -> (i32, i32, i32) {
    %c0_i32 = arith.constant 0 : i32
    %c0_i32_0 = arith.constant 0 : i32
    %c0_i32_1 = arith.constant 0 : i32
    return %arg0, %c0_i32, %c0_i32_0 : i32, i32, i32
  }
  func.func @transform_12(%arg0: i32) -> (i32, i32, i32) {
    %c0_i32 = arith.constant 0 : i32
    %c0_i32_0 = arith.constant 0 : i32
    %c0_i32_1 = arith.constant 0 : i32
    return %arg0, %c0_i32, %c0_i32_0 : i32, i32, i32
  }
  func.func @transform_13(%arg0: i32) -> (i32, i32, i32) {
    %c0_i32 = arith.constant 0 : i32
    %c0_i32_0 = arith.constant 0 : i32
    %c0_i32_1 = arith.constant 0 : i32
    return %arg0, %c0_i32, %c0_i32_0 : i32, i32, i32
  }
}

</mosaic_0001>

<llo_original>
// kernel: mvcln_forward.1
$region0: #{mvcln_forward.1}
  #allocation0 [shape = 'u32[]', space=smem, size = 0x4, offset = 0x4, fixed_abs, tag = 'smem constant byte address 0x4 - core index']
  #allocation1 [shape = 'u32[144,128]{1,0:T(1,128)}', space=vmem, size = 0x12000, scoped, tag = 'internal scratch']
  %s0 = inlined_call_operand.vmem [shape: bf16[2,8,784], index: 0, kind: input, shape index: {}]
  %s1 = inlined_call_operand.hbm [shape: bf16[2,784,1024], index: 1, kind: input, shape index: {}]
  %s2 = inlined_call_operand.hbm [shape: f32[2,1,1024], index: 2, kind: input, shape index: {}]
  %s3 = inlined_call_operand.hbm [shape: f32[2,1,1024], index: 3, kind: input, shape index: {}]
  %s4 = inlined_call_operand.hbm [shape: bf16[2,1024,1024], index: 4, kind: input, shape index: {}]
  %s5 = inlined_call_operand.hbm [shape: f32[2,1,1024], index: 5, kind: input, shape index: {}]
  %s6 = inlined_call_operand.hbm [shape: f32[2,1,1024], index: 6, kind: input, shape index: {}]
  %s7 = inlined_call_operand.hbm [shape: bf16[2,1024,1024], index: 7, kind: input, shape index: {}]
  %s8 = inlined_call_operand.hbm [shape: f32[2,1,1024], index: 8, kind: input, shape index: {}]
  %s9 = inlined_call_operand.hbm [shape: f32[2,1,1024], index: 9, kind: input, shape index: {}]
  %s10 = inlined_call_operand.hbm [shape: bf16[2,1024,128], index: 10, kind: input, shape index: {}]
  %s11 = inlined_call_operand.hbm [shape: f32[2,1,128], index: 11, kind: input, shape index: {}]
  %s12 = inlined_call_operand.hbm [shape: f32[2,1,128], index: 12, kind: input, shape index: {}]
  %s13 = inlined_call_operand.vmem [shape: f32[2,8,128], index: 13, kind: output, shape index: {}]
  %s14 = sld [smem:[#allocation0]]
  $region133: #{mvcln_forward.1} parent=0
    _
  %s16 = ssub.s32 1, %s14
  %s17 = scalar_select 0, %s16, %s14
  $region1: #{mvcln_forward.1} parent=0
    #allocation2 [shape = 'u8[3211264]{0}', space=vmem, size = 0x310000, scoped, tag = 'input window, operand 1']
    #allocation3 [shape = 's32[2]{0}', space=sflag, size = 0x8, scoped, tag = 'scoped memory for mvcln_forward.1']
    #allocation4 [shape = 'u8[8192]{0}', space=vmem, size = 0x2000, scoped, tag = 'input window, operand 2']
    #allocation5 [shape = 's32[2]{0}', space=sflag, size = 0x8, scoped, tag = 'scoped memory for mvcln_forward.1']
    #allocation6 [shape = 'u8[8192]{0}', space=vmem, size = 0x2000, scoped, tag = 'input window, operand 3']
    #allocation7 [shape = 'u8[4194304]{0}', space=vmem, size = 0x400000, scoped, tag = 'input window, operand 4']
    #allocation8 [shape = 's32[2]{0}', space=sflag, size = 0x8, scoped, tag = 'scoped memory for mvcln_forward.1']
    #allocation9 [shape = 'u8[8192]{0}', space=vmem, size = 0x2000, scoped, tag = 'input window, operand 5']
    #allocation10 [shape = 'u8[8192]{0}', space=vmem, size = 0x2000, scoped, tag = 'input window, operand 6']
    #allocation11 [shape = 's32[2]{0}', space=sflag, size = 0x8, scoped, tag = 'scoped memory for mvcln_forward.1']
    #allocation12 [shape = 'u8[4194304]{0}', space=vmem, size = 0x400000, scoped, tag = 'input window, operand 7']
    #allocation13 [shape = 'u8[8192]{0}', space=vmem, size = 0x2000, scoped, tag = 'input window, operand 8']
    #allocation14 [shape = 's32[2]{0}', space=sflag, size = 0x8, scoped, tag = 'scoped memory for mvcln_forward.1']
    #allocation15 [shape = 'u8[8192]{0}', space=vmem, size = 0x2000, scoped, tag = 'input window, operand 9']
    #allocation16 [shape = 'u8[524288]{0}', space=vmem, size = 0x80000, scoped, tag = 'input window, operand 10']
    #allocation17 [shape = 's32[2]{0}', space=sflag, size = 0x8, scoped, tag = 'scoped memory for mvcln_forward.1']
    #allocation18 [shape = 'u8[1024]{0}', space=vmem, size = 0x400, scoped, tag = 'input window, operand 11']
    #allocation19 [shape = 'u8[1024]{0}', space=vmem, size = 0x400, scoped, tag = 'input window, operand 12']
    #allocation20 [shape = 's32[2]{0}', space=sflag, size = 0x8, scoped, tag = 'scoped memory for mvcln_forward.1']
    %18 = vsyncpa [#allocation3], 0
    %s19 = scalar_lea.sflag [#allocation3], 1
    %20 = vsyncpa %s19, 0
    %21 = vsyncpa [#allocation5], 0
    %s22 = scalar_lea.sflag [#allocation5], 1
    %23 = vsyncpa %s22, 0
    %24 = vsyncpa [#allocation8], 0
    %s25 = scalar_lea.sflag [#allocation8], 1
    %26 = vsyncpa %s25, 0
    %27 = vsyncpa [#allocation11], 0
    %s28 = scalar_lea.sflag [#allocation11], 1
    %29 = vsyncpa %s28, 0
    %30 = vsyncpa [#allocation14], 0
    %s31 = scalar_lea.sflag [#allocation14], 1
    %32 = vsyncpa %s31, 0
    %33 = vsyncpa [#allocation17], 0
    %s34 = scalar_lea.sflag [#allocation17], 1
    %35 = vsyncpa %s34, 0
    %36 = vsyncpa [#allocation20], 0
    %s37 = scalar_lea.sflag [#allocation20], 1
    %38 = vsyncpa %s37, 0
    loop: start=0, step=1, limit=4
    $region2: #{mvcln_forward.1} parent=1 // loop_pre_header
      _
    $region3: #{mvcln_forward.1} parent=1 // loop_header
      %s40 = sphi 0, %s44
      %p41 = scmp.ge.s32.totalorder %s40, 4
      %s50 = sphi 0, %s52
      %s53 = sphi 0, %s50
      %s54 = sphi 0, %s53
      %s70 = sphi 0, %s54
      %s76 = sphi 0, %s78
      %s79 = sphi 0, %s76
      %s80 = sphi 0, %s79
      %s96 = sphi 0, %s80
      %s102 = sphi 0, %s104
      %s105 = sphi 0, %s102
      %s106 = sphi 0, %s105
      %s122 = sphi 0, %s106
      %s128 = sphi 0, %s130
      %s131 = sphi 0, %s128
      %s132 = sphi 0, %s131
      %s148 = sphi 0, %s132
      %s154 = sphi 0, %s156
      %s157 = sphi 0, %s154
      %s158 = sphi 0, %s157
      %s174 = sphi 0, %s158
      %s180 = sphi 0, %s182
      %s183 = sphi 0, %s180
      %s184 = sphi 0, %s183
      %s200 = sphi 0, %s184
      %s206 = sphi 0, %s208
      %s209 = sphi 0, %s206
      %s210 = sphi 0, %s209
      %s226 = sphi 0, %s210
      %s232 = sphi 0, %s234
      %s235 = sphi 0, %s232
      %s236 = sphi 0, %s235
      %s252 = sphi 0, %s236
      %s258 = sphi 0, %s260
      %s261 = sphi 0, %s258
      %s262 = sphi 0, %s261
      %s278 = sphi 0, %s262
      %s284 = sphi 0, %s286
      %s287 = sphi 0, %s284
      %s288 = sphi 0, %s287
      %s304 = sphi 0, %s288
      %s310 = sphi 0, %s312
      %s313 = sphi 0, %s310
      %s314 = sphi 0, %s313
      %s330 = sphi 0, %s314
      %s336 = sphi 0, %s338
      %s339 = sphi 0, %s336
      %s340 = sphi 0, %s339
      %s356 = sphi 0, %s340
      %s362 = sphi 0, %s364
      %s365 = sphi 0, %s362
      %s366 = sphi 0, %s365
      %s382 = sphi 0, %s366
      %s388 = sphi 0, %s390
      %s391 = sphi 0, %s388
      %s392 = sphi 0, %s391
      %s408 = sphi 0, %s392
    $region4: #{mvcln_forward.1} parent=1 // loop_header_branch
      %43 = sbr.rel (%p41) target = $region8
    $region5: #{mvcln_forward.1} parent=1 // loop_body
      %s45 = ssub.s32 %s40, 1
      %s46 = ssub.s32 %s40, 2
      %s47 = sadd.s32 %s40, 1
      %s48 = ssub.s32 %s40, %s47
      %p49 = scmp.eq.s32.totalorder %s48, 0
      %s51 = sadd.s32 %s50, 1
      %s52 = scalar_select %p49, %s50, %s51
      %p55 = pneg %p49
      %p56 = scmp.eq.s32.totalorder %s40, 1
      %p57 = por %p55, %p56
      %p58 = scmp.ne.s32.totalorder %s50, %s53
      %p59 = scmp.eq.s32.totalorder %s40, 0
      %p60 = por %p58, %p59
      %p61 = scmp.ne.s32.totalorder %s50, %s53
      %p62 = scmp.eq.s32.totalorder %s45, 1
      %p63 = por %p61, %p62
      %p64 = scmp.ne.s32.totalorder %s53, %s54
      %p65 = scmp.eq.s32.totalorder %s45, 0
      %p66 = por %p64, %p65
      %p67 = scmp.ne.s32.totalorder %s53, %s54
      %p68 = scmp.eq.s32.totalorder %s46, 1
      %p69 = por %p67, %p68
      %p71 = scmp.ne.s32.totalorder %s54, %s70
      %p72 = scmp.eq.s32.totalorder %s46, 0
      %p73 = por %p71, %p72
      %s74 = ssub.s32 %s40, %s47
      %p75 = scmp.eq.s32.totalorder %s74, 0
      %s77 = sadd.s32 %s76, 1
      %s78 = scalar_select %p75, %s76, %s77
      %p81 = pneg %p75
      %p82 = scmp.eq.s32.totalorder %s40, 1
      %p83 = por %p81, %p82
      %p84 = scmp.ne.s32.totalorder %s76, %s79
      %p85 = scmp.eq.s32.totalorder %s40, 0
      %p86 = por %p84, %p85
      %p87 = scmp.ne.s32.totalorder %s76, %s79
      %p88 = scmp.eq.s32.totalorder %s45, 1
      %p89 = por %p87, %p88
      %p90 = scmp.ne.s32.totalorder %s79, %s80
      %p91 = scmp.eq.s32.totalorder %s45, 0
      %p92 = por %p90, %p91
      %p93 = scmp.ne.s32.totalorder %s79, %s80
      %p94 = scmp.eq.s32.totalorder %s46, 1
      %p95 = por %p93, %p94
      %p97 = scmp.ne.s32.totalorder %s80, %s96
      %p98 = scmp.eq.s32.totalorder %s46, 0
      %p99 = por %p97, %p98
      %s100 = ssub.s32 %s40, %s47
      %p101 = scmp.eq.s32.totalorder %s100, 0
      %s103 = sadd.s32 %s102, 1
      %s104 = scalar_select %p101, %s102, %s103
      %p107 = pneg %p101
      %p108 = scmp.eq.s32.totalorder %s40, 1
      %p109 = por %p107, %p108
      %p110 = scmp.ne.s32.totalorder %s102, %s105
      %p111 = scmp.eq.s32.totalorder %s40, 0
      %p112 = por %p110, %p111
      %p113 = scmp.ne.s32.totalorder %s102, %s105
      %p114 = scmp.eq.s32.totalorder %s45, 1
      %p115 = por %p113, %p114
      %p116 = scmp.ne.s32.totalorder %s105, %s106
      %p117 = scmp.eq.s32.totalorder %s45, 0
      %p118 = por %p116, %p117
      %p119 = scmp.ne.s32.totalorder %s105, %s106
      %p120 = scmp.eq.s32.totalorder %s46, 1
      %p121 = por %p119, %p120
      %p123 = scmp.ne.s32.totalorder %s106, %s122
      %p124 = scmp.eq.s32.totalorder %s46, 0
      %p125 = por %p123, %p124
      %s126 = ssub.s32 %s40, %s47
      %p127 = scmp.eq.s32.totalorder %s126, 0
      %s129 = sadd.s32 %s128, 1
      %s130 = scalar_select %p127, %s128, %s129
      %p133 = pneg %p127
      %p134 = scmp.eq.s32.totalorder %s40, 1
      %p135 = por %p133, %p134
      %p136 = scmp.ne.s32.totalorder %s128, %s131
      %p137 = scmp.eq.s32.totalorder %s40, 0
      %p138 = por %p136, %p137
      %p139 = scmp.ne.s32.totalorder %s128, %s131
      %p140 = scmp.eq.s32.totalorder %s45, 1
      %p141 = por %p139, %p140
      %p142 = scmp.ne.s32.totalorder %s131, %s132
      %p143 = scmp.eq.s32.totalorder %s45, 0
      %p144 = por %p142, %p143
      %p145 = scmp.ne.s32.totalorder %s131, %s132
      %p146 = scmp.eq.s32.totalorder %s46, 1
      %p147 = por %p145, %p146
      %p149 = scmp.ne.s32.totalorder %s132, %s148
      %p150 = scmp.eq.s32.totalorder %s46, 0
      %p151 = por %p149, %p150
      %s152 = ssub.s32 %s40, %s47
      %p153 = scmp.eq.s32.totalorder %s152, 0
      %s155 = sadd.s32 %s154, 1
      %s156 = scalar_select %p153, %s154, %s155
      %p159 = pneg %p153
      %p160 = scmp.eq.s32.totalorder %s40, 1
      %p161 = por %p159, %p160
      %p162 = scmp.ne.s32.totalorder %s154, %s157
      %p163 = scmp.eq.s32.totalorder %s40, 0
      %p164 = por %p162, %p163
      %p165 = scmp.ne.s32.totalorder %s154, %s157
      %p166 = scmp.eq.s32.totalorder %s45, 1
      %p167 = por %p165, %p166
      %p168 = scmp.ne.s32.totalorder %s157, %s158
      %p169 = scmp.eq.s32.totalorder %s45, 0
      %p170 = por %p168, %p169
      %p171 = scmp.ne.s32.totalorder %s157, %s158
      %p172 = scmp.eq.s32.totalorder %s46, 1
      %p173 = por %p171, %p172
      %p175 = scmp.ne.s32.totalorder %s158, %s174
      %p176 = scmp.eq.s32.totalorder %s46, 0
      %p177 = por %p175, %p176
      %s178 = ssub.s32 %s40, %s47
      %p179 = scmp.eq.s32.totalorder %s178, 0
      %s181 = sadd.s32 %s180, 1
      %s182 = scalar_select %p179, %s180, %s181
      %p185 = pneg %p179
      %p186 = scmp.eq.s32.totalorder %s40, 1
      %p187 = por %p185, %p186
      %p188 = scmp.ne.s32.totalorder %s180, %s183
      %p189 = scmp.eq.s32.totalorder %s40, 0
      %p190 = por %p188, %p189
      %p191 = scmp.ne.s32.totalorder %s180, %s183
      %p192 = scmp.eq.s32.totalorder %s45, 1
      %p193 = por %p191, %p192
      %p194 = scmp.ne.s32.totalorder %s183, %s184
      %p195 = scmp.eq.s32.totalorder %s45, 0
      %p196 = por %p194, %p195
      %p197 = scmp.ne.s32.totalorder %s183, %s184
      %p198 = scmp.eq.s32.totalorder %s46, 1
      %p199 = por %p197, %p198
      %p201 = scmp.ne.s32.totalorder %s184, %s200
      %p202 = scmp.eq.s32.totalorder %s46, 0
      %p203 = por %p201, %p202
      %s204 = ssub.s32 %s40, %s47
      %p205 = scmp.eq.s32.totalorder %s204, 0
      %s207 = sadd.s32 %s206, 1
      %s208 = scalar_select %p205, %s206, %s207
      %p211 = pneg %p205
      %p212 = scmp.eq.s32.totalorder %s40, 1
      %p213 = por %p211, %p212
      %p214 = scmp.ne.s32.totalorder %s206, %s209
      %p215 = scmp.eq.s32.totalorder %s40, 0
      %p216 = por %p214, %p215
      %p217 = scmp.ne.s32.totalorder %s206, %s209
      %p218 = scmp.eq.s32.totalorder %s45, 1
      %p219 = por %p217, %p218
      %p220 = scmp.ne.s32.totalorder %s209, %s210
      %p221 = scmp.eq.s32.totalorder %s45, 0
      %p222 = por %p220, %p221
      %p223 = scmp.ne.s32.totalorder %s209, %s210
      %p224 = scmp.eq.s32.totalorder %s46, 1
      %p225 = por %p223, %p224
      %p227 = scmp.ne.s32.totalorder %s210, %s226
      %p228 = scmp.eq.s32.totalorder %s46, 0
      %p229 = por %p227, %p228
      %s230 = ssub.s32 %s40, %s47
      %p231 = scmp.eq.s32.totalorder %s230, 0
      %s233 = sadd.s32 %s232, 1
      %s234 = scalar_select %p231, %s232, %s233
      %p237 = pneg %p231
      %p238 = scmp.eq.s32.totalorder %s40, 1
      %p239 = por %p237, %p238
      %p240 = scmp.ne.s32.totalorder %s232, %s235
      %p241 = scmp.eq.s32.totalorder %s40, 0
      %p242 = por %p240, %p241
      %p243 = scmp.ne.s32.totalorder %s232, %s235
      %p244 = scmp.eq.s32.totalorder %s45, 1
      %p245 = por %p243, %p244
      %p246 = scmp.ne.s32.totalorder %s235, %s236
      %p247 = scmp.eq.s32.totalorder %s45, 0
      %p248 = por %p246, %p247
      %p249 = scmp.ne.s32.totalorder %s235, %s236
      %p250 = scmp.eq.s32.totalorder %s46, 1
      %p251 = por %p249, %p250
      %p253 = scmp.ne.s32.totalorder %s236, %s252
      %p254 = scmp.eq.s32.totalorder %s46, 0
      %p255 = por %p253, %p254
      %s256 = ssub.s32 %s40, %s47
      %p257 = scmp.eq.s32.totalorder %s256, 0
      %s259 = sadd.s32 %s258, 1
      %s260 = scalar_select %p257, %s258, %s259
      %p263 = pneg %p257
      %p264 = scmp.eq.s32.totalorder %s40, 1
      %p265 = por %p263, %p264
      %p266 = scmp.ne.s32.totalorder %s258, %s261
      %p267 = scmp.eq.s32.totalorder %s40, 0
      %p268 = por %p266, %p267
      %p269 = scmp.ne.s32.totalorder %s258, %s261
      %p270 = scmp.eq.s32.totalorder %s45, 1
      %p271 = por %p269, %p270
      %p272 = scmp.ne.s32.totalorder %s261, %s262
      %p273 = scmp.eq.s32.totalorder %s45, 0
      %p274 = por %p272, %p273
      %p275 = scmp.ne.s32.totalorder %s261, %s262
      %p276 = scmp.eq.s32.totalorder %s46, 1
      %p277 = por %p275, %p276
      %p279 = scmp.ne.s32.totalorder %s262, %s278
      %p280 = scmp.eq.s32.totalorder %s46, 0
      %p281 = por %p279, %p280
      %s282 = ssub.s32 %s40, %s47
      %p283 = scmp.eq.s32.totalorder %s282, 0
      %s285 = sadd.s32 %s284, 1
      %s286 = scalar_select %p283, %s284, %s285
      %p289 = pneg %p283
      %p290 = scmp.eq.s32.totalorder %s40, 1
      %p291 = por %p289, %p290
      %p292 = scmp.ne.s32.totalorder %s284, %s287
      %p293 = scmp.eq.s32.totalorder %s40, 0
      %p294 = por %p292, %p293
      %p295 = scmp.ne.s32.totalorder %s284, %s287
      %p296 = scmp.eq.s32.totalorder %s45, 1
      %p297 = por %p295, %p296
      %p298 = scmp.ne.s32.totalorder %s287, %s288
      %p299 = scmp.eq.s32.totalorder %s45, 0
      %p300 = por %p298, %p299
      %p301 = scmp.ne.s32.totalorder %s287, %s288
      %p302 = scmp.eq.s32.totalorder %s46, 1
      %p303 = por %p301, %p302
      %p305 = scmp.ne.s32.totalorder %s288, %s304
      %p306 = scmp.eq.s32.totalorder %s46, 0
      %p307 = por %p305, %p306
      %s308 = ssub.s32 %s40, %s47
      %p309 = scmp.eq.s32.totalorder %s308, 0
      %s311 = sadd.s32 %s310, 1
      %s312 = scalar_select %p309, %s310, %s311
      %p315 = pneg %p309
      %p316 = scmp.eq.s32.totalorder %s40, 1
      %p317 = por %p315, %p316
      %p318 = scmp.ne.s32.totalorder %s310, %s313
      %p319 = scmp.eq.s32.totalorder %s40, 0
      %p320 = por %p318, %p319
      %p321 = scmp.ne.s32.totalorder %s310, %s313
      %p322 = scmp.eq.s32.totalorder %s45, 1
      %p323 = por %p321, %p322
      %p324 = scmp.ne.s32.totalorder %s313, %s314
      %p325 = scmp.eq.s32.totalorder %s45, 0
      %p326 = por %p324, %p325
      %p327 = scmp.ne.s32.totalorder %s313, %s314
      %p328 = scmp.eq.s32.totalorder %s46, 1
      %p329 = por %p327, %p328
      %p331 = scmp.ne.s32.totalorder %s314, %s330
      %p332 = scmp.eq.s32.totalorder %s46, 0
      %p333 = por %p331, %p332
      %s334 = ssub.s32 %s40, %s47
      %p335 = scmp.eq.s32.totalorder %s334, 0
      %s337 = sadd.s32 %s336, 1
      %s338 = scalar_select %p335, %s336, %s337
      %p341 = pneg %p335
      %p342 = scmp.eq.s32.totalorder %s40, 1
      %p343 = por %p341, %p342
      %p344 = scmp.ne.s32.totalorder %s336, %s339
      %p345 = scmp.eq.s32.totalorder %s40, 0
      %p346 = por %p344, %p345
      %p347 = scmp.ne.s32.totalorder %s336, %s339
      %p348 = scmp.eq.s32.totalorder %s45, 1
      %p349 = por %p347, %p348
      %p350 = scmp.ne.s32.totalorder %s339, %s340
      %p351 = scmp.eq.s32.totalorder %s45, 0
      %p352 = por %p350, %p351
      %p353 = scmp.ne.s32.totalorder %s339, %s340
      %p354 = scmp.eq.s32.totalorder %s46, 1
      %p355 = por %p353, %p354
      %p357 = scmp.ne.s32.totalorder %s340, %s356
      %p358 = scmp.eq.s32.totalorder %s46, 0
      %p359 = por %p357, %p358
      %s360 = ssub.s32 %s40, %s47
      %p361 = scmp.eq.s32.totalorder %s360, 0
      %s363 = sadd.s32 %s362, 1
      %s364 = scalar_select %p361, %s362, %s363
      %p367 = pneg %p361
      %p368 = scmp.eq.s32.totalorder %s40, 1
      %p369 = por %p367, %p368
      %p370 = scmp.ne.s32.totalorder %s362, %s365
      %p371 = scmp.eq.s32.totalorder %s40, 0
      %p372 = por %p370, %p371
      %p373 = scmp.ne.s32.totalorder %s362, %s365
      %p374 = scmp.eq.s32.totalorder %s45, 1
      %p375 = por %p373, %p374
      %p376 = scmp.ne.s32.totalorder %s365, %s366
      %p377 = scmp.eq.s32.totalorder %s45, 0
      %p378 = por %p376, %p377
      %p379 = scmp.ne.s32.totalorder %s365, %s366
      %p380 = scmp.eq.s32.totalorder %s46, 1
      %p381 = por %p379, %p380
      %p383 = scmp.ne.s32.totalorder %s366, %s382
      %p384 = scmp.eq.s32.totalorder %s46, 0
      %p385 = por %p383, %p384
      %s386 = ssub.s32 %s40, %s47
      %p387 = scmp.eq.s32.totalorder %s386, 0
      %s389 = sadd.s32 %s388, 1
      %s390 = scalar_select %p387, %s388, %s389
      %p393 = pneg %p387
      %p394 = scmp.eq.s32.totalorder %s40, 1
      %p395 = por %p393, %p394
      %p396 = scmp.ne.s32.totalorder %s388, %s391
      %p397 = scmp.eq.s32.totalorder %s40, 0
      %p398 = por %p396, %p397
      %p399 = scmp.ne.s32.totalorder %s388, %s391
      %p400 = scmp.eq.s32.totalorder %s45, 1
      %p401 = por %p399, %p400
      %p402 = scmp.ne.s32.totalorder %s391, %s392
      %p403 = scmp.eq.s32.totalorder %s45, 0
      %p404 = por %p402, %p403
      %p405 = scmp.ne.s32.totalorder %s391, %s392
      %p406 = scmp.eq.s32.totalorder %s46, 1
      %p407 = por %p405, %p406
      %p409 = scmp.ne.s32.totalorder %s392, %s408
      %p410 = scmp.eq.s32.totalorder %s46, 0
      %p411 = por %p409, %p410
      %p412 = scmp.le.s32.totalorder 1, %s40
      %p413 = scmp.lt.s32.totalorder %s40, 3
      %p414 = pnand %p412, %p413
      %p415 = pneg %p414
      // Predicated region
      $region9: #{mvcln_forward.1} parent=5 // pred_check
        _
      $region10: #{mvcln_forward.1} parent=5 // pred_check_branch
        %417 = sbr.rel (%p414) target = $region12
      $region11: #{mvcln_forward.1} parent=5 // pred_region
        %s418 = ssub.s32 %s40, 1
      $region12: #{mvcln_forward.1} parent=5 // pred_fallthru
        _
      %p419 = scmp.lt.s32.totalorder %s40, 2
      // Predicated region
      $region13: #{mvcln_forward.1} parent=5 // pred_check
        %p420 = pneg %p419
      $region14: #{mvcln_forward.1} parent=5 // pred_check_branch
        %422 = sbr.rel (%p420) target = $region16
      $region15: #{mvcln_forward.1} parent=5 // pred_region
        // Predicated region
        $region17: #{mvcln_forward.1} parent=15 // pred_check
          %p423 = pneg %p60
        $region18: #{mvcln_forward.1} parent=15 // pred_check_branch
          %425 = sbr.rel (%p423) target = $region20
        $region19: #{mvcln_forward.1} parent=15 // pred_region
          %p426 = scmp.lt.s32.totalorder %s40, 1
          %s427 = scalar_select %p426, %s40, 1
          %s428 = smul.addr %s427, 7
          %s429 = smul.addr %s428, 4
          %s430 = scalar_lea.vmem %s0, %s429
        $region20: #{mvcln_forward.1} parent=15 // pred_fallthru
          _
        // Predicated region
        $region21: #{mvcln_forward.1} parent=15 // pred_check
          %p431 = pneg %p86
        $region22: #{mvcln_forward.1} parent=15 // pred_check_branch
          %433 = sbr.rel (%p431) target = $region24
        $region23: #{mvcln_forward.1} parent=15 // pred_region
          %s434 = sand.u32 %s76, 1
          %s435 = scalar_lea.sflag [#allocation3], %s434
          %s436 = sand.u32 %s76, 1
          %s437 = smul.addr %s436, 3136
          %s438 = scalar_lea.vmem [#allocation2], %s437
          %s440 = ssub.s32 50176, 50176
          %441 = vsyncadd %s435, %s440
          %s442 = smul.addr %s40, 784
          %s443 = smul.addr %s442, 64
          %s444 = scalar_lea.hbm %s1, %s443
          %s445 = sshll.u32 %s438, 4
          %s446 = int_to_ptr.vmem [resolvable:$true] %s445
          %451 = dma.hbm_to_vmem [thread:$0]  %s444, 50176, %s446, %s435, 512, 512, 32
        $region24: #{mvcln_forward.1} parent=15 // pred_fallthru
          _
        // Predicated region
        $region25: #{mvcln_forward.1} parent=15 // pred_check
          %p452 = pneg %p112
        $region26: #{mvcln_forward.1} parent=15 // pred_check_branch
          %454 = sbr.rel (%p452) target = $region28
        $region27: #{mvcln_forward.1} parent=15 // pred_region
          %s455 = sand.u32 %s40, 1
          %s456 = scalar_lea.sflag [#allocation5], %s455
          %s457 = sand.u32 %s102, 1
          %s458 = smul.addr %s457, 8
          %s459 = scalar_lea.vmem [#allocation4], %s458
          %s461 = ssub.s32 128, 128
          %462 = vsyncadd %s456, %s461
          %s463 = smul.addr %s40, 8
          %s464 = smul.addr %s463, 16
          %s465 = scalar_lea.hbm %s2, %s464
          %s467 = sshll.u32 %s459, 4
          %s468 = int_to_ptr.vmem [resolvable:$true] %s467
          %470 = dma.hbm_to_vmem [thread:$0]  %s465, 128, %s468, %s456
        $region28: #{mvcln_forward.1} parent=15 // pred_fallthru
          _
        // Predicated region
        $region29: #{mvcln_forward.1} parent=15 // pred_check
          %p471 = pneg %p138
        $region30: #{mvcln_forward.1} parent=15 // pred_check_branch
          %473 = sbr.rel (%p471) target = $region32
        $region31: #{mvcln_forward.1} parent=15 // pred_region
          %s474 = sand.u32 %s40, 1
          %s475 = scalar_lea.sflag [#allocation5], %s474
          %s476 = sand.u32 %s128, 1
          %s477 = smul.addr %s476, 8
          %s478 = scalar_lea.vmem [#allocation6], %s477
          %s480 = ssub.s32 128, 128
          %481 = vsyncadd %s475, %s480
          %s482 = smul.addr %s40, 8
          %s483 = smul.addr %s482, 16
          %s484 = scalar_lea.hbm %s3, %s483
          %s486 = sshll.u32 %s478, 4
          %s487 = int_to_ptr.vmem [resolvable:$true] %s486
          %489 = dma.hbm_to_vmem [thread:$0]  %s484, 128, %s487, %s475
        $region32: #{mvcln_forward.1} parent=15 // pred_fallthru
          _
        // Predicated region
        $region33: #{mvcln_forward.1} parent=15 // pred_check
          %p490 = pneg %p164
        $region34: #{mvcln_forward.1} parent=15 // pred_check_branch
          %492 = sbr.rel (%p490) target = $region36
        $region35: #{mvcln_forward.1} parent=15 // pred_region
          %s493 = sand.u32 %s40, 1
          %s494 = scalar_lea.sflag [#allocation8], %s493
          %s495 = sand.u32 %s154, 1
          %s496 = smul.addr %s495, 4096
          %s497 = scalar_lea.vmem [#allocation7], %s496
          %s499 = ssub.s32 65536, 65536
          %500 = vsyncadd %s494, %s499
          %s501 = smul.addr %s40, 1024
          %s502 = smul.addr %s501, 64
          %s503 = scalar_lea.hbm %s4, %s502
          %s504 = sshll.u32 %s497, 4
          %s505 = int_to_ptr.vmem [resolvable:$true] %s504
          %510 = dma.hbm_to_vmem [thread:$0]  %s503, 65536, %s505, %s494, 512, 512, 32
        $region36: #{mvcln_forward.1} parent=15 // pred_fallthru
          _
        // Predicated region
        $region37: #{mvcln_forward.1} parent=15 // pred_check
          %p511 = pneg %p190
        $region38: #{mvcln_forward.1} parent=15 // pred_check_branch
          %513 = sbr.rel (%p511) target = $region40
        $region39: #{mvcln_forward.1} parent=15 // pred_region
          %s514 = sand.u32 %s40, 1
          %s515 = scalar_lea.sflag [#allocation8], %s514
          %s516 = sand.u32 %s180, 1
          %s517 = smul.addr %s516, 8
          %s518 = scalar_lea.vmem [#allocation9], %s517
          %s520 = ssub.s32 128, 128
          %521 = vsyncadd %s515, %s520
          %s522 = smul.addr %s40, 8
          %s523 = smul.addr %s522, 16
          %s524 = scalar_lea.hbm %s5, %s523
          %s526 = sshll.u32 %s518, 4
          %s527 = int_to_ptr.vmem [resolvable:$true] %s526
          %529 = dma.hbm_to_vmem [thread:$0]  %s524, 128, %s527, %s515
        $region40: #{mvcln_forward.1} parent=15 // pred_fallthru
          _
        // Predicated region
        $region41: #{mvcln_forward.1} parent=15 // pred_check
          %p530 = pneg %p216
        $region42: #{mvcln_forward.1} parent=15 // pred_check_branch
          %532 = sbr.rel (%p530) target = $region44
        $region43: #{mvcln_forward.1} parent=15 // pred_region
          %s533 = sand.u32 %s40, 1
          %s534 = scalar_lea.sflag [#allocation11], %s533
          %s535 = sand.u32 %s206, 1
          %s536 = smul.addr %s535, 8
          %s537 = scalar_lea.vmem [#allocation10], %s536
          %s539 = ssub.s32 128, 128
          %540 = vsyncadd %s534, %s539
          %s541 = smul.addr %s40, 8
          %s542 = smul.addr %s541, 16
          %s543 = scalar_lea.hbm %s6, %s542
          %s545 = sshll.u32 %s537, 4
          %s546 = int_to_ptr.vmem [resolvable:$true] %s545
          %548 = dma.hbm_to_vmem [thread:$0]  %s543, 128, %s546, %s534
        $region44: #{mvcln_forward.1} parent=15 // pred_fallthru
          _
        // Predicated region
        $region45: #{mvcln_forward.1} parent=15 // pred_check
          %p549 = pneg %p242
        $region46: #{mvcln_forward.1} parent=15 // pred_check_branch
          %551 = sbr.rel (%p549) target = $region48
        $region47: #{mvcln_forward.1} parent=15 // pred_region
          %s552 = sand.u32 %s40, 1
          %s553 = scalar_lea.sflag [#allocation11], %s552
          %s554 = sand.u32 %s232, 1
          %s555 = smul.addr %s554, 4096
          %s556 = scalar_lea.vmem [#allocation12], %s555
          %s558 = ssub.s32 65536, 65536
          %559 = vsyncadd %s553, %s558
          %s560 = smul.addr %s40, 1024
          %s561 = smul.addr %s560, 64
          %s562 = scalar_lea.hbm %s7, %s561
          %s563 = sshll.u32 %s556, 4
          %s564 = int_to_ptr.vmem [resolvable:$true] %s563
          %569 = dma.hbm_to_vmem [thread:$0]  %s562, 65536, %s564, %s553, 512, 512, 32
        $region48: #{mvcln_forward.1} parent=15 // pred_fallthru
          _
        // Predicated region
        $region49: #{mvcln_forward.1} parent=15 // pred_check
          %p570 = pneg %p268
        $region50: #{mvcln_forward.1} parent=15 // pred_check_branch
          %572 = sbr.rel (%p570) target = $region52
        $region51: #{mvcln_forward.1} parent=15 // pred_region
          %s573 = sand.u32 %s40, 1
          %s574 = scalar_lea.sflag [#allocation14], %s573
          %s575 = sand.u32 %s258, 1
          %s576 = smul.addr %s575, 8
          %s577 = scalar_lea.vmem [#allocation13], %s576
          %s579 = ssub.s32 128, 128
          %580 = vsyncadd %s574, %s579
          %s581 = smul.addr %s40, 8
          %s582 = smul.addr %s581, 16
          %s583 = scalar_lea.hbm %s8, %s582
          %s585 = sshll.u32 %s577, 4
          %s586 = int_to_ptr.vmem [resolvable:$true] %s585
          %588 = dma.hbm_to_vmem [thread:$0]  %s583, 128, %s586, %s574
        $region52: #{mvcln_forward.1} parent=15 // pred_fallthru
          _
        // Predicated region
        $region53: #{mvcln_forward.1} parent=15 // pred_check
          %p589 = pneg %p294
        $region54: #{mvcln_forward.1} parent=15 // pred_check_branch
          %591 = sbr.rel (%p589) target = $region56
        $region55: #{mvcln_forward.1} parent=15 // pred_region
          %s592 = sand.u32 %s40, 1
          %s593 = scalar_lea.sflag [#allocation14], %s592
          %s594 = sand.u32 %s284, 1
          %s595 = smul.addr %s594, 8
          %s596 = scalar_lea.vmem [#allocation15], %s595
          %s598 = ssub.s32 128, 128
          %599 = vsyncadd %s593, %s598
          %s600 = smul.addr %s40, 8
          %s601 = smul.addr %s600, 16
          %s602 = scalar_lea.hbm %s9, %s601
          %s604 = sshll.u32 %s596, 4
          %s605 = int_to_ptr.vmem [resolvable:$true] %s604
          %607 = dma.hbm_to_vmem [thread:$0]  %s602, 128, %s605, %s593
        $region56: #{mvcln_forward.1} parent=15 // pred_fallthru
          _
        // Predicated region
        $region57: #{mvcln_forward.1} parent=15 // pred_check
          %p608 = pneg %p320
        $region58: #{mvcln_forward.1} parent=15 // pred_check_branch
          %610 = sbr.rel (%p608) target = $region60
        $region59: #{mvcln_forward.1} parent=15 // pred_region
          %s611 = sand.u32 %s40, 1
          %s612 = scalar_lea.sflag [#allocation17], %s611
          %s613 = sand.u32 %s310, 1
          %s614 = smul.addr %s613, 512
          %s615 = scalar_lea.vmem [#allocation16], %s614
          %s617 = ssub.s32 8192, 8192
          %618 = vsyncadd %s612, %s617
          %s619 = smul.addr %s40, 128
          %s620 = smul.addr %s619, 64
          %s621 = scalar_lea.hbm %s10, %s620
          %s622 = sshll.u32 %s615, 4
          %s623 = int_to_ptr.vmem [resolvable:$true] %s622
          %628 = dma.hbm_to_vmem [thread:$0]  %s621, 8192, %s623, %s612, 64, 64, 4
        $region60: #{mvcln_forward.1} parent=15 // pred_fallthru
          _
        // Predicated region
        $region61: #{mvcln_forward.1} parent=15 // pred_check
          %p629 = pneg %p346
        $region62: #{mvcln_forward.1} parent=15 // pred_check_branch
          %631 = sbr.rel (%p629) target = $region64
        $region63: #{mvcln_forward.1} parent=15 // pred_region
          %s632 = sand.u32 %s40, 1
          %s633 = scalar_lea.sflag [#allocation17], %s632
          %s634 = sand.u32 %s336, 1
          %s635 = scalar_lea.vmem [#allocation18], %s634
          %s637 = ssub.s32 16, 16
          %638 = vsyncadd %s633, %s637
          %s639 = smul.addr %s40, 16
          %s640 = scalar_lea.hbm %s11, %s639
          %s642 = sshll.u32 %s635, 4
          %s643 = int_to_ptr.vmem [resolvable:$true] %s642
          %645 = dma.hbm_to_vmem [thread:$0]  %s640, 16, %s643, %s633
        $region64: #{mvcln_forward.1} parent=15 // pred_fallthru
          _
        // Predicated region
        $region65: #{mvcln_forward.1} parent=15 // pred_check
          %p646 = pneg %p372
        $region66: #{mvcln_forward.1} parent=15 // pred_check_branch
          %648 = sbr.rel (%p646) target = $region68
        $region67: #{mvcln_forward.1} parent=15 // pred_region
          %s649 = sand.u32 %s362, 1
          %s650 = scalar_lea.sflag [#allocation20], %s649
          %s651 = sand.u32 %s362, 1
          %s652 = scalar_lea.vmem [#allocation19], %s651
          %s654 = ssub.s32 16, 16
          %655 = vsyncadd %s650, %s654
          %s656 = smul.addr %s40, 16
          %s657 = scalar_lea.hbm %s12, %s656
          %s659 = sshll.u32 %s652, 4
          %s660 = int_to_ptr.vmem [resolvable:$true] %s659
          %662 = dma.hbm_to_vmem [thread:$0]  %s657, 16, %s660, %s650
        $region68: #{mvcln_forward.1} parent=15 // pred_fallthru
          _
      $region16: #{mvcln_forward.1} parent=5 // pred_fallthru
        _
      %p663 = scmp.le.s32.totalorder 1, %s40
      %p664 = scmp.lt.s32.totalorder %s40, 3
      %p665 = pnand %p663, %p664
      %p666 = pneg %p665
      // Predicated region
      $region69: #{mvcln_forward.1} parent=5 // pred_check
        _
      $region70: #{mvcln_forward.1} parent=5 // pred_check_branch
        %668 = sbr.rel (%p665) target = $region72
      $region71: #{mvcln_forward.1} parent=5 // pred_region
        %s669 = ssub.s32 %s40, 1
        %s670 = sand.u32 %s79, 1
        %s671 = scalar_lea.sflag [#allocation3], %s670
        %s672 = sand.u32 %s79, 1
        %s673 = smul.addr %s672, 3136
        %s674 = scalar_lea.vmem [#allocation2], %s673
        // Predicated region
        $region73: #{mvcln_forward.1} parent=71 // pred_check
          %p675 = pneg %p92
        $region74: #{mvcln_forward.1} parent=71 // pred_check_branch
          %677 = sbr.rel (%p675) target = $region76
        $region75: #{mvcln_forward.1} parent=71 // pred_region
          %678 = dma.done %s671, 50176
        $region76: #{mvcln_forward.1} parent=71 // pred_fallthru
          _
        %s679 = sand.u32 %s45, 1
        %s680 = scalar_lea.sflag [#allocation5], %s679
        %s681 = sand.u32 %s105, 1
        %s682 = smul.addr %s681, 8
        %s683 = scalar_lea.vmem [#allocation4], %s682
        // Predicated region
        $region77: #{mvcln_forward.1} parent=71 // pred_check
          %p684 = pneg %p118
        $region78: #{mvcln_forward.1} parent=71 // pred_check_branch
          %686 = sbr.rel (%p684) target = $region80
        $region79: #{mvcln_forward.1} parent=71 // pred_region
          %687 = dma.done %s680, 128
        $region80: #{mvcln_forward.1} parent=71 // pred_fallthru
          _
        %s688 = sand.u32 %s45, 1
        %s689 = scalar_lea.sflag [#allocation5], %s688
        %s690 = sand.u32 %s131, 1
        %s691 = smul.addr %s690, 8
        %s692 = scalar_lea.vmem [#allocation6], %s691
        // Predicated region
        $region81: #{mvcln_forward.1} parent=71 // pred_check
          %p693 = pneg %p144
        $region82: #{mvcln_forward.1} parent=71 // pred_check_branch
          %695 = sbr.rel (%p693) target = $region84
        $region83: #{mvcln_forward.1} parent=71 // pred_region
          %696 = dma.done %s689, 128
        $region84: #{mvcln_forward.1} parent=71 // pred_fallthru
          _
        %s697 = sand.u32 %s45, 1
        %s698 = scalar_lea.sflag [#allocation8], %s697
        %s699 = sand.u32 %s157, 1
        %s700 = smul.addr %s699, 4096
        %s701 = scalar_lea.vmem [#allocation7], %s700
        // Predicated region
        $region85: #{mvcln_forward.1} parent=71 // pred_check
          %p702 = pneg %p170
        $region86: #{mvcln_forward.1} parent=71 // pred_check_branch
          %704 = sbr.rel (%p702) target = $region88
        $region87: #{mvcln_forward.1} parent=71 // pred_region
          %705 = dma.done %s698, 65536
        $region88: #{mvcln_forward.1} parent=71 // pred_fallthru
          _
        %s706 = sand.u32 %s45, 1
        %s707 = scalar_lea.sflag [#allocation8], %s706
        %s708 = sand.u32 %s183, 1
        %s709 = smul.addr %s708, 8
        %s710 = scalar_lea.vmem [#allocation9], %s709
        // Predicated region
        $region89: #{mvcln_forward.1} parent=71 // pred_check
          %p711 = pneg %p196
        $region90: #{mvcln_forward.1} parent=71 // pred_check_branch
          %713 = sbr.rel (%p711) target = $region92
        $region91: #{mvcln_forward.1} parent=71 // pred_region
          %714 = dma.done %s707, 128
        $region92: #{mvcln_forward.1} parent=71 // pred_fallthru
          _
        %s715 = sand.u32 %s45, 1
        %s716 = scalar_lea.sflag [#allocation11], %s715
        %s717 = sand.u32 %s209, 1
        %s718 = smul.addr %s717, 8
        %s719 = scalar_lea.vmem [#allocation10], %s718
        // Predicated region
        $region93: #{mvcln_forward.1} parent=71 // pred_check
          %p720 = pneg %p222
        $region94: #{mvcln_forward.1} parent=71 // pred_check_branch
          %722 = sbr.rel (%p720) target = $region96
        $region95: #{mvcln_forward.1} parent=71 // pred_region
          %723 = dma.done %s716, 128
        $region96: #{mvcln_forward.1} parent=71 // pred_fallthru
          _
        %s724 = sand.u32 %s45, 1
        %s725 = scalar_lea.sflag [#allocation11], %s724
        %s726 = sand.u32 %s235, 1
        %s727 = smul.addr %s726, 4096
        %s728 = scalar_lea.vmem [#allocation12], %s727
        // Predicated region
        $region97: #{mvcln_forward.1} parent=71 // pred_check
          %p729 = pneg %p248
        $region98: #{mvcln_forward.1} parent=71 // pred_check_branch
          %731 = sbr.rel (%p729) target = $region100
        $region99: #{mvcln_forward.1} parent=71 // pred_region
          %732 = dma.done %s725, 65536
        $region100: #{mvcln_forward.1} parent=71 // pred_fallthru
          _
        %s733 = sand.u32 %s45, 1
        %s734 = scalar_lea.sflag [#allocation14], %s733
        %s735 = sand.u32 %s261, 1
        %s736 = smul.addr %s735, 8
        %s737 = scalar_lea.vmem [#allocation13], %s736
        // Predicated region
        $region101: #{mvcln_forward.1} parent=71 // pred_check
          %p738 = pneg %p274
        $region102: #{mvcln_forward.1} parent=71 // pred_check_branch
          %740 = sbr.rel (%p738) target = $region104
        $region103: #{mvcln_forward.1} parent=71 // pred_region
          %741 = dma.done %s734, 128
        $region104: #{mvcln_forward.1} parent=71 // pred_fallthru
          _
        %s742 = sand.u32 %s45, 1
        %s743 = scalar_lea.sflag [#allocation14], %s742
        %s744 = sand.u32 %s287, 1
        %s745 = smul.addr %s744, 8
        %s746 = scalar_lea.vmem [#allocation15], %s745
        // Predicated region
        $region105: #{mvcln_forward.1} parent=71 // pred_check
          %p747 = pneg %p300
        $region106: #{mvcln_forward.1} parent=71 // pred_check_branch
          %749 = sbr.rel (%p747) target = $region108
        $region107: #{mvcln_forward.1} parent=71 // pred_region
          %750 = dma.done %s743, 128
        $region108: #{mvcln_forward.1} parent=71 // pred_fallthru
          _
        %s751 = sand.u32 %s45, 1
        %s752 = scalar_lea.sflag [#allocation17], %s751
        %s753 = sand.u32 %s313, 1
        %s754 = smul.addr %s753, 512
        %s755 = scalar_lea.vmem [#allocation16], %s754
        // Predicated region
        $region109: #{mvcln_forward.1} parent=71 // pred_check
          %p756 = pneg %p326
        $region110: #{mvcln_forward.1} parent=71 // pred_check_branch
          %758 = sbr.rel (%p756) target = $region112
        $region111: #{mvcln_forward.1} parent=71 // pred_region
          %759 = dma.done %s752, 8192
        $region112: #{mvcln_forward.1} parent=71 // pred_fallthru
          _
        %s760 = sand.u32 %s45, 1
        %s761 = scalar_lea.sflag [#allocation17], %s760
        %s762 = sand.u32 %s339, 1
        %s763 = scalar_lea.vmem [#allocation18], %s762
        // Predicated region
        $region113: #{mvcln_forward.1} parent=71 // pred_check
          %p764 = pneg %p352
        $region114: #{mvcln_forward.1} parent=71 // pred_check_branch
          %766 = sbr.rel (%p764) target = $region116
        $region115: #{mvcln_forward.1} parent=71 // pred_region
          %767 = dma.done %s761, 16
        $region116: #{mvcln_forward.1} parent=71 // pred_fallthru
          _
        %s768 = sand.u32 %s365, 1
        %s769 = scalar_lea.sflag [#allocation20], %s768
        %s770 = sand.u32 %s365, 1
        %s771 = scalar_lea.vmem [#allocation19], %s770
        // Predicated region
        $region117: #{mvcln_forward.1} parent=71 // pred_check
          %p772 = pneg %p378
        $region118: #{mvcln_forward.1} parent=71 // pred_check_branch
          %774 = sbr.rel (%p772) target = $region120
        $region119: #{mvcln_forward.1} parent=71 // pred_region
          %775 = dma.done %s769, 16
        $region120: #{mvcln_forward.1} parent=71 // pred_fallthru
          _
        %p776 = scmp.lt.s32.totalorder %s45, 1
        %s777 = scalar_select %p776, %s45, 1
        %s778 = smul.addr %s777, 7
        %s779 = smul.addr %s778, 4
        %s780 = scalar_lea.vmem %s0, %s779
        %p781 = pneg %p66
        %p782 = pneg %p63
        %s783 = sand.u32 %s79, 1
        %s784 = scalar_lea.sflag [#allocation3], %s783
        %s785 = sand.u32 %s79, 1
        %s786 = smul.addr %s785, 3136
        %s787 = scalar_lea.vmem [#allocation2], %s786
        %p788 = pneg %p92
        %p789 = pneg %p89
        %s790 = sand.u32 %s45, 1
        %s791 = scalar_lea.sflag [#allocation5], %s790
        %s792 = sand.u32 %s105, 1
        %s793 = smul.addr %s792, 8
        %s794 = scalar_lea.vmem [#allocation4], %s793
        %p795 = pneg %p118
        %p796 = pneg %p115
        %s797 = sand.u32 %s45, 1
        %s798 = scalar_lea.sflag [#allocation5], %s797
        %s799 = sand.u32 %s131, 1
        %s800 = smul.addr %s799, 8
        %s801 = scalar_lea.vmem [#allocation6], %s800
        %p802 = pneg %p144
        %p803 = pneg %p141
        %s804 = sand.u32 %s45, 1
        %s805 = scalar_lea.sflag [#allocation8], %s804
        %s806 = sand.u32 %s157, 1
        %s807 = smul.addr %s806, 4096
        %s808 = scalar_lea.vmem [#allocation7], %s807
        %p809 = pneg %p170
        %p810 = pneg %p167
        %s811 = sand.u32 %s45, 1
        %s812 = scalar_lea.sflag [#allocation8], %s811
        %s813 = sand.u32 %s183, 1
        %s814 = smul.addr %s813, 8
        %s815 = scalar_lea.vmem [#allocation9], %s814
        %p816 = pneg %p196
        %p817 = pneg %p193
        %s818 = sand.u32 %s45, 1
        %s819 = scalar_lea.sflag [#allocation11], %s818
        %s820 = sand.u32 %s209, 1
        %s821 = smul.addr %s820, 8
        %s822 = scalar_lea.vmem [#allocation10], %s821
        %p823 = pneg %p222
        %p824 = pneg %p219
        %s825 = sand.u32 %s45, 1
        %s826 = scalar_lea.sflag [#allocation11], %s825
        %s827 = sand.u32 %s235, 1
        %s828 = smul.addr %s827, 4096
        %s829 = scalar_lea.vmem [#allocation12], %s828
        %p830 = pneg %p248
        %p831 = pneg %p245
        %s832 = sand.u32 %s45, 1
        %s833 = scalar_lea.sflag [#allocation14], %s832
        %s834 = sand.u32 %s261, 1
        %s835 = smul.addr %s834, 8
        %s836 = scalar_lea.vmem [#allocation13], %s835
        %p837 = pneg %p274
        %p838 = pneg %p271
        %s839 = sand.u32 %s45, 1
        %s840 = scalar_lea.sflag [#allocation14], %s839
        %s841 = sand.u32 %s287, 1
        %s842 = smul.addr %s841, 8
        %s843 = scalar_lea.vmem [#allocation15], %s842
        %p844 = pneg %p300
        %p845 = pneg %p297
        %s846 = sand.u32 %s45, 1
        %s847 = scalar_lea.sflag [#allocation17], %s846
        %s848 = sand.u32 %s313, 1
        %s849 = smul.addr %s848, 512
        %s850 = scalar_lea.vmem [#allocation16], %s849
        %p851 = pneg %p326
        %p852 = pneg %p323
        %s853 = sand.u32 %s45, 1
        %s854 = scalar_lea.sflag [#allocation17], %s853
        %s855 = sand.u32 %s339, 1
        %s856 = scalar_lea.vmem [#allocation18], %s855
        %p857 = pneg %p352
        %p858 = pneg %p349
        %s859 = sand.u32 %s365, 1
        %s860 = scalar_lea.sflag [#allocation20], %s859
        %s861 = sand.u32 %s365, 1
        %s862 = scalar_lea.vmem [#allocation19], %s861
        %p863 = pneg %p378
        %p864 = pneg %p375
        %p865 = pneg %p404
        %p866 = pneg %p401
        %p867 = scmp.lt.s32.totalorder %s45, 1
        %s868 = scalar_select %p867, %s45, 1
        %s869 = smul.addr %s868, 8
        %s870 = scalar_lea.vmem %s13, %s869
        %p871 = scmp.lt.s32.totalorder %s45, 1
        %s872 = scalar_select %p871, %s45, 1
        %s873 = smul.addr %s872, 7
        %s874 = smul.addr %s873, 4
        %s875 = scalar_lea.vmem %s0, %s874
        %p876 = scmp.lt.s32.totalorder %s45, 1
        %s877 = scalar_select %p876, %s45, 1
        %s878 = smul.addr %s877, 8
        %s879 = scalar_lea.vmem %s13, %s878
        %v881 = vld [vmem:[%s875] sm:$0xff]
        %v882 = vld [vmem:[%s875 + $0x8] sm:$0xff]
        %v883 = vld [vmem:[%s875 + $0x10] sm:$0xff]
        %v884 = vld [vmem:[%s875 + $0x18] sm:$0xf]
        %v885 = vld [vmem:[%s674] sm:$0xff]
        %v886 = vld [vmem:[%s674 + $0x8] sm:$0xff]
        %v887 = vld [vmem:[%s674 + $0x10] sm:$0xff]
        %v888 = vld [vmem:[%s674 + $0x18] sm:$0xff]
        %v889 = vld [vmem:[%s674 + $0x20] sm:$0xff]
        %v890 = vld [vmem:[%s674 + $0x28] sm:$0xff]
        %v891 = vld [vmem:[%s674 + $0x30] sm:$0xff]
        %v892 = vld [vmem:[%s674 + $0x38] sm:$0xff]
        %v893 = vld [vmem:[%s674 + $0x40] sm:$0xff]
        %v894 = vld [vmem:[%s674 + $0x48] sm:$0xff]
        %v895 = vld [vmem:[%s674 + $0x50] sm:$0xff]
        %v896 = vld [vmem:[%s674 + $0x58] sm:$0xff]
        %v897 = vld [vmem:[%s674 + $0x60] sm:$0xff]
        %v898 = vld [vmem:[%s674 + $0x68] sm:$0xff]
        %v899 = vld [vmem:[%s674 + $0x70] sm:$0xff]
        %v900 = vld [vmem:[%s674 + $0x78] sm:$0xff]
        %v901 = vld [vmem:[%s674 + $0x80] sm:$0xff]
        %v902 = vld [vmem:[%s674 + $0x88] sm:$0xff]
        %v903 = vld [vmem:[%s674 + $0x90] sm:$0xff]
        %v904 = vld [vmem:[%s674 + $0x98] sm:$0xff]
        %v905 = vld [vmem:[%s674 + $0xa0] sm:$0xff]
        %v906 = vld [vmem:[%s674 + $0xa8] sm:$0xff]
        %v907 = vld [vmem:[%s674 + $0xb0] sm:$0xff]
        %v908 = vld [vmem:[%s674 + $0xb8] sm:$0xff]
        %v909 = vld [vmem:[%s674 + $0xc0] sm:$0xff]
        %v910 = vld [vmem:[%s674 + $0xc8] sm:$0xff]
        %v911 = vld [vmem:[%s674 + $0xd0] sm:$0xff]
        %v912 = vld [vmem:[%s674 + $0xd8] sm:$0xff]
        %v913 = vld [vmem:[%s674 + $0xe0] sm:$0xff]
        %v914 = vld [vmem:[%s674 + $0xe8] sm:$0xff]
        %v915 = vld [vmem:[%s674 + $0xf0] sm:$0xff]
        %v916 = vld [vmem:[%s674 + $0xf8] sm:$0xff]
        %v917 = vld [vmem:[%s674 + $0x100] sm:$0xff]
        %v918 = vld [vmem:[%s674 + $0x108] sm:$0xff]
        %v919 = vld [vmem:[%s674 + $0x110] sm:$0xff]
        %v920 = vld [vmem:[%s674 + $0x118] sm:$0xff]
        %v921 = vld [vmem:[%s674 + $0x120] sm:$0xff]
        %v922 = vld [vmem:[%s674 + $0x128] sm:$0xff]
        %v923 = vld [vmem:[%s674 + $0x130] sm:$0xff]
        %v924 = vld [vmem:[%s674 + $0x138] sm:$0xff]
        %v925 = vld [vmem:[%s674 + $0x140] sm:$0xff]
        %v926 = vld [vmem:[%s674 + $0x148] sm:$0xff]
        %v927 = vld [vmem:[%s674 + $0x150] sm:$0xff]
        %v928 = vld [vmem:[%s674 + $0x158] sm:$0xff]
        %v929 = vld [vmem:[%s674 + $0x160] sm:$0xff]
        %v930 = vld [vmem:[%s674 + $0x168] sm:$0xff]
        %v931 = vld [vmem:[%s674 + $0x170] sm:$0xff]
        %v932 = vld [vmem:[%s674 + $0x178] sm:$0xff]
        %v933 = vld [vmem:[%s674 + $0x180] sm:$0xff]
        %v934 = vld [vmem:[%s674 + $0x188] sm:$0xff]
        %v935 = vld [vmem:[%s674 + $0x190] sm:$0xff]
        %v936 = vld [vmem:[%s674 + $0x198] sm:$0xff]
        %v937 = vld [vmem:[%s674 + $0x1a0] sm:$0xff]
        %v938 = vld [vmem:[%s674 + $0x1a8] sm:$0xff]
        %v939 = vld [vmem:[%s674 + $0x1b0] sm:$0xff]
        %v940 = vld [vmem:[%s674 + $0x1b8] sm:$0xff]
        %v941 = vld [vmem:[%s674 + $0x1c0] sm:$0xff]
        %v942 = vld [vmem:[%s674 + $0x1c8] sm:$0xff]
        %v943 = vld [vmem:[%s674 + $0x1d0] sm:$0xff]
        %v944 = vld [vmem:[%s674 + $0x1d8] sm:$0xff]
        %v945 = vld [vmem:[%s674 + $0x1e0] sm:$0xff]
        %v946 = vld [vmem:[%s674 + $0x1e8] sm:$0xff]
        %v947 = vld [vmem:[%s674 + $0x1f0] sm:$0xff]
        %v948 = vld [vmem:[%s674 + $0x1f8] sm:$0xff]
        %v949 = vld [vmem:[%s674 + $0x200] sm:$0xff]
        %v950 = vld [vmem:[%s674 + $0x208] sm:$0xff]
        %v951 = vld [vmem:[%s674 + $0x210] sm:$0xff]
        %v952 = vld [vmem:[%s674 + $0x218] sm:$0xff]
        %v953 = vld [vmem:[%s674 + $0x220] sm:$0xff]
        %v954 = vld [vmem:[%s674 + $0x228] sm:$0xff]
        %v955 = vld [vmem:[%s674 + $0x230] sm:$0xff]
        %v956 = vld [vmem:[%s674 + $0x238] sm:$0xff]
        %v957 = vld [vmem:[%s674 + $0x240] sm:$0xff]
        %v958 = vld [vmem:[%s674 + $0x248] sm:$0xff]
        %v959 = vld [vmem:[%s674 + $0x250] sm:$0xff]
        %v960 = vld [vmem:[%s674 + $0x258] sm:$0xff]
        %v961 = vld [vmem:[%s674 + $0x260] sm:$0xff]
        %v962 = vld [vmem:[%s674 + $0x268] sm:$0xff]
        %v963 = vld [vmem:[%s674 + $0x270] sm:$0xff]
        %v964 = vld [vmem:[%s674 + $0x278] sm:$0xff]
        %v965 = vld [vmem:[%s674 + $0x280] sm:$0xff]
        %v966 = vld [vmem:[%s674 + $0x288] sm:$0xff]
        %v967 = vld [vmem:[%s674 + $0x290] sm:$0xff]
        %v968 = vld [vmem:[%s674 + $0x298] sm:$0xff]
        %v969 = vld [vmem:[%s674 + $0x2a0] sm:$0xff]
        %v970 = vld [vmem:[%s674 + $0x2a8] sm:$0xff]
        %v971 = vld [vmem:[%s674 + $0x2b0] sm:$0xff]
        %v972 = vld [vmem:[%s674 + $0x2b8] sm:$0xff]
        %v973 = vld [vmem:[%s674 + $0x2c0] sm:$0xff]
        %v974 = vld [vmem:[%s674 + $0x2c8] sm:$0xff]
        %v975 = vld [vmem:[%s674 + $0x2d0] sm:$0xff]
        %v976 = vld [vmem:[%s674 + $0x2d8] sm:$0xff]
        %v977 = vld [vmem:[%s674 + $0x2e0] sm:$0xff]
        %v978 = vld [vmem:[%s674 + $0x2e8] sm:$0xff]
        %v979 = vld [vmem:[%s674 + $0x2f0] sm:$0xff]
        %v980 = vld [vmem:[%s674 + $0x2f8] sm:$0xff]
        %v981 = vld [vmem:[%s674 + $0x300] sm:$0xff]
        %v982 = vld [vmem:[%s674 + $0x308] sm:$0xff]
        %v983 = vld [vmem:[%s674 + $0x310] sm:$0xff]
        %v984 = vld [vmem:[%s674 + $0x318] sm:$0xff]
        %v985 = vld [vmem:[%s674 + $0x320] sm:$0xff]
        %v986 = vld [vmem:[%s674 + $0x328] sm:$0xff]
        %v987 = vld [vmem:[%s674 + $0x330] sm:$0xff]
        %v988 = vld [vmem:[%s674 + $0x338] sm:$0xff]
        %v989 = vld [vmem:[%s674 + $0x340] sm:$0xff]
        %v990 = vld [vmem:[%s674 + $0x348] sm:$0xff]
        %v991 = vld [vmem:[%s674 + $0x350] sm:$0xff]
        %v992 = vld [vmem:[%s674 + $0x358] sm:$0xff]
        %v993 = vld [vmem:[%s674 + $0x360] sm:$0xff]
        %v994 = vld [vmem:[%s674 + $0x368] sm:$0xff]
        %v995 = vld [vmem:[%s674 + $0x370] sm:$0xff]
        %v996 = vld [vmem:[%s674 + $0x378] sm:$0xff]
        %v997 = vld [vmem:[%s674 + $0x380] sm:$0xff]
        %v998 = vld [vmem:[%s674 + $0x388] sm:$0xff]
        %v999 = vld [vmem:[%s674 + $0x390] sm:$0xff]
        %v1000 = vld [vmem:[%s674 + $0x398] sm:$0xff]
        %v1001 = vld [vmem:[%s674 + $0x3a0] sm:$0xff]
        %v1002 = vld [vmem:[%s674 + $0x3a8] sm:$0xff]
        %v1003 = vld [vmem:[%s674 + $0x3b0] sm:$0xff]
        %v1004 = vld [vmem:[%s674 + $0x3b8] sm:$0xff]
        %v1005 = vld [vmem:[%s674 + $0x3c0] sm:$0xff]
        %v1006 = vld [vmem:[%s674 + $0x3c8] sm:$0xff]
        %v1007 = vld [vmem:[%s674 + $0x3d0] sm:$0xff]
        %v1008 = vld [vmem:[%s674 + $0x3d8] sm:$0xff]
        %v1009 = vld [vmem:[%s674 + $0x3e0] sm:$0xff]
        %v1010 = vld [vmem:[%s674 + $0x3e8] sm:$0xff]
        %v1011 = vld [vmem:[%s674 + $0x3f0] sm:$0xff]
        %v1012 = vld [vmem:[%s674 + $0x3f8] sm:$0xff]
        %v1013 = vld [vmem:[%s674 + $0x400] sm:$0xff]
        %v1014 = vld [vmem:[%s674 + $0x408] sm:$0xff]
        %v1015 = vld [vmem:[%s674 + $0x410] sm:$0xff]
        %v1016 = vld [vmem:[%s674 + $0x418] sm:$0xff]
        %v1017 = vld [vmem:[%s674 + $0x420] sm:$0xff]
        %v1018 = vld [vmem:[%s674 + $0x428] sm:$0xff]
        %v1019 = vld [vmem:[%s674 + $0x430] sm:$0xff]
        %v1020 = vld [vmem:[%s674 + $0x438] sm:$0xff]
        %v1021 = vld [vmem:[%s674 + $0x440] sm:$0xff]
        %v1022 = vld [vmem:[%s674 + $0x448] sm:$0xff]
        %v1023 = vld [vmem:[%s674 + $0x450] sm:$0xff]
        %v1024 = vld [vmem:[%s674 + $0x458] sm:$0xff]
        %v1025 = vld [vmem:[%s674 + $0x460] sm:$0xff]
        %v1026 = vld [vmem:[%s674 + $0x468] sm:$0xff]
        %v1027 = vld [vmem:[%s674 + $0x470] sm:$0xff]
        %v1028 = vld [vmem:[%s674 + $0x478] sm:$0xff]
        %v1029 = vld [vmem:[%s674 + $0x480] sm:$0xff]
        %v1030 = vld [vmem:[%s674 + $0x488] sm:$0xff]
        %v1031 = vld [vmem:[%s674 + $0x490] sm:$0xff]
        %v1032 = vld [vmem:[%s674 + $0x498] sm:$0xff]
        %v1033 = vld [vmem:[%s674 + $0x4a0] sm:$0xff]
        %v1034 = vld [vmem:[%s674 + $0x4a8] sm:$0xff]
        %v1035 = vld [vmem:[%s674 + $0x4b0] sm:$0xff]
        %v1036 = vld [vmem:[%s674 + $0x4b8] sm:$0xff]
        %v1037 = vld [vmem:[%s674 + $0x4c0] sm:$0xff]
        %v1038 = vld [vmem:[%s674 + $0x4c8] sm:$0xff]
        %v1039 = vld [vmem:[%s674 + $0x4d0] sm:$0xff]
        %v1040 = vld [vmem:[%s674 + $0x4d8] sm:$0xff]
        %v1041 = vld [vmem:[%s674 + $0x4e0] sm:$0xff]
        %v1042 = vld [vmem:[%s674 + $0x4e8] sm:$0xff]
        %v1043 = vld [vmem:[%s674 + $0x4f0] sm:$0xff]
        %v1044 = vld [vmem:[%s674 + $0x4f8] sm:$0xff]
        %v1045 = vld [vmem:[%s674 + $0x500] sm:$0xff]
        %v1046 = vld [vmem:[%s674 + $0x508] sm:$0xff]
        %v1047 = vld [vmem:[%s674 + $0x510] sm:$0xff]
        %v1048 = vld [vmem:[%s674 + $0x518] sm:$0xff]
        %v1049 = vld [vmem:[%s674 + $0x520] sm:$0xff]
        %v1050 = vld [vmem:[%s674 + $0x528] sm:$0xff]
        %v1051 = vld [vmem:[%s674 + $0x530] sm:$0xff]
        %v1052 = vld [vmem:[%s674 + $0x538] sm:$0xff]
        %v1053 = vld [vmem:[%s674 + $0x540] sm:$0xff]
        %v1054 = vld [vmem:[%s674 + $0x548] sm:$0xff]
        %v1055 = vld [vmem:[%s674 + $0x550] sm:$0xff]
        %v1056 = vld [vmem:[%s674 + $0x558] sm:$0xff]
        %v1057 = vld [vmem:[%s674 + $0x560] sm:$0xff]
        %v1058 = vld [vmem:[%s674 + $0x568] sm:$0xff]
        %v1059 = vld [vmem:[%s674 + $0x570] sm:$0xff]
        %v1060 = vld [vmem:[%s674 + $0x578] sm:$0xff]
        %v1061 = vld [vmem:[%s674 + $0x580] sm:$0xff]
        %v1062 = vld [vmem:[%s674 + $0x588] sm:$0xff]
        %v1063 = vld [vmem:[%s674 + $0x590] sm:$0xff]
        %v1064 = vld [vmem:[%s674 + $0x598] sm:$0xff]
        %v1065 = vld [vmem:[%s674 + $0x5a0] sm:$0xff]
        %v1066 = vld [vmem:[%s674 + $0x5a8] sm:$0xff]
        %v1067 = vld [vmem:[%s674 + $0x5b0] sm:$0xff]
        %v1068 = vld [vmem:[%s674 + $0x5b8] sm:$0xff]
        %v1069 = vld [vmem:[%s674 + $0x5c0] sm:$0xff]
        %v1070 = vld [vmem:[%s674 + $0x5c8] sm:$0xff]
        %v1071 = vld [vmem:[%s674 + $0x5d0] sm:$0xff]
        %v1072 = vld [vmem:[%s674 + $0x5d8] sm:$0xff]
        %v1073 = vld [vmem:[%s674 + $0x5e0] sm:$0xff]
        %v1074 = vld [vmem:[%s674 + $0x5e8] sm:$0xff]
        %v1075 = vld [vmem:[%s674 + $0x5f0] sm:$0xff]
        %v1076 = vld [vmem:[%s674 + $0x5f8] sm:$0xff]
        %v1077 = vld [vmem:[%s674 + $0x600] sm:$0xff]
        %v1078 = vld [vmem:[%s674 + $0x608] sm:$0xff]
        %v1079 = vld [vmem:[%s674 + $0x610] sm:$0xff]
        %v1080 = vld [vmem:[%s674 + $0x618] sm:$0xff]
        %v1081 = vld [vmem:[%s674 + $0x620] sm:$0xff]
        %v1082 = vld [vmem:[%s674 + $0x628] sm:$0xff]
        %v1083 = vld [vmem:[%s674 + $0x630] sm:$0xff]
        %v1084 = vld [vmem:[%s674 + $0x638] sm:$0xff]
        %v1085 = vld [vmem:[%s674 + $0x640] sm:$0xff]
        %v1086 = vld [vmem:[%s674 + $0x648] sm:$0xff]
        %v1087 = vld [vmem:[%s674 + $0x650] sm:$0xff]
        %v1088 = vld [vmem:[%s674 + $0x658] sm:$0xff]
        %v1089 = vld [vmem:[%s674 + $0x660] sm:$0xff]
        %v1090 = vld [vmem:[%s674 + $0x668] sm:$0xff]
        %v1091 = vld [vmem:[%s674 + $0x670] sm:$0xff]
        %v1092 = vld [vmem:[%s674 + $0x678] sm:$0xff]
        %v1093 = vld [vmem:[%s674 + $0x680] sm:$0xff]
        %v1094 = vld [vmem:[%s674 + $0x688] sm:$0xff]
        %v1095 = vld [vmem:[%s674 + $0x690] sm:$0xff]
        %v1096 = vld [vmem:[%s674 + $0x698] sm:$0xff]
        %v1097 = vld [vmem:[%s674 + $0x6a0] sm:$0xff]
        %v1098 = vld [vmem:[%s674 + $0x6a8] sm:$0xff]
        %v1099 = vld [vmem:[%s674 + $0x6b0] sm:$0xff]
        %v1100 = vld [vmem:[%s674 + $0x6b8] sm:$0xff]
        %v1101 = vld [vmem:[%s674 + $0x6c0] sm:$0xff]
        %v1102 = vld [vmem:[%s674 + $0x6c8] sm:$0xff]
        %v1103 = vld [vmem:[%s674 + $0x6d0] sm:$0xff]
        %v1104 = vld [vmem:[%s674 + $0x6d8] sm:$0xff]
        %v1105 = vld [vmem:[%s674 + $0x6e0] sm:$0xff]
        %v1106 = vld [vmem:[%s674 + $0x6e8] sm:$0xff]
        %v1107 = vld [vmem:[%s674 + $0x6f0] sm:$0xff]
        %v1108 = vld [vmem:[%s674 + $0x6f8] sm:$0xff]
        %v1109 = vld [vmem:[%s674 + $0x700] sm:$0xff]
        %v1110 = vld [vmem:[%s674 + $0x708] sm:$0xff]
        %v1111 = vld [vmem:[%s674 + $0x710] sm:$0xff]
        %v1112 = vld [vmem:[%s674 + $0x718] sm:$0xff]
        %v1113 = vld [vmem:[%s674 + $0x720] sm:$0xff]
        %v1114 = vld [vmem:[%s674 + $0x728] sm:$0xff]
        %v1115 = vld [vmem:[%s674 + $0x730] sm:$0xff]
        %v1116 = vld [vmem:[%s674 + $0x738] sm:$0xff]
        %v1117 = vld [vmem:[%s674 + $0x740] sm:$0xff]
        %v1118 = vld [vmem:[%s674 + $0x748] sm:$0xff]
        %v1119 = vld [vmem:[%s674 + $0x750] sm:$0xff]
        %v1120 = vld [vmem:[%s674 + $0x758] sm:$0xff]
        %v1121 = vld [vmem:[%s674 + $0x760] sm:$0xff]
        %v1122 = vld [vmem:[%s674 + $0x768] sm:$0xff]
        %v1123 = vld [vmem:[%s674 + $0x770] sm:$0xff]
        %v1124 = vld [vmem:[%s674 + $0x778] sm:$0xff]
        %v1125 = vld [vmem:[%s674 + $0x780] sm:$0xff]
        %v1126 = vld [vmem:[%s674 + $0x788] sm:$0xff]
        %v1127 = vld [vmem:[%s674 + $0x790] sm:$0xff]
        %v1128 = vld [vmem:[%s674 + $0x798] sm:$0xff]
        %v1129 = vld [vmem:[%s674 + $0x7a0] sm:$0xff]
        %v1130 = vld [vmem:[%s674 + $0x7a8] sm:$0xff]
        %v1131 = vld [vmem:[%s674 + $0x7b0] sm:$0xff]
        %v1132 = vld [vmem:[%s674 + $0x7b8] sm:$0xff]
        %v1133 = vld [vmem:[%s674 + $0x7c0] sm:$0xff]
        %v1134 = vld [vmem:[%s674 + $0x7c8] sm:$0xff]
        %v1135 = vld [vmem:[%s674 + $0x7d0] sm:$0xff]
        %v1136 = vld [vmem:[%s674 + $0x7d8] sm:$0xff]
        %v1137 = vld [vmem:[%s674 + $0x7e0] sm:$0xff]
        %v1138 = vld [vmem:[%s674 + $0x7e8] sm:$0xff]
        %v1139 = vld [vmem:[%s674 + $0x7f0] sm:$0xff]
        %v1140 = vld [vmem:[%s674 + $0x7f8] sm:$0xff]
        %v1141 = vld [vmem:[%s674 + $0x800] sm:$0xff]
        %v1142 = vld [vmem:[%s674 + $0x808] sm:$0xff]
        %v1143 = vld [vmem:[%s674 + $0x810] sm:$0xff]
        %v1144 = vld [vmem:[%s674 + $0x818] sm:$0xff]
        %v1145 = vld [vmem:[%s674 + $0x820] sm:$0xff]
        %v1146 = vld [vmem:[%s674 + $0x828] sm:$0xff]
        %v1147 = vld [vmem:[%s674 + $0x830] sm:$0xff]
        %v1148 = vld [vmem:[%s674 + $0x838] sm:$0xff]
        %v1149 = vld [vmem:[%s674 + $0x840] sm:$0xff]
        %v1150 = vld [vmem:[%s674 + $0x848] sm:$0xff]
        %v1151 = vld [vmem:[%s674 + $0x850] sm:$0xff]
        %v1152 = vld [vmem:[%s674 + $0x858] sm:$0xff]
        %v1153 = vld [vmem:[%s674 + $0x860] sm:$0xff]
        %v1154 = vld [vmem:[%s674 + $0x868] sm:$0xff]
        %v1155 = vld [vmem:[%s674 + $0x870] sm:$0xff]
        %v1156 = vld [vmem:[%s674 + $0x878] sm:$0xff]
        %v1157 = vld [vmem:[%s674 + $0x880] sm:$0xff]
        %v1158 = vld [vmem:[%s674 + $0x888] sm:$0xff]
        %v1159 = vld [vmem:[%s674 + $0x890] sm:$0xff]
        %v1160 = vld [vmem:[%s674 + $0x898] sm:$0xff]
        %v1161 = vld [vmem:[%s674 + $0x8a0] sm:$0xff]
        %v1162 = vld [vmem:[%s674 + $0x8a8] sm:$0xff]
        %v1163 = vld [vmem:[%s674 + $0x8b0] sm:$0xff]
        %v1164 = vld [vmem:[%s674 + $0x8b8] sm:$0xff]
        %v1165 = vld [vmem:[%s674 + $0x8c0] sm:$0xff]
        %v1166 = vld [vmem:[%s674 + $0x8c8] sm:$0xff]
        %v1167 = vld [vmem:[%s674 + $0x8d0] sm:$0xff]
        %v1168 = vld [vmem:[%s674 + $0x8d8] sm:$0xff]
        %v1169 = vld [vmem:[%s674 + $0x8e0] sm:$0xff]
        %v1170 = vld [vmem:[%s674 + $0x8e8] sm:$0xff]
        %v1171 = vld [vmem:[%s674 + $0x8f0] sm:$0xff]
        %v1172 = vld [vmem:[%s674 + $0x8f8] sm:$0xff]
        %v1173 = vld [vmem:[%s674 + $0x900] sm:$0xff]
        %v1174 = vld [vmem:[%s674 + $0x908] sm:$0xff]
        %v1175 = vld [vmem:[%s674 + $0x910] sm:$0xff]
        %v1176 = vld [vmem:[%s674 + $0x918] sm:$0xff]
        %v1177 = vld [vmem:[%s674 + $0x920] sm:$0xff]
        %v1178 = vld [vmem:[%s674 + $0x928] sm:$0xff]
        %v1179 = vld [vmem:[%s674 + $0x930] sm:$0xff]
        %v1180 = vld [vmem:[%s674 + $0x938] sm:$0xff]
        %v1181 = vld [vmem:[%s674 + $0x940] sm:$0xff]
        %v1182 = vld [vmem:[%s674 + $0x948] sm:$0xff]
        %v1183 = vld [vmem:[%s674 + $0x950] sm:$0xff]
        %v1184 = vld [vmem:[%s674 + $0x958] sm:$0xff]
        %v1185 = vld [vmem:[%s674 + $0x960] sm:$0xff]
        %v1186 = vld [vmem:[%s674 + $0x968] sm:$0xff]
        %v1187 = vld [vmem:[%s674 + $0x970] sm:$0xff]
        %v1188 = vld [vmem:[%s674 + $0x978] sm:$0xff]
        %v1189 = vld [vmem:[%s674 + $0x980] sm:$0xff]
        %v1190 = vld [vmem:[%s674 + $0x988] sm:$0xff]
        %v1191 = vld [vmem:[%s674 + $0x990] sm:$0xff]
        %v1192 = vld [vmem:[%s674 + $0x998] sm:$0xff]
        %v1193 = vld [vmem:[%s674 + $0x9a0] sm:$0xff]
        %v1194 = vld [vmem:[%s674 + $0x9a8] sm:$0xff]
        %v1195 = vld [vmem:[%s674 + $0x9b0] sm:$0xff]
        %v1196 = vld [vmem:[%s674 + $0x9b8] sm:$0xff]
        %v1197 = vld [vmem:[%s674 + $0x9c0] sm:$0xff]
        %v1198 = vld [vmem:[%s674 + $0x9c8] sm:$0xff]
        %v1199 = vld [vmem:[%s674 + $0x9d0] sm:$0xff]
        %v1200 = vld [vmem:[%s674 + $0x9d8] sm:$0xff]
        %v1201 = vld [vmem:[%s674 + $0x9e0] sm:$0xff]
        %v1202 = vld [vmem:[%s674 + $0x9e8] sm:$0xff]
        %v1203 = vld [vmem:[%s674 + $0x9f0] sm:$0xff]
        %v1204 = vld [vmem:[%s674 + $0x9f8] sm:$0xff]
        %v1205 = vld [vmem:[%s674 + $0xa00] sm:$0xff]
        %v1206 = vld [vmem:[%s674 + $0xa08] sm:$0xff]
        %v1207 = vld [vmem:[%s674 + $0xa10] sm:$0xff]
        %v1208 = vld [vmem:[%s674 + $0xa18] sm:$0xff]
        %v1209 = vld [vmem:[%s674 + $0xa20] sm:$0xff]
        %v1210 = vld [vmem:[%s674 + $0xa28] sm:$0xff]
        %v1211 = vld [vmem:[%s674 + $0xa30] sm:$0xff]
        %v1212 = vld [vmem:[%s674 + $0xa38] sm:$0xff]
        %v1213 = vld [vmem:[%s674 + $0xa40] sm:$0xff]
        %v1214 = vld [vmem:[%s674 + $0xa48] sm:$0xff]
        %v1215 = vld [vmem:[%s674 + $0xa50] sm:$0xff]
        %v1216 = vld [vmem:[%s674 + $0xa58] sm:$0xff]
        %v1217 = vld [vmem:[%s674 + $0xa60] sm:$0xff]
        %v1218 = vld [vmem:[%s674 + $0xa68] sm:$0xff]
        %v1219 = vld [vmem:[%s674 + $0xa70] sm:$0xff]
        %v1220 = vld [vmem:[%s674 + $0xa78] sm:$0xff]
        %v1221 = vld [vmem:[%s674 + $0xa80] sm:$0xff]
        %v1222 = vld [vmem:[%s674 + $0xa88] sm:$0xff]
        %v1223 = vld [vmem:[%s674 + $0xa90] sm:$0xff]
        %v1224 = vld [vmem:[%s674 + $0xa98] sm:$0xff]
        %v1225 = vld [vmem:[%s674 + $0xaa0] sm:$0xff]
        %v1226 = vld [vmem:[%s674 + $0xaa8] sm:$0xff]
        %v1227 = vld [vmem:[%s674 + $0xab0] sm:$0xff]
        %v1228 = vld [vmem:[%s674 + $0xab8] sm:$0xff]
        %v1229 = vld [vmem:[%s674 + $0xac0] sm:$0xff]
        %v1230 = vld [vmem:[%s674 + $0xac8] sm:$0xff]
        %v1231 = vld [vmem:[%s674 + $0xad0] sm:$0xff]
        %v1232 = vld [vmem:[%s674 + $0xad8] sm:$0xff]
        %v1233 = vld [vmem:[%s674 + $0xae0] sm:$0xff]
        %v1234 = vld [vmem:[%s674 + $0xae8] sm:$0xff]
        %v1235 = vld [vmem:[%s674 + $0xaf0] sm:$0xff]
        %v1236 = vld [vmem:[%s674 + $0xaf8] sm:$0xff]
        %v1237 = vld [vmem:[%s674 + $0xb00] sm:$0xff]
        %v1238 = vld [vmem:[%s674 + $0xb08] sm:$0xff]
        %v1239 = vld [vmem:[%s674 + $0xb10] sm:$0xff]
        %v1240 = vld [vmem:[%s674 + $0xb18] sm:$0xff]
        %v1241 = vld [vmem:[%s674 + $0xb20] sm:$0xff]
        %v1242 = vld [vmem:[%s674 + $0xb28] sm:$0xff]
        %v1243 = vld [vmem:[%s674 + $0xb30] sm:$0xff]
        %v1244 = vld [vmem:[%s674 + $0xb38] sm:$0xff]
        %v1245 = vld [vmem:[%s674 + $0xb40] sm:$0xff]
        %v1246 = vld [vmem:[%s674 + $0xb48] sm:$0xff]
        %v1247 = vld [vmem:[%s674 + $0xb50] sm:$0xff]
        %v1248 = vld [vmem:[%s674 + $0xb58] sm:$0xff]
        %v1249 = vld [vmem:[%s674 + $0xb60] sm:$0xff]
        %v1250 = vld [vmem:[%s674 + $0xb68] sm:$0xff]
        %v1251 = vld [vmem:[%s674 + $0xb70] sm:$0xff]
        %v1252 = vld [vmem:[%s674 + $0xb78] sm:$0xff]
        %v1253 = vld [vmem:[%s674 + $0xb80] sm:$0xff]
        %v1254 = vld [vmem:[%s674 + $0xb88] sm:$0xff]
        %v1255 = vld [vmem:[%s674 + $0xb90] sm:$0xff]
        %v1256 = vld [vmem:[%s674 + $0xb98] sm:$0xff]
        %v1257 = vld [vmem:[%s674 + $0xba0] sm:$0xff]
        %v1258 = vld [vmem:[%s674 + $0xba8] sm:$0xff]
        %v1259 = vld [vmem:[%s674 + $0xbb0] sm:$0xff]
        %v1260 = vld [vmem:[%s674 + $0xbb8] sm:$0xff]
        %v1261 = vld [vmem:[%s674 + $0xbc0] sm:$0xff]
        %v1262 = vld [vmem:[%s674 + $0xbc8] sm:$0xff]
        %v1263 = vld [vmem:[%s674 + $0xbd0] sm:$0xff]
        %v1264 = vld [vmem:[%s674 + $0xbd8] sm:$0xff]
        %v1265 = vld [vmem:[%s674 + $0xbe0] sm:$0xff]
        %v1266 = vld [vmem:[%s674 + $0xbe8] sm:$0xff]
        %v1267 = vld [vmem:[%s674 + $0xbf0] sm:$0xff]
        %v1268 = vld [vmem:[%s674 + $0xbf8] sm:$0xff]
        %v1269 = vld [vmem:[%s674 + $0xc00] sm:$0xff]
        %v1270 = vld [vmem:[%s674 + $0xc08] sm:$0xff]
        %v1271 = vld [vmem:[%s674 + $0xc10] sm:$0xff]
        %v1272 = vld [vmem:[%s674 + $0xc18] sm:$0xff]
        %v1273 = vld [vmem:[%s674 + $0xc20] sm:$0xff]
        %v1274 = vld [vmem:[%s674 + $0xc28] sm:$0xff]
        %v1275 = vld [vmem:[%s674 + $0xc30] sm:$0xff]
        %v1276 = vld [vmem:[%s674 + $0xc38] sm:$0xff]
        %v1281 = vunpack.c.l.b16 %v881
        %v1282 = vunpack.c.h.b16 %v881
        %v1283 = vunpack.c.l.b16 %v882
        %v1284 = vunpack.c.h.b16 %v882
        %v1285 = vunpack.c.l.b16 %v883
        %v1286 = vunpack.c.h.b16 %v883
        %v1287 = vunpack.c.l.b16 %v884
        %v1288 = vpack.c.b16 %v1281, %v1281
        %v1289 = vpack.c.b16 %v1282, %v1282
        %v1290 = vpack.c.b16 %v1283, %v1283
        %v1291 = vpack.c.b16 %v1284, %v1284
        %v1292 = vpack.c.b16 %v1285, %v1285
        %v1293 = vpack.c.b16 %v1286, %v1286
        %v1294 = vpack.c.b16 %v1287, %v1287
        %v1693 = vunpack.c.l.b16 %v885
        %v1694 = vunpack.c.h.b16 %v885
        %v1695 = vunpack.c.l.b16 %v886
        %v1696 = vunpack.c.h.b16 %v886
        %v1697 = vunpack.c.l.b16 %v887
        %v1698 = vunpack.c.h.b16 %v887
        %v1699 = vunpack.c.l.b16 %v888
        %v1700 = vunpack.c.h.b16 %v888
        %v1701 = vunpack.c.l.b16 %v889
        %v1702 = vunpack.c.h.b16 %v889
        %v1703 = vunpack.c.l.b16 %v890
        %v1704 = vunpack.c.h.b16 %v890
        %v1705 = vunpack.c.l.b16 %v891
        %v1706 = vunpack.c.h.b16 %v891
        %v1707 = vunpack.c.l.b16 %v892
        %v1708 = vunpack.c.h.b16 %v892
        %v1709 = vunpack.c.l.b16 %v893
        %v1710 = vunpack.c.h.b16 %v893
        %v1711 = vunpack.c.l.b16 %v894
        %v1712 = vunpack.c.h.b16 %v894
        %v1713 = vunpack.c.l.b16 %v895
        %v1714 = vunpack.c.h.b16 %v895
        %v1715 = vunpack.c.l.b16 %v896
        %v1716 = vunpack.c.h.b16 %v896
        %v1717 = vunpack.c.l.b16 %v897
        %v1718 = vunpack.c.h.b16 %v897
        %v1719 = vunpack.c.l.b16 %v898
        %v1720 = vunpack.c.h.b16 %v898
        %v1721 = vunpack.c.l.b16 %v899
        %v1722 = vunpack.c.h.b16 %v899
        %v1723 = vunpack.c.l.b16 %v900
        %v1724 = vunpack.c.h.b16 %v900
        %v1725 = vunpack.c.l.b16 %v901
        %v1726 = vunpack.c.h.b16 %v901
        %v1727 = vunpack.c.l.b16 %v902
        %v1728 = vunpack.c.h.b16 %v902
        %v1729 = vunpack.c.l.b16 %v903
        %v1730 = vunpack.c.h.b16 %v903
        %v1731 = vunpack.c.l.b16 %v904
        %v1732 = vunpack.c.h.b16 %v904
        %v1733 = vunpack.c.l.b16 %v905
        %v1734 = vunpack.c.h.b16 %v905
        %v1735 = vunpack.c.l.b16 %v906
        %v1736 = vunpack.c.h.b16 %v906
        %v1737 = vunpack.c.l.b16 %v907
        %v1738 = vunpack.c.h.b16 %v907
        %v1739 = vunpack.c.l.b16 %v908
        %v1740 = vunpack.c.h.b16 %v908
        %v1741 = vunpack.c.l.b16 %v909
        %v1742 = vunpack.c.h.b16 %v909
        %v1743 = vunpack.c.l.b16 %v910
        %v1744 = vunpack.c.h.b16 %v910
        %v1745 = vunpack.c.l.b16 %v911
        %v1746 = vunpack.c.h.b16 %v911
        %v1747 = vunpack.c.l.b16 %v912
        %v1748 = vunpack.c.h.b16 %v912
        %v1749 = vunpack.c.l.b16 %v913
        %v1750 = vunpack.c.h.b16 %v913
        %v1751 = vunpack.c.l.b16 %v914
        %v1752 = vunpack.c.h.b16 %v914
        %v1753 = vunpack.c.l.b16 %v915
        %v1754 = vunpack.c.h.b16 %v915
        %v1755 = vunpack.c.l.b16 %v916
        %v1756 = vunpack.c.h.b16 %v916
        %v1757 = vunpack.c.l.b16 %v917
        %v1758 = vunpack.c.h.b16 %v917
        %v1759 = vunpack.c.l.b16 %v918
        %v1760 = vunpack.c.h.b16 %v918
        %v1761 = vunpack.c.l.b16 %v919
        %v1762 = vunpack.c.h.b16 %v919
        %v1763 = vunpack.c.l.b16 %v920
        %v1764 = vunpack.c.h.b16 %v920
        %v1765 = vunpack.c.l.b16 %v921
        %v1766 = vunpack.c.h.b16 %v921
        %v1767 = vunpack.c.l.b16 %v922
        %v1768 = vunpack.c.h.b16 %v922
        %v1769 = vunpack.c.l.b16 %v923
        %v1770 = vunpack.c.h.b16 %v923
        %v1771 = vunpack.c.l.b16 %v924
        %v1772 = vunpack.c.h.b16 %v924
        %v1773 = vunpack.c.l.b16 %v925
        %v1774 = vunpack.c.h.b16 %v925
        %v1775 = vunpack.c.l.b16 %v926
        %v1776 = vunpack.c.h.b16 %v926
        %v1777 = vunpack.c.l.b16 %v927
        %v1778 = vunpack.c.h.b16 %v927
        %v1779 = vunpack.c.l.b16 %v928
        %v1780 = vunpack.c.h.b16 %v928
        %v1781 = vunpack.c.l.b16 %v929
        %v1782 = vunpack.c.h.b16 %v929
        %v1783 = vunpack.c.l.b16 %v930
        %v1784 = vunpack.c.h.b16 %v930
        %v1785 = vunpack.c.l.b16 %v931
        %v1786 = vunpack.c.h.b16 %v931
        %v1787 = vunpack.c.l.b16 %v932
        %v1788 = vunpack.c.h.b16 %v932
        %v1789 = vunpack.c.l.b16 %v933
        %v1790 = vunpack.c.h.b16 %v933
        %v1791 = vunpack.c.l.b16 %v934
        %v1792 = vunpack.c.h.b16 %v934
        %v1793 = vunpack.c.l.b16 %v935
        %v1794 = vunpack.c.h.b16 %v935
        %v1795 = vunpack.c.l.b16 %v936
        %v1796 = vunpack.c.h.b16 %v936
        %v1797 = vunpack.c.l.b16 %v937
        %v1798 = vunpack.c.h.b16 %v937
        %v1799 = vunpack.c.l.b16 %v938
        %v1800 = vunpack.c.h.b16 %v938
        %v1801 = vunpack.c.l.b16 %v939
        %v1802 = vunpack.c.h.b16 %v939
        %v1803 = vunpack.c.l.b16 %v940
        %v1804 = vunpack.c.h.b16 %v940
        %v1805 = vunpack.c.l.b16 %v941
        %v1806 = vunpack.c.h.b16 %v941
        %v1807 = vunpack.c.l.b16 %v942
        %v1808 = vunpack.c.h.b16 %v942
        %v1809 = vunpack.c.l.b16 %v943
        %v1810 = vunpack.c.h.b16 %v943
        %v1811 = vunpack.c.l.b16 %v944
        %v1812 = vunpack.c.h.b16 %v944
        %v1813 = vunpack.c.l.b16 %v945
        %v1814 = vunpack.c.h.b16 %v945
        %v1815 = vunpack.c.l.b16 %v946
        %v1816 = vunpack.c.h.b16 %v946
        %v1817 = vunpack.c.l.b16 %v947
        %v1818 = vunpack.c.h.b16 %v947
        %v1819 = vunpack.c.l.b16 %v948
        %v1820 = vunpack.c.h.b16 %v948
        %v1821 = vunpack.c.l.b16 %v949
        %v1822 = vunpack.c.h.b16 %v949
        %v1823 = vunpack.c.l.b16 %v950
        %v1824 = vunpack.c.h.b16 %v950
        %v1825 = vunpack.c.l.b16 %v951
        %v1826 = vunpack.c.h.b16 %v951
        %v1827 = vunpack.c.l.b16 %v952
        %v1828 = vunpack.c.h.b16 %v952
        %v1829 = vunpack.c.l.b16 %v953
        %v1830 = vunpack.c.h.b16 %v953
        %v1831 = vunpack.c.l.b16 %v954
        %v1832 = vunpack.c.h.b16 %v954
        %v1833 = vunpack.c.l.b16 %v955
        %v1834 = vunpack.c.h.b16 %v955
        %v1835 = vunpack.c.l.b16 %v956
        %v1836 = vunpack.c.h.b16 %v956
        %v1837 = vunpack.c.l.b16 %v957
        %v1838 = vunpack.c.h.b16 %v957
        %v1839 = vunpack.c.l.b16 %v958
        %v1840 = vunpack.c.h.b16 %v958
        %v1841 = vunpack.c.l.b16 %v959
        %v1842 = vunpack.c.h.b16 %v959
        %v1843 = vunpack.c.l.b16 %v960
        %v1844 = vunpack.c.h.b16 %v960
        %v1845 = vunpack.c.l.b16 %v961
        %v1846 = vunpack.c.h.b16 %v961
        %v1847 = vunpack.c.l.b16 %v962
        %v1848 = vunpack.c.h.b16 %v962
        %v1849 = vunpack.c.l.b16 %v963
        %v1850 = vunpack.c.h.b16 %v963
        %v1851 = vunpack.c.l.b16 %v964
        %v1852 = vunpack.c.h.b16 %v964
        %v1853 = vunpack.c.l.b16 %v965
        %v1854 = vunpack.c.h.b16 %v965
        %v1855 = vunpack.c.l.b16 %v966
        %v1856 = vunpack.c.h.b16 %v966
        %v1857 = vunpack.c.l.b16 %v967
        %v1858 = vunpack.c.h.b16 %v967
        %v1859 = vunpack.c.l.b16 %v968
        %v1860 = vunpack.c.h.b16 %v968
        %v1861 = vunpack.c.l.b16 %v969
        %v1862 = vunpack.c.h.b16 %v969
        %v1863 = vunpack.c.l.b16 %v970
        %v1864 = vunpack.c.h.b16 %v970
        %v1865 = vunpack.c.l.b16 %v971
        %v1866 = vunpack.c.h.b16 %v971
        %v1867 = vunpack.c.l.b16 %v972
        %v1868 = vunpack.c.h.b16 %v972
        %v1869 = vunpack.c.l.b16 %v973
        %v1870 = vunpack.c.h.b16 %v973
        %v1871 = vunpack.c.l.b16 %v974
        %v1872 = vunpack.c.h.b16 %v974
        %v1873 = vunpack.c.l.b16 %v975
        %v1874 = vunpack.c.h.b16 %v975
        %v1875 = vunpack.c.l.b16 %v976
        %v1876 = vunpack.c.h.b16 %v976
        %v1877 = vunpack.c.l.b16 %v977
        %v1878 = vunpack.c.h.b16 %v977
        %v1879 = vunpack.c.l.b16 %v978
        %v1880 = vunpack.c.h.b16 %v978
        %v1881 = vunpack.c.l.b16 %v979
        %v1882 = vunpack.c.h.b16 %v979
        %v1883 = vunpack.c.l.b16 %v980
        %v1884 = vunpack.c.h.b16 %v980
        %v1885 = vunpack.c.l.b16 %v981
        %v1886 = vunpack.c.h.b16 %v981
        %v1887 = vunpack.c.l.b16 %v982
        %v1888 = vunpack.c.h.b16 %v982
        %v1889 = vunpack.c.l.b16 %v983
        %v1890 = vunpack.c.h.b16 %v983
        %v1891 = vunpack.c.l.b16 %v984
        %v1892 = vunpack.c.h.b16 %v984
        %v1893 = vunpack.c.l.b16 %v985
        %v1894 = vunpack.c.h.b16 %v985
        %v1895 = vunpack.c.l.b16 %v986
        %v1896 = vunpack.c.h.b16 %v986
        %v1897 = vunpack.c.l.b16 %v987
        %v1898 = vunpack.c.h.b16 %v987
        %v1899 = vunpack.c.l.b16 %v988
        %v1900 = vunpack.c.h.b16 %v988
        %v1901 = vunpack.c.l.b16 %v989
        %v1902 = vunpack.c.h.b16 %v989
        %v1903 = vunpack.c.l.b16 %v990
        %v1904 = vunpack.c.h.b16 %v990
        %v1905 = vunpack.c.l.b16 %v991
        %v1906 = vunpack.c.h.b16 %v991
        %v1907 = vunpack.c.l.b16 %v992
        %v1908 = vunpack.c.h.b16 %v992
        %v1909 = vunpack.c.l.b16 %v993
        %v1910 = vunpack.c.h.b16 %v993
        %v1911 = vunpack.c.l.b16 %v994
        %v1912 = vunpack.c.h.b16 %v994
        %v1913 = vunpack.c.l.b16 %v995
        %v1914 = vunpack.c.h.b16 %v995
        %v1915 = vunpack.c.l.b16 %v996
        %v1916 = vunpack.c.h.b16 %v996
        %v1917 = vunpack.c.l.b16 %v997
        %v1918 = vunpack.c.h.b16 %v997
        %v1919 = vunpack.c.l.b16 %v998
        %v1920 = vunpack.c.h.b16 %v998
        %v1921 = vunpack.c.l.b16 %v999
        %v1922 = vunpack.c.h.b16 %v999
        %v1923 = vunpack.c.l.b16 %v1000
        %v1924 = vunpack.c.h.b16 %v1000
        %v1925 = vunpack.c.l.b16 %v1001
        %v1926 = vunpack.c.h.b16 %v1001
        %v1927 = vunpack.c.l.b16 %v1002
        %v1928 = vunpack.c.h.b16 %v1002
        %v1929 = vunpack.c.l.b16 %v1003
        %v1930 = vunpack.c.h.b16 %v1003
        %v1931 = vunpack.c.l.b16 %v1004
        %v1932 = vunpack.c.h.b16 %v1004
        %v1933 = vunpack.c.l.b16 %v1005
        %v1934 = vunpack.c.h.b16 %v1005
        %v1935 = vunpack.c.l.b16 %v1006
        %v1936 = vunpack.c.h.b16 %v1006
        %v1937 = vunpack.c.l.b16 %v1007
        %v1938 = vunpack.c.h.b16 %v1007
        %v1939 = vunpack.c.l.b16 %v1008
        %v1940 = vunpack.c.h.b16 %v1008
        %v1941 = vunpack.c.l.b16 %v1009
        %v1942 = vunpack.c.h.b16 %v1009
        %v1943 = vunpack.c.l.b16 %v1010
        %v1944 = vunpack.c.h.b16 %v1010
        %v1945 = vunpack.c.l.b16 %v1011
        %v1946 = vunpack.c.h.b16 %v1011
        %v1947 = vunpack.c.l.b16 %v1012
        %v1948 = vunpack.c.h.b16 %v1012
        %v1949 = vunpack.c.l.b16 %v1013
        %v1950 = vunpack.c.h.b16 %v1013
        %v1951 = vunpack.c.l.b16 %v1014
        %v1952 = vunpack.c.h.b16 %v1014
        %v1953 = vunpack.c.l.b16 %v1015
        %v1954 = vunpack.c.h.b16 %v1015
        %v1955 = vunpack.c.l.b16 %v1016
        %v1956 = vunpack.c.h.b16 %v1016
        %v1957 = vunpack.c.l.b16 %v1017
        %v1958 = vunpack.c.h.b16 %v1017
        %v1959 = vunpack.c.l.b16 %v1018
        %v1960 = vunpack.c.h.b16 %v1018
        %v1961 = vunpack.c.l.b16 %v1019
        %v1962 = vunpack.c.h.b16 %v1019
        %v1963 = vunpack.c.l.b16 %v1020
        %v1964 = vunpack.c.h.b16 %v1020
        %v1965 = vunpack.c.l.b16 %v1021
        %v1966 = vunpack.c.h.b16 %v1021
        %v1967 = vunpack.c.l.b16 %v1022
        %v1968 = vunpack.c.h.b16 %v1022
        %v1969 = vunpack.c.l.b16 %v1023
        %v1970 = vunpack.c.h.b16 %v1023
        %v1971 = vunpack.c.l.b16 %v1024
        %v1972 = vunpack.c.h.b16 %v1024
        %v1973 = vunpack.c.l.b16 %v1025
        %v1974 = vunpack.c.h.b16 %v1025
        %v1975 = vunpack.c.l.b16 %v1026
        %v1976 = vunpack.c.h.b16 %v1026
        %v1977 = vunpack.c.l.b16 %v1027
        %v1978 = vunpack.c.h.b16 %v1027
        %v1979 = vunpack.c.l.b16 %v1028
        %v1980 = vunpack.c.h.b16 %v1028
        %v1981 = vunpack.c.l.b16 %v1029
        %v1982 = vunpack.c.h.b16 %v1029
        %v1983 = vunpack.c.l.b16 %v1030
        %v1984 = vunpack.c.h.b16 %v1030
        %v1985 = vunpack.c.l.b16 %v1031
        %v1986 = vunpack.c.h.b16 %v1031
        %v1987 = vunpack.c.l.b16 %v1032
        %v1988 = vunpack.c.h.b16 %v1032
        %v1989 = vunpack.c.l.b16 %v1033
        %v1990 = vunpack.c.h.b16 %v1033
        %v1991 = vunpack.c.l.b16 %v1034
        %v1992 = vunpack.c.h.b16 %v1034
        %v1993 = vunpack.c.l.b16 %v1035
        %v1994 = vunpack.c.h.b16 %v1035
        %v1995 = vunpack.c.l.b16 %v1036
        %v1996 = vunpack.c.h.b16 %v1036
        %v1997 = vunpack.c.l.b16 %v1037
        %v1998 = vunpack.c.h.b16 %v1037
        %v1999 = vunpack.c.l.b16 %v1038
        %v2000 = vunpack.c.h.b16 %v1038
        %v2001 = vunpack.c.l.b16 %v1039
        %v2002 = vunpack.c.h.b16 %v1039
        %v2003 = vunpack.c.l.b16 %v1040
        %v2004 = vunpack.c.h.b16 %v1040
        %v2005 = vunpack.c.l.b16 %v1041
        %v2006 = vunpack.c.h.b16 %v1041
        %v2007 = vunpack.c.l.b16 %v1042
        %v2008 = vunpack.c.h.b16 %v1042
        %v2009 = vunpack.c.l.b16 %v1043
        %v2010 = vunpack.c.h.b16 %v1043
        %v2011 = vunpack.c.l.b16 %v1044
        %v2012 = vunpack.c.h.b16 %v1044
        %v2013 = vunpack.c.l.b16 %v1045
        %v2014 = vunpack.c.h.b16 %v1045
        %v2015 = vunpack.c.l.b16 %v1046
        %v2016 = vunpack.c.h.b16 %v1046
        %v2017 = vunpack.c.l.b16 %v1047
        %v2018 = vunpack.c.h.b16 %v1047
        %v2019 = vunpack.c.l.b16 %v1048
        %v2020 = vunpack.c.h.b16 %v1048
        %v2021 = vunpack.c.l.b16 %v1049
        %v2022 = vunpack.c.h.b16 %v1049
        %v2023 = vunpack.c.l.b16 %v1050
        %v2024 = vunpack.c.h.b16 %v1050
        %v2025 = vunpack.c.l.b16 %v1051
        %v2026 = vunpack.c.h.b16 %v1051
        %v2027 = vunpack.c.l.b16 %v1052
        %v2028 = vunpack.c.h.b16 %v1052
        %v2029 = vunpack.c.l.b16 %v1053
        %v2030 = vunpack.c.h.b16 %v1053
        %v2031 = vunpack.c.l.b16 %v1054
        %v2032 = vunpack.c.h.b16 %v1054
        %v2033 = vunpack.c.l.b16 %v1055
        %v2034 = vunpack.c.h.b16 %v1055
        %v2035 = vunpack.c.l.b16 %v1056
        %v2036 = vunpack.c.h.b16 %v1056
        %v2037 = vunpack.c.l.b16 %v1057
        %v2038 = vunpack.c.h.b16 %v1057
        %v2039 = vunpack.c.l.b16 %v1058
        %v2040 = vunpack.c.h.b16 %v1058
        %v2041 = vunpack.c.l.b16 %v1059
        %v2042 = vunpack.c.h.b16 %v1059
        %v2043 = vunpack.c.l.b16 %v1060
        %v2044 = vunpack.c.h.b16 %v1060
        %v2045 = vunpack.c.l.b16 %v1061
        %v2046 = vunpack.c.h.b16 %v1061
        %v2047 = vunpack.c.l.b16 %v1062
        %v2048 = vunpack.c.h.b16 %v1062
        %v2049 = vunpack.c.l.b16 %v1063
        %v2050 = vunpack.c.h.b16 %v1063
        %v2051 = vunpack.c.l.b16 %v1064
        %v2052 = vunpack.c.h.b16 %v1064
        %v2053 = vunpack.c.l.b16 %v1065
        %v2054 = vunpack.c.h.b16 %v1065
        %v2055 = vunpack.c.l.b16 %v1066
        %v2056 = vunpack.c.h.b16 %v1066
        %v2057 = vunpack.c.l.b16 %v1067
        %v2058 = vunpack.c.h.b16 %v1067
        %v2059 = vunpack.c.l.b16 %v1068
        %v2060 = vunpack.c.h.b16 %v1068
        %v2061 = vunpack.c.l.b16 %v1069
        %v2062 = vunpack.c.h.b16 %v1069
        %v2063 = vunpack.c.l.b16 %v1070
        %v2064 = vunpack.c.h.b16 %v1070
        %v2065 = vunpack.c.l.b16 %v1071
        %v2066 = vunpack.c.h.b16 %v1071
        %v2067 = vunpack.c.l.b16 %v1072
        %v2068 = vunpack.c.h.b16 %v1072
        %v2069 = vunpack.c.l.b16 %v1073
        %v2070 = vunpack.c.h.b16 %v1073
        %v2071 = vunpack.c.l.b16 %v1074
        %v2072 = vunpack.c.h.b16 %v1074
        %v2073 = vunpack.c.l.b16 %v1075
        %v2074 = vunpack.c.h.b16 %v1075
        %v2075 = vunpack.c.l.b16 %v1076
        %v2076 = vunpack.c.h.b16 %v1076
        %v2077 = vunpack.c.l.b16 %v1077
        %v2078 = vunpack.c.h.b16 %v1077
        %v2079 = vunpack.c.l.b16 %v1078
        %v2080 = vunpack.c.h.b16 %v1078
        %v2081 = vunpack.c.l.b16 %v1079
        %v2082 = vunpack.c.h.b16 %v1079
        %v2083 = vunpack.c.l.b16 %v1080
        %v2084 = vunpack.c.h.b16 %v1080
        %v2085 = vunpack.c.l.b16 %v1081
        %v2086 = vunpack.c.h.b16 %v1081
        %v2087 = vunpack.c.l.b16 %v1082
        %v2088 = vunpack.c.h.b16 %v1082
        %v2089 = vunpack.c.l.b16 %v1083
        %v2090 = vunpack.c.h.b16 %v1083
        %v2091 = vunpack.c.l.b16 %v1084
        %v2092 = vunpack.c.h.b16 %v1084
        %v2093 = vunpack.c.l.b16 %v1085
        %v2094 = vunpack.c.h.b16 %v1085
        %v2095 = vunpack.c.l.b16 %v1086
        %v2096 = vunpack.c.h.b16 %v1086
        %v2097 = vunpack.c.l.b16 %v1087
        %v2098 = vunpack.c.h.b16 %v1087
        %v2099 = vunpack.c.l.b16 %v1088
        %v2100 = vunpack.c.h.b16 %v1088
        %v2101 = vunpack.c.l.b16 %v1089
        %v2102 = vunpack.c.h.b16 %v1089
        %v2103 = vunpack.c.l.b16 %v1090
        %v2104 = vunpack.c.h.b16 %v1090
        %v2105 = vunpack.c.l.b16 %v1091
        %v2106 = vunpack.c.h.b16 %v1091
        %v2107 = vunpack.c.l.b16 %v1092
        %v2108 = vunpack.c.h.b16 %v1092
        %v2109 = vunpack.c.l.b16 %v1093
        %v2110 = vunpack.c.h.b16 %v1093
        %v2111 = vunpack.c.l.b16 %v1094
        %v2112 = vunpack.c.h.b16 %v1094
        %v2113 = vunpack.c.l.b16 %v1095
        %v2114 = vunpack.c.h.b16 %v1095
        %v2115 = vunpack.c.l.b16 %v1096
        %v2116 = vunpack.c.h.b16 %v1096
        %v2117 = vunpack.c.l.b16 %v1097
        %v2118 = vunpack.c.h.b16 %v1097
        %v2119 = vunpack.c.l.b16 %v1098
        %v2120 = vunpack.c.h.b16 %v1098
        %v2121 = vunpack.c.l.b16 %v1099
        %v2122 = vunpack.c.h.b16 %v1099
        %v2123 = vunpack.c.l.b16 %v1100
        %v2124 = vunpack.c.h.b16 %v1100
        %v2125 = vunpack.c.l.b16 %v1101
        %v2126 = vunpack.c.h.b16 %v1101
        %v2127 = vunpack.c.l.b16 %v1102
        %v2128 = vunpack.c.h.b16 %v1102
        %v2129 = vunpack.c.l.b16 %v1103
        %v2130 = vunpack.c.h.b16 %v1103
        %v2131 = vunpack.c.l.b16 %v1104
        %v2132 = vunpack.c.h.b16 %v1104
        %v2133 = vunpack.c.l.b16 %v1105
        %v2134 = vunpack.c.h.b16 %v1105
        %v2135 = vunpack.c.l.b16 %v1106
        %v2136 = vunpack.c.h.b16 %v1106
        %v2137 = vunpack.c.l.b16 %v1107
        %v2138 = vunpack.c.h.b16 %v1107
        %v2139 = vunpack.c.l.b16 %v1108
        %v2140 = vunpack.c.h.b16 %v1108
        %v2141 = vunpack.c.l.b16 %v1109
        %v2142 = vunpack.c.h.b16 %v1109
        %v2143 = vunpack.c.l.b16 %v1110
        %v2144 = vunpack.c.h.b16 %v1110
        %v2145 = vunpack.c.l.b16 %v1111
        %v2146 = vunpack.c.h.b16 %v1111
        %v2147 = vunpack.c.l.b16 %v1112
        %v2148 = vunpack.c.h.b16 %v1112
        %v2149 = vunpack.c.l.b16 %v1113
        %v2150 = vunpack.c.h.b16 %v1113
        %v2151 = vunpack.c.l.b16 %v1114
        %v2152 = vunpack.c.h.b16 %v1114
        %v2153 = vunpack.c.l.b16 %v1115
        %v2154 = vunpack.c.h.b16 %v1115
        %v2155 = vunpack.c.l.b16 %v1116
        %v2156 = vunpack.c.h.b16 %v1116
        %v2157 = vunpack.c.l.b16 %v1117
        %v2158 = vunpack.c.h.b16 %v1117
        %v2159 = vunpack.c.l.b16 %v1118
        %v2160 = vunpack.c.h.b16 %v1118
        %v2161 = vunpack.c.l.b16 %v1119
        %v2162 = vunpack.c.h.b16 %v1119
        %v2163 = vunpack.c.l.b16 %v1120
        %v2164 = vunpack.c.h.b16 %v1120
        %v2165 = vunpack.c.l.b16 %v1121
        %v2166 = vunpack.c.h.b16 %v1121
        %v2167 = vunpack.c.l.b16 %v1122
        %v2168 = vunpack.c.h.b16 %v1122
        %v2169 = vunpack.c.l.b16 %v1123
        %v2170 = vunpack.c.h.b16 %v1123
        %v2171 = vunpack.c.l.b16 %v1124
        %v2172 = vunpack.c.h.b16 %v1124
        %v2173 = vunpack.c.l.b16 %v1125
        %v2174 = vunpack.c.h.b16 %v1125
        %v2175 = vunpack.c.l.b16 %v1126
        %v2176 = vunpack.c.h.b16 %v1126
        %v2177 = vunpack.c.l.b16 %v1127
        %v2178 = vunpack.c.h.b16 %v1127
        %v2179 = vunpack.c.l.b16 %v1128
        %v2180 = vunpack.c.h.b16 %v1128
        %v2181 = vunpack.c.l.b16 %v1129
        %v2182 = vunpack.c.h.b16 %v1129
        %v2183 = vunpack.c.l.b16 %v1130
        %v2184 = vunpack.c.h.b16 %v1130
        %v2185 = vunpack.c.l.b16 %v1131
        %v2186 = vunpack.c.h.b16 %v1131
        %v2187 = vunpack.c.l.b16 %v1132
        %v2188 = vunpack.c.h.b16 %v1132
        %v2189 = vunpack.c.l.b16 %v1133
        %v2190 = vunpack.c.h.b16 %v1133
        %v2191 = vunpack.c.l.b16 %v1134
        %v2192 = vunpack.c.h.b16 %v1134
        %v2193 = vunpack.c.l.b16 %v1135
        %v2194 = vunpack.c.h.b16 %v1135
        %v2195 = vunpack.c.l.b16 %v1136
        %v2196 = vunpack.c.h.b16 %v1136
        %v2197 = vunpack.c.l.b16 %v1137
        %v2198 = vunpack.c.h.b16 %v1137
        %v2199 = vunpack.c.l.b16 %v1138
        %v2200 = vunpack.c.h.b16 %v1138
        %v2201 = vunpack.c.l.b16 %v1139
        %v2202 = vunpack.c.h.b16 %v1139
        %v2203 = vunpack.c.l.b16 %v1140
        %v2204 = vunpack.c.h.b16 %v1140
        %v2205 = vunpack.c.l.b16 %v1141
        %v2206 = vunpack.c.h.b16 %v1141
        %v2207 = vunpack.c.l.b16 %v1142
        %v2208 = vunpack.c.h.b16 %v1142
        %v2209 = vunpack.c.l.b16 %v1143
        %v2210 = vunpack.c.h.b16 %v1143
        %v2211 = vunpack.c.l.b16 %v1144
        %v2212 = vunpack.c.h.b16 %v1144
        %v2213 = vunpack.c.l.b16 %v1145
        %v2214 = vunpack.c.h.b16 %v1145
        %v2215 = vunpack.c.l.b16 %v1146
        %v2216 = vunpack.c.h.b16 %v1146
        %v2217 = vunpack.c.l.b16 %v1147
        %v2218 = vunpack.c.h.b16 %v1147
        %v2219 = vunpack.c.l.b16 %v1148
        %v2220 = vunpack.c.h.b16 %v1148
        %v2221 = vunpack.c.l.b16 %v1149
        %v2222 = vunpack.c.h.b16 %v1149
        %v2223 = vunpack.c.l.b16 %v1150
        %v2224 = vunpack.c.h.b16 %v1150
        %v2225 = vunpack.c.l.b16 %v1151
        %v2226 = vunpack.c.h.b16 %v1151
        %v2227 = vunpack.c.l.b16 %v1152
        %v2228 = vunpack.c.h.b16 %v1152
        %v2229 = vunpack.c.l.b16 %v1153
        %v2230 = vunpack.c.h.b16 %v1153
        %v2231 = vunpack.c.l.b16 %v1154
        %v2232 = vunpack.c.h.b16 %v1154
        %v2233 = vunpack.c.l.b16 %v1155
        %v2234 = vunpack.c.h.b16 %v1155
        %v2235 = vunpack.c.l.b16 %v1156
        %v2236 = vunpack.c.h.b16 %v1156
        %v2237 = vunpack.c.l.b16 %v1157
        %v2238 = vunpack.c.h.b16 %v1157
        %v2239 = vunpack.c.l.b16 %v1158
        %v2240 = vunpack.c.h.b16 %v1158
        %v2241 = vunpack.c.l.b16 %v1159
        %v2242 = vunpack.c.h.b16 %v1159
        %v2243 = vunpack.c.l.b16 %v1160
        %v2244 = vunpack.c.h.b16 %v1160
        %v2245 = vunpack.c.l.b16 %v1161
        %v2246 = vunpack.c.h.b16 %v1161
        %v2247 = vunpack.c.l.b16 %v1162
        %v2248 = vunpack.c.h.b16 %v1162
        %v2249 = vunpack.c.l.b16 %v1163
        %v2250 = vunpack.c.h.b16 %v1163
        %v2251 = vunpack.c.l.b16 %v1164
        %v2252 = vunpack.c.h.b16 %v1164
        %v2253 = vunpack.c.l.b16 %v1165
        %v2254 = vunpack.c.h.b16 %v1165
        %v2255 = vunpack.c.l.b16 %v1166
        %v2256 = vunpack.c.h.b16 %v1166
        %v2257 = vunpack.c.l.b16 %v1167
        %v2258 = vunpack.c.h.b16 %v1167
        %v2259 = vunpack.c.l.b16 %v1168
        %v2260 = vunpack.c.h.b16 %v1168
        %v2261 = vunpack.c.l.b16 %v1169
        %v2262 = vunpack.c.h.b16 %v1169
        %v2263 = vunpack.c.l.b16 %v1170
        %v2264 = vunpack.c.h.b16 %v1170
        %v2265 = vunpack.c.l.b16 %v1171
        %v2266 = vunpack.c.h.b16 %v1171
        %v2267 = vunpack.c.l.b16 %v1172
        %v2268 = vunpack.c.h.b16 %v1172
        %v2269 = vunpack.c.l.b16 %v1173
        %v2270 = vunpack.c.h.b16 %v1173
        %v2271 = vunpack.c.l.b16 %v1174
        %v2272 = vunpack.c.h.b16 %v1174
        %v2273 = vunpack.c.l.b16 %v1175
        %v2274 = vunpack.c.h.b16 %v1175
        %v2275 = vunpack.c.l.b16 %v1176
        %v2276 = vunpack.c.h.b16 %v1176
        %v2277 = vunpack.c.l.b16 %v1177
        %v2278 = vunpack.c.h.b16 %v1177
        %v2279 = vunpack.c.l.b16 %v1178
        %v2280 = vunpack.c.h.b16 %v1178
        %v2281 = vunpack.c.l.b16 %v1179
        %v2282 = vunpack.c.h.b16 %v1179
        %v2283 = vunpack.c.l.b16 %v1180
        %v2284 = vunpack.c.h.b16 %v1180
        %v2285 = vunpack.c.l.b16 %v1181
        %v2286 = vunpack.c.h.b16 %v1181
        %v2287 = vunpack.c.l.b16 %v1182
        %v2288 = vunpack.c.h.b16 %v1182
        %v2289 = vunpack.c.l.b16 %v1183
        %v2290 = vunpack.c.h.b16 %v1183
        %v2291 = vunpack.c.l.b16 %v1184
        %v2292 = vunpack.c.h.b16 %v1184
        %v2293 = vunpack.c.l.b16 %v1185
        %v2294 = vunpack.c.h.b16 %v1185
        %v2295 = vunpack.c.l.b16 %v1186
        %v2296 = vunpack.c.h.b16 %v1186
        %v2297 = vunpack.c.l.b16 %v1187
        %v2298 = vunpack.c.h.b16 %v1187
        %v2299 = vunpack.c.l.b16 %v1188
        %v2300 = vunpack.c.h.b16 %v1188
        %v2301 = vunpack.c.l.b16 %v1189
        %v2302 = vunpack.c.h.b16 %v1189
        %v2303 = vunpack.c.l.b16 %v1190
        %v2304 = vunpack.c.h.b16 %v1190
        %v2305 = vunpack.c.l.b16 %v1191
        %v2306 = vunpack.c.h.b16 %v1191
        %v2307 = vunpack.c.l.b16 %v1192
        %v2308 = vunpack.c.h.b16 %v1192
        %v2309 = vunpack.c.l.b16 %v1193
        %v2310 = vunpack.c.h.b16 %v1193
        %v2311 = vunpack.c.l.b16 %v1194
        %v2312 = vunpack.c.h.b16 %v1194
        %v2313 = vunpack.c.l.b16 %v1195
        %v2314 = vunpack.c.h.b16 %v1195
        %v2315 = vunpack.c.l.b16 %v1196
        %v2316 = vunpack.c.h.b16 %v1196
        %v2317 = vunpack.c.l.b16 %v1197
        %v2318 = vunpack.c.h.b16 %v1197
        %v2319 = vunpack.c.l.b16 %v1198
        %v2320 = vunpack.c.h.b16 %v1198
        %v2321 = vunpack.c.l.b16 %v1199
        %v2322 = vunpack.c.h.b16 %v1199
        %v2323 = vunpack.c.l.b16 %v1200
        %v2324 = vunpack.c.h.b16 %v1200
        %v2325 = vunpack.c.l.b16 %v1201
        %v2326 = vunpack.c.h.b16 %v1201
        %v2327 = vunpack.c.l.b16 %v1202
        %v2328 = vunpack.c.h.b16 %v1202
        %v2329 = vunpack.c.l.b16 %v1203
        %v2330 = vunpack.c.h.b16 %v1203
        %v2331 = vunpack.c.l.b16 %v1204
        %v2332 = vunpack.c.h.b16 %v1204
        %v2333 = vunpack.c.l.b16 %v1205
        %v2334 = vunpack.c.h.b16 %v1205
        %v2335 = vunpack.c.l.b16 %v1206
        %v2336 = vunpack.c.h.b16 %v1206
        %v2337 = vunpack.c.l.b16 %v1207
        %v2338 = vunpack.c.h.b16 %v1207
        %v2339 = vunpack.c.l.b16 %v1208
        %v2340 = vunpack.c.h.b16 %v1208
        %v2341 = vunpack.c.l.b16 %v1209
        %v2342 = vunpack.c.h.b16 %v1209
        %v2343 = vunpack.c.l.b16 %v1210
        %v2344 = vunpack.c.h.b16 %v1210
        %v2345 = vunpack.c.l.b16 %v1211
        %v2346 = vunpack.c.h.b16 %v1211
        %v2347 = vunpack.c.l.b16 %v1212
        %v2348 = vunpack.c.h.b16 %v1212
        %v2349 = vunpack.c.l.b16 %v1213
        %v2350 = vunpack.c.h.b16 %v1213
        %v2351 = vunpack.c.l.b16 %v1214
        %v2352 = vunpack.c.h.b16 %v1214
        %v2353 = vunpack.c.l.b16 %v1215
        %v2354 = vunpack.c.h.b16 %v1215
        %v2355 = vunpack.c.l.b16 %v1216
        %v2356 = vunpack.c.h.b16 %v1216
        %v2357 = vunpack.c.l.b16 %v1217
        %v2358 = vunpack.c.h.b16 %v1217
        %v2359 = vunpack.c.l.b16 %v1218
        %v2360 = vunpack.c.h.b16 %v1218
        %v2361 = vunpack.c.l.b16 %v1219
        %v2362 = vunpack.c.h.b16 %v1219
        %v2363 = vunpack.c.l.b16 %v1220
        %v2364 = vunpack.c.h.b16 %v1220
        %v2365 = vunpack.c.l.b16 %v1221
        %v2366 = vunpack.c.h.b16 %v1221
        %v2367 = vunpack.c.l.b16 %v1222
        %v2368 = vunpack.c.h.b16 %v1222
        %v2369 = vunpack.c.l.b16 %v1223
        %v2370 = vunpack.c.h.b16 %v1223
        %v2371 = vunpack.c.l.b16 %v1224
        %v2372 = vunpack.c.h.b16 %v1224
        %v2373 = vunpack.c.l.b16 %v1225
        %v2374 = vunpack.c.h.b16 %v1225
        %v2375 = vunpack.c.l.b16 %v1226
        %v2376 = vunpack.c.h.b16 %v1226
        %v2377 = vunpack.c.l.b16 %v1227
        %v2378 = vunpack.c.h.b16 %v1227
        %v2379 = vunpack.c.l.b16 %v1228
        %v2380 = vunpack.c.h.b16 %v1228
        %v2381 = vunpack.c.l.b16 %v1229
        %v2382 = vunpack.c.h.b16 %v1229
        %v2383 = vunpack.c.l.b16 %v1230
        %v2384 = vunpack.c.h.b16 %v1230
        %v2385 = vunpack.c.l.b16 %v1231
        %v2386 = vunpack.c.h.b16 %v1231
        %v2387 = vunpack.c.l.b16 %v1232
        %v2388 = vunpack.c.h.b16 %v1232
        %v2389 = vunpack.c.l.b16 %v1233
        %v2390 = vunpack.c.h.b16 %v1233
        %v2391 = vunpack.c.l.b16 %v1234
        %v2392 = vunpack.c.h.b16 %v1234
        %v2393 = vunpack.c.l.b16 %v1235
        %v2394 = vunpack.c.h.b16 %v1235
        %v2395 = vunpack.c.l.b16 %v1236
        %v2396 = vunpack.c.h.b16 %v1236
        %v2397 = vunpack.c.l.b16 %v1237
        %v2398 = vunpack.c.h.b16 %v1237
        %v2399 = vunpack.c.l.b16 %v1238
        %v2400 = vunpack.c.h.b16 %v1238
        %v2401 = vunpack.c.l.b16 %v1239
        %v2402 = vunpack.c.h.b16 %v1239
        %v2403 = vunpack.c.l.b16 %v1240
        %v2404 = vunpack.c.h.b16 %v1240
        %v2405 = vunpack.c.l.b16 %v1241
        %v2406 = vunpack.c.h.b16 %v1241
        %v2407 = vunpack.c.l.b16 %v1242
        %v2408 = vunpack.c.h.b16 %v1242
        %v2409 = vunpack.c.l.b16 %v1243
        %v2410 = vunpack.c.h.b16 %v1243
        %v2411 = vunpack.c.l.b16 %v1244
        %v2412 = vunpack.c.h.b16 %v1244
        %v2413 = vunpack.c.l.b16 %v1245
        %v2414 = vunpack.c.h.b16 %v1245
        %v2415 = vunpack.c.l.b16 %v1246
        %v2416 = vunpack.c.h.b16 %v1246
        %v2417 = vunpack.c.l.b16 %v1247
        %v2418 = vunpack.c.h.b16 %v1247
        %v2419 = vunpack.c.l.b16 %v1248
        %v2420 = vunpack.c.h.b16 %v1248
        %v2421 = vunpack.c.l.b16 %v1249
        %v2422 = vunpack.c.h.b16 %v1249
        %v2423 = vunpack.c.l.b16 %v1250
        %v2424 = vunpack.c.h.b16 %v1250
        %v2425 = vunpack.c.l.b16 %v1251
        %v2426 = vunpack.c.h.b16 %v1251
        %v2427 = vunpack.c.l.b16 %v1252
        %v2428 = vunpack.c.h.b16 %v1252
        %v2429 = vunpack.c.l.b16 %v1253
        %v2430 = vunpack.c.h.b16 %v1253
        %v2431 = vunpack.c.l.b16 %v1254
        %v2432 = vunpack.c.h.b16 %v1254
        %v2433 = vunpack.c.l.b16 %v1255
        %v2434 = vunpack.c.h.b16 %v1255
        %v2435 = vunpack.c.l.b16 %v1256
        %v2436 = vunpack.c.h.b16 %v1256
        %v2437 = vunpack.c.l.b16 %v1257
        %v2438 = vunpack.c.h.b16 %v1257
        %v2439 = vunpack.c.l.b16 %v1258
        %v2440 = vunpack.c.h.b16 %v1258
        %v2441 = vunpack.c.l.b16 %v1259
        %v2442 = vunpack.c.h.b16 %v1259
        %v2443 = vunpack.c.l.b16 %v1260
        %v2444 = vunpack.c.h.b16 %v1260
        %v2445 = vunpack.c.l.b16 %v1261
        %v2446 = vunpack.c.h.b16 %v1261
        %v2447 = vunpack.c.l.b16 %v1262
        %v2448 = vunpack.c.h.b16 %v1262
        %v2449 = vunpack.c.l.b16 %v1263
        %v2450 = vunpack.c.h.b16 %v1263
        %v2451 = vunpack.c.l.b16 %v1264
        %v2452 = vunpack.c.h.b16 %v1264
        %v2453 = vunpack.c.l.b16 %v1265
        %v2454 = vunpack.c.h.b16 %v1265
        %v2455 = vunpack.c.l.b16 %v1266
        %v2456 = vunpack.c.h.b16 %v1266
        %v2457 = vunpack.c.l.b16 %v1267
        %v2458 = vunpack.c.h.b16 %v1267
        %v2459 = vunpack.c.l.b16 %v1268
        %v2460 = vunpack.c.h.b16 %v1268
        %v2461 = vunpack.c.l.b16 %v1269
        %v2462 = vunpack.c.h.b16 %v1269
        %v2463 = vunpack.c.l.b16 %v1270
        %v2464 = vunpack.c.h.b16 %v1270
        %v2465 = vunpack.c.l.b16 %v1271
        %v2466 = vunpack.c.h.b16 %v1271
        %v2467 = vunpack.c.l.b16 %v1272
        %v2468 = vunpack.c.h.b16 %v1272
        %v2469 = vunpack.c.l.b16 %v1273
        %v2470 = vunpack.c.h.b16 %v1273
        %v2471 = vunpack.c.l.b16 %v1274
        %v2472 = vunpack.c.h.b16 %v1274
        %v2473 = vunpack.c.l.b16 %v1275
        %v2474 = vunpack.c.h.b16 %v1275
        %v2475 = vunpack.c.l.b16 %v1276
        %v2476 = vunpack.c.h.b16 %v1276
        %v2477 = vpack.c.b16 %v1701, %v1693
        %v2478 = vpack.c.b16 %v1702, %v1694
        %v2479 = vpack.c.b16 %v1703, %v1695
        %v2480 = vpack.c.b16 %v1704, %v1696
        %v2481 = vpack.c.b16 %v1705, %v1697
        %v2482 = vpack.c.b16 %v1706, %v1698
        %v2483 = vpack.c.b16 %v1707, %v1699
        %v2484 = vpack.c.b16 %v1708, %v1700
        %v2485 = vpack.c.b16 %v1717, %v1709
        %v2486 = vpack.c.b16 %v1718, %v1710
        %v2487 = vpack.c.b16 %v1719, %v1711
        %v2488 = vpack.c.b16 %v1720, %v1712
        %v2489 = vpack.c.b16 %v1721, %v1713
        %v2490 = vpack.c.b16 %v1722, %v1714
        %v2491 = vpack.c.b16 %v1723, %v1715
        %v2492 = vpack.c.b16 %v1724, %v1716
        %v2493 = vpack.c.b16 %v1733, %v1725
        %v2494 = vpack.c.b16 %v1734, %v1726
        %v2495 = vpack.c.b16 %v1735, %v1727
        %v2496 = vpack.c.b16 %v1736, %v1728
        %v2497 = vpack.c.b16 %v1737, %v1729
        %v2498 = vpack.c.b16 %v1738, %v1730
        %v2499 = vpack.c.b16 %v1739, %v1731
        %v2500 = vpack.c.b16 %v1740, %v1732
        %v2501 = vpack.c.b16 %v1749, %v1741
        %v2502 = vpack.c.b16 %v1750, %v1742
        %v2503 = vpack.c.b16 %v1751, %v1743
        %v2504 = vpack.c.b16 %v1752, %v1744
        %v2505 = vpack.c.b16 %v1753, %v1745
        %v2506 = vpack.c.b16 %v1754, %v1746
        %v2507 = vpack.c.b16 %v1755, %v1747
        %v2508 = vpack.c.b16 %v1756, %v1748
        %v2509 = vpack.c.b16 %v1765, %v1757
        %v2510 = vpack.c.b16 %v1766, %v1758
        %v2511 = vpack.c.b16 %v1767, %v1759
        %v2512 = vpack.c.b16 %v1768, %v1760
        %v2513 = vpack.c.b16 %v1769, %v1761
        %v2514 = vpack.c.b16 %v1770, %v1762
        %v2515 = vpack.c.b16 %v1771, %v1763
        %v2516 = vpack.c.b16 %v1772, %v1764
        %v2517 = vpack.c.b16 %v1781, %v1773
        %v2518 = vpack.c.b16 %v1782, %v1774
        %v2519 = vpack.c.b16 %v1783, %v1775
        %v2520 = vpack.c.b16 %v1784, %v1776
        %v2521 = vpack.c.b16 %v1785, %v1777
        %v2522 = vpack.c.b16 %v1786, %v1778
        %v2523 = vpack.c.b16 %v1787, %v1779
        %v2524 = vpack.c.b16 %v1788, %v1780
        %v2525 = vpack.c.b16 %v1797, %v1789
        %v2526 = vpack.c.b16 %v1798, %v1790
        %v2527 = vpack.c.b16 %v1799, %v1791
        %v2528 = vpack.c.b16 %v1800, %v1792
        %v2529 = vpack.c.b16 %v1801, %v1793
        %v2530 = vpack.c.b16 %v1802, %v1794
        %v2531 = vpack.c.b16 %v1803, %v1795
        %v2532 = vpack.c.b16 %v1804, %v1796
        %v2533 = vpack.c.b16 %v1813, %v1805
        %v2534 = vpack.c.b16 %v1814, %v1806
        %v2535 = vpack.c.b16 %v1815, %v1807
        %v2536 = vpack.c.b16 %v1816, %v1808
        %v2537 = vpack.c.b16 %v1817, %v1809
        %v2538 = vpack.c.b16 %v1818, %v1810
        %v2539 = vpack.c.b16 %v1819, %v1811
        %v2540 = vpack.c.b16 %v1820, %v1812
        %v2541 = vpack.c.b16 %v1829, %v1821
        %v2542 = vpack.c.b16 %v1830, %v1822
        %v2543 = vpack.c.b16 %v1831, %v1823
        %v2544 = vpack.c.b16 %v1832, %v1824
        %v2545 = vpack.c.b16 %v1833, %v1825
        %v2546 = vpack.c.b16 %v1834, %v1826
        %v2547 = vpack.c.b16 %v1835, %v1827
        %v2548 = vpack.c.b16 %v1836, %v1828
        %v2549 = vpack.c.b16 %v1845, %v1837
        %v2550 = vpack.c.b16 %v1846, %v1838
        %v2551 = vpack.c.b16 %v1847, %v1839
        %v2552 = vpack.c.b16 %v1848, %v1840
        %v2553 = vpack.c.b16 %v1849, %v1841
        %v2554 = vpack.c.b16 %v1850, %v1842
        %v2555 = vpack.c.b16 %v1851, %v1843
        %v2556 = vpack.c.b16 %v1852, %v1844
        %v2557 = vpack.c.b16 %v1861, %v1853
        %v2558 = vpack.c.b16 %v1862, %v1854
        %v2559 = vpack.c.b16 %v1863, %v1855
        %v2560 = vpack.c.b16 %v1864, %v1856
        %v2561 = vpack.c.b16 %v1865, %v1857
        %v2562 = vpack.c.b16 %v1866, %v1858
        %v2563 = vpack.c.b16 %v1867, %v1859
        %v2564 = vpack.c.b16 %v1868, %v1860
        %v2565 = vpack.c.b16 %v1877, %v1869
        %v2566 = vpack.c.b16 %v1878, %v1870
        %v2567 = vpack.c.b16 %v1879, %v1871
        %v2568 = vpack.c.b16 %v1880, %v1872
        %v2569 = vpack.c.b16 %v1881, %v1873
        %v2570 = vpack.c.b16 %v1882, %v1874
        %v2571 = vpack.c.b16 %v1883, %v1875
        %v2572 = vpack.c.b16 %v1884, %v1876
        %v2573 = vpack.c.b16 %v1893, %v1885
        %v2574 = vpack.c.b16 %v1894, %v1886
        %v2575 = vpack.c.b16 %v1895, %v1887
        %v2576 = vpack.c.b16 %v1896, %v1888
        %v2577 = vpack.c.b16 %v1897, %v1889
        %v2578 = vpack.c.b16 %v1898, %v1890
        %v2579 = vpack.c.b16 %v1899, %v1891
        %v2580 = vpack.c.b16 %v1900, %v1892
        %v2581 = vpack.c.b16 %v1909, %v1901
        %v2582 = vpack.c.b16 %v1910, %v1902
        %v2583 = vpack.c.b16 %v1911, %v1903
        %v2584 = vpack.c.b16 %v1912, %v1904
        %v2585 = vpack.c.b16 %v1913, %v1905
        %v2586 = vpack.c.b16 %v1914, %v1906
        %v2587 = vpack.c.b16 %v1915, %v1907
        %v2588 = vpack.c.b16 %v1916, %v1908
        %v2589 = vpack.c.b16 %v1925, %v1917
        %v2590 = vpack.c.b16 %v1926, %v1918
        %v2591 = vpack.c.b16 %v1927, %v1919
        %v2592 = vpack.c.b16 %v1928, %v1920
        %v2593 = vpack.c.b16 %v1929, %v1921
        %v2594 = vpack.c.b16 %v1930, %v1922
        %v2595 = vpack.c.b16 %v1931, %v1923
        %v2596 = vpack.c.b16 %v1932, %v1924
        %v2597 = vpack.c.b16 %v1941, %v1933
        %v2598 = vpack.c.b16 %v1942, %v1934
        %v2599 = vpack.c.b16 %v1943, %v1935
        %v2600 = vpack.c.b16 %v1944, %v1936
        %v2601 = vpack.c.b16 %v1945, %v1937
        %v2602 = vpack.c.b16 %v1946, %v1938
        %v2603 = vpack.c.b16 %v1947, %v1939
        %v2604 = vpack.c.b16 %v1948, %v1940
        %v2605 = vpack.c.b16 %v1957, %v1949
        %v2606 = vpack.c.b16 %v1958, %v1950
        %v2607 = vpack.c.b16 %v1959, %v1951
        %v2608 = vpack.c.b16 %v1960, %v1952
        %v2609 = vpack.c.b16 %v1961, %v1953
        %v2610 = vpack.c.b16 %v1962, %v1954
        %v2611 = vpack.c.b16 %v1963, %v1955
        %v2612 = vpack.c.b16 %v1964, %v1956
        %v2613 = vpack.c.b16 %v1973, %v1965
        %v2614 = vpack.c.b16 %v1974, %v1966
        %v2615 = vpack.c.b16 %v1975, %v1967
        %v2616 = vpack.c.b16 %v1976, %v1968
        %v2617 = vpack.c.b16 %v1977, %v1969
        %v2618 = vpack.c.b16 %v1978, %v1970
        %v2619 = vpack.c.b16 %v1979, %v1971
        %v2620 = vpack.c.b16 %v1980, %v1972
        %v2621 = vpack.c.b16 %v1989, %v1981
        %v2622 = vpack.c.b16 %v1990, %v1982
        %v2623 = vpack.c.b16 %v1991, %v1983
        %v2624 = vpack.c.b16 %v1992, %v1984
        %v2625 = vpack.c.b16 %v1993, %v1985
        %v2626 = vpack.c.b16 %v1994, %v1986
        %v2627 = vpack.c.b16 %v1995, %v1987
        %v2628 = vpack.c.b16 %v1996, %v1988
        %v2629 = vpack.c.b16 %v2005, %v1997
        %v2630 = vpack.c.b16 %v2006, %v1998
        %v2631 = vpack.c.b16 %v2007, %v1999
        %v2632 = vpack.c.b16 %v2008, %v2000
        %v2633 = vpack.c.b16 %v2009, %v2001
        %v2634 = vpack.c.b16 %v2010, %v2002
        %v2635 = vpack.c.b16 %v2011, %v2003
        %v2636 = vpack.c.b16 %v2012, %v2004
        %v2637 = vpack.c.b16 %v2021, %v2013
        %v2638 = vpack.c.b16 %v2022, %v2014
        %v2639 = vpack.c.b16 %v2023, %v2015
        %v2640 = vpack.c.b16 %v2024, %v2016
        %v2641 = vpack.c.b16 %v2025, %v2017
        %v2642 = vpack.c.b16 %v2026, %v2018
        %v2643 = vpack.c.b16 %v2027, %v2019
        %v2644 = vpack.c.b16 %v2028, %v2020
        %v2645 = vpack.c.b16 %v2037, %v2029
        %v2646 = vpack.c.b16 %v2038, %v2030
        %v2647 = vpack.c.b16 %v2039, %v2031
        %v2648 = vpack.c.b16 %v2040, %v2032
        %v2649 = vpack.c.b16 %v2041, %v2033
        %v2650 = vpack.c.b16 %v2042, %v2034
        %v2651 = vpack.c.b16 %v2043, %v2035
        %v2652 = vpack.c.b16 %v2044, %v2036
        %v2653 = vpack.c.b16 %v2053, %v2045
        %v2654 = vpack.c.b16 %v2054, %v2046
        %v2655 = vpack.c.b16 %v2055, %v2047
        %v2656 = vpack.c.b16 %v2056, %v2048
        %v2657 = vpack.c.b16 %v2057, %v2049
        %v2658 = vpack.c.b16 %v2058, %v2050
        %v2659 = vpack.c.b16 %v2059, %v2051
        %v2660 = vpack.c.b16 %v2060, %v2052
        %v2661 = vpack.c.b16 %v2069, %v2061
        %v2662 = vpack.c.b16 %v2070, %v2062
        %v2663 = vpack.c.b16 %v2071, %v2063
        %v2664 = vpack.c.b16 %v2072, %v2064
        %v2665 = vpack.c.b16 %v2073, %v2065
        %v2666 = vpack.c.b16 %v2074, %v2066
        %v2667 = vpack.c.b16 %v2075, %v2067
        %v2668 = vpack.c.b16 %v2076, %v2068
        %v2669 = vpack.c.b16 %v2085, %v2077
        %v2670 = vpack.c.b16 %v2086, %v2078
        %v2671 = vpack.c.b16 %v2087, %v2079
        %v2672 = vpack.c.b16 %v2088, %v2080
        %v2673 = vpack.c.b16 %v2089, %v2081
        %v2674 = vpack.c.b16 %v2090, %v2082
        %v2675 = vpack.c.b16 %v2091, %v2083
        %v2676 = vpack.c.b16 %v2092, %v2084
        %v2677 = vpack.c.b16 %v2101, %v2093
        %v2678 = vpack.c.b16 %v2102, %v2094
        %v2679 = vpack.c.b16 %v2103, %v2095
        %v2680 = vpack.c.b16 %v2104, %v2096
        %v2681 = vpack.c.b16 %v2105, %v2097
        %v2682 = vpack.c.b16 %v2106, %v2098
        %v2683 = vpack.c.b16 %v2107, %v2099
        %v2684 = vpack.c.b16 %v2108, %v2100
        %v2685 = vpack.c.b16 %v2117, %v2109
        %v2686 = vpack.c.b16 %v2118, %v2110
        %v2687 = vpack.c.b16 %v2119, %v2111
        %v2688 = vpack.c.b16 %v2120, %v2112
        %v2689 = vpack.c.b16 %v2121, %v2113
        %v2690 = vpack.c.b16 %v2122, %v2114
        %v2691 = vpack.c.b16 %v2123, %v2115
        %v2692 = vpack.c.b16 %v2124, %v2116
        %v2693 = vpack.c.b16 %v2133, %v2125
        %v2694 = vpack.c.b16 %v2134, %v2126
        %v2695 = vpack.c.b16 %v2135, %v2127
        %v2696 = vpack.c.b16 %v2136, %v2128
        %v2697 = vpack.c.b16 %v2137, %v2129
        %v2698 = vpack.c.b16 %v2138, %v2130
        %v2699 = vpack.c.b16 %v2139, %v2131
        %v2700 = vpack.c.b16 %v2140, %v2132
        %v2701 = vpack.c.b16 %v2149, %v2141
        %v2702 = vpack.c.b16 %v2150, %v2142
        %v2703 = vpack.c.b16 %v2151, %v2143
        %v2704 = vpack.c.b16 %v2152, %v2144
        %v2705 = vpack.c.b16 %v2153, %v2145
        %v2706 = vpack.c.b16 %v2154, %v2146
        %v2707 = vpack.c.b16 %v2155, %v2147
        %v2708 = vpack.c.b16 %v2156, %v2148
        %v2709 = vpack.c.b16 %v2165, %v2157
        %v2710 = vpack.c.b16 %v2166, %v2158
        %v2711 = vpack.c.b16 %v2167, %v2159
        %v2712 = vpack.c.b16 %v2168, %v2160
        %v2713 = vpack.c.b16 %v2169, %v2161
        %v2714 = vpack.c.b16 %v2170, %v2162
        %v2715 = vpack.c.b16 %v2171, %v2163
        %v2716 = vpack.c.b16 %v2172, %v2164
        %v2717 = vpack.c.b16 %v2181, %v2173
        %v2718 = vpack.c.b16 %v2182, %v2174
        %v2719 = vpack.c.b16 %v2183, %v2175
        %v2720 = vpack.c.b16 %v2184, %v2176
        %v2721 = vpack.c.b16 %v2185, %v2177
        %v2722 = vpack.c.b16 %v2186, %v2178
        %v2723 = vpack.c.b16 %v2187, %v2179
        %v2724 = vpack.c.b16 %v2188, %v2180
        %v2725 = vpack.c.b16 %v2197, %v2189
        %v2726 = vpack.c.b16 %v2198, %v2190
        %v2727 = vpack.c.b16 %v2199, %v2191
        %v2728 = vpack.c.b16 %v2200, %v2192
        %v2729 = vpack.c.b16 %v2201, %v2193
        %v2730 = vpack.c.b16 %v2202, %v2194
        %v2731 = vpack.c.b16 %v2203, %v2195
        %v2732 = vpack.c.b16 %v2204, %v2196
        %v2733 = vpack.c.b16 %v2213, %v2205
        %v2734 = vpack.c.b16 %v2214, %v2206
        %v2735 = vpack.c.b16 %v2215, %v2207
        %v2736 = vpack.c.b16 %v2216, %v2208
        %v2737 = vpack.c.b16 %v2217, %v2209
        %v2738 = vpack.c.b16 %v2218, %v2210
        %v2739 = vpack.c.b16 %v2219, %v2211
        %v2740 = vpack.c.b16 %v2220, %v2212
        %v2741 = vpack.c.b16 %v2229, %v2221
        %v2742 = vpack.c.b16 %v2230, %v2222
        %v2743 = vpack.c.b16 %v2231, %v2223
        %v2744 = vpack.c.b16 %v2232, %v2224
        %v2745 = vpack.c.b16 %v2233, %v2225
        %v2746 = vpack.c.b16 %v2234, %v2226
        %v2747 = vpack.c.b16 %v2235, %v2227
        %v2748 = vpack.c.b16 %v2236, %v2228
        %v2749 = vpack.c.b16 %v2245, %v2237
        %v2750 = vpack.c.b16 %v2246, %v2238
        %v2751 = vpack.c.b16 %v2247, %v2239
        %v2752 = vpack.c.b16 %v2248, %v2240
        %v2753 = vpack.c.b16 %v2249, %v2241
        %v2754 = vpack.c.b16 %v2250, %v2242
        %v2755 = vpack.c.b16 %v2251, %v2243
        %v2756 = vpack.c.b16 %v2252, %v2244
        %v2757 = vpack.c.b16 %v2261, %v2253
        %v2758 = vpack.c.b16 %v2262, %v2254
        %v2759 = vpack.c.b16 %v2263, %v2255
        %v2760 = vpack.c.b16 %v2264, %v2256
        %v2761 = vpack.c.b16 %v2265, %v2257
        %v2762 = vpack.c.b16 %v2266, %v2258
        %v2763 = vpack.c.b16 %v2267, %v2259
        %v2764 = vpack.c.b16 %v2268, %v2260
        %v2765 = vpack.c.b16 %v2277, %v2269
        %v2766 = vpack.c.b16 %v2278, %v2270
        %v2767 = vpack.c.b16 %v2279, %v2271
        %v2768 = vpack.c.b16 %v2280, %v2272
        %v2769 = vpack.c.b16 %v2281, %v2273
        %v2770 = vpack.c.b16 %v2282, %v2274
        %v2771 = vpack.c.b16 %v2283, %v2275
        %v2772 = vpack.c.b16 %v2284, %v2276
        %v2773 = vpack.c.b16 %v2293, %v2285
        %v2774 = vpack.c.b16 %v2294, %v2286
        %v2775 = vpack.c.b16 %v2295, %v2287
        %v2776 = vpack.c.b16 %v2296, %v2288
        %v2777 = vpack.c.b16 %v2297, %v2289
        %v2778 = vpack.c.b16 %v2298, %v2290
        %v2779 = vpack.c.b16 %v2299, %v2291
        %v2780 = vpack.c.b16 %v2300, %v2292
        %v2781 = vpack.c.b16 %v2309, %v2301
        %v2782 = vpack.c.b16 %v2310, %v2302
        %v2783 = vpack.c.b16 %v2311, %v2303
        %v2784 = vpack.c.b16 %v2312, %v2304
        %v2785 = vpack.c.b16 %v2313, %v2305
        %v2786 = vpack.c.b16 %v2314, %v2306
        %v2787 = vpack.c.b16 %v2315, %v2307
        %v2788 = vpack.c.b16 %v2316, %v2308
        %v2789 = vpack.c.b16 %v2325, %v2317
        %v2790 = vpack.c.b16 %v2326, %v2318
        %v2791 = vpack.c.b16 %v2327, %v2319
        %v2792 = vpack.c.b16 %v2328, %v2320
        %v2793 = vpack.c.b16 %v2329, %v2321
        %v2794 = vpack.c.b16 %v2330, %v2322
        %v2795 = vpack.c.b16 %v2331, %v2323
        %v2796 = vpack.c.b16 %v2332, %v2324
        %v2797 = vpack.c.b16 %v2341, %v2333
        %v2798 = vpack.c.b16 %v2342, %v2334
        %v2799 = vpack.c.b16 %v2343, %v2335
        %v2800 = vpack.c.b16 %v2344, %v2336
        %v2801 = vpack.c.b16 %v2345, %v2337
        %v2802 = vpack.c.b16 %v2346, %v2338
        %v2803 = vpack.c.b16 %v2347, %v2339
        %v2804 = vpack.c.b16 %v2348, %v2340
        %v2805 = vpack.c.b16 %v2357, %v2349
        %v2806 = vpack.c.b16 %v2358, %v2350
        %v2807 = vpack.c.b16 %v2359, %v2351
        %v2808 = vpack.c.b16 %v2360, %v2352
        %v2809 = vpack.c.b16 %v2361, %v2353
        %v2810 = vpack.c.b16 %v2362, %v2354
        %v2811 = vpack.c.b16 %v2363, %v2355
        %v2812 = vpack.c.b16 %v2364, %v2356
        %v2813 = vpack.c.b16 %v2373, %v2365
        %v2814 = vpack.c.b16 %v2374, %v2366
        %v2815 = vpack.c.b16 %v2375, %v2367
        %v2816 = vpack.c.b16 %v2376, %v2368
        %v2817 = vpack.c.b16 %v2377, %v2369
        %v2818 = vpack.c.b16 %v2378, %v2370
        %v2819 = vpack.c.b16 %v2379, %v2371
        %v2820 = vpack.c.b16 %v2380, %v2372
        %v2821 = vpack.c.b16 %v2389, %v2381
        %v2822 = vpack.c.b16 %v2390, %v2382
        %v2823 = vpack.c.b16 %v2391, %v2383
        %v2824 = vpack.c.b16 %v2392, %v2384
        %v2825 = vpack.c.b16 %v2393, %v2385
        %v2826 = vpack.c.b16 %v2394, %v2386
        %v2827 = vpack.c.b16 %v2395, %v2387
        %v2828 = vpack.c.b16 %v2396, %v2388
        %v2829 = vpack.c.b16 %v2405, %v2397
        %v2830 = vpack.c.b16 %v2406, %v2398
        %v2831 = vpack.c.b16 %v2407, %v2399
        %v2832 = vpack.c.b16 %v2408, %v2400
        %v2833 = vpack.c.b16 %v2409, %v2401
        %v2834 = vpack.c.b16 %v2410, %v2402
        %v2835 = vpack.c.b16 %v2411, %v2403
        %v2836 = vpack.c.b16 %v2412, %v2404
        %v2837 = vpack.c.b16 %v2421, %v2413
        %v2838 = vpack.c.b16 %v2422, %v2414
        %v2839 = vpack.c.b16 %v2423, %v2415
        %v2840 = vpack.c.b16 %v2424, %v2416
        %v2841 = vpack.c.b16 %v2425, %v2417
        %v2842 = vpack.c.b16 %v2426, %v2418
        %v2843 = vpack.c.b16 %v2427, %v2419
        %v2844 = vpack.c.b16 %v2428, %v2420
        %v2845 = vpack.c.b16 %v2437, %v2429
        %v2846 = vpack.c.b16 %v2438, %v2430
        %v2847 = vpack.c.b16 %v2439, %v2431
        %v2848 = vpack.c.b16 %v2440, %v2432
        %v2849 = vpack.c.b16 %v2441, %v2433
        %v2850 = vpack.c.b16 %v2442, %v2434
        %v2851 = vpack.c.b16 %v2443, %v2435
        %v2852 = vpack.c.b16 %v2444, %v2436
        %v2853 = vpack.c.b16 %v2453, %v2445
        %v2854 = vpack.c.b16 %v2454, %v2446
        %v2855 = vpack.c.b16 %v2455, %v2447
        %v2856 = vpack.c.b16 %v2456, %v2448
        %v2857 = vpack.c.b16 %v2457, %v2449
        %v2858 = vpack.c.b16 %v2458, %v2450
        %v2859 = vpack.c.b16 %v2459, %v2451
        %v2860 = vpack.c.b16 %v2460, %v2452
        %v2861 = vpack.c.b16 %v2469, %v2461
        %v2862 = vpack.c.b16 %v2470, %v2462
        %v2863 = vpack.c.b16 %v2471, %v2463
        %v2864 = vpack.c.b16 %v2472, %v2464
        %v2865 = vpack.c.b16 %v2473, %v2465
        %v2866 = vpack.c.b16 %v2474, %v2466
        %v2867 = vpack.c.b16 %v2475, %v2467
        %v2868 = vpack.c.b16 %v2476, %v2468
        %vm3261 = vcmask 130048
        %v3263 = vsel %vm3261, %v1294, 0
        %3265 = vmatprep.subr.bf16.mxu0 %v2534
        %3266 = vmatpush1.bf16.msra.mxu0 %v2533
        %3267 = vmatprep.subr.bf16.mxu0 %v2526
        %3268 = vmatpush1.bf16.msra.mxu0 %v2525
        %3269 = vmatprep.subr.bf16.mxu0 %v2518
        %3270 = vmatpush1.bf16.msra.mxu0 %v2517
        %3271 = vmatprep.subr.bf16.mxu0 %v2510
        %3272 = vmatpush1.bf16.msra.mxu0 %v2509
        %3273 = vmatprep.subr.bf16.mxu0 %v2502
        %3274 = vmatpush1.bf16.msra.mxu0 %v2501
        %3275 = vmatprep.subr.bf16.mxu0 %v2494
        %3276 = vmatpush1.bf16.msra.mxu0 %v2493
        %3277 = vmatprep.subr.bf16.mxu0 %v2486
        %3278 = vmatpush1.bf16.msra.mxu0 %v2485
        %3279 = vmatprep.subr.bf16.mxu0 %v2478
        %3280 = vmatpush1.bf16.msra.mxu0 %v2477
        %3281 = vmatprep.subr.bf16.mxu0 %v2598
        %3282 = vmatpush2.bf16.msra.mxu0 %v2597
        %3283 = vmatprep.subr.bf16.mxu0 %v2590
        %3284 = vmatpush2.bf16.msra.mxu0 %v2589
        %3285 = vmatprep.subr.bf16.mxu0 %v2582
        %3286 = vmatpush2.bf16.msra.mxu0 %v2581
        %3287 = vmatprep.subr.bf16.mxu0 %v2574
        %3288 = vmatpush2.bf16.msra.mxu0 %v2573
        %3289 = vmatprep.subr.bf16.mxu0 %v2566
        %3290 = vmatpush2.bf16.msra.mxu0 %v2565
        %3291 = vmatprep.subr.bf16.mxu0 %v2558
        %3292 = vmatpush2.bf16.msra.mxu0 %v2557
        %3293 = vmatprep.subr.bf16.mxu0 %v2550
        %3294 = vmatpush2.bf16.msra.mxu0 %v2549
        %3295 = vmatprep.subr.bf16.mxu0 %v2542
        %3296 = vmatpush2.bf16.msra.mxu0 %v2541
        %3297 = vmatprep.mubr.bf16.mxu0 %v1289
        %3298 = vmatmul.mubr.bf16.gmra.mxu0 %v1288
        %v3299 = vpop.f32.mrf.mxu0
        %v3300 = vadd.f32 0.0, %v3299
        %v3301 = vpop.f32.mrf.mxu0
        %v3302 = vadd.f32 0.0, %v3301
        %v3303 = vpop.f32.mrf.mxu0
        %v3304 = vpop.f32.mrf.mxu0
        %3305 = vdwg.mxu0
        %3306 = vmatprep.subr.bf16.mxu0 %v2662
        %3307 = vmatpush1.bf16.msra.mxu0 %v2661
        %3308 = vmatprep.subr.bf16.mxu0 %v2654
        %3309 = vmatpush1.bf16.msra.mxu0 %v2653
        %3310 = vmatprep.subr.bf16.mxu0 %v2646
        %3311 = vmatpush1.bf16.msra.mxu0 %v2645
        %3312 = vmatprep.subr.bf16.mxu0 %v2638
        %3313 = vmatpush1.bf16.msra.mxu0 %v2637
        %3314 = vmatprep.subr.bf16.mxu0 %v2630
        %3315 = vmatpush1.bf16.msra.mxu0 %v2629
        %3316 = vmatprep.subr.bf16.mxu0 %v2622
        %3317 = vmatpush1.bf16.msra.mxu0 %v2621
        %3318 = vmatprep.subr.bf16.mxu0 %v2614
        %3319 = vmatpush1.bf16.msra.mxu0 %v2613
        %3320 = vmatprep.subr.bf16.mxu0 %v2606
        %3321 = vmatpush1.bf16.msra.mxu0 %v2605
        %3322 = vmatprep.subr.bf16.mxu0 %v2726
        %3323 = vmatpush2.bf16.msra.mxu0 %v2725
        %3324 = vmatprep.subr.bf16.mxu0 %v2718
        %3325 = vmatpush2.bf16.msra.mxu0 %v2717
        %3326 = vmatprep.subr.bf16.mxu0 %v2710
        %3327 = vmatpush2.bf16.msra.mxu0 %v2709
        %3328 = vmatprep.subr.bf16.mxu0 %v2702
        %3329 = vmatpush2.bf16.msra.mxu0 %v2701
        %3330 = vmatprep.subr.bf16.mxu0 %v2694
        %3331 = vmatpush2.bf16.msra.mxu0 %v2693
        %3332 = vmatprep.subr.bf16.mxu0 %v2686
        %3333 = vmatpush2.bf16.msra.mxu0 %v2685
        %3334 = vmatprep.subr.bf16.mxu0 %v2678
        %3335 = vmatpush2.bf16.msra.mxu0 %v2677
        %3336 = vmatprep.subr.bf16.mxu0 %v2670
        %3337 = vmatpush2.bf16.msra.mxu0 %v2669
        %3338 = vmatprep.mubr.bf16.mxu0 %v1291
        %3339 = vmatmul.mubr.bf16.gmra.mxu0 %v1290
        %v3340 = vpop.f32.mrf.mxu0
        %v3341 = vadd.f32 %v3300, %v3340
        %v3342 = vpop.f32.mrf.mxu0
        %v3343 = vadd.f32 %v3302, %v3342
        %v3344 = vpop.f32.mrf.mxu0
        %v3345 = vpop.f32.mrf.mxu0
        %3346 = vdwg.mxu0
        %3347 = vmatprep.subr.bf16.mxu0 %v2790
        %3348 = vmatpush1.bf16.msra.mxu0 %v2789
        %3349 = vmatprep.subr.bf16.mxu0 %v2782
        %3350 = vmatpush1.bf16.msra.mxu0 %v2781
        %3351 = vmatprep.subr.bf16.mxu0 %v2774
        %3352 = vmatpush1.bf16.msra.mxu0 %v2773
        %3353 = vmatprep.subr.bf16.mxu0 %v2766
        %3354 = vmatpush1.bf16.msra.mxu0 %v2765
        %3355 = vmatprep.subr.bf16.mxu0 %v2758
        %3356 = vmatpush1.bf16.msra.mxu0 %v2757
        %3357 = vmatprep.subr.bf16.mxu0 %v2750
        %3358 = vmatpush1.bf16.msra.mxu0 %v2749
        %3359 = vmatprep.subr.bf16.mxu0 %v2742
        %3360 = vmatpush1.bf16.msra.mxu0 %v2741
        %3361 = vmatprep.subr.bf16.mxu0 %v2734
        %3362 = vmatpush1.bf16.msra.mxu0 %v2733
        %3363 = vmatprep.subr.bf16.mxu0 %v2854
        %3364 = vmatpush2.bf16.msra.mxu0 %v2853
        %3365 = vmatprep.subr.bf16.mxu0 %v2846
        %3366 = vmatpush2.bf16.msra.mxu0 %v2845
        %3367 = vmatprep.subr.bf16.mxu0 %v2838
        %3368 = vmatpush2.bf16.msra.mxu0 %v2837
        %3369 = vmatprep.subr.bf16.mxu0 %v2830
        %3370 = vmatpush2.bf16.msra.mxu0 %v2829
        %3371 = vmatprep.subr.bf16.mxu0 %v2822
        %3372 = vmatpush2.bf16.msra.mxu0 %v2821
        %3373 = vmatprep.subr.bf16.mxu0 %v2814
        %3374 = vmatpush2.bf16.msra.mxu0 %v2813
        %3375 = vmatprep.subr.bf16.mxu0 %v2806
        %3376 = vmatpush2.bf16.msra.mxu0 %v2805
        %3377 = vmatprep.subr.bf16.mxu0 %v2798
        %3378 = vmatpush2.bf16.msra.mxu0 %v2797
        %3379 = vmatprep.mubr.bf16.mxu0 %v1293
        %3380 = vmatmul.mubr.bf16.gmra.mxu0 %v1292
        %v3381 = vpop.f32.mrf.mxu0
        %v3382 = vadd.f32 %v3341, %v3381
        %v3383 = vpop.f32.mrf.mxu0
        %v3384 = vadd.f32 %v3343, %v3383
        %v3385 = vpop.f32.mrf.mxu0
        %v3386 = vpop.f32.mrf.mxu0
        %3387 = vdwg.mxu0
        %3388 = vmatprep.subr.bf16.mxu0 0
        %3389 = vmatpush1.bf16.msra.mxu0 0
        %3390 = vmatprep.subr.bf16.mxu0 0
        %3391 = vmatpush1.bf16.msra.mxu0 0
        %3392 = vmatprep.subr.bf16.mxu0 0
        %3393 = vmatpush1.bf16.msra.mxu0 0
        %3394 = vmatprep.subr.bf16.mxu0 0
        %3395 = vmatpush1.bf16.msra.mxu0 0
        %3396 = vmatprep.subr.bf16.mxu0 0
        %3397 = vmatpush1.bf16.msra.mxu0 0
        %3398 = vmatprep.subr.bf16.mxu0 0
        %3399 = vmatpush1.bf16.msra.mxu0 0
        %3400 = vmatprep.subr.bf16.mxu0 0
        %3401 = vmatpush1.bf16.msra.mxu0 0
        %3402 = vmatprep.subr.bf16.mxu0 %v2862
        %3403 = vmatpush1.bf16.msra.mxu0 %v2861
        %3404 = vmatprep.subr.bf16.mxu0 0
        %3405 = vmatpush2.bf16.msra.mxu0 0
        %3406 = vmatprep.subr.bf16.mxu0 0
        %3407 = vmatpush2.bf16.msra.mxu0 0
        %3408 = vmatprep.subr.bf16.mxu0 0
        %3409 = vmatpush2.bf16.msra.mxu0 0
        %3410 = vmatprep.subr.bf16.mxu0 0
        %3411 = vmatpush2.bf16.msra.mxu0 0
        %3412 = vmatprep.subr.bf16.mxu0 0
        %3413 = vmatpush2.bf16.msra.mxu0 0
        %3414 = vmatprep.subr.bf16.mxu0 0
        %3415 = vmatpush2.bf16.msra.mxu0 0
        %3416 = vmatprep.subr.bf16.mxu0 0
        %3417 = vmatpush2.bf16.msra.mxu0 0
        %3418 = vmatprep.subr.bf16.mxu0 0
        %3419 = vmatpush2.bf16.msra.mxu0 0
        %3420 = vmatprep.mubr.bf16.mxu0 0
        %3421 = vmatmul.mubr.bf16.gmra.mxu0 %v3263
        %v3422 = vpop.f32.mrf.mxu0
        %v3423 = vadd.f32 %v3382, %v3422
        %v3424 = vpop.f32.mrf.mxu0
        %v3425 = vadd.f32 %v3384, %v3424
        %v3426 = vpop.f32.mrf.mxu0
        %v3427 = vpop.f32.mrf.mxu0
        %3428 = vdwg.mxu0
        %3429 = vmatprep.subr.bf16.mxu0 %v2536
        %3430 = vmatpush1.bf16.msra.mxu0 %v2535
        %3431 = vmatprep.subr.bf16.mxu0 %v2528
        %3432 = vmatpush1.bf16.msra.mxu0 %v2527
        %3433 = vmatprep.subr.bf16.mxu0 %v2520
        %3434 = vmatpush1.bf16.msra.mxu0 %v2519
        %3435 = vmatprep.subr.bf16.mxu0 %v2512
        %3436 = vmatpush1.bf16.msra.mxu0 %v2511
        %3437 = vmatprep.subr.bf16.mxu0 %v2504
        %3438 = vmatpush1.bf16.msra.mxu0 %v2503
        %3439 = vmatprep.subr.bf16.mxu0 %v2496
        %3440 = vmatpush1.bf16.msra.mxu0 %v2495
        %3441 = vmatprep.subr.bf16.mxu0 %v2488
        %3442 = vmatpush1.bf16.msra.mxu0 %v2487
        %3443 = vmatprep.subr.bf16.mxu0 %v2480
        %3444 = vmatpush1.bf16.msra.mxu0 %v2479
        %3445 = vmatprep.subr.bf16.mxu0 %v2600
        %3446 = vmatpush2.bf16.msra.mxu0 %v2599
        %3447 = vmatprep.subr.bf16.mxu0 %v2592
        %3448 = vmatpush2.bf16.msra.mxu0 %v2591
        %3449 = vmatprep.subr.bf16.mxu0 %v2584
        %3450 = vmatpush2.bf16.msra.mxu0 %v2583
        %3451 = vmatprep.subr.bf16.mxu0 %v2576
        %3452 = vmatpush2.bf16.msra.mxu0 %v2575
        %3453 = vmatprep.subr.bf16.mxu0 %v2568
        %3454 = vmatpush2.bf16.msra.mxu0 %v2567
        %3455 = vmatprep.subr.bf16.mxu0 %v2560
        %3456 = vmatpush2.bf16.msra.mxu0 %v2559
        %3457 = vmatprep.subr.bf16.mxu0 %v2552
        %3458 = vmatpush2.bf16.msra.mxu0 %v2551
        %3459 = vmatprep.subr.bf16.mxu0 %v2544
        %3460 = vmatpush2.bf16.msra.mxu0 %v2543
        %3461 = vmatprep.mubr.bf16.mxu0 %v1289
        %3462 = vmatmul.mubr.bf16.gmra.mxu0 %v1288
        %v3463 = vpop.f32.mrf.mxu0
        %v3464 = vadd.f32 0.0, %v3463
        %v3465 = vpop.f32.mrf.mxu0
        %v3466 = vadd.f32 0.0, %v3465
        %v3467 = vpop.f32.mrf.mxu0
        %v3468 = vpop.f32.mrf.mxu0
        %3469 = vdwg.mxu0
        %3470 = vmatprep.subr.bf16.mxu0 %v2664
        %3471 = vmatpush1.bf16.msra.mxu0 %v2663
        %3472 = vmatprep.subr.bf16.mxu0 %v2656
        %3473 = vmatpush1.bf16.msra.mxu0 %v2655
        %3474 = vmatprep.subr.bf16.mxu0 %v2648
        %3475 = vmatpush1.bf16.msra.mxu0 %v2647
        %3476 = vmatprep.subr.bf16.mxu0 %v2640
        %3477 = vmatpush1.bf16.msra.mxu0 %v2639
        %3478 = vmatprep.subr.bf16.mxu0 %v2632
        %3479 = vmatpush1.bf16.msra.mxu0 %v2631
        %3480 = vmatprep.subr.bf16.mxu0 %v2624
        %3481 = vmatpush1.bf16.msra.mxu0 %v2623
        %3482 = vmatprep.subr.bf16.mxu0 %v2616
        %3483 = vmatpush1.bf16.msra.mxu0 %v2615
        %3484 = vmatprep.subr.bf16.mxu0 %v2608
        %3485 = vmatpush1.bf16.msra.mxu0 %v2607
        %3486 = vmatprep.subr.bf16.mxu0 %v2728
        %3487 = vmatpush2.bf16.msra.mxu0 %v2727
        %3488 = vmatprep.subr.bf16.mxu0 %v2720
        %3489 = vmatpush2.bf16.msra.mxu0 %v2719
        %3490 = vmatprep.subr.bf16.mxu0 %v2712
        %3491 = vmatpush2.bf16.msra.mxu0 %v2711
        %3492 = vmatprep.subr.bf16.mxu0 %v2704
        %3493 = vmatpush2.bf16.msra.mxu0 %v2703
        %3494 = vmatprep.subr.bf16.mxu0 %v2696
        %3495 = vmatpush2.bf16.msra.mxu0 %v2695
        %3496 = vmatprep.subr.bf16.mxu0 %v2688
        %3497 = vmatpush2.bf16.msra.mxu0 %v2687
        %3498 = vmatprep.subr.bf16.mxu0 %v2680
        %3499 = vmatpush2.bf16.msra.mxu0 %v2679
        %3500 = vmatprep.subr.bf16.mxu0 %v2672
        %3501 = vmatpush2.bf16.msra.mxu0 %v2671
        %3502 = vmatprep.mubr.bf16.mxu0 %v1291
        %3503 = vmatmul.mubr.bf16.gmra.mxu0 %v1290
        %v3504 = vpop.f32.mrf.mxu0
        %v3505 = vadd.f32 %v3464, %v3504
        %v3506 = vpop.f32.mrf.mxu0
        %v3507 = vadd.f32 %v3466, %v3506
        %v3508 = vpop.f32.mrf.mxu0
        %v3509 = vpop.f32.mrf.mxu0
        %3510 = vdwg.mxu0
        %3511 = vmatprep.subr.bf16.mxu0 %v2792
        %3512 = vmatpush1.bf16.msra.mxu0 %v2791
        %3513 = vmatprep.subr.bf16.mxu0 %v2784
        %3514 = vmatpush1.bf16.msra.mxu0 %v2783
        %3515 = vmatprep.subr.bf16.mxu0 %v2776
        %3516 = vmatpush1.bf16.msra.mxu0 %v2775
        %3517 = vmatprep.subr.bf16.mxu0 %v2768
        %3518 = vmatpush1.bf16.msra.mxu0 %v2767
        %3519 = vmatprep.subr.bf16.mxu0 %v2760
        %3520 = vmatpush1.bf16.msra.mxu0 %v2759
        %3521 = vmatprep.subr.bf16.mxu0 %v2752
        %3522 = vmatpush1.bf16.msra.mxu0 %v2751
        %3523 = vmatprep.subr.bf16.mxu0 %v2744
        %3524 = vmatpush1.bf16.msra.mxu0 %v2743
        %3525 = vmatprep.subr.bf16.mxu0 %v2736
        %3526 = vmatpush1.bf16.msra.mxu0 %v2735
        %3527 = vmatprep.subr.bf16.mxu0 %v2856
        %3528 = vmatpush2.bf16.msra.mxu0 %v2855
        %3529 = vmatprep.subr.bf16.mxu0 %v2848
        %3530 = vmatpush2.bf16.msra.mxu0 %v2847
        %3531 = vmatprep.subr.bf16.mxu0 %v2840
        %3532 = vmatpush2.bf16.msra.mxu0 %v2839
        %3533 = vmatprep.subr.bf16.mxu0 %v2832
        %3534 = vmatpush2.bf16.msra.mxu0 %v2831
        %3535 = vmatprep.subr.bf16.mxu0 %v2824
        %3536 = vmatpush2.bf16.msra.mxu0 %v2823
        %3537 = vmatprep.subr.bf16.mxu0 %v2816
        %3538 = vmatpush2.bf16.msra.mxu0 %v2815
        %3539 = vmatprep.subr.bf16.mxu0 %v2808
        %3540 = vmatpush2.bf16.msra.mxu0 %v2807
        %3541 = vmatprep.subr.bf16.mxu0 %v2800
        %3542 = vmatpush2.bf16.msra.mxu0 %v2799
        %3543 = vmatprep.mubr.bf16.mxu0 %v1293
        %3544 = vmatmul.mubr.bf16.gmra.mxu0 %v1292
        %v3545 = vpop.f32.mrf.mxu0
        %v3546 = vadd.f32 %v3505, %v3545
        %v3547 = vpop.f32.mrf.mxu0
        %v3548 = vadd.f32 %v3507, %v3547
        %v3549 = vpop.f32.mrf.mxu0
        %v3550 = vpop.f32.mrf.mxu0
        %3551 = vdwg.mxu0
        %3552 = vmatprep.subr.bf16.mxu0 0
        %3553 = vmatpush1.bf16.msra.mxu0 0
        %3554 = vmatprep.subr.bf16.mxu0 0
        %3555 = vmatpush1.bf16.msra.mxu0 0
        %3556 = vmatprep.subr.bf16.mxu0 0
        %3557 = vmatpush1.bf16.msra.mxu0 0
        %3558 = vmatprep.subr.bf16.mxu0 0
        %3559 = vmatpush1.bf16.msra.mxu0 0
        %3560 = vmatprep.subr.bf16.mxu0 0
        %3561 = vmatpush1.bf16.msra.mxu0 0
        %3562 = vmatprep.subr.bf16.mxu0 0
        %3563 = vmatpush1.bf16.msra.mxu0 0
        %3564 = vmatprep.subr.bf16.mxu0 0
        %3565 = vmatpush1.bf16.msra.mxu0 0
        %3566 = vmatprep.subr.bf16.mxu0 %v2864
        %3567 = vmatpush1.bf16.msra.mxu0 %v2863
        %3568 = vmatprep.subr.bf16.mxu0 0
        %3569 = vmatpush2.bf16.msra.mxu0 0
        %3570 = vmatprep.subr.bf16.mxu0 0
        %3571 = vmatpush2.bf16.msra.mxu0 0
        %3572 = vmatprep.subr.bf16.mxu0 0
        %3573 = vmatpush2.bf16.msra.mxu0 0
        %3574 = vmatprep.subr.bf16.mxu0 0
        %3575 = vmatpush2.bf16.msra.mxu0 0
        %3576 = vmatprep.subr.bf16.mxu0 0
        %3577 = vmatpush2.bf16.msra.mxu0 0
        %3578 = vmatprep.subr.bf16.mxu0 0
        %3579 = vmatpush2.bf16.msra.mxu0 0
        %3580 = vmatprep.subr.bf16.mxu0 0
        %3581 = vmatpush2.bf16.msra.mxu0 0
        %3582 = vmatprep.subr.bf16.mxu0 0
        %3583 = vmatpush2.bf16.msra.mxu0 0
        %3584 = vmatprep.mubr.bf16.mxu0 0
        %3585 = vmatmul.mubr.bf16.gmra.mxu0 %v3263
        %v3586 = vpop.f32.mrf.mxu0
        %v3587 = vadd.f32 %v3546, %v3586
        %v3588 = vpop.f32.mrf.mxu0
        %v3589 = vadd.f32 %v3548, %v3588
        %v3590 = vpop.f32.mrf.mxu0
        %v3591 = vpop.f32.mrf.mxu0
        %3592 = vdwg.mxu0
        %3593 = vmatprep.subr.bf16.mxu0 %v2538
        %3594 = vmatpush1.bf16.msra.mxu0 %v2537
        %3595 = vmatprep.subr.bf16.mxu0 %v2530
        %3596 = vmatpush1.bf16.msra.mxu0 %v2529
        %3597 = vmatprep.subr.bf16.mxu0 %v2522
        %3598 = vmatpush1.bf16.msra.mxu0 %v2521
        %3599 = vmatprep.subr.bf16.mxu0 %v2514
        %3600 = vmatpush1.bf16.msra.mxu0 %v2513
        %3601 = vmatprep.subr.bf16.mxu0 %v2506
        %3602 = vmatpush1.bf16.msra.mxu0 %v2505
        %3603 = vmatprep.subr.bf16.mxu0 %v2498
        %3604 = vmatpush1.bf16.msra.mxu0 %v2497
        %3605 = vmatprep.subr.bf16.mxu0 %v2490
        %3606 = vmatpush1.bf16.msra.mxu0 %v2489
        %3607 = vmatprep.subr.bf16.mxu0 %v2482
        %3608 = vmatpush1.bf16.msra.mxu0 %v2481
        %3609 = vmatprep.subr.bf16.mxu0 %v2602
        %3610 = vmatpush2.bf16.msra.mxu0 %v2601
        %3611 = vmatprep.subr.bf16.mxu0 %v2594
        %3612 = vmatpush2.bf16.msra.mxu0 %v2593
        %3613 = vmatprep.subr.bf16.mxu0 %v2586
        %3614 = vmatpush2.bf16.msra.mxu0 %v2585
        %3615 = vmatprep.subr.bf16.mxu0 %v2578
        %3616 = vmatpush2.bf16.msra.mxu0 %v2577
        %3617 = vmatprep.subr.bf16.mxu0 %v2570
        %3618 = vmatpush2.bf16.msra.mxu0 %v2569
        %3619 = vmatprep.subr.bf16.mxu0 %v2562
        %3620 = vmatpush2.bf16.msra.mxu0 %v2561
        %3621 = vmatprep.subr.bf16.mxu0 %v2554
        %3622 = vmatpush2.bf16.msra.mxu0 %v2553
        %3623 = vmatprep.subr.bf16.mxu0 %v2546
        %3624 = vmatpush2.bf16.msra.mxu0 %v2545
        %3625 = vmatprep.mubr.bf16.mxu0 %v1289
        %3626 = vmatmul.mubr.bf16.gmra.mxu0 %v1288
        %v3627 = vpop.f32.mrf.mxu0
        %v3628 = vadd.f32 0.0, %v3627
        %v3629 = vpop.f32.mrf.mxu0
        %v3630 = vadd.f32 0.0, %v3629
        %v3631 = vpop.f32.mrf.mxu0
        %v3632 = vpop.f32.mrf.mxu0
        %3633 = vdwg.mxu0
        %3634 = vmatprep.subr.bf16.mxu0 %v2666
        %3635 = vmatpush1.bf16.msra.mxu0 %v2665
        %3636 = vmatprep.subr.bf16.mxu0 %v2658
        %3637 = vmatpush1.bf16.msra.mxu0 %v2657
        %3638 = vmatprep.subr.bf16.mxu0 %v2650
        %3639 = vmatpush1.bf16.msra.mxu0 %v2649
        %3640 = vmatprep.subr.bf16.mxu0 %v2642
        %3641 = vmatpush1.bf16.msra.mxu0 %v2641
        %3642 = vmatprep.subr.bf16.mxu0 %v2634
        %3643 = vmatpush1.bf16.msra.mxu0 %v2633
        %3644 = vmatprep.subr.bf16.mxu0 %v2626
        %3645 = vmatpush1.bf16.msra.mxu0 %v2625
        %3646 = vmatprep.subr.bf16.mxu0 %v2618
        %3647 = vmatpush1.bf16.msra.mxu0 %v2617
        %3648 = vmatprep.subr.bf16.mxu0 %v2610
        %3649 = vmatpush1.bf16.msra.mxu0 %v2609
        %3650 = vmatprep.subr.bf16.mxu0 %v2730
        %3651 = vmatpush2.bf16.msra.mxu0 %v2729
        %3652 = vmatprep.subr.bf16.mxu0 %v2722
        %3653 = vmatpush2.bf16.msra.mxu0 %v2721
        %3654 = vmatprep.subr.bf16.mxu0 %v2714
        %3655 = vmatpush2.bf16.msra.mxu0 %v2713
        %3656 = vmatprep.subr.bf16.mxu0 %v2706
        %3657 = vmatpush2.bf16.msra.mxu0 %v2705
        %3658 = vmatprep.subr.bf16.mxu0 %v2698
        %3659 = vmatpush2.bf16.msra.mxu0 %v2697
        %3660 = vmatprep.subr.bf16.mxu0 %v2690
        %3661 = vmatpush2.bf16.msra.mxu0 %v2689
        %3662 = vmatprep.subr.bf16.mxu0 %v2682
        %3663 = vmatpush2.bf16.msra.mxu0 %v2681
        %3664 = vmatprep.subr.bf16.mxu0 %v2674
        %3665 = vmatpush2.bf16.msra.mxu0 %v2673
        %3666 = vmatprep.mubr.bf16.mxu0 %v1291
        %3667 = vmatmul.mubr.bf16.gmra.mxu0 %v1290
        %v3668 = vpop.f32.mrf.mxu0
        %v3669 = vadd.f32 %v3628, %v3668
        %v3670 = vpop.f32.mrf.mxu0
        %v3671 = vadd.f32 %v3630, %v3670
        %v3672 = vpop.f32.mrf.mxu0
        %v3673 = vpop.f32.mrf.mxu0
        %3674 = vdwg.mxu0
        %3675 = vmatprep.subr.bf16.mxu0 %v2794
        %3676 = vmatpush1.bf16.msra.mxu0 %v2793
        %3677 = vmatprep.subr.bf16.mxu0 %v2786
        %3678 = vmatpush1.bf16.msra.mxu0 %v2785
        %3679 = vmatprep.subr.bf16.mxu0 %v2778
        %3680 = vmatpush1.bf16.msra.mxu0 %v2777
        %3681 = vmatprep.subr.bf16.mxu0 %v2770
        %3682 = vmatpush1.bf16.msra.mxu0 %v2769
        %3683 = vmatprep.subr.bf16.mxu0 %v2762
        %3684 = vmatpush1.bf16.msra.mxu0 %v2761
        %3685 = vmatprep.subr.bf16.mxu0 %v2754
        %3686 = vmatpush1.bf16.msra.mxu0 %v2753
        %3687 = vmatprep.subr.bf16.mxu0 %v2746
        %3688 = vmatpush1.bf16.msra.mxu0 %v2745
        %3689 = vmatprep.subr.bf16.mxu0 %v2738
        %3690 = vmatpush1.bf16.msra.mxu0 %v2737
        %3691 = vmatprep.subr.bf16.mxu0 %v2858
        %3692 = vmatpush2.bf16.msra.mxu0 %v2857
        %3693 = vmatprep.subr.bf16.mxu0 %v2850
        %3694 = vmatpush2.bf16.msra.mxu0 %v2849
        %3695 = vmatprep.subr.bf16.mxu0 %v2842
        %3696 = vmatpush2.bf16.msra.mxu0 %v2841
        %3697 = vmatprep.subr.bf16.mxu0 %v2834
        %3698 = vmatpush2.bf16.msra.mxu0 %v2833
        %3699 = vmatprep.subr.bf16.mxu0 %v2826
        %3700 = vmatpush2.bf16.msra.mxu0 %v2825
        %3701 = vmatprep.subr.bf16.mxu0 %v2818
        %3702 = vmatpush2.bf16.msra.mxu0 %v2817
        %3703 = vmatprep.subr.bf16.mxu0 %v2810
        %3704 = vmatpush2.bf16.msra.mxu0 %v2809
        %3705 = vmatprep.subr.bf16.mxu0 %v2802
        %3706 = vmatpush2.bf16.msra.mxu0 %v2801
        %3707 = vmatprep.mubr.bf16.mxu0 %v1293
        %3708 = vmatmul.mubr.bf16.gmra.mxu0 %v1292
        %v3709 = vpop.f32.mrf.mxu0
        %v3710 = vadd.f32 %v3669, %v3709
        %v3711 = vpop.f32.mrf.mxu0
        %v3712 = vadd.f32 %v3671, %v3711
        %v3713 = vpop.f32.mrf.mxu0
        %v3714 = vpop.f32.mrf.mxu0
        %3715 = vdwg.mxu0
        %3716 = vmatprep.subr.bf16.mxu0 0
        %3717 = vmatpush1.bf16.msra.mxu0 0
        %3718 = vmatprep.subr.bf16.mxu0 0
        %3719 = vmatpush1.bf16.msra.mxu0 0
        %3720 = vmatprep.subr.bf16.mxu0 0
        %3721 = vmatpush1.bf16.msra.mxu0 0
        %3722 = vmatprep.subr.bf16.mxu0 0
        %3723 = vmatpush1.bf16.msra.mxu0 0
        %3724 = vmatprep.subr.bf16.mxu0 0
        %3725 = vmatpush1.bf16.msra.mxu0 0
        %3726 = vmatprep.subr.bf16.mxu0 0
        %3727 = vmatpush1.bf16.msra.mxu0 0
        %3728 = vmatprep.subr.bf16.mxu0 0
        %3729 = vmatpush1.bf16.msra.mxu0 0
        %3730 = vmatprep.subr.bf16.mxu0 %v2866
        %3731 = vmatpush1.bf16.msra.mxu0 %v2865
        %3732 = vmatprep.subr.bf16.mxu0 0
        %3733 = vmatpush2.bf16.msra.mxu0 0
        %3734 = vmatprep.subr.bf16.mxu0 0
        %3735 = vmatpush2.bf16.msra.mxu0 0
        %3736 = vmatprep.subr.bf16.mxu0 0
        %3737 = vmatpush2.bf16.msra.mxu0 0
        %3738 = vmatprep.subr.bf16.mxu0 0
        %3739 = vmatpush2.bf16.msra.mxu0 0
        %3740 = vmatprep.subr.bf16.mxu0 0
        %3741 = vmatpush2.bf16.msra.mxu0 0
        %3742 = vmatprep.subr.bf16.mxu0 0
        %3743 = vmatpush2.bf16.msra.mxu0 0
        %3744 = vmatprep.subr.bf16.mxu0 0
        %3745 = vmatpush2.bf16.msra.mxu0 0
        %3746 = vmatprep.subr.bf16.mxu0 0
        %3747 = vmatpush2.bf16.msra.mxu0 0
        %3748 = vmatprep.mubr.bf16.mxu0 0
        %3749 = vmatmul.mubr.bf16.gmra.mxu0 %v3263
        %v3750 = vpop.f32.mrf.mxu0
        %v3751 = vadd.f32 %v3710, %v3750
        %v3752 = vpop.f32.mrf.mxu0
        %v3753 = vadd.f32 %v3712, %v3752
        %v3754 = vpop.f32.mrf.mxu0
        %v3755 = vpop.f32.mrf.mxu0
        %3756 = vdwg.mxu0
        %3757 = vmatprep.subr.bf16.mxu0 %v2540
        %3758 = vmatpush1.bf16.msra.mxu0 %v2539
        %3759 = vmatprep.subr.bf16.mxu0 %v2532
        %3760 = vmatpush1.bf16.msra.mxu0 %v2531
        %3761 = vmatprep.subr.bf16.mxu0 %v2524
        %3762 = vmatpush1.bf16.msra.mxu0 %v2523
        %3763 = vmatprep.subr.bf16.mxu0 %v2516
        %3764 = vmatpush1.bf16.msra.mxu0 %v2515
        %3765 = vmatprep.subr.bf16.mxu0 %v2508
        %3766 = vmatpush1.bf16.msra.mxu0 %v2507
        %3767 = vmatprep.subr.bf16.mxu0 %v2500
        %3768 = vmatpush1.bf16.msra.mxu0 %v2499
        %3769 = vmatprep.subr.bf16.mxu0 %v2492
        %3770 = vmatpush1.bf16.msra.mxu0 %v2491
        %3771 = vmatprep.subr.bf16.mxu0 %v2484
        %3772 = vmatpush1.bf16.msra.mxu0 %v2483
        %3773 = vmatprep.subr.bf16.mxu0 %v2604
        %3774 = vmatpush2.bf16.msra.mxu0 %v2603
        %3775 = vmatprep.subr.bf16.mxu0 %v2596
        %3776 = vmatpush2.bf16.msra.mxu0 %v2595
        %3777 = vmatprep.subr.bf16.mxu0 %v2588
        %3778 = vmatpush2.bf16.msra.mxu0 %v2587
        %3779 = vmatprep.subr.bf16.mxu0 %v2580
        %3780 = vmatpush2.bf16.msra.mxu0 %v2579
        %3781 = vmatprep.subr.bf16.mxu0 %v2572
        %3782 = vmatpush2.bf16.msra.mxu0 %v2571
        %3783 = vmatprep.subr.bf16.mxu0 %v2564
        %3784 = vmatpush2.bf16.msra.mxu0 %v2563
        %3785 = vmatprep.subr.bf16.mxu0 %v2556
        %3786 = vmatpush2.bf16.msra.mxu0 %v2555
        %3787 = vmatprep.subr.bf16.mxu0 %v2548
        %3788 = vmatpush2.bf16.msra.mxu0 %v2547
        %3789 = vmatprep.mubr.bf16.mxu0 %v1289
        %3790 = vmatmul.mubr.bf16.gmra.mxu0 %v1288
        %v3791 = vpop.f32.mrf.mxu0
        %v3792 = vadd.f32 0.0, %v3791
        %v3793 = vpop.f32.mrf.mxu0
        %v3794 = vadd.f32 0.0, %v3793
        %v3795 = vpop.f32.mrf.mxu0
        %v3796 = vpop.f32.mrf.mxu0
        %3797 = vdwg.mxu0
        %3798 = vmatprep.subr.bf16.mxu0 %v2668
        %3799 = vmatpush1.bf16.msra.mxu0 %v2667
        %3800 = vmatprep.subr.bf16.mxu0 %v2660
        %3801 = vmatpush1.bf16.msra.mxu0 %v2659
        %3802 = vmatprep.subr.bf16.mxu0 %v2652
        %3803 = vmatpush1.bf16.msra.mxu0 %v2651
        %3804 = vmatprep.subr.bf16.mxu0 %v2644
        %3805 = vmatpush1.bf16.msra.mxu0 %v2643
        %3806 = vmatprep.subr.bf16.mxu0 %v2636
        %3807 = vmatpush1.bf16.msra.mxu0 %v2635
        %3808 = vmatprep.subr.bf16.mxu0 %v2628
        %3809 = vmatpush1.bf16.msra.mxu0 %v2627
        %3810 = vmatprep.subr.bf16.mxu0 %v2620
        %3811 = vmatpush1.bf16.msra.mxu0 %v2619
        %3812 = vmatprep.subr.bf16.mxu0 %v2612
        %3813 = vmatpush1.bf16.msra.mxu0 %v2611
        %3814 = vmatprep.subr.bf16.mxu0 %v2732
        %3815 = vmatpush2.bf16.msra.mxu0 %v2731
        %3816 = vmatprep.subr.bf16.mxu0 %v2724
        %3817 = vmatpush2.bf16.msra.mxu0 %v2723
        %3818 = vmatprep.subr.bf16.mxu0 %v2716
        %3819 = vmatpush2.bf16.msra.mxu0 %v2715
        %3820 = vmatprep.subr.bf16.mxu0 %v2708
        %3821 = vmatpush2.bf16.msra.mxu0 %v2707
        %3822 = vmatprep.subr.bf16.mxu0 %v2700
        %3823 = vmatpush2.bf16.msra.mxu0 %v2699
        %3824 = vmatprep.subr.bf16.mxu0 %v2692
        %3825 = vmatpush2.bf16.msra.mxu0 %v2691
        %3826 = vmatprep.subr.bf16.mxu0 %v2684
        %3827 = vmatpush2.bf16.msra.mxu0 %v2683
        %3828 = vmatprep.subr.bf16.mxu0 %v2676
        %3829 = vmatpush2.bf16.msra.mxu0 %v2675
        %3830 = vmatprep.mubr.bf16.mxu0 %v1291
        %3831 = vmatmul.mubr.bf16.gmra.mxu0 %v1290
        %v3832 = vpop.f32.mrf.mxu0
        %v3833 = vadd.f32 %v3792, %v3832
        %v3834 = vpop.f32.mrf.mxu0
        %v3835 = vadd.f32 %v3794, %v3834
        %v3836 = vpop.f32.mrf.mxu0
        %v3837 = vpop.f32.mrf.mxu0
        %3838 = vdwg.mxu0
        %3839 = vmatprep.subr.bf16.mxu0 %v2796
        %3840 = vmatpush1.bf16.msra.mxu0 %v2795
        %3841 = vmatprep.subr.bf16.mxu0 %v2788
        %3842 = vmatpush1.bf16.msra.mxu0 %v2787
        %3843 = vmatprep.subr.bf16.mxu0 %v2780
        %3844 = vmatpush1.bf16.msra.mxu0 %v2779
        %3845 = vmatprep.subr.bf16.mxu0 %v2772
        %3846 = vmatpush1.bf16.msra.mxu0 %v2771
        %3847 = vmatprep.subr.bf16.mxu0 %v2764
        %3848 = vmatpush1.bf16.msra.mxu0 %v2763
        %3849 = vmatprep.subr.bf16.mxu0 %v2756
        %3850 = vmatpush1.bf16.msra.mxu0 %v2755
        %3851 = vmatprep.subr.bf16.mxu0 %v2748
        %3852 = vmatpush1.bf16.msra.mxu0 %v2747
        %3853 = vmatprep.subr.bf16.mxu0 %v2740
        %3854 = vmatpush1.bf16.msra.mxu0 %v2739
        %3855 = vmatprep.subr.bf16.mxu0 %v2860
        %3856 = vmatpush2.bf16.msra.mxu0 %v2859
        %3857 = vmatprep.subr.bf16.mxu0 %v2852
        %3858 = vmatpush2.bf16.msra.mxu0 %v2851
        %3859 = vmatprep.subr.bf16.mxu0 %v2844
        %3860 = vmatpush2.bf16.msra.mxu0 %v2843
        %3861 = vmatprep.subr.bf16.mxu0 %v2836
        %3862 = vmatpush2.bf16.msra.mxu0 %v2835
        %3863 = vmatprep.subr.bf16.mxu0 %v2828
        %3864 = vmatpush2.bf16.msra.mxu0 %v2827
        %3865 = vmatprep.subr.bf16.mxu0 %v2820
        %3866 = vmatpush2.bf16.msra.mxu0 %v2819
        %3867 = vmatprep.subr.bf16.mxu0 %v2812
        %3868 = vmatpush2.bf16.msra.mxu0 %v2811
        %3869 = vmatprep.subr.bf16.mxu0 %v2804
        %3870 = vmatpush2.bf16.msra.mxu0 %v2803
        %3871 = vmatprep.mubr.bf16.mxu0 %v1293
        %3872 = vmatmul.mubr.bf16.gmra.mxu0 %v1292
        %v3873 = vpop.f32.mrf.mxu0
        %v3874 = vadd.f32 %v3833, %v3873
        %v3875 = vpop.f32.mrf.mxu0
        %v3876 = vadd.f32 %v3835, %v3875
        %v3877 = vpop.f32.mrf.mxu0
        %v3878 = vpop.f32.mrf.mxu0
        %3879 = vdwg.mxu0
        %3880 = vmatprep.subr.bf16.mxu0 0
        %3881 = vmatpush1.bf16.msra.mxu0 0
        %3882 = vmatprep.subr.bf16.mxu0 0
        %3883 = vmatpush1.bf16.msra.mxu0 0
        %3884 = vmatprep.subr.bf16.mxu0 0
        %3885 = vmatpush1.bf16.msra.mxu0 0
        %3886 = vmatprep.subr.bf16.mxu0 0
        %3887 = vmatpush1.bf16.msra.mxu0 0
        %3888 = vmatprep.subr.bf16.mxu0 0
        %3889 = vmatpush1.bf16.msra.mxu0 0
        %3890 = vmatprep.subr.bf16.mxu0 0
        %3891 = vmatpush1.bf16.msra.mxu0 0
        %3892 = vmatprep.subr.bf16.mxu0 0
        %3893 = vmatpush1.bf16.msra.mxu0 0
        %3894 = vmatprep.subr.bf16.mxu0 %v2868
        %3895 = vmatpush1.bf16.msra.mxu0 %v2867
        %3896 = vmatprep.subr.bf16.mxu0 0
        %3897 = vmatpush2.bf16.msra.mxu0 0
        %3898 = vmatprep.subr.bf16.mxu0 0
        %3899 = vmatpush2.bf16.msra.mxu0 0
        %3900 = vmatprep.subr.bf16.mxu0 0
        %3901 = vmatpush2.bf16.msra.mxu0 0
        %3902 = vmatprep.subr.bf16.mxu0 0
        %3903 = vmatpush2.bf16.msra.mxu0 0
        %3904 = vmatprep.subr.bf16.mxu0 0
        %3905 = vmatpush2.bf16.msra.mxu0 0
        %3906 = vmatprep.subr.bf16.mxu0 0
        %3907 = vmatpush2.bf16.msra.mxu0 0
        %3908 = vmatprep.subr.bf16.mxu0 0
        %3909 = vmatpush2.bf16.msra.mxu0 0
        %3910 = vmatprep.subr.bf16.mxu0 0
        %3911 = vmatpush2.bf16.msra.mxu0 0
        %3912 = vmatprep.mubr.bf16.mxu0 0
        %3913 = vmatmul.mubr.bf16.gmra.mxu0 %v3263
        %v3914 = vpop.f32.mrf.mxu0
        %v3915 = vadd.f32 %v3874, %v3914
        %v3916 = vpop.f32.mrf.mxu0
        %v3917 = vadd.f32 %v3876, %v3916
        %v3918 = vpop.f32.mrf.mxu0
        %v3919 = vpop.f32.mrf.mxu0
        %3920 = vdwg.mxu0
        %v3921 = vld [vmem:[%s683] sm:$0xff]
        %v3923 = vlaneseq
        %v3924 = vshrl.u32 %v3923, 7
        %v3925 = vsub.s32 0, %v3924
        %v3926 = vrot.slane %v3921, %v3925
        %v3927 = vlaneseq
        %v3928 = vshrl.u32 %v3927, 7
        %v3929 = vsub.s32 1, %v3928
        %v3930 = vrot.slane %v3921, %v3929
        %v3931 = vlaneseq
        %v3932 = vshrl.u32 %v3931, 7
        %v3933 = vsub.s32 2, %v3932
        %v3934 = vrot.slane %v3921, %v3933
        %v3935 = vlaneseq
        %v3936 = vshrl.u32 %v3935, 7
        %v3937 = vsub.s32 3, %v3936
        %v3938 = vrot.slane %v3921, %v3937
        %v3939 = vlaneseq
        %v3940 = vshrl.u32 %v3939, 7
        %v3941 = vsub.s32 4, %v3940
        %v3942 = vrot.slane %v3921, %v3941
        %v3943 = vlaneseq
        %v3944 = vshrl.u32 %v3943, 7
        %v3945 = vsub.s32 5, %v3944
        %v3946 = vrot.slane %v3921, %v3945
        %v3947 = vlaneseq
        %v3948 = vshrl.u32 %v3947, 7
        %v3949 = vsub.s32 6, %v3948
        %v3950 = vrot.slane %v3921, %v3949
        %v3951 = vlaneseq
        %v3952 = vshrl.u32 %v3951, 7
        %v3953 = vsub.s32 7, %v3952
        %v3954 = vrot.slane %v3921, %v3953
        %v3963 = vmul.f32 %v3423, %v3926
        %v3964 = vmul.f32 %v3425, %v3930
        %v3965 = vmul.f32 %v3587, %v3934
        %v3966 = vmul.f32 %v3589, %v3938
        %v3967 = vmul.f32 %v3751, %v3942
        %v3968 = vmul.f32 %v3753, %v3946
        %v3969 = vmul.f32 %v3915, %v3950
        %v3970 = vmul.f32 %v3917, %v3954
        %v3971 = vld [vmem:[%s692] sm:$0xff]
        %v3973 = vlaneseq
        %v3974 = vshrl.u32 %v3973, 7
        %v3975 = vsub.s32 0, %v3974
        %v3976 = vrot.slane %v3971, %v3975
        %v3977 = vlaneseq
        %v3978 = vshrl.u32 %v3977, 7
        %v3979 = vsub.s32 1, %v3978
        %v3980 = vrot.slane %v3971, %v3979
        %v3981 = vlaneseq
        %v3982 = vshrl.u32 %v3981, 7
        %v3983 = vsub.s32 2, %v3982
        %v3984 = vrot.slane %v3971, %v3983
        %v3985 = vlaneseq
        %v3986 = vshrl.u32 %v3985, 7
        %v3987 = vsub.s32 3, %v3986
        %v3988 = vrot.slane %v3971, %v3987
        %v3989 = vlaneseq
        %v3990 = vshrl.u32 %v3989, 7
        %v3991 = vsub.s32 4, %v3990
        %v3992 = vrot.slane %v3971, %v3991
        %v3993 = vlaneseq
        %v3994 = vshrl.u32 %v3993, 7
        %v3995 = vsub.s32 5, %v3994
        %v3996 = vrot.slane %v3971, %v3995
        %v3997 = vlaneseq
        %v3998 = vshrl.u32 %v3997, 7
        %v3999 = vsub.s32 6, %v3998
        %v4000 = vrot.slane %v3971, %v3999
        %v4001 = vlaneseq
        %v4002 = vshrl.u32 %v4001, 7
        %v4003 = vsub.s32 7, %v4002
        %v4004 = vrot.slane %v3971, %v4003
        %v4013 = vadd.f32 %v3963, %v3976
        %v4014 = vadd.f32 %v3964, %v3980
        %v4015 = vadd.f32 %v3965, %v3984
        %v4016 = vadd.f32 %v3966, %v3988
        %v4017 = vadd.f32 %v3967, %v3992
        %v4018 = vadd.f32 %v3968, %v3996
        %v4019 = vadd.f32 %v3969, %v4000
        %v4020 = vadd.f32 %v3970, %v4004
        %v4021 = vmax.f32 %v4013, 0.0
        %v4022 = vmax.f32 %v4014, 0.0
        %v4023 = vmax.f32 %v4015, 0.0
        %v4024 = vmax.f32 %v4016, 0.0
        %v4025 = vmax.f32 %v4017, 0.0
        %v4026 = vmax.f32 %v4018, 0.0
        %v4027 = vmax.f32 %v4019, 0.0
        %v4028 = vmax.f32 %v4020, 0.0
        %v4029 = vpack.c.bf16 %v4021, %v4021
        %v4030 = vpack.c.bf16 %v4022, %v4022
        %v4031 = vpack.c.bf16 %v4023, %v4023
        %v4032 = vpack.c.bf16 %v4024, %v4024
        %v4033 = vpack.c.bf16 %v4025, %v4025
        %v4034 = vpack.c.bf16 %v4026, %v4026
        %v4035 = vpack.c.bf16 %v4027, %v4027
        %v4036 = vpack.c.bf16 %v4028, %v4028
        %v4037 = vld [vmem:[%s701] sm:$0xff]
        %v4038 = vld [vmem:[%s701 + $0x8] sm:$0xff]
        %v4039 = vld [vmem:[%s701 + $0x10] sm:$0xff]
        %v4040 = vld [vmem:[%s701 + $0x18] sm:$0xff]
        %v4041 = vld [vmem:[%s701 + $0x20] sm:$0xff]
        %v4042 = vld [vmem:[%s701 + $0x28] sm:$0xff]
        %v4043 = vld [vmem:[%s701 + $0x30] sm:$0xff]
        %v4044 = vld [vmem:[%s701 + $0x38] sm:$0xff]
        %v4045 = vld [vmem:[%s701 + $0x40] sm:$0xff]
        %v4046 = vld [vmem:[%s701 + $0x48] sm:$0xff]
        %v4047 = vld [vmem:[%s701 + $0x50] sm:$0xff]
        %v4048 = vld [vmem:[%s701 + $0x58] sm:$0xff]
        %v4049 = vld [vmem:[%s701 + $0x60] sm:$0xff]
        %v4050 = vld [vmem:[%s701 + $0x68] sm:$0xff]
        %v4051 = vld [vmem:[%s701 + $0x70] sm:$0xff]
        %v4052 = vld [vmem:[%s701 + $0x78] sm:$0xff]
        %v4053 = vld [vmem:[%s701 + $0x80] sm:$0xff]
        %v4054 = vld [vmem:[%s701 + $0x88] sm:$0xff]
        %v4055 = vld [vmem:[%s701 + $0x90] sm:$0xff]
        %v4056 = vld [vmem:[%s701 + $0x98] sm:$0xff]
        %v4057 = vld [vmem:[%s701 + $0xa0] sm:$0xff]
        %v4058 = vld [vmem:[%s701 + $0xa8] sm:$0xff]
        %v4059 = vld [vmem:[%s701 + $0xb0] sm:$0xff]
        %v4060 = vld [vmem:[%s701 + $0xb8] sm:$0xff]
        %v4061 = vld [vmem:[%s701 + $0xc0] sm:$0xff]
        %v4062 = vld [vmem:[%s701 + $0xc8] sm:$0xff]
        %v4063 = vld [vmem:[%s701 + $0xd0] sm:$0xff]
        %v4064 = vld [vmem:[%s701 + $0xd8] sm:$0xff]
        %v4065 = vld [vmem:[%s701 + $0xe0] sm:$0xff]
        %v4066 = vld [vmem:[%s701 + $0xe8] sm:$0xff]
        %v4067 = vld [vmem:[%s701 + $0xf0] sm:$0xff]
        %v4068 = vld [vmem:[%s701 + $0xf8] sm:$0xff]
        %v4069 = vld [vmem:[%s701 + $0x100] sm:$0xff]
        %v4070 = vld [vmem:[%s701 + $0x108] sm:$0xff]
        %v4071 = vld [vmem:[%s701 + $0x110] sm:$0xff]
        %v4072 = vld [vmem:[%s701 + $0x118] sm:$0xff]
        %v4073 = vld [vmem:[%s701 + $0x120] sm:$0xff]
        %v4074 = vld [vmem:[%s701 + $0x128] sm:$0xff]
        %v4075 = vld [vmem:[%s701 + $0x130] sm:$0xff]
        %v4076 = vld [vmem:[%s701 + $0x138] sm:$0xff]
        %v4077 = vld [vmem:[%s701 + $0x140] sm:$0xff]
        %v4078 = vld [vmem:[%s701 + $0x148] sm:$0xff]
        %v4079 = vld [vmem:[%s701 + $0x150] sm:$0xff]
        %v4080 = vld [vmem:[%s701 + $0x158] sm:$0xff]
        %v4081 = vld [vmem:[%s701 + $0x160] sm:$0xff]
        %v4082 = vld [vmem:[%s701 + $0x168] sm:$0xff]
        %v4083 = vld [vmem:[%s701 + $0x170] sm:$0xff]
        %v4084 = vld [vmem:[%s701 + $0x178] sm:$0xff]
        %v4085 = vld [vmem:[%s701 + $0x180] sm:$0xff]
        %v4086 = vld [vmem:[%s701 + $0x188] sm:$0xff]
        %v4087 = vld [vmem:[%s701 + $0x190] sm:$0xff]
        %v4088 = vld [vmem:[%s701 + $0x198] sm:$0xff]
        %v4089 = vld [vmem:[%s701 + $0x1a0] sm:$0xff]
        %v4090 = vld [vmem:[%s701 + $0x1a8] sm:$0xff]
        %v4091 = vld [vmem:[%s701 + $0x1b0] sm:$0xff]
        %v4092 = vld [vmem:[%s701 + $0x1b8] sm:$0xff]
        %v4093 = vld [vmem:[%s701 + $0x1c0] sm:$0xff]
        %v4094 = vld [vmem:[%s701 + $0x1c8] sm:$0xff]
        %v4095 = vld [vmem:[%s701 + $0x1d0] sm:$0xff]
        %v4096 = vld [vmem:[%s701 + $0x1d8] sm:$0xff]
        %v4097 = vld [vmem:[%s701 + $0x1e0] sm:$0xff]
        %v4098 = vld [vmem:[%s701 + $0x1e8] sm:$0xff]
        %v4099 = vld [vmem:[%s701 + $0x1f0] sm:$0xff]
        %v4100 = vld [vmem:[%s701 + $0x1f8] sm:$0xff]
        %v4101 = vld [vmem:[%s701 + $0x200] sm:$0xff]
        %v4102 = vld [vmem:[%s701 + $0x208] sm:$0xff]
        %v4103 = vld [vmem:[%s701 + $0x210] sm:$0xff]
        %v4104 = vld [vmem:[%s701 + $0x218] sm:$0xff]
        %v4105 = vld [vmem:[%s701 + $0x220] sm:$0xff]
        %v4106 = vld [vmem:[%s701 + $0x228] sm:$0xff]
        %v4107 = vld [vmem:[%s701 + $0x230] sm:$0xff]
        %v4108 = vld [vmem:[%s701 + $0x238] sm:$0xff]
        %v4109 = vld [vmem:[%s701 + $0x240] sm:$0xff]
        %v4110 = vld [vmem:[%s701 + $0x248] sm:$0xff]
        %v4111 = vld [vmem:[%s701 + $0x250] sm:$0xff]
        %v4112 = vld [vmem:[%s701 + $0x258] sm:$0xff]
        %v4113 = vld [vmem:[%s701 + $0x260] sm:$0xff]
        %v4114 = vld [vmem:[%s701 + $0x268] sm:$0xff]
        %v4115 = vld [vmem:[%s701 + $0x270] sm:$0xff]
        %v4116 = vld [vmem:[%s701 + $0x278] sm:$0xff]
        %v4117 = vld [vmem:[%s701 + $0x280] sm:$0xff]
        %v4118 = vld [vmem:[%s701 + $0x288] sm:$0xff]
        %v4119 = vld [vmem:[%s701 + $0x290] sm:$0xff]
        %v4120 = vld [vmem:[%s701 + $0x298] sm:$0xff]
        %v4121 = vld [vmem:[%s701 + $0x2a0] sm:$0xff]
        %v4122 = vld [vmem:[%s701 + $0x2a8] sm:$0xff]
        %v4123 = vld [vmem:[%s701 + $0x2b0] sm:$0xff]
        %v4124 = vld [vmem:[%s701 + $0x2b8] sm:$0xff]
        %v4125 = vld [vmem:[%s701 + $0x2c0] sm:$0xff]
        %v4126 = vld [vmem:[%s701 + $0x2c8] sm:$0xff]
        %v4127 = vld [vmem:[%s701 + $0x2d0] sm:$0xff]
        %v4128 = vld [vmem:[%s701 + $0x2d8] sm:$0xff]
        %v4129 = vld [vmem:[%s701 + $0x2e0] sm:$0xff]
        %v4130 = vld [vmem:[%s701 + $0x2e8] sm:$0xff]
        %v4131 = vld [vmem:[%s701 + $0x2f0] sm:$0xff]
        %v4132 = vld [vmem:[%s701 + $0x2f8] sm:$0xff]
        %v4133 = vld [vmem:[%s701 + $0x300] sm:$0xff]
        %v4134 = vld [vmem:[%s701 + $0x308] sm:$0xff]
        %v4135 = vld [vmem:[%s701 + $0x310] sm:$0xff]
        %v4136 = vld [vmem:[%s701 + $0x318] sm:$0xff]
        %v4137 = vld [vmem:[%s701 + $0x320] sm:$0xff]
        %v4138 = vld [vmem:[%s701 + $0x328] sm:$0xff]
        %v4139 = vld [vmem:[%s701 + $0x330] sm:$0xff]
        %v4140 = vld [vmem:[%s701 + $0x338] sm:$0xff]
        %v4141 = vld [vmem:[%s701 + $0x340] sm:$0xff]
        %v4142 = vld [vmem:[%s701 + $0x348] sm:$0xff]
        %v4143 = vld [vmem:[%s701 + $0x350] sm:$0xff]
        %v4144 = vld [vmem:[%s701 + $0x358] sm:$0xff]
        %v4145 = vld [vmem:[%s701 + $0x360] sm:$0xff]
        %v4146 = vld [vmem:[%s701 + $0x368] sm:$0xff]
        %v4147 = vld [vmem:[%s701 + $0x370] sm:$0xff]
        %v4148 = vld [vmem:[%s701 + $0x378] sm:$0xff]
        %v4149 = vld [vmem:[%s701 + $0x380] sm:$0xff]
        %v4150 = vld [vmem:[%s701 + $0x388] sm:$0xff]
        %v4151 = vld [vmem:[%s701 + $0x390] sm:$0xff]
        %v4152 = vld [vmem:[%s701 + $0x398] sm:$0xff]
        %v4153 = vld [vmem:[%s701 + $0x3a0] sm:$0xff]
        %v4154 = vld [vmem:[%s701 + $0x3a8] sm:$0xff]
        %v4155 = vld [vmem:[%s701 + $0x3b0] sm:$0xff]
        %v4156 = vld [vmem:[%s701 + $0x3b8] sm:$0xff]
        %v4157 = vld [vmem:[%s701 + $0x3c0] sm:$0xff]
        %v4158 = vld [vmem:[%s701 + $0x3c8] sm:$0xff]
        %v4159 = vld [vmem:[%s701 + $0x3d0] sm:$0xff]
        %v4160 = vld [vmem:[%s701 + $0x3d8] sm:$0xff]
        %v4161 = vld [vmem:[%s701 + $0x3e0] sm:$0xff]
        %v4162 = vld [vmem:[%s701 + $0x3e8] sm:$0xff]
        %v4163 = vld [vmem:[%s701 + $0x3f0] sm:$0xff]
        %v4164 = vld [vmem:[%s701 + $0x3f8] sm:$0xff]
        %v4165 = vld [vmem:[%s701 + $0x400] sm:$0xff]
        %v4166 = vld [vmem:[%s701 + $0x408] sm:$0xff]
        %v4167 = vld [vmem:[%s701 + $0x410] sm:$0xff]
        %v4168 = vld [vmem:[%s701 + $0x418] sm:$0xff]
        %v4169 = vld [vmem:[%s701 + $0x420] sm:$0xff]
        %v4170 = vld [vmem:[%s701 + $0x428] sm:$0xff]
        %v4171 = vld [vmem:[%s701 + $0x430] sm:$0xff]
        %v4172 = vld [vmem:[%s701 + $0x438] sm:$0xff]
        %v4173 = vld [vmem:[%s701 + $0x440] sm:$0xff]
        %v4174 = vld [vmem:[%s701 + $0x448] sm:$0xff]
        %v4175 = vld [vmem:[%s701 + $0x450] sm:$0xff]
        %v4176 = vld [vmem:[%s701 + $0x458] sm:$0xff]
        %v4177 = vld [vmem:[%s701 + $0x460] sm:$0xff]
        %v4178 = vld [vmem:[%s701 + $0x468] sm:$0xff]
        %v4179 = vld [vmem:[%s701 + $0x470] sm:$0xff]
        %v4180 = vld [vmem:[%s701 + $0x478] sm:$0xff]
        %v4181 = vld [vmem:[%s701 + $0x480] sm:$0xff]
        %v4182 = vld [vmem:[%s701 + $0x488] sm:$0xff]
        %v4183 = vld [vmem:[%s701 + $0x490] sm:$0xff]
        %v4184 = vld [vmem:[%s701 + $0x498] sm:$0xff]
        %v4185 = vld [vmem:[%s701 + $0x4a0] sm:$0xff]
        %v4186 = vld [vmem:[%s701 + $0x4a8] sm:$0xff]
        %v4187 = vld [vmem:[%s701 + $0x4b0] sm:$0xff]
        %v4188 = vld [vmem:[%s701 + $0x4b8] sm:$0xff]
        %v4189 = vld [vmem:[%s701 + $0x4c0] sm:$0xff]
        %v4190 = vld [vmem:[%s701 + $0x4c8] sm:$0xff]
        %v4191 = vld [vmem:[%s701 + $0x4d0] sm:$0xff]
        %v4192 = vld [vmem:[%s701 + $0x4d8] sm:$0xff]
        %v4193 = vld [vmem:[%s701 + $0x4e0] sm:$0xff]
        %v4194 = vld [vmem:[%s701 + $0x4e8] sm:$0xff]
        %v4195 = vld [vmem:[%s701 + $0x4f0] sm:$0xff]
        %v4196 = vld [vmem:[%s701 + $0x4f8] sm:$0xff]
        %v4197 = vld [vmem:[%s701 + $0x500] sm:$0xff]
        %v4198 = vld [vmem:[%s701 + $0x508] sm:$0xff]
        %v4199 = vld [vmem:[%s701 + $0x510] sm:$0xff]
        %v4200 = vld [vmem:[%s701 + $0x518] sm:$0xff]
        %v4201 = vld [vmem:[%s701 + $0x520] sm:$0xff]
        %v4202 = vld [vmem:[%s701 + $0x528] sm:$0xff]
        %v4203 = vld [vmem:[%s701 + $0x530] sm:$0xff]
        %v4204 = vld [vmem:[%s701 + $0x538] sm:$0xff]
        %v4205 = vld [vmem:[%s701 + $0x540] sm:$0xff]
        %v4206 = vld [vmem:[%s701 + $0x548] sm:$0xff]
        %v4207 = vld [vmem:[%s701 + $0x550] sm:$0xff]
        %v4208 = vld [vmem:[%s701 + $0x558] sm:$0xff]
        %v4209 = vld [vmem:[%s701 + $0x560] sm:$0xff]
        %v4210 = vld [vmem:[%s701 + $0x568] sm:$0xff]
        %v4211 = vld [vmem:[%s701 + $0x570] sm:$0xff]
        %v4212 = vld [vmem:[%s701 + $0x578] sm:$0xff]
        %v4213 = vld [vmem:[%s701 + $0x580] sm:$0xff]
        %v4214 = vld [vmem:[%s701 + $0x588] sm:$0xff]
        %v4215 = vld [vmem:[%s701 + $0x590] sm:$0xff]
        %v4216 = vld [vmem:[%s701 + $0x598] sm:$0xff]
        %v4217 = vld [vmem:[%s701 + $0x5a0] sm:$0xff]
        %v4218 = vld [vmem:[%s701 + $0x5a8] sm:$0xff]
        %v4219 = vld [vmem:[%s701 + $0x5b0] sm:$0xff]
        %v4220 = vld [vmem:[%s701 + $0x5b8] sm:$0xff]
        %v4221 = vld [vmem:[%s701 + $0x5c0] sm:$0xff]
        %v4222 = vld [vmem:[%s701 + $0x5c8] sm:$0xff]
        %v4223 = vld [vmem:[%s701 + $0x5d0] sm:$0xff]
        %v4224 = vld [vmem:[%s701 + $0x5d8] sm:$0xff]
        %v4225 = vld [vmem:[%s701 + $0x5e0] sm:$0xff]
        %v4226 = vld [vmem:[%s701 + $0x5e8] sm:$0xff]
        %v4227 = vld [vmem:[%s701 + $0x5f0] sm:$0xff]
        %v4228 = vld [vmem:[%s701 + $0x5f8] sm:$0xff]
        %v4229 = vld [vmem:[%s701 + $0x600] sm:$0xff]
        %v4230 = vld [vmem:[%s701 + $0x608] sm:$0xff]
        %v4231 = vld [vmem:[%s701 + $0x610] sm:$0xff]
        %v4232 = vld [vmem:[%s701 + $0x618] sm:$0xff]
        %v4233 = vld [vmem:[%s701 + $0x620] sm:$0xff]
        %v4234 = vld [vmem:[%s701 + $0x628] sm:$0xff]
        %v4235 = vld [vmem:[%s701 + $0x630] sm:$0xff]
        %v4236 = vld [vmem:[%s701 + $0x638] sm:$0xff]
        %v4237 = vld [vmem:[%s701 + $0x640] sm:$0xff]
        %v4238 = vld [vmem:[%s701 + $0x648] sm:$0xff]
        %v4239 = vld [vmem:[%s701 + $0x650] sm:$0xff]
        %v4240 = vld [vmem:[%s701 + $0x658] sm:$0xff]
        %v4241 = vld [vmem:[%s701 + $0x660] sm:$0xff]
        %v4242 = vld [vmem:[%s701 + $0x668] sm:$0xff]
        %v4243 = vld [vmem:[%s701 + $0x670] sm:$0xff]
        %v4244 = vld [vmem:[%s701 + $0x678] sm:$0xff]
        %v4245 = vld [vmem:[%s701 + $0x680] sm:$0xff]
        %v4246 = vld [vmem:[%s701 + $0x688] sm:$0xff]
        %v4247 = vld [vmem:[%s701 + $0x690] sm:$0xff]
        %v4248 = vld [vmem:[%s701 + $0x698] sm:$0xff]
        %v4249 = vld [vmem:[%s701 + $0x6a0] sm:$0xff]
        %v4250 = vld [vmem:[%s701 + $0x6a8] sm:$0xff]
        %v4251 = vld [vmem:[%s701 + $0x6b0] sm:$0xff]
        %v4252 = vld [vmem:[%s701 + $0x6b8] sm:$0xff]
        %v4253 = vld [vmem:[%s701 + $0x6c0] sm:$0xff]
        %v4254 = vld [vmem:[%s701 + $0x6c8] sm:$0xff]
        %v4255 = vld [vmem:[%s701 + $0x6d0] sm:$0xff]
        %v4256 = vld [vmem:[%s701 + $0x6d8] sm:$0xff]
        %v4257 = vld [vmem:[%s701 + $0x6e0] sm:$0xff]
        %v4258 = vld [vmem:[%s701 + $0x6e8] sm:$0xff]
        %v4259 = vld [vmem:[%s701 + $0x6f0] sm:$0xff]
        %v4260 = vld [vmem:[%s701 + $0x6f8] sm:$0xff]
        %v4261 = vld [vmem:[%s701 + $0x700] sm:$0xff]
        %v4262 = vld [vmem:[%s701 + $0x708] sm:$0xff]
        %v4263 = vld [vmem:[%s701 + $0x710] sm:$0xff]
        %v4264 = vld [vmem:[%s701 + $0x718] sm:$0xff]
        %v4265 = vld [vmem:[%s701 + $0x720] sm:$0xff]
        %v4266 = vld [vmem:[%s701 + $0x728] sm:$0xff]
        %v4267 = vld [vmem:[%s701 + $0x730] sm:$0xff]
        %v4268 = vld [vmem:[%s701 + $0x738] sm:$0xff]
        %v4269 = vld [vmem:[%s701 + $0x740] sm:$0xff]
        %v4270 = vld [vmem:[%s701 + $0x748] sm:$0xff]
        %v4271 = vld [vmem:[%s701 + $0x750] sm:$0xff]
        %v4272 = vld [vmem:[%s701 + $0x758] sm:$0xff]
        %v4273 = vld [vmem:[%s701 + $0x760] sm:$0xff]
        %v4274 = vld [vmem:[%s701 + $0x768] sm:$0xff]
        %v4275 = vld [vmem:[%s701 + $0x770] sm:$0xff]
        %v4276 = vld [vmem:[%s701 + $0x778] sm:$0xff]
        %v4277 = vld [vmem:[%s701 + $0x780] sm:$0xff]
        %v4278 = vld [vmem:[%s701 + $0x788] sm:$0xff]
        %v4279 = vld [vmem:[%s701 + $0x790] sm:$0xff]
        %v4280 = vld [vmem:[%s701 + $0x798] sm:$0xff]
        %v4281 = vld [vmem:[%s701 + $0x7a0] sm:$0xff]
        %v4282 = vld [vmem:[%s701 + $0x7a8] sm:$0xff]
        %v4283 = vld [vmem:[%s701 + $0x7b0] sm:$0xff]
        %v4284 = vld [vmem:[%s701 + $0x7b8] sm:$0xff]
        %v4285 = vld [vmem:[%s701 + $0x7c0] sm:$0xff]
        %v4286 = vld [vmem:[%s701 + $0x7c8] sm:$0xff]
        %v4287 = vld [vmem:[%s701 + $0x7d0] sm:$0xff]
        %v4288 = vld [vmem:[%s701 + $0x7d8] sm:$0xff]
        %v4289 = vld [vmem:[%s701 + $0x7e0] sm:$0xff]
        %v4290 = vld [vmem:[%s701 + $0x7e8] sm:$0xff]
        %v4291 = vld [vmem:[%s701 + $0x7f0] sm:$0xff]
        %v4292 = vld [vmem:[%s701 + $0x7f8] sm:$0xff]
        %v4293 = vld [vmem:[%s701 + $0x800] sm:$0xff]
        %v4294 = vld [vmem:[%s701 + $0x808] sm:$0xff]
        %v4295 = vld [vmem:[%s701 + $0x810] sm:$0xff]
        %v4296 = vld [vmem:[%s701 + $0x818] sm:$0xff]
        %v4297 = vld [vmem:[%s701 + $0x820] sm:$0xff]
        %v4298 = vld [vmem:[%s701 + $0x828] sm:$0xff]
        %v4299 = vld [vmem:[%s701 + $0x830] sm:$0xff]
        %v4300 = vld [vmem:[%s701 + $0x838] sm:$0xff]
        %v4301 = vld [vmem:[%s701 + $0x840] sm:$0xff]
        %v4302 = vld [vmem:[%s701 + $0x848] sm:$0xff]
        %v4303 = vld [vmem:[%s701 + $0x850] sm:$0xff]
        %v4304 = vld [vmem:[%s701 + $0x858] sm:$0xff]
        %v4305 = vld [vmem:[%s701 + $0x860] sm:$0xff]
        %v4306 = vld [vmem:[%s701 + $0x868] sm:$0xff]
        %v4307 = vld [vmem:[%s701 + $0x870] sm:$0xff]
        %v4308 = vld [vmem:[%s701 + $0x878] sm:$0xff]
        %v4309 = vld [vmem:[%s701 + $0x880] sm:$0xff]
        %v4310 = vld [vmem:[%s701 + $0x888] sm:$0xff]
        %v4311 = vld [vmem:[%s701 + $0x890] sm:$0xff]
        %v4312 = vld [vmem:[%s701 + $0x898] sm:$0xff]
        %v4313 = vld [vmem:[%s701 + $0x8a0] sm:$0xff]
        %v4314 = vld [vmem:[%s701 + $0x8a8] sm:$0xff]
        %v4315 = vld [vmem:[%s701 + $0x8b0] sm:$0xff]
        %v4316 = vld [vmem:[%s701 + $0x8b8] sm:$0xff]
        %v4317 = vld [vmem:[%s701 + $0x8c0] sm:$0xff]
        %v4318 = vld [vmem:[%s701 + $0x8c8] sm:$0xff]
        %v4319 = vld [vmem:[%s701 + $0x8d0] sm:$0xff]
        %v4320 = vld [vmem:[%s701 + $0x8d8] sm:$0xff]
        %v4321 = vld [vmem:[%s701 + $0x8e0] sm:$0xff]
        %v4322 = vld [vmem:[%s701 + $0x8e8] sm:$0xff]
        %v4323 = vld [vmem:[%s701 + $0x8f0] sm:$0xff]
        %v4324 = vld [vmem:[%s701 + $0x8f8] sm:$0xff]
        %v4325 = vld [vmem:[%s701 + $0x900] sm:$0xff]
        %v4326 = vld [vmem:[%s701 + $0x908] sm:$0xff]
        %v4327 = vld [vmem:[%s701 + $0x910] sm:$0xff]
        %v4328 = vld [vmem:[%s701 + $0x918] sm:$0xff]
        %v4329 = vld [vmem:[%s701 + $0x920] sm:$0xff]
        %v4330 = vld [vmem:[%s701 + $0x928] sm:$0xff]
        %v4331 = vld [vmem:[%s701 + $0x930] sm:$0xff]
        %v4332 = vld [vmem:[%s701 + $0x938] sm:$0xff]
        %v4333 = vld [vmem:[%s701 + $0x940] sm:$0xff]
        %v4334 = vld [vmem:[%s701 + $0x948] sm:$0xff]
        %v4335 = vld [vmem:[%s701 + $0x950] sm:$0xff]
        %v4336 = vld [vmem:[%s701 + $0x958] sm:$0xff]
        %v4337 = vld [vmem:[%s701 + $0x960] sm:$0xff]
        %v4338 = vld [vmem:[%s701 + $0x968] sm:$0xff]
        %v4339 = vld [vmem:[%s701 + $0x970] sm:$0xff]
        %v4340 = vld [vmem:[%s701 + $0x978] sm:$0xff]
        %v4341 = vld [vmem:[%s701 + $0x980] sm:$0xff]
        %v4342 = vld [vmem:[%s701 + $0x988] sm:$0xff]
        %v4343 = vld [vmem:[%s701 + $0x990] sm:$0xff]
        %v4344 = vld [vmem:[%s701 + $0x998] sm:$0xff]
        %v4345 = vld [vmem:[%s701 + $0x9a0] sm:$0xff]
        %v4346 = vld [vmem:[%s701 + $0x9a8] sm:$0xff]
        %v4347 = vld [vmem:[%s701 + $0x9b0] sm:$0xff]
        %v4348 = vld [vmem:[%s701 + $0x9b8] sm:$0xff]
        %v4349 = vld [vmem:[%s701 + $0x9c0] sm:$0xff]
        %v4350 = vld [vmem:[%s701 + $0x9c8] sm:$0xff]
        %v4351 = vld [vmem:[%s701 + $0x9d0] sm:$0xff]
        %v4352 = vld [vmem:[%s701 + $0x9d8] sm:$0xff]
        %v4353 = vld [vmem:[%s701 + $0x9e0] sm:$0xff]
        %v4354 = vld [vmem:[%s701 + $0x9e8] sm:$0xff]
        %v4355 = vld [vmem:[%s701 + $0x9f0] sm:$0xff]
        %v4356 = vld [vmem:[%s701 + $0x9f8] sm:$0xff]
        %v4357 = vld [vmem:[%s701 + $0xa00] sm:$0xff]
        %v4358 = vld [vmem:[%s701 + $0xa08] sm:$0xff]
        %v4359 = vld [vmem:[%s701 + $0xa10] sm:$0xff]
        %v4360 = vld [vmem:[%s701 + $0xa18] sm:$0xff]
        %v4361 = vld [vmem:[%s701 + $0xa20] sm:$0xff]
        %v4362 = vld [vmem:[%s701 + $0xa28] sm:$0xff]
        %v4363 = vld [vmem:[%s701 + $0xa30] sm:$0xff]
        %v4364 = vld [vmem:[%s701 + $0xa38] sm:$0xff]
        %v4365 = vld [vmem:[%s701 + $0xa40] sm:$0xff]
        %v4366 = vld [vmem:[%s701 + $0xa48] sm:$0xff]
        %v4367 = vld [vmem:[%s701 + $0xa50] sm:$0xff]
        %v4368 = vld [vmem:[%s701 + $0xa58] sm:$0xff]
        %v4369 = vld [vmem:[%s701 + $0xa60] sm:$0xff]
        %v4370 = vld [vmem:[%s701 + $0xa68] sm:$0xff]
        %v4371 = vld [vmem:[%s701 + $0xa70] sm:$0xff]
        %v4372 = vld [vmem:[%s701 + $0xa78] sm:$0xff]
        %v4373 = vld [vmem:[%s701 + $0xa80] sm:$0xff]
        %v4374 = vld [vmem:[%s701 + $0xa88] sm:$0xff]
        %v4375 = vld [vmem:[%s701 + $0xa90] sm:$0xff]
        %v4376 = vld [vmem:[%s701 + $0xa98] sm:$0xff]
        %v4377 = vld [vmem:[%s701 + $0xaa0] sm:$0xff]
        %v4378 = vld [vmem:[%s701 + $0xaa8] sm:$0xff]
        %v4379 = vld [vmem:[%s701 + $0xab0] sm:$0xff]
        %v4380 = vld [vmem:[%s701 + $0xab8] sm:$0xff]
        %v4381 = vld [vmem:[%s701 + $0xac0] sm:$0xff]
        %v4382 = vld [vmem:[%s701 + $0xac8] sm:$0xff]
        %v4383 = vld [vmem:[%s701 + $0xad0] sm:$0xff]
        %v4384 = vld [vmem:[%s701 + $0xad8] sm:$0xff]
        %v4385 = vld [vmem:[%s701 + $0xae0] sm:$0xff]
        %v4386 = vld [vmem:[%s701 + $0xae8] sm:$0xff]
        %v4387 = vld [vmem:[%s701 + $0xaf0] sm:$0xff]
        %v4388 = vld [vmem:[%s701 + $0xaf8] sm:$0xff]
        %v4389 = vld [vmem:[%s701 + $0xb00] sm:$0xff]
        %v4390 = vld [vmem:[%s701 + $0xb08] sm:$0xff]
        %v4391 = vld [vmem:[%s701 + $0xb10] sm:$0xff]
        %v4392 = vld [vmem:[%s701 + $0xb18] sm:$0xff]
        %v4393 = vld [vmem:[%s701 + $0xb20] sm:$0xff]
        %v4394 = vld [vmem:[%s701 + $0xb28] sm:$0xff]
        %v4395 = vld [vmem:[%s701 + $0xb30] sm:$0xff]
        %v4396 = vld [vmem:[%s701 + $0xb38] sm:$0xff]
        %v4397 = vld [vmem:[%s701 + $0xb40] sm:$0xff]
        %v4398 = vld [vmem:[%s701 + $0xb48] sm:$0xff]
        %v4399 = vld [vmem:[%s701 + $0xb50] sm:$0xff]
        %v4400 = vld [vmem:[%s701 + $0xb58] sm:$0xff]
        %v4401 = vld [vmem:[%s701 + $0xb60] sm:$0xff]
        %v4402 = vld [vmem:[%s701 + $0xb68] sm:$0xff]
        %v4403 = vld [vmem:[%s701 + $0xb70] sm:$0xff]
        %v4404 = vld [vmem:[%s701 + $0xb78] sm:$0xff]
        %v4405 = vld [vmem:[%s701 + $0xb80] sm:$0xff]
        %v4406 = vld [vmem:[%s701 + $0xb88] sm:$0xff]
        %v4407 = vld [vmem:[%s701 + $0xb90] sm:$0xff]
        %v4408 = vld [vmem:[%s701 + $0xb98] sm:$0xff]
        %v4409 = vld [vmem:[%s701 + $0xba0] sm:$0xff]
        %v4410 = vld [vmem:[%s701 + $0xba8] sm:$0xff]
        %v4411 = vld [vmem:[%s701 + $0xbb0] sm:$0xff]
        %v4412 = vld [vmem:[%s701 + $0xbb8] sm:$0xff]
        %v4413 = vld [vmem:[%s701 + $0xbc0] sm:$0xff]
        %v4414 = vld [vmem:[%s701 + $0xbc8] sm:$0xff]
        %v4415 = vld [vmem:[%s701 + $0xbd0] sm:$0xff]
        %v4416 = vld [vmem:[%s701 + $0xbd8] sm:$0xff]
        %v4417 = vld [vmem:[%s701 + $0xbe0] sm:$0xff]
        %v4418 = vld [vmem:[%s701 + $0xbe8] sm:$0xff]
        %v4419 = vld [vmem:[%s701 + $0xbf0] sm:$0xff]
        %v4420 = vld [vmem:[%s701 + $0xbf8] sm:$0xff]
        %v4421 = vld [vmem:[%s701 + $0xc00] sm:$0xff]
        %v4422 = vld [vmem:[%s701 + $0xc08] sm:$0xff]
        %v4423 = vld [vmem:[%s701 + $0xc10] sm:$0xff]
        %v4424 = vld [vmem:[%s701 + $0xc18] sm:$0xff]
        %v4425 = vld [vmem:[%s701 + $0xc20] sm:$0xff]
        %v4426 = vld [vmem:[%s701 + $0xc28] sm:$0xff]
        %v4427 = vld [vmem:[%s701 + $0xc30] sm:$0xff]
        %v4428 = vld [vmem:[%s701 + $0xc38] sm:$0xff]
        %v4429 = vld [vmem:[%s701 + $0xc40] sm:$0xff]
        %v4430 = vld [vmem:[%s701 + $0xc48] sm:$0xff]
        %v4431 = vld [vmem:[%s701 + $0xc50] sm:$0xff]
        %v4432 = vld [vmem:[%s701 + $0xc58] sm:$0xff]
        %v4433 = vld [vmem:[%s701 + $0xc60] sm:$0xff]
        %v4434 = vld [vmem:[%s701 + $0xc68] sm:$0xff]
        %v4435 = vld [vmem:[%s701 + $0xc70] sm:$0xff]
        %v4436 = vld [vmem:[%s701 + $0xc78] sm:$0xff]
        %v4437 = vld [vmem:[%s701 + $0xc80] sm:$0xff]
        %v4438 = vld [vmem:[%s701 + $0xc88] sm:$0xff]
        %v4439 = vld [vmem:[%s701 + $0xc90] sm:$0xff]
        %v4440 = vld [vmem:[%s701 + $0xc98] sm:$0xff]
        %v4441 = vld [vmem:[%s701 + $0xca0] sm:$0xff]
        %v4442 = vld [vmem:[%s701 + $0xca8] sm:$0xff]
        %v4443 = vld [vmem:[%s701 + $0xcb0] sm:$0xff]
        %v4444 = vld [vmem:[%s701 + $0xcb8] sm:$0xff]
        %v4445 = vld [vmem:[%s701 + $0xcc0] sm:$0xff]
        %v4446 = vld [vmem:[%s701 + $0xcc8] sm:$0xff]
        %v4447 = vld [vmem:[%s701 + $0xcd0] sm:$0xff]
        %v4448 = vld [vmem:[%s701 + $0xcd8] sm:$0xff]
        %v4449 = vld [vmem:[%s701 + $0xce0] sm:$0xff]
        %v4450 = vld [vmem:[%s701 + $0xce8] sm:$0xff]
        %v4451 = vld [vmem:[%s701 + $0xcf0] sm:$0xff]
        %v4452 = vld [vmem:[%s701 + $0xcf8] sm:$0xff]
        %v4453 = vld [vmem:[%s701 + $0xd00] sm:$0xff]
        %v4454 = vld [vmem:[%s701 + $0xd08] sm:$0xff]
        %v4455 = vld [vmem:[%s701 + $0xd10] sm:$0xff]
        %v4456 = vld [vmem:[%s701 + $0xd18] sm:$0xff]
        %v4457 = vld [vmem:[%s701 + $0xd20] sm:$0xff]
        %v4458 = vld [vmem:[%s701 + $0xd28] sm:$0xff]
        %v4459 = vld [vmem:[%s701 + $0xd30] sm:$0xff]
        %v4460 = vld [vmem:[%s701 + $0xd38] sm:$0xff]
        %v4461 = vld [vmem:[%s701 + $0xd40] sm:$0xff]
        %v4462 = vld [vmem:[%s701 + $0xd48] sm:$0xff]
        %v4463 = vld [vmem:[%s701 + $0xd50] sm:$0xff]
        %v4464 = vld [vmem:[%s701 + $0xd58] sm:$0xff]
        %v4465 = vld [vmem:[%s701 + $0xd60] sm:$0xff]
        %v4466 = vld [vmem:[%s701 + $0xd68] sm:$0xff]
        %v4467 = vld [vmem:[%s701 + $0xd70] sm:$0xff]
        %v4468 = vld [vmem:[%s701 + $0xd78] sm:$0xff]
        %v4469 = vld [vmem:[%s701 + $0xd80] sm:$0xff]
        %v4470 = vld [vmem:[%s701 + $0xd88] sm:$0xff]
        %v4471 = vld [vmem:[%s701 + $0xd90] sm:$0xff]
        %v4472 = vld [vmem:[%s701 + $0xd98] sm:$0xff]
        %v4473 = vld [vmem:[%s701 + $0xda0] sm:$0xff]
        %v4474 = vld [vmem:[%s701 + $0xda8] sm:$0xff]
        %v4475 = vld [vmem:[%s701 + $0xdb0] sm:$0xff]
        %v4476 = vld [vmem:[%s701 + $0xdb8] sm:$0xff]
        %v4477 = vld [vmem:[%s701 + $0xdc0] sm:$0xff]
        %v4478 = vld [vmem:[%s701 + $0xdc8] sm:$0xff]
        %v4479 = vld [vmem:[%s701 + $0xdd0] sm:$0xff]
        %v4480 = vld [vmem:[%s701 + $0xdd8] sm:$0xff]
        %v4481 = vld [vmem:[%s701 + $0xde0] sm:$0xff]
        %v4482 = vld [vmem:[%s701 + $0xde8] sm:$0xff]
        %v4483 = vld [vmem:[%s701 + $0xdf0] sm:$0xff]
        %v4484 = vld [vmem:[%s701 + $0xdf8] sm:$0xff]
        %v4485 = vld [vmem:[%s701 + $0xe00] sm:$0xff]
        %v4486 = vld [vmem:[%s701 + $0xe08] sm:$0xff]
        %v4487 = vld [vmem:[%s701 + $0xe10] sm:$0xff]
        %v4488 = vld [vmem:[%s701 + $0xe18] sm:$0xff]
        %v4489 = vld [vmem:[%s701 + $0xe20] sm:$0xff]
        %v4490 = vld [vmem:[%s701 + $0xe28] sm:$0xff]
        %v4491 = vld [vmem:[%s701 + $0xe30] sm:$0xff]
        %v4492 = vld [vmem:[%s701 + $0xe38] sm:$0xff]
        %v4493 = vld [vmem:[%s701 + $0xe40] sm:$0xff]
        %v4494 = vld [vmem:[%s701 + $0xe48] sm:$0xff]
        %v4495 = vld [vmem:[%s701 + $0xe50] sm:$0xff]
        %v4496 = vld [vmem:[%s701 + $0xe58] sm:$0xff]
        %v4497 = vld [vmem:[%s701 + $0xe60] sm:$0xff]
        %v4498 = vld [vmem:[%s701 + $0xe68] sm:$0xff]
        %v4499 = vld [vmem:[%s701 + $0xe70] sm:$0xff]
        %v4500 = vld [vmem:[%s701 + $0xe78] sm:$0xff]
        %v4501 = vld [vmem:[%s701 + $0xe80] sm:$0xff]
        %v4502 = vld [vmem:[%s701 + $0xe88] sm:$0xff]
        %v4503 = vld [vmem:[%s701 + $0xe90] sm:$0xff]
        %v4504 = vld [vmem:[%s701 + $0xe98] sm:$0xff]
        %v4505 = vld [vmem:[%s701 + $0xea0] sm:$0xff]
        %v4506 = vld [vmem:[%s701 + $0xea8] sm:$0xff]
        %v4507 = vld [vmem:[%s701 + $0xeb0] sm:$0xff]
        %v4508 = vld [vmem:[%s701 + $0xeb8] sm:$0xff]
        %v4509 = vld [vmem:[%s701 + $0xec0] sm:$0xff]
        %v4510 = vld [vmem:[%s701 + $0xec8] sm:$0xff]
        %v4511 = vld [vmem:[%s701 + $0xed0] sm:$0xff]
        %v4512 = vld [vmem:[%s701 + $0xed8] sm:$0xff]
        %v4513 = vld [vmem:[%s701 + $0xee0] sm:$0xff]
        %v4514 = vld [vmem:[%s701 + $0xee8] sm:$0xff]
        %v4515 = vld [vmem:[%s701 + $0xef0] sm:$0xff]
        %v4516 = vld [vmem:[%s701 + $0xef8] sm:$0xff]
        %v4517 = vld [vmem:[%s701 + $0xf00] sm:$0xff]
        %v4518 = vld [vmem:[%s701 + $0xf08] sm:$0xff]
        %v4519 = vld [vmem:[%s701 + $0xf10] sm:$0xff]
        %v4520 = vld [vmem:[%s701 + $0xf18] sm:$0xff]
        %v4521 = vld [vmem:[%s701 + $0xf20] sm:$0xff]
        %v4522 = vld [vmem:[%s701 + $0xf28] sm:$0xff]
        %v4523 = vld [vmem:[%s701 + $0xf30] sm:$0xff]
        %v4524 = vld [vmem:[%s701 + $0xf38] sm:$0xff]
        %v4525 = vld [vmem:[%s701 + $0xf40] sm:$0xff]
        %v4526 = vld [vmem:[%s701 + $0xf48] sm:$0xff]
        %v4527 = vld [vmem:[%s701 + $0xf50] sm:$0xff]
        %v4528 = vld [vmem:[%s701 + $0xf58] sm:$0xff]
        %v4529 = vld [vmem:[%s701 + $0xf60] sm:$0xff]
        %v4530 = vld [vmem:[%s701 + $0xf68] sm:$0xff]
        %v4531 = vld [vmem:[%s701 + $0xf70] sm:$0xff]
        %v4532 = vld [vmem:[%s701 + $0xf78] sm:$0xff]
        %v4533 = vld [vmem:[%s701 + $0xf80] sm:$0xff]
        %v4534 = vld [vmem:[%s701 + $0xf88] sm:$0xff]
        %v4535 = vld [vmem:[%s701 + $0xf90] sm:$0xff]
        %v4536 = vld [vmem:[%s701 + $0xf98] sm:$0xff]
        %v4537 = vld [vmem:[%s701 + $0xfa0] sm:$0xff]
        %v4538 = vld [vmem:[%s701 + $0xfa8] sm:$0xff]
        %v4539 = vld [vmem:[%s701 + $0xfb0] sm:$0xff]
        %v4540 = vld [vmem:[%s701 + $0xfb8] sm:$0xff]
        %v4541 = vld [vmem:[%s701 + $0xfc0] sm:$0xff]
        %v4542 = vld [vmem:[%s701 + $0xfc8] sm:$0xff]
        %v4543 = vld [vmem:[%s701 + $0xfd0] sm:$0xff]
        %v4544 = vld [vmem:[%s701 + $0xfd8] sm:$0xff]
        %v4545 = vld [vmem:[%s701 + $0xfe0] sm:$0xff]
        %v4546 = vld [vmem:[%s701 + $0xfe8] sm:$0xff]
        %v4547 = vld [vmem:[%s701 + $0xff0] sm:$0xff]
        %v4548 = vld [vmem:[%s701 + $0xff8] sm:$0xff]
        %v5061 = vunpack.c.l.b16 %v4037
        %v5062 = vunpack.c.h.b16 %v4037
        %v5063 = vunpack.c.l.b16 %v4038
        %v5064 = vunpack.c.h.b16 %v4038
        %v5065 = vunpack.c.l.b16 %v4039
        %v5066 = vunpack.c.h.b16 %v4039
        %v5067 = vunpack.c.l.b16 %v4040
        %v5068 = vunpack.c.h.b16 %v4040
        %v5069 = vunpack.c.l.b16 %v4041
        %v5070 = vunpack.c.h.b16 %v4041
        %v5071 = vunpack.c.l.b16 %v4042
        %v5072 = vunpack.c.h.b16 %v4042
        %v5073 = vunpack.c.l.b16 %v4043
        %v5074 = vunpack.c.h.b16 %v4043
        %v5075 = vunpack.c.l.b16 %v4044
        %v5076 = vunpack.c.h.b16 %v4044
        %v5077 = vunpack.c.l.b16 %v4045
        %v5078 = vunpack.c.h.b16 %v4045
        %v5079 = vunpack.c.l.b16 %v4046
        %v5080 = vunpack.c.h.b16 %v4046
        %v5081 = vunpack.c.l.b16 %v4047
        %v5082 = vunpack.c.h.b16 %v4047
        %v5083 = vunpack.c.l.b16 %v4048
        %v5084 = vunpack.c.h.b16 %v4048
        %v5085 = vunpack.c.l.b16 %v4049
        %v5086 = vunpack.c.h.b16 %v4049
        %v5087 = vunpack.c.l.b16 %v4050
        %v5088 = vunpack.c.h.b16 %v4050
        %v5089 = vunpack.c.l.b16 %v4051
        %v5090 = vunpack.c.h.b16 %v4051
        %v5091 = vunpack.c.l.b16 %v4052
        %v5092 = vunpack.c.h.b16 %v4052
        %v5093 = vunpack.c.l.b16 %v4053
        %v5094 = vunpack.c.h.b16 %v4053
        %v5095 = vunpack.c.l.b16 %v4054
        %v5096 = vunpack.c.h.b16 %v4054
        %v5097 = vunpack.c.l.b16 %v4055
        %v5098 = vunpack.c.h.b16 %v4055
        %v5099 = vunpack.c.l.b16 %v4056
        %v5100 = vunpack.c.h.b16 %v4056
        %v5101 = vunpack.c.l.b16 %v4057
        %v5102 = vunpack.c.h.b16 %v4057
        %v5103 = vunpack.c.l.b16 %v4058
        %v5104 = vunpack.c.h.b16 %v4058
        %v5105 = vunpack.c.l.b16 %v4059
        %v5106 = vunpack.c.h.b16 %v4059
        %v5107 = vunpack.c.l.b16 %v4060
        %v5108 = vunpack.c.h.b16 %v4060
        %v5109 = vunpack.c.l.b16 %v4061
        %v5110 = vunpack.c.h.b16 %v4061
        %v5111 = vunpack.c.l.b16 %v4062
        %v5112 = vunpack.c.h.b16 %v4062
        %v5113 = vunpack.c.l.b16 %v4063
        %v5114 = vunpack.c.h.b16 %v4063
        %v5115 = vunpack.c.l.b16 %v4064
        %v5116 = vunpack.c.h.b16 %v4064
        %v5117 = vunpack.c.l.b16 %v4065
        %v5118 = vunpack.c.h.b16 %v4065
        %v5119 = vunpack.c.l.b16 %v4066
        %v5120 = vunpack.c.h.b16 %v4066
        %v5121 = vunpack.c.l.b16 %v4067
        %v5122 = vunpack.c.h.b16 %v4067
        %v5123 = vunpack.c.l.b16 %v4068
        %v5124 = vunpack.c.h.b16 %v4068
        %v5125 = vunpack.c.l.b16 %v4069
        %v5126 = vunpack.c.h.b16 %v4069
        %v5127 = vunpack.c.l.b16 %v4070
        %v5128 = vunpack.c.h.b16 %v4070
        %v5129 = vunpack.c.l.b16 %v4071
        %v5130 = vunpack.c.h.b16 %v4071
        %v5131 = vunpack.c.l.b16 %v4072
        %v5132 = vunpack.c.h.b16 %v4072
        %v5133 = vunpack.c.l.b16 %v4073
        %v5134 = vunpack.c.h.b16 %v4073
        %v5135 = vunpack.c.l.b16 %v4074
        %v5136 = vunpack.c.h.b16 %v4074
        %v5137 = vunpack.c.l.b16 %v4075
        %v5138 = vunpack.c.h.b16 %v4075
        %v5139 = vunpack.c.l.b16 %v4076
        %v5140 = vunpack.c.h.b16 %v4076
        %v5141 = vunpack.c.l.b16 %v4077
        %v5142 = vunpack.c.h.b16 %v4077
        %v5143 = vunpack.c.l.b16 %v4078
        %v5144 = vunpack.c.h.b16 %v4078
        %v5145 = vunpack.c.l.b16 %v4079
        %v5146 = vunpack.c.h.b16 %v4079
        %v5147 = vunpack.c.l.b16 %v4080
        %v5148 = vunpack.c.h.b16 %v4080
        %v5149 = vunpack.c.l.b16 %v4081
        %v5150 = vunpack.c.h.b16 %v4081
        %v5151 = vunpack.c.l.b16 %v4082
        %v5152 = vunpack.c.h.b16 %v4082
        %v5153 = vunpack.c.l.b16 %v4083
        %v5154 = vunpack.c.h.b16 %v4083
        %v5155 = vunpack.c.l.b16 %v4084
        %v5156 = vunpack.c.h.b16 %v4084
        %v5157 = vunpack.c.l.b16 %v4085
        %v5158 = vunpack.c.h.b16 %v4085
        %v5159 = vunpack.c.l.b16 %v4086
        %v5160 = vunpack.c.h.b16 %v4086
        %v5161 = vunpack.c.l.b16 %v4087
        %v5162 = vunpack.c.h.b16 %v4087
        %v5163 = vunpack.c.l.b16 %v4088
        %v5164 = vunpack.c.h.b16 %v4088
        %v5165 = vunpack.c.l.b16 %v4089
        %v5166 = vunpack.c.h.b16 %v4089
        %v5167 = vunpack.c.l.b16 %v4090
        %v5168 = vunpack.c.h.b16 %v4090
        %v5169 = vunpack.c.l.b16 %v4091
        %v5170 = vunpack.c.h.b16 %v4091
        %v5171 = vunpack.c.l.b16 %v4092
        %v5172 = vunpack.c.h.b16 %v4092
        %v5173 = vunpack.c.l.b16 %v4093
        %v5174 = vunpack.c.h.b16 %v4093
        %v5175 = vunpack.c.l.b16 %v4094
        %v5176 = vunpack.c.h.b16 %v4094
        %v5177 = vunpack.c.l.b16 %v4095
        %v5178 = vunpack.c.h.b16 %v4095
        %v5179 = vunpack.c.l.b16 %v4096
        %v5180 = vunpack.c.h.b16 %v4096
        %v5181 = vunpack.c.l.b16 %v4097
        %v5182 = vunpack.c.h.b16 %v4097
        %v5183 = vunpack.c.l.b16 %v4098
        %v5184 = vunpack.c.h.b16 %v4098
        %v5185 = vunpack.c.l.b16 %v4099
        %v5186 = vunpack.c.h.b16 %v4099
        %v5187 = vunpack.c.l.b16 %v4100
        %v5188 = vunpack.c.h.b16 %v4100
        %v5189 = vunpack.c.l.b16 %v4101
        %v5190 = vunpack.c.h.b16 %v4101
        %v5191 = vunpack.c.l.b16 %v4102
        %v5192 = vunpack.c.h.b16 %v4102
        %v5193 = vunpack.c.l.b16 %v4103
        %v5194 = vunpack.c.h.b16 %v4103
        %v5195 = vunpack.c.l.b16 %v4104
        %v5196 = vunpack.c.h.b16 %v4104
        %v5197 = vunpack.c.l.b16 %v4105
        %v5198 = vunpack.c.h.b16 %v4105
        %v5199 = vunpack.c.l.b16 %v4106
        %v5200 = vunpack.c.h.b16 %v4106
        %v5201 = vunpack.c.l.b16 %v4107
        %v5202 = vunpack.c.h.b16 %v4107
        %v5203 = vunpack.c.l.b16 %v4108
        %v5204 = vunpack.c.h.b16 %v4108
        %v5205 = vunpack.c.l.b16 %v4109
        %v5206 = vunpack.c.h.b16 %v4109
        %v5207 = vunpack.c.l.b16 %v4110
        %v5208 = vunpack.c.h.b16 %v4110
        %v5209 = vunpack.c.l.b16 %v4111
        %v5210 = vunpack.c.h.b16 %v4111
        %v5211 = vunpack.c.l.b16 %v4112
        %v5212 = vunpack.c.h.b16 %v4112
        %v5213 = vunpack.c.l.b16 %v4113
        %v5214 = vunpack.c.h.b16 %v4113
        %v5215 = vunpack.c.l.b16 %v4114
        %v5216 = vunpack.c.h.b16 %v4114
        %v5217 = vunpack.c.l.b16 %v4115
        %v5218 = vunpack.c.h.b16 %v4115
        %v5219 = vunpack.c.l.b16 %v4116
        %v5220 = vunpack.c.h.b16 %v4116
        %v5221 = vunpack.c.l.b16 %v4117
        %v5222 = vunpack.c.h.b16 %v4117
        %v5223 = vunpack.c.l.b16 %v4118
        %v5224 = vunpack.c.h.b16 %v4118
        %v5225 = vunpack.c.l.b16 %v4119
        %v5226 = vunpack.c.h.b16 %v4119
        %v5227 = vunpack.c.l.b16 %v4120
        %v5228 = vunpack.c.h.b16 %v4120
        %v5229 = vunpack.c.l.b16 %v4121
        %v5230 = vunpack.c.h.b16 %v4121
        %v5231 = vunpack.c.l.b16 %v4122
        %v5232 = vunpack.c.h.b16 %v4122
        %v5233 = vunpack.c.l.b16 %v4123
        %v5234 = vunpack.c.h.b16 %v4123
        %v5235 = vunpack.c.l.b16 %v4124
        %v5236 = vunpack.c.h.b16 %v4124
        %v5237 = vunpack.c.l.b16 %v4125
        %v5238 = vunpack.c.h.b16 %v4125
        %v5239 = vunpack.c.l.b16 %v4126
        %v5240 = vunpack.c.h.b16 %v4126
        %v5241 = vunpack.c.l.b16 %v4127
        %v5242 = vunpack.c.h.b16 %v4127
        %v5243 = vunpack.c.l.b16 %v4128
        %v5244 = vunpack.c.h.b16 %v4128
        %v5245 = vunpack.c.l.b16 %v4129
        %v5246 = vunpack.c.h.b16 %v4129
        %v5247 = vunpack.c.l.b16 %v4130
        %v5248 = vunpack.c.h.b16 %v4130
        %v5249 = vunpack.c.l.b16 %v4131
        %v5250 = vunpack.c.h.b16 %v4131
        %v5251 = vunpack.c.l.b16 %v4132
        %v5252 = vunpack.c.h.b16 %v4132
        %v5253 = vunpack.c.l.b16 %v4133
        %v5254 = vunpack.c.h.b16 %v4133
        %v5255 = vunpack.c.l.b16 %v4134
        %v5256 = vunpack.c.h.b16 %v4134
        %v5257 = vunpack.c.l.b16 %v4135
        %v5258 = vunpack.c.h.b16 %v4135
        %v5259 = vunpack.c.l.b16 %v4136
        %v5260 = vunpack.c.h.b16 %v4136
        %v5261 = vunpack.c.l.b16 %v4137
        %v5262 = vunpack.c.h.b16 %v4137
        %v5263 = vunpack.c.l.b16 %v4138
        %v5264 = vunpack.c.h.b16 %v4138
        %v5265 = vunpack.c.l.b16 %v4139
        %v5266 = vunpack.c.h.b16 %v4139
        %v5267 = vunpack.c.l.b16 %v4140
        %v5268 = vunpack.c.h.b16 %v4140
        %v5269 = vunpack.c.l.b16 %v4141
        %v5270 = vunpack.c.h.b16 %v4141
        %v5271 = vunpack.c.l.b16 %v4142
        %v5272 = vunpack.c.h.b16 %v4142
        %v5273 = vunpack.c.l.b16 %v4143
        %v5274 = vunpack.c.h.b16 %v4143
        %v5275 = vunpack.c.l.b16 %v4144
        %v5276 = vunpack.c.h.b16 %v4144
        %v5277 = vunpack.c.l.b16 %v4145
        %v5278 = vunpack.c.h.b16 %v4145
        %v5279 = vunpack.c.l.b16 %v4146
        %v5280 = vunpack.c.h.b16 %v4146
        %v5281 = vunpack.c.l.b16 %v4147
        %v5282 = vunpack.c.h.b16 %v4147
        %v5283 = vunpack.c.l.b16 %v4148
        %v5284 = vunpack.c.h.b16 %v4148
        %v5285 = vunpack.c.l.b16 %v4149
        %v5286 = vunpack.c.h.b16 %v4149
        %v5287 = vunpack.c.l.b16 %v4150
        %v5288 = vunpack.c.h.b16 %v4150
        %v5289 = vunpack.c.l.b16 %v4151
        %v5290 = vunpack.c.h.b16 %v4151
        %v5291 = vunpack.c.l.b16 %v4152
        %v5292 = vunpack.c.h.b16 %v4152
        %v5293 = vunpack.c.l.b16 %v4153
        %v5294 = vunpack.c.h.b16 %v4153
        %v5295 = vunpack.c.l.b16 %v4154
        %v5296 = vunpack.c.h.b16 %v4154
        %v5297 = vunpack.c.l.b16 %v4155
        %v5298 = vunpack.c.h.b16 %v4155
        %v5299 = vunpack.c.l.b16 %v4156
        %v5300 = vunpack.c.h.b16 %v4156
        %v5301 = vunpack.c.l.b16 %v4157
        %v5302 = vunpack.c.h.b16 %v4157
        %v5303 = vunpack.c.l.b16 %v4158
        %v5304 = vunpack.c.h.b16 %v4158
        %v5305 = vunpack.c.l.b16 %v4159
        %v5306 = vunpack.c.h.b16 %v4159
        %v5307 = vunpack.c.l.b16 %v4160
        %v5308 = vunpack.c.h.b16 %v4160
        %v5309 = vunpack.c.l.b16 %v4161
        %v5310 = vunpack.c.h.b16 %v4161
        %v5311 = vunpack.c.l.b16 %v4162
        %v5312 = vunpack.c.h.b16 %v4162
        %v5313 = vunpack.c.l.b16 %v4163
        %v5314 = vunpack.c.h.b16 %v4163
        %v5315 = vunpack.c.l.b16 %v4164
        %v5316 = vunpack.c.h.b16 %v4164
        %v5317 = vunpack.c.l.b16 %v4165
        %v5318 = vunpack.c.h.b16 %v4165
        %v5319 = vunpack.c.l.b16 %v4166
        %v5320 = vunpack.c.h.b16 %v4166
        %v5321 = vunpack.c.l.b16 %v4167
        %v5322 = vunpack.c.h.b16 %v4167
        %v5323 = vunpack.c.l.b16 %v4168
        %v5324 = vunpack.c.h.b16 %v4168
        %v5325 = vunpack.c.l.b16 %v4169
        %v5326 = vunpack.c.h.b16 %v4169
        %v5327 = vunpack.c.l.b16 %v4170
        %v5328 = vunpack.c.h.b16 %v4170
        %v5329 = vunpack.c.l.b16 %v4171
        %v5330 = vunpack.c.h.b16 %v4171
        %v5331 = vunpack.c.l.b16 %v4172
        %v5332 = vunpack.c.h.b16 %v4172
        %v5333 = vunpack.c.l.b16 %v4173
        %v5334 = vunpack.c.h.b16 %v4173
        %v5335 = vunpack.c.l.b16 %v4174
        %v5336 = vunpack.c.h.b16 %v4174
        %v5337 = vunpack.c.l.b16 %v4175
        %v5338 = vunpack.c.h.b16 %v4175
        %v5339 = vunpack.c.l.b16 %v4176
        %v5340 = vunpack.c.h.b16 %v4176
        %v5341 = vunpack.c.l.b16 %v4177
        %v5342 = vunpack.c.h.b16 %v4177
        %v5343 = vunpack.c.l.b16 %v4178
        %v5344 = vunpack.c.h.b16 %v4178
        %v5345 = vunpack.c.l.b16 %v4179
        %v5346 = vunpack.c.h.b16 %v4179
        %v5347 = vunpack.c.l.b16 %v4180
        %v5348 = vunpack.c.h.b16 %v4180
        %v5349 = vunpack.c.l.b16 %v4181
        %v5350 = vunpack.c.h.b16 %v4181
        %v5351 = vunpack.c.l.b16 %v4182
        %v5352 = vunpack.c.h.b16 %v4182
        %v5353 = vunpack.c.l.b16 %v4183
        %v5354 = vunpack.c.h.b16 %v4183
        %v5355 = vunpack.c.l.b16 %v4184
        %v5356 = vunpack.c.h.b16 %v4184
        %v5357 = vunpack.c.l.b16 %v4185
        %v5358 = vunpack.c.h.b16 %v4185
        %v5359 = vunpack.c.l.b16 %v4186
        %v5360 = vunpack.c.h.b16 %v4186
        %v5361 = vunpack.c.l.b16 %v4187
        %v5362 = vunpack.c.h.b16 %v4187
        %v5363 = vunpack.c.l.b16 %v4188
        %v5364 = vunpack.c.h.b16 %v4188
        %v5365 = vunpack.c.l.b16 %v4189
        %v5366 = vunpack.c.h.b16 %v4189
        %v5367 = vunpack.c.l.b16 %v4190
        %v5368 = vunpack.c.h.b16 %v4190
        %v5369 = vunpack.c.l.b16 %v4191
        %v5370 = vunpack.c.h.b16 %v4191
        %v5371 = vunpack.c.l.b16 %v4192
        %v5372 = vunpack.c.h.b16 %v4192
        %v5373 = vunpack.c.l.b16 %v4193
        %v5374 = vunpack.c.h.b16 %v4193
        %v5375 = vunpack.c.l.b16 %v4194
        %v5376 = vunpack.c.h.b16 %v4194
        %v5377 = vunpack.c.l.b16 %v4195
        %v5378 = vunpack.c.h.b16 %v4195
        %v5379 = vunpack.c.l.b16 %v4196
        %v5380 = vunpack.c.h.b16 %v4196
        %v5381 = vunpack.c.l.b16 %v4197
        %v5382 = vunpack.c.h.b16 %v4197
        %v5383 = vunpack.c.l.b16 %v4198
        %v5384 = vunpack.c.h.b16 %v4198
        %v5385 = vunpack.c.l.b16 %v4199
        %v5386 = vunpack.c.h.b16 %v4199
        %v5387 = vunpack.c.l.b16 %v4200
        %v5388 = vunpack.c.h.b16 %v4200
        %v5389 = vunpack.c.l.b16 %v4201
        %v5390 = vunpack.c.h.b16 %v4201
        %v5391 = vunpack.c.l.b16 %v4202
        %v5392 = vunpack.c.h.b16 %v4202
        %v5393 = vunpack.c.l.b16 %v4203
        %v5394 = vunpack.c.h.b16 %v4203
        %v5395 = vunpack.c.l.b16 %v4204
        %v5396 = vunpack.c.h.b16 %v4204
        %v5397 = vunpack.c.l.b16 %v4205
        %v5398 = vunpack.c.h.b16 %v4205
        %v5399 = vunpack.c.l.b16 %v4206
        %v5400 = vunpack.c.h.b16 %v4206
        %v5401 = vunpack.c.l.b16 %v4207
        %v5402 = vunpack.c.h.b16 %v4207
        %v5403 = vunpack.c.l.b16 %v4208
        %v5404 = vunpack.c.h.b16 %v4208
        %v5405 = vunpack.c.l.b16 %v4209
        %v5406 = vunpack.c.h.b16 %v4209
        %v5407 = vunpack.c.l.b16 %v4210
        %v5408 = vunpack.c.h.b16 %v4210
        %v5409 = vunpack.c.l.b16 %v4211
        %v5410 = vunpack.c.h.b16 %v4211
        %v5411 = vunpack.c.l.b16 %v4212
        %v5412 = vunpack.c.h.b16 %v4212
        %v5413 = vunpack.c.l.b16 %v4213
        %v5414 = vunpack.c.h.b16 %v4213
        %v5415 = vunpack.c.l.b16 %v4214
        %v5416 = vunpack.c.h.b16 %v4214
        %v5417 = vunpack.c.l.b16 %v4215
        %v5418 = vunpack.c.h.b16 %v4215
        %v5419 = vunpack.c.l.b16 %v4216
        %v5420 = vunpack.c.h.b16 %v4216
        %v5421 = vunpack.c.l.b16 %v4217
        %v5422 = vunpack.c.h.b16 %v4217
        %v5423 = vunpack.c.l.b16 %v4218
        %v5424 = vunpack.c.h.b16 %v4218
        %v5425 = vunpack.c.l.b16 %v4219
        %v5426 = vunpack.c.h.b16 %v4219
        %v5427 = vunpack.c.l.b16 %v4220
        %v5428 = vunpack.c.h.b16 %v4220
        %v5429 = vunpack.c.l.b16 %v4221
        %v5430 = vunpack.c.h.b16 %v4221
        %v5431 = vunpack.c.l.b16 %v4222
        %v5432 = vunpack.c.h.b16 %v4222
        %v5433 = vunpack.c.l.b16 %v4223
        %v5434 = vunpack.c.h.b16 %v4223
        %v5435 = vunpack.c.l.b16 %v4224
        %v5436 = vunpack.c.h.b16 %v4224
        %v5437 = vunpack.c.l.b16 %v4225
        %v5438 = vunpack.c.h.b16 %v4225
        %v5439 = vunpack.c.l.b16 %v4226
        %v5440 = vunpack.c.h.b16 %v4226
        %v5441 = vunpack.c.l.b16 %v4227
        %v5442 = vunpack.c.h.b16 %v4227
        %v5443 = vunpack.c.l.b16 %v4228
        %v5444 = vunpack.c.h.b16 %v4228
        %v5445 = vunpack.c.l.b16 %v4229
        %v5446 = vunpack.c.h.b16 %v4229
        %v5447 = vunpack.c.l.b16 %v4230
        %v5448 = vunpack.c.h.b16 %v4230
        %v5449 = vunpack.c.l.b16 %v4231
        %v5450 = vunpack.c.h.b16 %v4231
        %v5451 = vunpack.c.l.b16 %v4232
        %v5452 = vunpack.c.h.b16 %v4232
        %v5453 = vunpack.c.l.b16 %v4233
        %v5454 = vunpack.c.h.b16 %v4233
        %v5455 = vunpack.c.l.b16 %v4234
        %v5456 = vunpack.c.h.b16 %v4234
        %v5457 = vunpack.c.l.b16 %v4235
        %v5458 = vunpack.c.h.b16 %v4235
        %v5459 = vunpack.c.l.b16 %v4236
        %v5460 = vunpack.c.h.b16 %v4236
        %v5461 = vunpack.c.l.b16 %v4237
        %v5462 = vunpack.c.h.b16 %v4237
        %v5463 = vunpack.c.l.b16 %v4238
        %v5464 = vunpack.c.h.b16 %v4238
        %v5465 = vunpack.c.l.b16 %v4239
        %v5466 = vunpack.c.h.b16 %v4239
        %v5467 = vunpack.c.l.b16 %v4240
        %v5468 = vunpack.c.h.b16 %v4240
        %v5469 = vunpack.c.l.b16 %v4241
        %v5470 = vunpack.c.h.b16 %v4241
        %v5471 = vunpack.c.l.b16 %v4242
        %v5472 = vunpack.c.h.b16 %v4242
        %v5473 = vunpack.c.l.b16 %v4243
        %v5474 = vunpack.c.h.b16 %v4243
        %v5475 = vunpack.c.l.b16 %v4244
        %v5476 = vunpack.c.h.b16 %v4244
        %v5477 = vunpack.c.l.b16 %v4245
        %v5478 = vunpack.c.h.b16 %v4245
        %v5479 = vunpack.c.l.b16 %v4246
        %v5480 = vunpack.c.h.b16 %v4246
        %v5481 = vunpack.c.l.b16 %v4247
        %v5482 = vunpack.c.h.b16 %v4247
        %v5483 = vunpack.c.l.b16 %v4248
        %v5484 = vunpack.c.h.b16 %v4248
        %v5485 = vunpack.c.l.b16 %v4249
        %v5486 = vunpack.c.h.b16 %v4249
        %v5487 = vunpack.c.l.b16 %v4250
        %v5488 = vunpack.c.h.b16 %v4250
        %v5489 = vunpack.c.l.b16 %v4251
        %v5490 = vunpack.c.h.b16 %v4251
        %v5491 = vunpack.c.l.b16 %v4252
        %v5492 = vunpack.c.h.b16 %v4252
        %v5493 = vunpack.c.l.b16 %v4253
        %v5494 = vunpack.c.h.b16 %v4253
        %v5495 = vunpack.c.l.b16 %v4254
        %v5496 = vunpack.c.h.b16 %v4254
        %v5497 = vunpack.c.l.b16 %v4255
        %v5498 = vunpack.c.h.b16 %v4255
        %v5499 = vunpack.c.l.b16 %v4256
        %v5500 = vunpack.c.h.b16 %v4256
        %v5501 = vunpack.c.l.b16 %v4257
        %v5502 = vunpack.c.h.b16 %v4257
        %v5503 = vunpack.c.l.b16 %v4258
        %v5504 = vunpack.c.h.b16 %v4258
        %v5505 = vunpack.c.l.b16 %v4259
        %v5506 = vunpack.c.h.b16 %v4259
        %v5507 = vunpack.c.l.b16 %v4260
        %v5508 = vunpack.c.h.b16 %v4260
        %v5509 = vunpack.c.l.b16 %v4261
        %v5510 = vunpack.c.h.b16 %v4261
        %v5511 = vunpack.c.l.b16 %v4262
        %v5512 = vunpack.c.h.b16 %v4262
        %v5513 = vunpack.c.l.b16 %v4263
        %v5514 = vunpack.c.h.b16 %v4263
        %v5515 = vunpack.c.l.b16 %v4264
        %v5516 = vunpack.c.h.b16 %v4264
        %v5517 = vunpack.c.l.b16 %v4265
        %v5518 = vunpack.c.h.b16 %v4265
        %v5519 = vunpack.c.l.b16 %v4266
        %v5520 = vunpack.c.h.b16 %v4266
        %v5521 = vunpack.c.l.b16 %v4267
        %v5522 = vunpack.c.h.b16 %v4267
        %v5523 = vunpack.c.l.b16 %v4268
        %v5524 = vunpack.c.h.b16 %v4268
        %v5525 = vunpack.c.l.b16 %v4269
        %v5526 = vunpack.c.h.b16 %v4269
        %v5527 = vunpack.c.l.b16 %v4270
        %v5528 = vunpack.c.h.b16 %v4270
        %v5529 = vunpack.c.l.b16 %v4271
        %v5530 = vunpack.c.h.b16 %v4271
        %v5531 = vunpack.c.l.b16 %v4272
        %v5532 = vunpack.c.h.b16 %v4272
        %v5533 = vunpack.c.l.b16 %v4273
        %v5534 = vunpack.c.h.b16 %v4273
        %v5535 = vunpack.c.l.b16 %v4274
        %v5536 = vunpack.c.h.b16 %v4274
        %v5537 = vunpack.c.l.b16 %v4275
        %v5538 = vunpack.c.h.b16 %v4275
        %v5539 = vunpack.c.l.b16 %v4276
        %v5540 = vunpack.c.h.b16 %v4276
        %v5541 = vunpack.c.l.b16 %v4277
        %v5542 = vunpack.c.h.b16 %v4277
        %v5543 = vunpack.c.l.b16 %v4278
        %v5544 = vunpack.c.h.b16 %v4278
        %v5545 = vunpack.c.l.b16 %v4279
        %v5546 = vunpack.c.h.b16 %v4279
        %v5547 = vunpack.c.l.b16 %v4280
        %v5548 = vunpack.c.h.b16 %v4280
        %v5549 = vunpack.c.l.b16 %v4281
        %v5550 = vunpack.c.h.b16 %v4281
        %v5551 = vunpack.c.l.b16 %v4282
        %v5552 = vunpack.c.h.b16 %v4282
        %v5553 = vunpack.c.l.b16 %v4283
        %v5554 = vunpack.c.h.b16 %v4283
        %v5555 = vunpack.c.l.b16 %v4284
        %v5556 = vunpack.c.h.b16 %v4284
        %v5557 = vunpack.c.l.b16 %v4285
        %v5558 = vunpack.c.h.b16 %v4285
        %v5559 = vunpack.c.l.b16 %v4286
        %v5560 = vunpack.c.h.b16 %v4286
        %v5561 = vunpack.c.l.b16 %v4287
        %v5562 = vunpack.c.h.b16 %v4287
        %v5563 = vunpack.c.l.b16 %v4288
        %v5564 = vunpack.c.h.b16 %v4288
        %v5565 = vunpack.c.l.b16 %v4289
        %v5566 = vunpack.c.h.b16 %v4289
        %v5567 = vunpack.c.l.b16 %v4290
        %v5568 = vunpack.c.h.b16 %v4290
        %v5569 = vunpack.c.l.b16 %v4291
        %v5570 = vunpack.c.h.b16 %v4291
        %v5571 = vunpack.c.l.b16 %v4292
        %v5572 = vunpack.c.h.b16 %v4292
        %v5573 = vunpack.c.l.b16 %v4293
        %v5574 = vunpack.c.h.b16 %v4293
        %v5575 = vunpack.c.l.b16 %v4294
        %v5576 = vunpack.c.h.b16 %v4294
        %v5577 = vunpack.c.l.b16 %v4295
        %v5578 = vunpack.c.h.b16 %v4295
        %v5579 = vunpack.c.l.b16 %v4296
        %v5580 = vunpack.c.h.b16 %v4296
        %v5581 = vunpack.c.l.b16 %v4297
        %v5582 = vunpack.c.h.b16 %v4297
        %v5583 = vunpack.c.l.b16 %v4298
        %v5584 = vunpack.c.h.b16 %v4298
        %v5585 = vunpack.c.l.b16 %v4299
        %v5586 = vunpack.c.h.b16 %v4299
        %v5587 = vunpack.c.l.b16 %v4300
        %v5588 = vunpack.c.h.b16 %v4300
        %v5589 = vunpack.c.l.b16 %v4301
        %v5590 = vunpack.c.h.b16 %v4301
        %v5591 = vunpack.c.l.b16 %v4302
        %v5592 = vunpack.c.h.b16 %v4302
        %v5593 = vunpack.c.l.b16 %v4303
        %v5594 = vunpack.c.h.b16 %v4303
        %v5595 = vunpack.c.l.b16 %v4304
        %v5596 = vunpack.c.h.b16 %v4304
        %v5597 = vunpack.c.l.b16 %v4305
        %v5598 = vunpack.c.h.b16 %v4305
        %v5599 = vunpack.c.l.b16 %v4306
        %v5600 = vunpack.c.h.b16 %v4306
        %v5601 = vunpack.c.l.b16 %v4307
        %v5602 = vunpack.c.h.b16 %v4307
        %v5603 = vunpack.c.l.b16 %v4308
        %v5604 = vunpack.c.h.b16 %v4308
        %v5605 = vunpack.c.l.b16 %v4309
        %v5606 = vunpack.c.h.b16 %v4309
        %v5607 = vunpack.c.l.b16 %v4310
        %v5608 = vunpack.c.h.b16 %v4310
        %v5609 = vunpack.c.l.b16 %v4311
        %v5610 = vunpack.c.h.b16 %v4311
        %v5611 = vunpack.c.l.b16 %v4312
        %v5612 = vunpack.c.h.b16 %v4312
        %v5613 = vunpack.c.l.b16 %v4313
        %v5614 = vunpack.c.h.b16 %v4313
        %v5615 = vunpack.c.l.b16 %v4314
        %v5616 = vunpack.c.h.b16 %v4314
        %v5617 = vunpack.c.l.b16 %v4315
        %v5618 = vunpack.c.h.b16 %v4315
        %v5619 = vunpack.c.l.b16 %v4316
        %v5620 = vunpack.c.h.b16 %v4316
        %v5621 = vunpack.c.l.b16 %v4317
        %v5622 = vunpack.c.h.b16 %v4317
        %v5623 = vunpack.c.l.b16 %v4318
        %v5624 = vunpack.c.h.b16 %v4318
        %v5625 = vunpack.c.l.b16 %v4319
        %v5626 = vunpack.c.h.b16 %v4319
        %v5627 = vunpack.c.l.b16 %v4320
        %v5628 = vunpack.c.h.b16 %v4320
        %v5629 = vunpack.c.l.b16 %v4321
        %v5630 = vunpack.c.h.b16 %v4321
        %v5631 = vunpack.c.l.b16 %v4322
        %v5632 = vunpack.c.h.b16 %v4322
        %v5633 = vunpack.c.l.b16 %v4323
        %v5634 = vunpack.c.h.b16 %v4323
        %v5635 = vunpack.c.l.b16 %v4324
        %v5636 = vunpack.c.h.b16 %v4324
        %v5637 = vunpack.c.l.b16 %v4325
        %v5638 = vunpack.c.h.b16 %v4325
        %v5639 = vunpack.c.l.b16 %v4326
        %v5640 = vunpack.c.h.b16 %v4326
        %v5641 = vunpack.c.l.b16 %v4327
        %v5642 = vunpack.c.h.b16 %v4327
        %v5643 = vunpack.c.l.b16 %v4328
        %v5644 = vunpack.c.h.b16 %v4328
        %v5645 = vunpack.c.l.b16 %v4329
        %v5646 = vunpack.c.h.b16 %v4329
        %v5647 = vunpack.c.l.b16 %v4330
        %v5648 = vunpack.c.h.b16 %v4330
        %v5649 = vunpack.c.l.b16 %v4331
        %v5650 = vunpack.c.h.b16 %v4331
        %v5651 = vunpack.c.l.b16 %v4332
        %v5652 = vunpack.c.h.b16 %v4332
        %v5653 = vunpack.c.l.b16 %v4333
        %v5654 = vunpack.c.h.b16 %v4333
        %v5655 = vunpack.c.l.b16 %v4334
        %v5656 = vunpack.c.h.b16 %v4334
        %v5657 = vunpack.c.l.b16 %v4335
        %v5658 = vunpack.c.h.b16 %v4335
        %v5659 = vunpack.c.l.b16 %v4336
        %v5660 = vunpack.c.h.b16 %v4336
        %v5661 = vunpack.c.l.b16 %v4337
        %v5662 = vunpack.c.h.b16 %v4337
        %v5663 = vunpack.c.l.b16 %v4338
        %v5664 = vunpack.c.h.b16 %v4338
        %v5665 = vunpack.c.l.b16 %v4339
        %v5666 = vunpack.c.h.b16 %v4339
        %v5667 = vunpack.c.l.b16 %v4340
        %v5668 = vunpack.c.h.b16 %v4340
        %v5669 = vunpack.c.l.b16 %v4341
        %v5670 = vunpack.c.h.b16 %v4341
        %v5671 = vunpack.c.l.b16 %v4342
        %v5672 = vunpack.c.h.b16 %v4342
        %v5673 = vunpack.c.l.b16 %v4343
        %v5674 = vunpack.c.h.b16 %v4343
        %v5675 = vunpack.c.l.b16 %v4344
        %v5676 = vunpack.c.h.b16 %v4344
        %v5677 = vunpack.c.l.b16 %v4345
        %v5678 = vunpack.c.h.b16 %v4345
        %v5679 = vunpack.c.l.b16 %v4346
        %v5680 = vunpack.c.h.b16 %v4346
        %v5681 = vunpack.c.l.b16 %v4347
        %v5682 = vunpack.c.h.b16 %v4347
        %v5683 = vunpack.c.l.b16 %v4348
        %v5684 = vunpack.c.h.b16 %v4348
        %v5685 = vunpack.c.l.b16 %v4349
        %v5686 = vunpack.c.h.b16 %v4349
        %v5687 = vunpack.c.l.b16 %v4350
        %v5688 = vunpack.c.h.b16 %v4350
        %v5689 = vunpack.c.l.b16 %v4351
        %v5690 = vunpack.c.h.b16 %v4351
        %v5691 = vunpack.c.l.b16 %v4352
        %v5692 = vunpack.c.h.b16 %v4352
        %v5693 = vunpack.c.l.b16 %v4353
        %v5694 = vunpack.c.h.b16 %v4353
        %v5695 = vunpack.c.l.b16 %v4354
        %v5696 = vunpack.c.h.b16 %v4354
        %v5697 = vunpack.c.l.b16 %v4355
        %v5698 = vunpack.c.h.b16 %v4355
        %v5699 = vunpack.c.l.b16 %v4356
        %v5700 = vunpack.c.h.b16 %v4356
        %v5701 = vunpack.c.l.b16 %v4357
        %v5702 = vunpack.c.h.b16 %v4357
        %v5703 = vunpack.c.l.b16 %v4358
        %v5704 = vunpack.c.h.b16 %v4358
        %v5705 = vunpack.c.l.b16 %v4359
        %v5706 = vunpack.c.h.b16 %v4359
        %v5707 = vunpack.c.l.b16 %v4360
        %v5708 = vunpack.c.h.b16 %v4360
        %v5709 = vunpack.c.l.b16 %v4361
        %v5710 = vunpack.c.h.b16 %v4361
        %v5711 = vunpack.c.l.b16 %v4362
        %v5712 = vunpack.c.h.b16 %v4362
        %v5713 = vunpack.c.l.b16 %v4363
        %v5714 = vunpack.c.h.b16 %v4363
        %v5715 = vunpack.c.l.b16 %v4364
        %v5716 = vunpack.c.h.b16 %v4364
        %v5717 = vunpack.c.l.b16 %v4365
        %v5718 = vunpack.c.h.b16 %v4365
        %v5719 = vunpack.c.l.b16 %v4366
        %v5720 = vunpack.c.h.b16 %v4366
        %v5721 = vunpack.c.l.b16 %v4367
        %v5722 = vunpack.c.h.b16 %v4367
        %v5723 = vunpack.c.l.b16 %v4368
        %v5724 = vunpack.c.h.b16 %v4368
        %v5725 = vunpack.c.l.b16 %v4369
        %v5726 = vunpack.c.h.b16 %v4369
        %v5727 = vunpack.c.l.b16 %v4370
        %v5728 = vunpack.c.h.b16 %v4370
        %v5729 = vunpack.c.l.b16 %v4371
        %v5730 = vunpack.c.h.b16 %v4371
        %v5731 = vunpack.c.l.b16 %v4372
        %v5732 = vunpack.c.h.b16 %v4372
        %v5733 = vunpack.c.l.b16 %v4373
        %v5734 = vunpack.c.h.b16 %v4373
        %v5735 = vunpack.c.l.b16 %v4374
        %v5736 = vunpack.c.h.b16 %v4374
        %v5737 = vunpack.c.l.b16 %v4375
        %v5738 = vunpack.c.h.b16 %v4375
        %v5739 = vunpack.c.l.b16 %v4376
        %v5740 = vunpack.c.h.b16 %v4376
        %v5741 = vunpack.c.l.b16 %v4377
        %v5742 = vunpack.c.h.b16 %v4377
        %v5743 = vunpack.c.l.b16 %v4378
        %v5744 = vunpack.c.h.b16 %v4378
        %v5745 = vunpack.c.l.b16 %v4379
        %v5746 = vunpack.c.h.b16 %v4379
        %v5747 = vunpack.c.l.b16 %v4380
        %v5748 = vunpack.c.h.b16 %v4380
        %v5749 = vunpack.c.l.b16 %v4381
        %v5750 = vunpack.c.h.b16 %v4381
        %v5751 = vunpack.c.l.b16 %v4382
        %v5752 = vunpack.c.h.b16 %v4382
        %v5753 = vunpack.c.l.b16 %v4383
        %v5754 = vunpack.c.h.b16 %v4383
        %v5755 = vunpack.c.l.b16 %v4384
        %v5756 = vunpack.c.h.b16 %v4384
        %v5757 = vunpack.c.l.b16 %v4385
        %v5758 = vunpack.c.h.b16 %v4385
        %v5759 = vunpack.c.l.b16 %v4386
        %v5760 = vunpack.c.h.b16 %v4386
        %v5761 = vunpack.c.l.b16 %v4387
        %v5762 = vunpack.c.h.b16 %v4387
        %v5763 = vunpack.c.l.b16 %v4388
        %v5764 = vunpack.c.h.b16 %v4388
        %v5765 = vunpack.c.l.b16 %v4389
        %v5766 = vunpack.c.h.b16 %v4389
        %v5767 = vunpack.c.l.b16 %v4390
        %v5768 = vunpack.c.h.b16 %v4390
        %v5769 = vunpack.c.l.b16 %v4391
        %v5770 = vunpack.c.h.b16 %v4391
        %v5771 = vunpack.c.l.b16 %v4392
        %v5772 = vunpack.c.h.b16 %v4392
        %v5773 = vunpack.c.l.b16 %v4393
        %v5774 = vunpack.c.h.b16 %v4393
        %v5775 = vunpack.c.l.b16 %v4394
        %v5776 = vunpack.c.h.b16 %v4394
        %v5777 = vunpack.c.l.b16 %v4395
        %v5778 = vunpack.c.h.b16 %v4395
        %v5779 = vunpack.c.l.b16 %v4396
        %v5780 = vunpack.c.h.b16 %v4396
        %v5781 = vunpack.c.l.b16 %v4397
        %v5782 = vunpack.c.h.b16 %v4397
        %v5783 = vunpack.c.l.b16 %v4398
        %v5784 = vunpack.c.h.b16 %v4398
        %v5785 = vunpack.c.l.b16 %v4399
        %v5786 = vunpack.c.h.b16 %v4399
        %v5787 = vunpack.c.l.b16 %v4400
        %v5788 = vunpack.c.h.b16 %v4400
        %v5789 = vunpack.c.l.b16 %v4401
        %v5790 = vunpack.c.h.b16 %v4401
        %v5791 = vunpack.c.l.b16 %v4402
        %v5792 = vunpack.c.h.b16 %v4402
        %v5793 = vunpack.c.l.b16 %v4403
        %v5794 = vunpack.c.h.b16 %v4403
        %v5795 = vunpack.c.l.b16 %v4404
        %v5796 = vunpack.c.h.b16 %v4404
        %v5797 = vunpack.c.l.b16 %v4405
        %v5798 = vunpack.c.h.b16 %v4405
        %v5799 = vunpack.c.l.b16 %v4406
        %v5800 = vunpack.c.h.b16 %v4406
        %v5801 = vunpack.c.l.b16 %v4407
        %v5802 = vunpack.c.h.b16 %v4407
        %v5803 = vunpack.c.l.b16 %v4408
        %v5804 = vunpack.c.h.b16 %v4408
        %v5805 = vunpack.c.l.b16 %v4409
        %v5806 = vunpack.c.h.b16 %v4409
        %v5807 = vunpack.c.l.b16 %v4410
        %v5808 = vunpack.c.h.b16 %v4410
        %v5809 = vunpack.c.l.b16 %v4411
        %v5810 = vunpack.c.h.b16 %v4411
        %v5811 = vunpack.c.l.b16 %v4412
        %v5812 = vunpack.c.h.b16 %v4412
        %v5813 = vunpack.c.l.b16 %v4413
        %v5814 = vunpack.c.h.b16 %v4413
        %v5815 = vunpack.c.l.b16 %v4414
        %v5816 = vunpack.c.h.b16 %v4414
        %v5817 = vunpack.c.l.b16 %v4415
        %v5818 = vunpack.c.h.b16 %v4415
        %v5819 = vunpack.c.l.b16 %v4416
        %v5820 = vunpack.c.h.b16 %v4416
        %v5821 = vunpack.c.l.b16 %v4417
        %v5822 = vunpack.c.h.b16 %v4417
        %v5823 = vunpack.c.l.b16 %v4418
        %v5824 = vunpack.c.h.b16 %v4418
        %v5825 = vunpack.c.l.b16 %v4419
        %v5826 = vunpack.c.h.b16 %v4419
        %v5827 = vunpack.c.l.b16 %v4420
        %v5828 = vunpack.c.h.b16 %v4420
        %v5829 = vunpack.c.l.b16 %v4421
        %v5830 = vunpack.c.h.b16 %v4421
        %v5831 = vunpack.c.l.b16 %v4422
        %v5832 = vunpack.c.h.b16 %v4422
        %v5833 = vunpack.c.l.b16 %v4423
        %v5834 = vunpack.c.h.b16 %v4423
        %v5835 = vunpack.c.l.b16 %v4424
        %v5836 = vunpack.c.h.b16 %v4424
        %v5837 = vunpack.c.l.b16 %v4425
        %v5838 = vunpack.c.h.b16 %v4425
        %v5839 = vunpack.c.l.b16 %v4426
        %v5840 = vunpack.c.h.b16 %v4426
        %v5841 = vunpack.c.l.b16 %v4427
        %v5842 = vunpack.c.h.b16 %v4427
        %v5843 = vunpack.c.l.b16 %v4428
        %v5844 = vunpack.c.h.b16 %v4428
        %v5845 = vunpack.c.l.b16 %v4429
        %v5846 = vunpack.c.h.b16 %v4429
        %v5847 = vunpack.c.l.b16 %v4430
        %v5848 = vunpack.c.h.b16 %v4430
        %v5849 = vunpack.c.l.b16 %v4431
        %v5850 = vunpack.c.h.b16 %v4431
        %v5851 = vunpack.c.l.b16 %v4432
        %v5852 = vunpack.c.h.b16 %v4432
        %v5853 = vunpack.c.l.b16 %v4433
        %v5854 = vunpack.c.h.b16 %v4433
        %v5855 = vunpack.c.l.b16 %v4434
        %v5856 = vunpack.c.h.b16 %v4434
        %v5857 = vunpack.c.l.b16 %v4435
        %v5858 = vunpack.c.h.b16 %v4435
        %v5859 = vunpack.c.l.b16 %v4436
        %v5860 = vunpack.c.h.b16 %v4436
        %v5861 = vunpack.c.l.b16 %v4437
        %v5862 = vunpack.c.h.b16 %v4437
        %v5863 = vunpack.c.l.b16 %v4438
        %v5864 = vunpack.c.h.b16 %v4438
        %v5865 = vunpack.c.l.b16 %v4439
        %v5866 = vunpack.c.h.b16 %v4439
        %v5867 = vunpack.c.l.b16 %v4440
        %v5868 = vunpack.c.h.b16 %v4440
        %v5869 = vunpack.c.l.b16 %v4441
        %v5870 = vunpack.c.h.b16 %v4441
        %v5871 = vunpack.c.l.b16 %v4442
        %v5872 = vunpack.c.h.b16 %v4442
        %v5873 = vunpack.c.l.b16 %v4443
        %v5874 = vunpack.c.h.b16 %v4443
        %v5875 = vunpack.c.l.b16 %v4444
        %v5876 = vunpack.c.h.b16 %v4444
        %v5877 = vunpack.c.l.b16 %v4445
        %v5878 = vunpack.c.h.b16 %v4445
        %v5879 = vunpack.c.l.b16 %v4446
        %v5880 = vunpack.c.h.b16 %v4446
        %v5881 = vunpack.c.l.b16 %v4447
        %v5882 = vunpack.c.h.b16 %v4447
        %v5883 = vunpack.c.l.b16 %v4448
        %v5884 = vunpack.c.h.b16 %v4448
        %v5885 = vunpack.c.l.b16 %v4449
        %v5886 = vunpack.c.h.b16 %v4449
        %v5887 = vunpack.c.l.b16 %v4450
        %v5888 = vunpack.c.h.b16 %v4450
        %v5889 = vunpack.c.l.b16 %v4451
        %v5890 = vunpack.c.h.b16 %v4451
        %v5891 = vunpack.c.l.b16 %v4452
        %v5892 = vunpack.c.h.b16 %v4452
        %v5893 = vunpack.c.l.b16 %v4453
        %v5894 = vunpack.c.h.b16 %v4453
        %v5895 = vunpack.c.l.b16 %v4454
        %v5896 = vunpack.c.h.b16 %v4454
        %v5897 = vunpack.c.l.b16 %v4455
        %v5898 = vunpack.c.h.b16 %v4455
        %v5899 = vunpack.c.l.b16 %v4456
        %v5900 = vunpack.c.h.b16 %v4456
        %v5901 = vunpack.c.l.b16 %v4457
        %v5902 = vunpack.c.h.b16 %v4457
        %v5903 = vunpack.c.l.b16 %v4458
        %v5904 = vunpack.c.h.b16 %v4458
        %v5905 = vunpack.c.l.b16 %v4459
        %v5906 = vunpack.c.h.b16 %v4459
        %v5907 = vunpack.c.l.b16 %v4460
        %v5908 = vunpack.c.h.b16 %v4460
        %v5909 = vunpack.c.l.b16 %v4461
        %v5910 = vunpack.c.h.b16 %v4461
        %v5911 = vunpack.c.l.b16 %v4462
        %v5912 = vunpack.c.h.b16 %v4462
        %v5913 = vunpack.c.l.b16 %v4463
        %v5914 = vunpack.c.h.b16 %v4463
        %v5915 = vunpack.c.l.b16 %v4464
        %v5916 = vunpack.c.h.b16 %v4464
        %v5917 = vunpack.c.l.b16 %v4465
        %v5918 = vunpack.c.h.b16 %v4465
        %v5919 = vunpack.c.l.b16 %v4466
        %v5920 = vunpack.c.h.b16 %v4466
        %v5921 = vunpack.c.l.b16 %v4467
        %v5922 = vunpack.c.h.b16 %v4467
        %v5923 = vunpack.c.l.b16 %v4468
        %v5924 = vunpack.c.h.b16 %v4468
        %v5925 = vunpack.c.l.b16 %v4469
        %v5926 = vunpack.c.h.b16 %v4469
        %v5927 = vunpack.c.l.b16 %v4470
        %v5928 = vunpack.c.h.b16 %v4470
        %v5929 = vunpack.c.l.b16 %v4471
        %v5930 = vunpack.c.h.b16 %v4471
        %v5931 = vunpack.c.l.b16 %v4472
        %v5932 = vunpack.c.h.b16 %v4472
        %v5933 = vunpack.c.l.b16 %v4473
        %v5934 = vunpack.c.h.b16 %v4473
        %v5935 = vunpack.c.l.b16 %v4474
        %v5936 = vunpack.c.h.b16 %v4474
        %v5937 = vunpack.c.l.b16 %v4475
        %v5938 = vunpack.c.h.b16 %v4475
        %v5939 = vunpack.c.l.b16 %v4476
        %v5940 = vunpack.c.h.b16 %v4476
        %v5941 = vunpack.c.l.b16 %v4477
        %v5942 = vunpack.c.h.b16 %v4477
        %v5943 = vunpack.c.l.b16 %v4478
        %v5944 = vunpack.c.h.b16 %v4478
        %v5945 = vunpack.c.l.b16 %v4479
        %v5946 = vunpack.c.h.b16 %v4479
        %v5947 = vunpack.c.l.b16 %v4480
        %v5948 = vunpack.c.h.b16 %v4480
        %v5949 = vunpack.c.l.b16 %v4481
        %v5950 = vunpack.c.h.b16 %v4481
        %v5951 = vunpack.c.l.b16 %v4482
        %v5952 = vunpack.c.h.b16 %v4482
        %v5953 = vunpack.c.l.b16 %v4483
        %v5954 = vunpack.c.h.b16 %v4483
        %v5955 = vunpack.c.l.b16 %v4484
        %v5956 = vunpack.c.h.b16 %v4484
        %v5957 = vunpack.c.l.b16 %v4485
        %v5958 = vunpack.c.h.b16 %v4485
        %v5959 = vunpack.c.l.b16 %v4486
        %v5960 = vunpack.c.h.b16 %v4486
        %v5961 = vunpack.c.l.b16 %v4487
        %v5962 = vunpack.c.h.b16 %v4487
        %v5963 = vunpack.c.l.b16 %v4488
        %v5964 = vunpack.c.h.b16 %v4488
        %v5965 = vunpack.c.l.b16 %v4489
        %v5966 = vunpack.c.h.b16 %v4489
        %v5967 = vunpack.c.l.b16 %v4490
        %v5968 = vunpack.c.h.b16 %v4490
        %v5969 = vunpack.c.l.b16 %v4491
        %v5970 = vunpack.c.h.b16 %v4491
        %v5971 = vunpack.c.l.b16 %v4492
        %v5972 = vunpack.c.h.b16 %v4492
        %v5973 = vunpack.c.l.b16 %v4493
        %v5974 = vunpack.c.h.b16 %v4493
        %v5975 = vunpack.c.l.b16 %v4494
        %v5976 = vunpack.c.h.b16 %v4494
        %v5977 = vunpack.c.l.b16 %v4495
        %v5978 = vunpack.c.h.b16 %v4495
        %v5979 = vunpack.c.l.b16 %v4496
        %v5980 = vunpack.c.h.b16 %v4496
        %v5981 = vunpack.c.l.b16 %v4497
        %v5982 = vunpack.c.h.b16 %v4497
        %v5983 = vunpack.c.l.b16 %v4498
        %v5984 = vunpack.c.h.b16 %v4498
        %v5985 = vunpack.c.l.b16 %v4499
        %v5986 = vunpack.c.h.b16 %v4499
        %v5987 = vunpack.c.l.b16 %v4500
        %v5988 = vunpack.c.h.b16 %v4500
        %v5989 = vunpack.c.l.b16 %v4501
        %v5990 = vunpack.c.h.b16 %v4501
        %v5991 = vunpack.c.l.b16 %v4502
        %v5992 = vunpack.c.h.b16 %v4502
        %v5993 = vunpack.c.l.b16 %v4503
        %v5994 = vunpack.c.h.b16 %v4503
        %v5995 = vunpack.c.l.b16 %v4504
        %v5996 = vunpack.c.h.b16 %v4504
        %v5997 = vunpack.c.l.b16 %v4505
        %v5998 = vunpack.c.h.b16 %v4505
        %v5999 = vunpack.c.l.b16 %v4506
        %v6000 = vunpack.c.h.b16 %v4506
        %v6001 = vunpack.c.l.b16 %v4507
        %v6002 = vunpack.c.h.b16 %v4507
        %v6003 = vunpack.c.l.b16 %v4508
        %v6004 = vunpack.c.h.b16 %v4508
        %v6005 = vunpack.c.l.b16 %v4509
        %v6006 = vunpack.c.h.b16 %v4509
        %v6007 = vunpack.c.l.b16 %v4510
        %v6008 = vunpack.c.h.b16 %v4510
        %v6009 = vunpack.c.l.b16 %v4511
        %v6010 = vunpack.c.h.b16 %v4511
        %v6011 = vunpack.c.l.b16 %v4512
        %v6012 = vunpack.c.h.b16 %v4512
        %v6013 = vunpack.c.l.b16 %v4513
        %v6014 = vunpack.c.h.b16 %v4513
        %v6015 = vunpack.c.l.b16 %v4514
        %v6016 = vunpack.c.h.b16 %v4514
        %v6017 = vunpack.c.l.b16 %v4515
        %v6018 = vunpack.c.h.b16 %v4515
        %v6019 = vunpack.c.l.b16 %v4516
        %v6020 = vunpack.c.h.b16 %v4516
        %v6021 = vunpack.c.l.b16 %v4517
        %v6022 = vunpack.c.h.b16 %v4517
        %v6023 = vunpack.c.l.b16 %v4518
        %v6024 = vunpack.c.h.b16 %v4518
        %v6025 = vunpack.c.l.b16 %v4519
        %v6026 = vunpack.c.h.b16 %v4519
        %v6027 = vunpack.c.l.b16 %v4520
        %v6028 = vunpack.c.h.b16 %v4520
        %v6029 = vunpack.c.l.b16 %v4521
        %v6030 = vunpack.c.h.b16 %v4521
        %v6031 = vunpack.c.l.b16 %v4522
        %v6032 = vunpack.c.h.b16 %v4522
        %v6033 = vunpack.c.l.b16 %v4523
        %v6034 = vunpack.c.h.b16 %v4523
        %v6035 = vunpack.c.l.b16 %v4524
        %v6036 = vunpack.c.h.b16 %v4524
        %v6037 = vunpack.c.l.b16 %v4525
        %v6038 = vunpack.c.h.b16 %v4525
        %v6039 = vunpack.c.l.b16 %v4526
        %v6040 = vunpack.c.h.b16 %v4526
        %v6041 = vunpack.c.l.b16 %v4527
        %v6042 = vunpack.c.h.b16 %v4527
        %v6043 = vunpack.c.l.b16 %v4528
        %v6044 = vunpack.c.h.b16 %v4528
        %v6045 = vunpack.c.l.b16 %v4529
        %v6046 = vunpack.c.h.b16 %v4529
        %v6047 = vunpack.c.l.b16 %v4530
        %v6048 = vunpack.c.h.b16 %v4530
        %v6049 = vunpack.c.l.b16 %v4531
        %v6050 = vunpack.c.h.b16 %v4531
        %v6051 = vunpack.c.l.b16 %v4532
        %v6052 = vunpack.c.h.b16 %v4532
        %v6053 = vunpack.c.l.b16 %v4533
        %v6054 = vunpack.c.h.b16 %v4533
        %v6055 = vunpack.c.l.b16 %v4534
        %v6056 = vunpack.c.h.b16 %v4534
        %v6057 = vunpack.c.l.b16 %v4535
        %v6058 = vunpack.c.h.b16 %v4535
        %v6059 = vunpack.c.l.b16 %v4536
        %v6060 = vunpack.c.h.b16 %v4536
        %v6061 = vunpack.c.l.b16 %v4537
        %v6062 = vunpack.c.h.b16 %v4537
        %v6063 = vunpack.c.l.b16 %v4538
        %v6064 = vunpack.c.h.b16 %v4538
        %v6065 = vunpack.c.l.b16 %v4539
        %v6066 = vunpack.c.h.b16 %v4539
        %v6067 = vunpack.c.l.b16 %v4540
        %v6068 = vunpack.c.h.b16 %v4540
        %v6069 = vunpack.c.l.b16 %v4541
        %v6070 = vunpack.c.h.b16 %v4541
        %v6071 = vunpack.c.l.b16 %v4542
        %v6072 = vunpack.c.h.b16 %v4542
        %v6073 = vunpack.c.l.b16 %v4543
        %v6074 = vunpack.c.h.b16 %v4543
        %v6075 = vunpack.c.l.b16 %v4544
        %v6076 = vunpack.c.h.b16 %v4544
        %v6077 = vunpack.c.l.b16 %v4545
        %v6078 = vunpack.c.h.b16 %v4545
        %v6079 = vunpack.c.l.b16 %v4546
        %v6080 = vunpack.c.h.b16 %v4546
        %v6081 = vunpack.c.l.b16 %v4547
        %v6082 = vunpack.c.h.b16 %v4547
        %v6083 = vunpack.c.l.b16 %v4548
        %v6084 = vunpack.c.h.b16 %v4548
        %v6085 = vpack.c.b16 %v5069, %v5061
        %v6086 = vpack.c.b16 %v5070, %v5062
        %v6087 = vpack.c.b16 %v5071, %v5063
        %v6088 = vpack.c.b16 %v5072, %v5064
        %v6089 = vpack.c.b16 %v5073, %v5065
        %v6090 = vpack.c.b16 %v5074, %v5066
        %v6091 = vpack.c.b16 %v5075, %v5067
        %v6092 = vpack.c.b16 %v5076, %v5068
        %v6093 = vpack.c.b16 %v5085, %v5077
        %v6094 = vpack.c.b16 %v5086, %v5078
        %v6095 = vpack.c.b16 %v5087, %v5079
        %v6096 = vpack.c.b16 %v5088, %v5080
        %v6097 = vpack.c.b16 %v5089, %v5081
        %v6098 = vpack.c.b16 %v5090, %v5082
        %v6099 = vpack.c.b16 %v5091, %v5083
        %v6100 = vpack.c.b16 %v5092, %v5084
        %v6101 = vpack.c.b16 %v5101, %v5093
        %v6102 = vpack.c.b16 %v5102, %v5094
        %v6103 = vpack.c.b16 %v5103, %v5095
        %v6104 = vpack.c.b16 %v5104, %v5096
        %v6105 = vpack.c.b16 %v5105, %v5097
        %v6106 = vpack.c.b16 %v5106, %v5098
        %v6107 = vpack.c.b16 %v5107, %v5099
        %v6108 = vpack.c.b16 %v5108, %v5100
        %v6109 = vpack.c.b16 %v5117, %v5109
        %v6110 = vpack.c.b16 %v5118, %v5110
        %v6111 = vpack.c.b16 %v5119, %v5111
        %v6112 = vpack.c.b16 %v5120, %v5112
        %v6113 = vpack.c.b16 %v5121, %v5113
        %v6114 = vpack.c.b16 %v5122, %v5114
        %v6115 = vpack.c.b16 %v5123, %v5115
        %v6116 = vpack.c.b16 %v5124, %v5116
        %v6117 = vpack.c.b16 %v5133, %v5125
        %v6118 = vpack.c.b16 %v5134, %v5126
        %v6119 = vpack.c.b16 %v5135, %v5127
        %v6120 = vpack.c.b16 %v5136, %v5128
        %v6121 = vpack.c.b16 %v5137, %v5129
        %v6122 = vpack.c.b16 %v5138, %v5130
        %v6123 = vpack.c.b16 %v5139, %v5131
        %v6124 = vpack.c.b16 %v5140, %v5132
        %v6125 = vpack.c.b16 %v5149, %v5141
        %v6126 = vpack.c.b16 %v5150, %v5142
        %v6127 = vpack.c.b16 %v5151, %v5143
        %v6128 = vpack.c.b16 %v5152, %v5144
        %v6129 = vpack.c.b16 %v5153, %v5145
        %v6130 = vpack.c.b16 %v5154, %v5146
        %v6131 = vpack.c.b16 %v5155, %v5147
        %v6132 = vpack.c.b16 %v5156, %v5148
        %v6133 = vpack.c.b16 %v5165, %v5157
        %v6134 = vpack.c.b16 %v5166, %v5158
        %v6135 = vpack.c.b16 %v5167, %v5159
        %v6136 = vpack.c.b16 %v5168, %v5160
        %v6137 = vpack.c.b16 %v5169, %v5161
        %v6138 = vpack.c.b16 %v5170, %v5162
        %v6139 = vpack.c.b16 %v5171, %v5163
        %v6140 = vpack.c.b16 %v5172, %v5164
        %v6141 = vpack.c.b16 %v5181, %v5173
        %v6142 = vpack.c.b16 %v5182, %v5174
        %v6143 = vpack.c.b16 %v5183, %v5175
        %v6144 = vpack.c.b16 %v5184, %v5176
        %v6145 = vpack.c.b16 %v5185, %v5177
        %v6146 = vpack.c.b16 %v5186, %v5178
        %v6147 = vpack.c.b16 %v5187, %v5179
        %v6148 = vpack.c.b16 %v5188, %v5180
        %v6149 = vpack.c.b16 %v5197, %v5189
        %v6150 = vpack.c.b16 %v5198, %v5190
        %v6151 = vpack.c.b16 %v5199, %v5191
        %v6152 = vpack.c.b16 %v5200, %v5192
        %v6153 = vpack.c.b16 %v5201, %v5193
        %v6154 = vpack.c.b16 %v5202, %v5194
        %v6155 = vpack.c.b16 %v5203, %v5195
        %v6156 = vpack.c.b16 %v5204, %v5196
        %v6157 = vpack.c.b16 %v5213, %v5205
        %v6158 = vpack.c.b16 %v5214, %v5206
        %v6159 = vpack.c.b16 %v5215, %v5207
        %v6160 = vpack.c.b16 %v5216, %v5208
        %v6161 = vpack.c.b16 %v5217, %v5209
        %v6162 = vpack.c.b16 %v5218, %v5210
        %v6163 = vpack.c.b16 %v5219, %v5211
        %v6164 = vpack.c.b16 %v5220, %v5212
        %v6165 = vpack.c.b16 %v5229, %v5221
        %v6166 = vpack.c.b16 %v5230, %v5222
        %v6167 = vpack.c.b16 %v5231, %v5223
        %v6168 = vpack.c.b16 %v5232, %v5224
        %v6169 = vpack.c.b16 %v5233, %v5225
        %v6170 = vpack.c.b16 %v5234, %v5226
        %v6171 = vpack.c.b16 %v5235, %v5227
        %v6172 = vpack.c.b16 %v5236, %v5228
        %v6173 = vpack.c.b16 %v5245, %v5237
        %v6174 = vpack.c.b16 %v5246, %v5238
        %v6175 = vpack.c.b16 %v5247, %v5239
        %v6176 = vpack.c.b16 %v5248, %v5240
        %v6177 = vpack.c.b16 %v5249, %v5241
        %v6178 = vpack.c.b16 %v5250, %v5242
        %v6179 = vpack.c.b16 %v5251, %v5243
        %v6180 = vpack.c.b16 %v5252, %v5244
        %v6181 = vpack.c.b16 %v5261, %v5253
        %v6182 = vpack.c.b16 %v5262, %v5254
        %v6183 = vpack.c.b16 %v5263, %v5255
        %v6184 = vpack.c.b16 %v5264, %v5256
        %v6185 = vpack.c.b16 %v5265, %v5257
        %v6186 = vpack.c.b16 %v5266, %v5258
        %v6187 = vpack.c.b16 %v5267, %v5259
        %v6188 = vpack.c.b16 %v5268, %v5260
        %v6189 = vpack.c.b16 %v5277, %v5269
        %v6190 = vpack.c.b16 %v5278, %v5270
        %v6191 = vpack.c.b16 %v5279, %v5271
        %v6192 = vpack.c.b16 %v5280, %v5272
        %v6193 = vpack.c.b16 %v5281, %v5273
        %v6194 = vpack.c.b16 %v5282, %v5274
        %v6195 = vpack.c.b16 %v5283, %v5275
        %v6196 = vpack.c.b16 %v5284, %v5276
        %v6197 = vpack.c.b16 %v5293, %v5285
        %v6198 = vpack.c.b16 %v5294, %v5286
        %v6199 = vpack.c.b16 %v5295, %v5287
        %v6200 = vpack.c.b16 %v5296, %v5288
        %v6201 = vpack.c.b16 %v5297, %v5289
        %v6202 = vpack.c.b16 %v5298, %v5290
        %v6203 = vpack.c.b16 %v5299, %v5291
        %v6204 = vpack.c.b16 %v5300, %v5292
        %v6205 = vpack.c.b16 %v5309, %v5301
        %v6206 = vpack.c.b16 %v5310, %v5302
        %v6207 = vpack.c.b16 %v5311, %v5303
        %v6208 = vpack.c.b16 %v5312, %v5304
        %v6209 = vpack.c.b16 %v5313, %v5305
        %v6210 = vpack.c.b16 %v5314, %v5306
        %v6211 = vpack.c.b16 %v5315, %v5307
        %v6212 = vpack.c.b16 %v5316, %v5308
        %v6213 = vpack.c.b16 %v5325, %v5317
        %v6214 = vpack.c.b16 %v5326, %v5318
        %v6215 = vpack.c.b16 %v5327, %v5319
        %v6216 = vpack.c.b16 %v5328, %v5320
        %v6217 = vpack.c.b16 %v5329, %v5321
        %v6218 = vpack.c.b16 %v5330, %v5322
        %v6219 = vpack.c.b16 %v5331, %v5323
        %v6220 = vpack.c.b16 %v5332, %v5324
        %v6221 = vpack.c.b16 %v5341, %v5333
        %v6222 = vpack.c.b16 %v5342, %v5334
        %v6223 = vpack.c.b16 %v5343, %v5335
        %v6224 = vpack.c.b16 %v5344, %v5336
        %v6225 = vpack.c.b16 %v5345, %v5337
        %v6226 = vpack.c.b16 %v5346, %v5338
        %v6227 = vpack.c.b16 %v5347, %v5339
        %v6228 = vpack.c.b16 %v5348, %v5340
        %v6229 = vpack.c.b16 %v5357, %v5349
        %v6230 = vpack.c.b16 %v5358, %v5350
        %v6231 = vpack.c.b16 %v5359, %v5351
        %v6232 = vpack.c.b16 %v5360, %v5352
        %v6233 = vpack.c.b16 %v5361, %v5353
        %v6234 = vpack.c.b16 %v5362, %v5354
        %v6235 = vpack.c.b16 %v5363, %v5355
        %v6236 = vpack.c.b16 %v5364, %v5356
        %v6237 = vpack.c.b16 %v5373, %v5365
        %v6238 = vpack.c.b16 %v5374, %v5366
        %v6239 = vpack.c.b16 %v5375, %v5367
        %v6240 = vpack.c.b16 %v5376, %v5368
        %v6241 = vpack.c.b16 %v5377, %v5369
        %v6242 = vpack.c.b16 %v5378, %v5370
        %v6243 = vpack.c.b16 %v5379, %v5371
        %v6244 = vpack.c.b16 %v5380, %v5372
        %v6245 = vpack.c.b16 %v5389, %v5381
        %v6246 = vpack.c.b16 %v5390, %v5382
        %v6247 = vpack.c.b16 %v5391, %v5383
        %v6248 = vpack.c.b16 %v5392, %v5384
        %v6249 = vpack.c.b16 %v5393, %v5385
        %v6250 = vpack.c.b16 %v5394, %v5386
        %v6251 = vpack.c.b16 %v5395, %v5387
        %v6252 = vpack.c.b16 %v5396, %v5388
        %v6253 = vpack.c.b16 %v5405, %v5397
        %v6254 = vpack.c.b16 %v5406, %v5398
        %v6255 = vpack.c.b16 %v5407, %v5399
        %v6256 = vpack.c.b16 %v5408, %v5400
        %v6257 = vpack.c.b16 %v5409, %v5401
        %v6258 = vpack.c.b16 %v5410, %v5402
        %v6259 = vpack.c.b16 %v5411, %v5403
        %v6260 = vpack.c.b16 %v5412, %v5404
        %v6261 = vpack.c.b16 %v5421, %v5413
        %v6262 = vpack.c.b16 %v5422, %v5414
        %v6263 = vpack.c.b16 %v5423, %v5415
        %v6264 = vpack.c.b16 %v5424, %v5416
        %v6265 = vpack.c.b16 %v5425, %v5417
        %v6266 = vpack.c.b16 %v5426, %v5418
        %v6267 = vpack.c.b16 %v5427, %v5419
        %v6268 = vpack.c.b16 %v5428, %v5420
        %v6269 = vpack.c.b16 %v5437, %v5429
        %v6270 = vpack.c.b16 %v5438, %v5430
        %v6271 = vpack.c.b16 %v5439, %v5431
        %v6272 = vpack.c.b16 %v5440, %v5432
        %v6273 = vpack.c.b16 %v5441, %v5433
        %v6274 = vpack.c.b16 %v5442, %v5434
        %v6275 = vpack.c.b16 %v5443, %v5435
        %v6276 = vpack.c.b16 %v5444, %v5436
        %v6277 = vpack.c.b16 %v5453, %v5445
        %v6278 = vpack.c.b16 %v5454, %v5446
        %v6279 = vpack.c.b16 %v5455, %v5447
        %v6280 = vpack.c.b16 %v5456, %v5448
        %v6281 = vpack.c.b16 %v5457, %v5449
        %v6282 = vpack.c.b16 %v5458, %v5450
        %v6283 = vpack.c.b16 %v5459, %v5451
        %v6284 = vpack.c.b16 %v5460, %v5452
        %v6285 = vpack.c.b16 %v5469, %v5461
        %v6286 = vpack.c.b16 %v5470, %v5462
        %v6287 = vpack.c.b16 %v5471, %v5463
        %v6288 = vpack.c.b16 %v5472, %v5464
        %v6289 = vpack.c.b16 %v5473, %v5465
        %v6290 = vpack.c.b16 %v5474, %v5466
        %v6291 = vpack.c.b16 %v5475, %v5467
        %v6292 = vpack.c.b16 %v5476, %v5468
        %v6293 = vpack.c.b16 %v5485, %v5477
        %v6294 = vpack.c.b16 %v5486, %v5478
        %v6295 = vpack.c.b16 %v5487, %v5479
        %v6296 = vpack.c.b16 %v5488, %v5480
        %v6297 = vpack.c.b16 %v5489, %v5481
        %v6298 = vpack.c.b16 %v5490, %v5482
        %v6299 = vpack.c.b16 %v5491, %v5483
        %v6300 = vpack.c.b16 %v5492, %v5484
        %v6301 = vpack.c.b16 %v5501, %v5493
        %v6302 = vpack.c.b16 %v5502, %v5494
        %v6303 = vpack.c.b16 %v5503, %v5495
        %v6304 = vpack.c.b16 %v5504, %v5496
        %v6305 = vpack.c.b16 %v5505, %v5497
        %v6306 = vpack.c.b16 %v5506, %v5498
        %v6307 = vpack.c.b16 %v5507, %v5499
        %v6308 = vpack.c.b16 %v5508, %v5500
        %v6309 = vpack.c.b16 %v5517, %v5509
        %v6310 = vpack.c.b16 %v5518, %v5510
        %v6311 = vpack.c.b16 %v5519, %v5511
        %v6312 = vpack.c.b16 %v5520, %v5512
        %v6313 = vpack.c.b16 %v5521, %v5513
        %v6314 = vpack.c.b16 %v5522, %v5514
        %v6315 = vpack.c.b16 %v5523, %v5515
        %v6316 = vpack.c.b16 %v5524, %v5516
        %v6317 = vpack.c.b16 %v5533, %v5525
        %v6318 = vpack.c.b16 %v5534, %v5526
        %v6319 = vpack.c.b16 %v5535, %v5527
        %v6320 = vpack.c.b16 %v5536, %v5528
        %v6321 = vpack.c.b16 %v5537, %v5529
        %v6322 = vpack.c.b16 %v5538, %v5530
        %v6323 = vpack.c.b16 %v5539, %v5531
        %v6324 = vpack.c.b16 %v5540, %v5532
        %v6325 = vpack.c.b16 %v5549, %v5541
        %v6326 = vpack.c.b16 %v5550, %v5542
        %v6327 = vpack.c.b16 %v5551, %v5543
        %v6328 = vpack.c.b16 %v5552, %v5544
        %v6329 = vpack.c.b16 %v5553, %v5545
        %v6330 = vpack.c.b16 %v5554, %v5546
        %v6331 = vpack.c.b16 %v5555, %v5547
        %v6332 = vpack.c.b16 %v5556, %v5548
        %v6333 = vpack.c.b16 %v5565, %v5557
        %v6334 = vpack.c.b16 %v5566, %v5558
        %v6335 = vpack.c.b16 %v5567, %v5559
        %v6336 = vpack.c.b16 %v5568, %v5560
        %v6337 = vpack.c.b16 %v5569, %v5561
        %v6338 = vpack.c.b16 %v5570, %v5562
        %v6339 = vpack.c.b16 %v5571, %v5563
        %v6340 = vpack.c.b16 %v5572, %v5564
        %v6341 = vpack.c.b16 %v5581, %v5573
        %v6342 = vpack.c.b16 %v5582, %v5574
        %v6343 = vpack.c.b16 %v5583, %v5575
        %v6344 = vpack.c.b16 %v5584, %v5576
        %v6345 = vpack.c.b16 %v5585, %v5577
        %v6346 = vpack.c.b16 %v5586, %v5578
        %v6347 = vpack.c.b16 %v5587, %v5579
        %v6348 = vpack.c.b16 %v5588, %v5580
        %v6349 = vpack.c.b16 %v5597, %v5589
        %v6350 = vpack.c.b16 %v5598, %v5590
        %v6351 = vpack.c.b16 %v5599, %v5591
        %v6352 = vpack.c.b16 %v5600, %v5592
        %v6353 = vpack.c.b16 %v5601, %v5593
        %v6354 = vpack.c.b16 %v5602, %v5594
        %v6355 = vpack.c.b16 %v5603, %v5595
        %v6356 = vpack.c.b16 %v5604, %v5596
        %v6357 = vpack.c.b16 %v5613, %v5605
        %v6358 = vpack.c.b16 %v5614, %v5606
        %v6359 = vpack.c.b16 %v5615, %v5607
        %v6360 = vpack.c.b16 %v5616, %v5608
        %v6361 = vpack.c.b16 %v5617, %v5609
        %v6362 = vpack.c.b16 %v5618, %v5610
        %v6363 = vpack.c.b16 %v5619, %v5611
        %v6364 = vpack.c.b16 %v5620, %v5612
        %v6365 = vpack.c.b16 %v5629, %v5621
        %v6366 = vpack.c.b16 %v5630, %v5622
        %v6367 = vpack.c.b16 %v5631, %v5623
        %v6368 = vpack.c.b16 %v5632, %v5624
        %v6369 = vpack.c.b16 %v5633, %v5625
        %v6370 = vpack.c.b16 %v5634, %v5626
        %v6371 = vpack.c.b16 %v5635, %v5627
        %v6372 = vpack.c.b16 %v5636, %v5628
        %v6373 = vpack.c.b16 %v5645, %v5637
        %v6374 = vpack.c.b16 %v5646, %v5638
        %v6375 = vpack.c.b16 %v5647, %v5639
        %v6376 = vpack.c.b16 %v5648, %v5640
        %v6377 = vpack.c.b16 %v5649, %v5641
        %v6378 = vpack.c.b16 %v5650, %v5642
        %v6379 = vpack.c.b16 %v5651, %v5643
        %v6380 = vpack.c.b16 %v5652, %v5644
        %v6381 = vpack.c.b16 %v5661, %v5653
        %v6382 = vpack.c.b16 %v5662, %v5654
        %v6383 = vpack.c.b16 %v5663, %v5655
        %v6384 = vpack.c.b16 %v5664, %v5656
        %v6385 = vpack.c.b16 %v5665, %v5657
        %v6386 = vpack.c.b16 %v5666, %v5658
        %v6387 = vpack.c.b16 %v5667, %v5659
        %v6388 = vpack.c.b16 %v5668, %v5660
        %v6389 = vpack.c.b16 %v5677, %v5669
        %v6390 = vpack.c.b16 %v5678, %v5670
        %v6391 = vpack.c.b16 %v5679, %v5671
        %v6392 = vpack.c.b16 %v5680, %v5672
        %v6393 = vpack.c.b16 %v5681, %v5673
        %v6394 = vpack.c.b16 %v5682, %v5674
        %v6395 = vpack.c.b16 %v5683, %v5675
        %v6396 = vpack.c.b16 %v5684, %v5676
        %v6397 = vpack.c.b16 %v5693, %v5685
        %v6398 = vpack.c.b16 %v5694, %v5686
        %v6399 = vpack.c.b16 %v5695, %v5687
        %v6400 = vpack.c.b16 %v5696, %v5688
        %v6401 = vpack.c.b16 %v5697, %v5689
        %v6402 = vpack.c.b16 %v5698, %v5690
        %v6403 = vpack.c.b16 %v5699, %v5691
        %v6404 = vpack.c.b16 %v5700, %v5692
        %v6405 = vpack.c.b16 %v5709, %v5701
        %v6406 = vpack.c.b16 %v5710, %v5702
        %v6407 = vpack.c.b16 %v5711, %v5703
        %v6408 = vpack.c.b16 %v5712, %v5704
        %v6409 = vpack.c.b16 %v5713, %v5705
        %v6410 = vpack.c.b16 %v5714, %v5706
        %v6411 = vpack.c.b16 %v5715, %v5707
        %v6412 = vpack.c.b16 %v5716, %v5708
        %v6413 = vpack.c.b16 %v5725, %v5717
        %v6414 = vpack.c.b16 %v5726, %v5718
        %v6415 = vpack.c.b16 %v5727, %v5719
        %v6416 = vpack.c.b16 %v5728, %v5720
        %v6417 = vpack.c.b16 %v5729, %v5721
        %v6418 = vpack.c.b16 %v5730, %v5722
        %v6419 = vpack.c.b16 %v5731, %v5723
        %v6420 = vpack.c.b16 %v5732, %v5724
        %v6421 = vpack.c.b16 %v5741, %v5733
        %v6422 = vpack.c.b16 %v5742, %v5734
        %v6423 = vpack.c.b16 %v5743, %v5735
        %v6424 = vpack.c.b16 %v5744, %v5736
        %v6425 = vpack.c.b16 %v5745, %v5737
        %v6426 = vpack.c.b16 %v5746, %v5738
        %v6427 = vpack.c.b16 %v5747, %v5739
        %v6428 = vpack.c.b16 %v5748, %v5740
        %v6429 = vpack.c.b16 %v5757, %v5749
        %v6430 = vpack.c.b16 %v5758, %v5750
        %v6431 = vpack.c.b16 %v5759, %v5751
        %v6432 = vpack.c.b16 %v5760, %v5752
        %v6433 = vpack.c.b16 %v5761, %v5753
        %v6434 = vpack.c.b16 %v5762, %v5754
        %v6435 = vpack.c.b16 %v5763, %v5755
        %v6436 = vpack.c.b16 %v5764, %v5756
        %v6437 = vpack.c.b16 %v5773, %v5765
        %v6438 = vpack.c.b16 %v5774, %v5766
        %v6439 = vpack.c.b16 %v5775, %v5767
        %v6440 = vpack.c.b16 %v5776, %v5768
        %v6441 = vpack.c.b16 %v5777, %v5769
        %v6442 = vpack.c.b16 %v5778, %v5770
        %v6443 = vpack.c.b16 %v5779, %v5771
        %v6444 = vpack.c.b16 %v5780, %v5772
        %v6445 = vpack.c.b16 %v5789, %v5781
        %v6446 = vpack.c.b16 %v5790, %v5782
        %v6447 = vpack.c.b16 %v5791, %v5783
        %v6448 = vpack.c.b16 %v5792, %v5784
        %v6449 = vpack.c.b16 %v5793, %v5785
        %v6450 = vpack.c.b16 %v5794, %v5786
        %v6451 = vpack.c.b16 %v5795, %v5787
        %v6452 = vpack.c.b16 %v5796, %v5788
        %v6453 = vpack.c.b16 %v5805, %v5797
        %v6454 = vpack.c.b16 %v5806, %v5798
        %v6455 = vpack.c.b16 %v5807, %v5799
        %v6456 = vpack.c.b16 %v5808, %v5800
        %v6457 = vpack.c.b16 %v5809, %v5801
        %v6458 = vpack.c.b16 %v5810, %v5802
        %v6459 = vpack.c.b16 %v5811, %v5803
        %v6460 = vpack.c.b16 %v5812, %v5804
        %v6461 = vpack.c.b16 %v5821, %v5813
        %v6462 = vpack.c.b16 %v5822, %v5814
        %v6463 = vpack.c.b16 %v5823, %v5815
        %v6464 = vpack.c.b16 %v5824, %v5816
        %v6465 = vpack.c.b16 %v5825, %v5817
        %v6466 = vpack.c.b16 %v5826, %v5818
        %v6467 = vpack.c.b16 %v5827, %v5819
        %v6468 = vpack.c.b16 %v5828, %v5820
        %v6469 = vpack.c.b16 %v5837, %v5829
        %v6470 = vpack.c.b16 %v5838, %v5830
        %v6471 = vpack.c.b16 %v5839, %v5831
        %v6472 = vpack.c.b16 %v5840, %v5832
        %v6473 = vpack.c.b16 %v5841, %v5833
        %v6474 = vpack.c.b16 %v5842, %v5834
        %v6475 = vpack.c.b16 %v5843, %v5835
        %v6476 = vpack.c.b16 %v5844, %v5836
        %v6477 = vpack.c.b16 %v5853, %v5845
        %v6478 = vpack.c.b16 %v5854, %v5846
        %v6479 = vpack.c.b16 %v5855, %v5847
        %v6480 = vpack.c.b16 %v5856, %v5848
        %v6481 = vpack.c.b16 %v5857, %v5849
        %v6482 = vpack.c.b16 %v5858, %v5850
        %v6483 = vpack.c.b16 %v5859, %v5851
        %v6484 = vpack.c.b16 %v5860, %v5852
        %v6485 = vpack.c.b16 %v5869, %v5861
        %v6486 = vpack.c.b16 %v5870, %v5862
        %v6487 = vpack.c.b16 %v5871, %v5863
        %v6488 = vpack.c.b16 %v5872, %v5864
        %v6489 = vpack.c.b16 %v5873, %v5865
        %v6490 = vpack.c.b16 %v5874, %v5866
        %v6491 = vpack.c.b16 %v5875, %v5867
        %v6492 = vpack.c.b16 %v5876, %v5868
        %v6493 = vpack.c.b16 %v5885, %v5877
        %v6494 = vpack.c.b16 %v5886, %v5878
        %v6495 = vpack.c.b16 %v5887, %v5879
        %v6496 = vpack.c.b16 %v5888, %v5880
        %v6497 = vpack.c.b16 %v5889, %v5881
        %v6498 = vpack.c.b16 %v5890, %v5882
        %v6499 = vpack.c.b16 %v5891, %v5883
        %v6500 = vpack.c.b16 %v5892, %v5884
        %v6501 = vpack.c.b16 %v5901, %v5893
        %v6502 = vpack.c.b16 %v5902, %v5894
        %v6503 = vpack.c.b16 %v5903, %v5895
        %v6504 = vpack.c.b16 %v5904, %v5896
        %v6505 = vpack.c.b16 %v5905, %v5897
        %v6506 = vpack.c.b16 %v5906, %v5898
        %v6507 = vpack.c.b16 %v5907, %v5899
        %v6508 = vpack.c.b16 %v5908, %v5900
        %v6509 = vpack.c.b16 %v5917, %v5909
        %v6510 = vpack.c.b16 %v5918, %v5910
        %v6511 = vpack.c.b16 %v5919, %v5911
        %v6512 = vpack.c.b16 %v5920, %v5912
        %v6513 = vpack.c.b16 %v5921, %v5913
        %v6514 = vpack.c.b16 %v5922, %v5914
        %v6515 = vpack.c.b16 %v5923, %v5915
        %v6516 = vpack.c.b16 %v5924, %v5916
        %v6517 = vpack.c.b16 %v5933, %v5925
        %v6518 = vpack.c.b16 %v5934, %v5926
        %v6519 = vpack.c.b16 %v5935, %v5927
        %v6520 = vpack.c.b16 %v5936, %v5928
        %v6521 = vpack.c.b16 %v5937, %v5929
        %v6522 = vpack.c.b16 %v5938, %v5930
        %v6523 = vpack.c.b16 %v5939, %v5931
        %v6524 = vpack.c.b16 %v5940, %v5932
        %v6525 = vpack.c.b16 %v5949, %v5941
        %v6526 = vpack.c.b16 %v5950, %v5942
        %v6527 = vpack.c.b16 %v5951, %v5943
        %v6528 = vpack.c.b16 %v5952, %v5944
        %v6529 = vpack.c.b16 %v5953, %v5945
        %v6530 = vpack.c.b16 %v5954, %v5946
        %v6531 = vpack.c.b16 %v5955, %v5947
        %v6532 = vpack.c.b16 %v5956, %v5948
        %v6533 = vpack.c.b16 %v5965, %v5957
        %v6534 = vpack.c.b16 %v5966, %v5958
        %v6535 = vpack.c.b16 %v5967, %v5959
        %v6536 = vpack.c.b16 %v5968, %v5960
        %v6537 = vpack.c.b16 %v5969, %v5961
        %v6538 = vpack.c.b16 %v5970, %v5962
        %v6539 = vpack.c.b16 %v5971, %v5963
        %v6540 = vpack.c.b16 %v5972, %v5964
        %v6541 = vpack.c.b16 %v5981, %v5973
        %v6542 = vpack.c.b16 %v5982, %v5974
        %v6543 = vpack.c.b16 %v5983, %v5975
        %v6544 = vpack.c.b16 %v5984, %v5976
        %v6545 = vpack.c.b16 %v5985, %v5977
        %v6546 = vpack.c.b16 %v5986, %v5978
        %v6547 = vpack.c.b16 %v5987, %v5979
        %v6548 = vpack.c.b16 %v5988, %v5980
        %v6549 = vpack.c.b16 %v5997, %v5989
        %v6550 = vpack.c.b16 %v5998, %v5990
        %v6551 = vpack.c.b16 %v5999, %v5991
        %v6552 = vpack.c.b16 %v6000, %v5992
        %v6553 = vpack.c.b16 %v6001, %v5993
        %v6554 = vpack.c.b16 %v6002, %v5994
        %v6555 = vpack.c.b16 %v6003, %v5995
        %v6556 = vpack.c.b16 %v6004, %v5996
        %v6557 = vpack.c.b16 %v6013, %v6005
        %v6558 = vpack.c.b16 %v6014, %v6006
        %v6559 = vpack.c.b16 %v6015, %v6007
        %v6560 = vpack.c.b16 %v6016, %v6008
        %v6561 = vpack.c.b16 %v6017, %v6009
        %v6562 = vpack.c.b16 %v6018, %v6010
        %v6563 = vpack.c.b16 %v6019, %v6011
        %v6564 = vpack.c.b16 %v6020, %v6012
        %v6565 = vpack.c.b16 %v6029, %v6021
        %v6566 = vpack.c.b16 %v6030, %v6022
        %v6567 = vpack.c.b16 %v6031, %v6023
        %v6568 = vpack.c.b16 %v6032, %v6024
        %v6569 = vpack.c.b16 %v6033, %v6025
        %v6570 = vpack.c.b16 %v6034, %v6026
        %v6571 = vpack.c.b16 %v6035, %v6027
        %v6572 = vpack.c.b16 %v6036, %v6028
        %v6573 = vpack.c.b16 %v6045, %v6037
        %v6574 = vpack.c.b16 %v6046, %v6038
        %v6575 = vpack.c.b16 %v6047, %v6039
        %v6576 = vpack.c.b16 %v6048, %v6040
        %v6577 = vpack.c.b16 %v6049, %v6041
        %v6578 = vpack.c.b16 %v6050, %v6042
        %v6579 = vpack.c.b16 %v6051, %v6043
        %v6580 = vpack.c.b16 %v6052, %v6044
        %v6581 = vpack.c.b16 %v6061, %v6053
        %v6582 = vpack.c.b16 %v6062, %v6054
        %v6583 = vpack.c.b16 %v6063, %v6055
        %v6584 = vpack.c.b16 %v6064, %v6056
        %v6585 = vpack.c.b16 %v6065, %v6057
        %v6586 = vpack.c.b16 %v6066, %v6058
        %v6587 = vpack.c.b16 %v6067, %v6059
        %v6588 = vpack.c.b16 %v6068, %v6060
        %v6589 = vpack.c.b16 %v6077, %v6069
        %v6590 = vpack.c.b16 %v6078, %v6070
        %v6591 = vpack.c.b16 %v6079, %v6071
        %v6592 = vpack.c.b16 %v6080, %v6072
        %v6593 = vpack.c.b16 %v6081, %v6073
        %v6594 = vpack.c.b16 %v6082, %v6074
        %v6595 = vpack.c.b16 %v6083, %v6075
        %v6596 = vpack.c.b16 %v6084, %v6076
        %7109 = vmatprep.subr.bf16.mxu0 %v6142
        %7110 = vmatpush1.bf16.msra.mxu0 %v6141
        %7111 = vmatprep.subr.bf16.mxu0 %v6134
        %7112 = vmatpush1.bf16.msra.mxu0 %v6133
        %7113 = vmatprep.subr.bf16.mxu0 %v6126
        %7114 = vmatpush1.bf16.msra.mxu0 %v6125
        %7115 = vmatprep.subr.bf16.mxu0 %v6118
        %7116 = vmatpush1.bf16.msra.mxu0 %v6117
        %7117 = vmatprep.subr.bf16.mxu0 %v6110
        %7118 = vmatpush1.bf16.msra.mxu0 %v6109
        %7119 = vmatprep.subr.bf16.mxu0 %v6102
        %7120 = vmatpush1.bf16.msra.mxu0 %v6101
        %7121 = vmatprep.subr.bf16.mxu0 %v6094
        %7122 = vmatpush1.bf16.msra.mxu0 %v6093
        %7123 = vmatprep.subr.bf16.mxu0 %v6086
        %7124 = vmatpush1.bf16.msra.mxu0 %v6085
        %7125 = vmatprep.subr.bf16.mxu0 %v6206
        %7126 = vmatpush2.bf16.msra.mxu0 %v6205
        %7127 = vmatprep.subr.bf16.mxu0 %v6198
        %7128 = vmatpush2.bf16.msra.mxu0 %v6197
        %7129 = vmatprep.subr.bf16.mxu0 %v6190
        %7130 = vmatpush2.bf16.msra.mxu0 %v6189
        %7131 = vmatprep.subr.bf16.mxu0 %v6182
        %7132 = vmatpush2.bf16.msra.mxu0 %v6181
        %7133 = vmatprep.subr.bf16.mxu0 %v6174
        %7134 = vmatpush2.bf16.msra.mxu0 %v6173
        %7135 = vmatprep.subr.bf16.mxu0 %v6166
        %7136 = vmatpush2.bf16.msra.mxu0 %v6165
        %7137 = vmatprep.subr.bf16.mxu0 %v6158
        %7138 = vmatpush2.bf16.msra.mxu0 %v6157
        %7139 = vmatprep.subr.bf16.mxu0 %v6150
        %7140 = vmatpush2.bf16.msra.mxu0 %v6149
        %7141 = vmatprep.mubr.bf16.mxu0 %v4030
        %7142 = vmatmul.mubr.bf16.gmra.mxu0 %v4029
        %v7143 = vpop.f32.mrf.mxu0
        %v7144 = vadd.f32 0.0, %v7143
        %v7145 = vpop.f32.mrf.mxu0
        %v7146 = vadd.f32 0.0, %v7145
        %v7147 = vpop.f32.mrf.mxu0
        %v7148 = vpop.f32.mrf.mxu0
        %7149 = vdwg.mxu0
        %7150 = vmatprep.subr.bf16.mxu0 %v6270
        %7151 = vmatpush1.bf16.msra.mxu0 %v6269
        %7152 = vmatprep.subr.bf16.mxu0 %v6262
        %7153 = vmatpush1.bf16.msra.mxu0 %v6261
        %7154 = vmatprep.subr.bf16.mxu0 %v6254
        %7155 = vmatpush1.bf16.msra.mxu0 %v6253
        %7156 = vmatprep.subr.bf16.mxu0 %v6246
        %7157 = vmatpush1.bf16.msra.mxu0 %v6245
        %7158 = vmatprep.subr.bf16.mxu0 %v6238
        %7159 = vmatpush1.bf16.msra.mxu0 %v6237
        %7160 = vmatprep.subr.bf16.mxu0 %v6230
        %7161 = vmatpush1.bf16.msra.mxu0 %v6229
        %7162 = vmatprep.subr.bf16.mxu0 %v6222
        %7163 = vmatpush1.bf16.msra.mxu0 %v6221
        %7164 = vmatprep.subr.bf16.mxu0 %v6214
        %7165 = vmatpush1.bf16.msra.mxu0 %v6213
        %7166 = vmatprep.subr.bf16.mxu0 %v6334
        %7167 = vmatpush2.bf16.msra.mxu0 %v6333
        %7168 = vmatprep.subr.bf16.mxu0 %v6326
        %7169 = vmatpush2.bf16.msra.mxu0 %v6325
        %7170 = vmatprep.subr.bf16.mxu0 %v6318
        %7171 = vmatpush2.bf16.msra.mxu0 %v6317
        %7172 = vmatprep.subr.bf16.mxu0 %v6310
        %7173 = vmatpush2.bf16.msra.mxu0 %v6309
        %7174 = vmatprep.subr.bf16.mxu0 %v6302
        %7175 = vmatpush2.bf16.msra.mxu0 %v6301
        %7176 = vmatprep.subr.bf16.mxu0 %v6294
        %7177 = vmatpush2.bf16.msra.mxu0 %v6293
        %7178 = vmatprep.subr.bf16.mxu0 %v6286
        %7179 = vmatpush2.bf16.msra.mxu0 %v6285
        %7180 = vmatprep.subr.bf16.mxu0 %v6278
        %7181 = vmatpush2.bf16.msra.mxu0 %v6277
        %7182 = vmatprep.mubr.bf16.mxu0 %v4032
        %7183 = vmatmul.mubr.bf16.gmra.mxu0 %v4031
        %v7184 = vpop.f32.mrf.mxu0
        %v7185 = vadd.f32 %v7144, %v7184
        %v7186 = vpop.f32.mrf.mxu0
        %v7187 = vadd.f32 %v7146, %v7186
        %v7188 = vpop.f32.mrf.mxu0
        %v7189 = vpop.f32.mrf.mxu0
        %7190 = vdwg.mxu0
        %7191 = vmatprep.subr.bf16.mxu0 %v6398
        %7192 = vmatpush1.bf16.msra.mxu0 %v6397
        %7193 = vmatprep.subr.bf16.mxu0 %v6390
        %7194 = vmatpush1.bf16.msra.mxu0 %v6389
        %7195 = vmatprep.subr.bf16.mxu0 %v6382
        %7196 = vmatpush1.bf16.msra.mxu0 %v6381
        %7197 = vmatprep.subr.bf16.mxu0 %v6374
        %7198 = vmatpush1.bf16.msra.mxu0 %v6373
        %7199 = vmatprep.subr.bf16.mxu0 %v6366
        %7200 = vmatpush1.bf16.msra.mxu0 %v6365
        %7201 = vmatprep.subr.bf16.mxu0 %v6358
        %7202 = vmatpush1.bf16.msra.mxu0 %v6357
        %7203 = vmatprep.subr.bf16.mxu0 %v6350
        %7204 = vmatpush1.bf16.msra.mxu0 %v6349
        %7205 = vmatprep.subr.bf16.mxu0 %v6342
        %7206 = vmatpush1.bf16.msra.mxu0 %v6341
        %7207 = vmatprep.subr.bf16.mxu0 %v6462
        %7208 = vmatpush2.bf16.msra.mxu0 %v6461
        %7209 = vmatprep.subr.bf16.mxu0 %v6454
        %7210 = vmatpush2.bf16.msra.mxu0 %v6453
        %7211 = vmatprep.subr.bf16.mxu0 %v6446
        %7212 = vmatpush2.bf16.msra.mxu0 %v6445
        %7213 = vmatprep.subr.bf16.mxu0 %v6438
        %7214 = vmatpush2.bf16.msra.mxu0 %v6437
        %7215 = vmatprep.subr.bf16.mxu0 %v6430
        %7216 = vmatpush2.bf16.msra.mxu0 %v6429
        %7217 = vmatprep.subr.bf16.mxu0 %v6422
        %7218 = vmatpush2.bf16.msra.mxu0 %v6421
        %7219 = vmatprep.subr.bf16.mxu0 %v6414
        %7220 = vmatpush2.bf16.msra.mxu0 %v6413
        %7221 = vmatprep.subr.bf16.mxu0 %v6406
        %7222 = vmatpush2.bf16.msra.mxu0 %v6405
        %7223 = vmatprep.mubr.bf16.mxu0 %v4034
        %7224 = vmatmul.mubr.bf16.gmra.mxu0 %v4033
        %v7225 = vpop.f32.mrf.mxu0
        %v7226 = vadd.f32 %v7185, %v7225
        %v7227 = vpop.f32.mrf.mxu0
        %v7228 = vadd.f32 %v7187, %v7227
        %v7229 = vpop.f32.mrf.mxu0
        %v7230 = vpop.f32.mrf.mxu0
        %7231 = vdwg.mxu0
        %7232 = vmatprep.subr.bf16.mxu0 %v6526
        %7233 = vmatpush1.bf16.msra.mxu0 %v6525
        %7234 = vmatprep.subr.bf16.mxu0 %v6518
        %7235 = vmatpush1.bf16.msra.mxu0 %v6517
        %7236 = vmatprep.subr.bf16.mxu0 %v6510
        %7237 = vmatpush1.bf16.msra.mxu0 %v6509
        %7238 = vmatprep.subr.bf16.mxu0 %v6502
        %7239 = vmatpush1.bf16.msra.mxu0 %v6501
        %7240 = vmatprep.subr.bf16.mxu0 %v6494
        %7241 = vmatpush1.bf16.msra.mxu0 %v6493
        %7242 = vmatprep.subr.bf16.mxu0 %v6486
        %7243 = vmatpush1.bf16.msra.mxu0 %v6485
        %7244 = vmatprep.subr.bf16.mxu0 %v6478
        %7245 = vmatpush1.bf16.msra.mxu0 %v6477
        %7246 = vmatprep.subr.bf16.mxu0 %v6470
        %7247 = vmatpush1.bf16.msra.mxu0 %v6469
        %7248 = vmatprep.subr.bf16.mxu0 %v6590
        %7249 = vmatpush2.bf16.msra.mxu0 %v6589
        %7250 = vmatprep.subr.bf16.mxu0 %v6582
        %7251 = vmatpush2.bf16.msra.mxu0 %v6581
        %7252 = vmatprep.subr.bf16.mxu0 %v6574
        %7253 = vmatpush2.bf16.msra.mxu0 %v6573
        %7254 = vmatprep.subr.bf16.mxu0 %v6566
        %7255 = vmatpush2.bf16.msra.mxu0 %v6565
        %7256 = vmatprep.subr.bf16.mxu0 %v6558
        %7257 = vmatpush2.bf16.msra.mxu0 %v6557
        %7258 = vmatprep.subr.bf16.mxu0 %v6550
        %7259 = vmatpush2.bf16.msra.mxu0 %v6549
        %7260 = vmatprep.subr.bf16.mxu0 %v6542
        %7261 = vmatpush2.bf16.msra.mxu0 %v6541
        %7262 = vmatprep.subr.bf16.mxu0 %v6534
        %7263 = vmatpush2.bf16.msra.mxu0 %v6533
        %7264 = vmatprep.mubr.bf16.mxu0 %v4036
        %7265 = vmatmul.mubr.bf16.gmra.mxu0 %v4035
        %v7266 = vpop.f32.mrf.mxu0
        %v7267 = vadd.f32 %v7226, %v7266
        %v7268 = vpop.f32.mrf.mxu0
        %v7269 = vadd.f32 %v7228, %v7268
        %v7270 = vpop.f32.mrf.mxu0
        %v7271 = vpop.f32.mrf.mxu0
        %7272 = vdwg.mxu0
        %7273 = vmatprep.subr.bf16.mxu0 %v6144
        %7274 = vmatpush1.bf16.msra.mxu0 %v6143
        %7275 = vmatprep.subr.bf16.mxu0 %v6136
        %7276 = vmatpush1.bf16.msra.mxu0 %v6135
        %7277 = vmatprep.subr.bf16.mxu0 %v6128
        %7278 = vmatpush1.bf16.msra.mxu0 %v6127
        %7279 = vmatprep.subr.bf16.mxu0 %v6120
        %7280 = vmatpush1.bf16.msra.mxu0 %v6119
        %7281 = vmatprep.subr.bf16.mxu0 %v6112
        %7282 = vmatpush1.bf16.msra.mxu0 %v6111
        %7283 = vmatprep.subr.bf16.mxu0 %v6104
        %7284 = vmatpush1.bf16.msra.mxu0 %v6103
        %7285 = vmatprep.subr.bf16.mxu0 %v6096
        %7286 = vmatpush1.bf16.msra.mxu0 %v6095
        %7287 = vmatprep.subr.bf16.mxu0 %v6088
        %7288 = vmatpush1.bf16.msra.mxu0 %v6087
        %7289 = vmatprep.subr.bf16.mxu0 %v6208
        %7290 = vmatpush2.bf16.msra.mxu0 %v6207
        %7291 = vmatprep.subr.bf16.mxu0 %v6200
        %7292 = vmatpush2.bf16.msra.mxu0 %v6199
        %7293 = vmatprep.subr.bf16.mxu0 %v6192
        %7294 = vmatpush2.bf16.msra.mxu0 %v6191
        %7295 = vmatprep.subr.bf16.mxu0 %v6184
        %7296 = vmatpush2.bf16.msra.mxu0 %v6183
        %7297 = vmatprep.subr.bf16.mxu0 %v6176
        %7298 = vmatpush2.bf16.msra.mxu0 %v6175
        %7299 = vmatprep.subr.bf16.mxu0 %v6168
        %7300 = vmatpush2.bf16.msra.mxu0 %v6167
        %7301 = vmatprep.subr.bf16.mxu0 %v6160
        %7302 = vmatpush2.bf16.msra.mxu0 %v6159
        %7303 = vmatprep.subr.bf16.mxu0 %v6152
        %7304 = vmatpush2.bf16.msra.mxu0 %v6151
        %7305 = vmatprep.mubr.bf16.mxu0 %v4030
        %7306 = vmatmul.mubr.bf16.gmra.mxu0 %v4029
        %v7307 = vpop.f32.mrf.mxu0
        %v7308 = vadd.f32 0.0, %v7307
        %v7309 = vpop.f32.mrf.mxu0
        %v7310 = vadd.f32 0.0, %v7309
        %v7311 = vpop.f32.mrf.mxu0
        %v7312 = vpop.f32.mrf.mxu0
        %7313 = vdwg.mxu0
        %7314 = vmatprep.subr.bf16.mxu0 %v6272
        %7315 = vmatpush1.bf16.msra.mxu0 %v6271
        %7316 = vmatprep.subr.bf16.mxu0 %v6264
        %7317 = vmatpush1.bf16.msra.mxu0 %v6263
        %7318 = vmatprep.subr.bf16.mxu0 %v6256
        %7319 = vmatpush1.bf16.msra.mxu0 %v6255
        %7320 = vmatprep.subr.bf16.mxu0 %v6248
        %7321 = vmatpush1.bf16.msra.mxu0 %v6247
        %7322 = vmatprep.subr.bf16.mxu0 %v6240
        %7323 = vmatpush1.bf16.msra.mxu0 %v6239
        %7324 = vmatprep.subr.bf16.mxu0 %v6232
        %7325 = vmatpush1.bf16.msra.mxu0 %v6231
        %7326 = vmatprep.subr.bf16.mxu0 %v6224
        %7327 = vmatpush1.bf16.msra.mxu0 %v6223
        %7328 = vmatprep.subr.bf16.mxu0 %v6216
        %7329 = vmatpush1.bf16.msra.mxu0 %v6215
        %7330 = vmatprep.subr.bf16.mxu0 %v6336
        %7331 = vmatpush2.bf16.msra.mxu0 %v6335
        %7332 = vmatprep.subr.bf16.mxu0 %v6328
        %7333 = vmatpush2.bf16.msra.mxu0 %v6327
        %7334 = vmatprep.subr.bf16.mxu0 %v6320
        %7335 = vmatpush2.bf16.msra.mxu0 %v6319
        %7336 = vmatprep.subr.bf16.mxu0 %v6312
        %7337 = vmatpush2.bf16.msra.mxu0 %v6311
        %7338 = vmatprep.subr.bf16.mxu0 %v6304
        %7339 = vmatpush2.bf16.msra.mxu0 %v6303
        %7340 = vmatprep.subr.bf16.mxu0 %v6296
        %7341 = vmatpush2.bf16.msra.mxu0 %v6295
        %7342 = vmatprep.subr.bf16.mxu0 %v6288
        %7343 = vmatpush2.bf16.msra.mxu0 %v6287
        %7344 = vmatprep.subr.bf16.mxu0 %v6280
        %7345 = vmatpush2.bf16.msra.mxu0 %v6279
        %7346 = vmatprep.mubr.bf16.mxu0 %v4032
        %7347 = vmatmul.mubr.bf16.gmra.mxu0 %v4031
        %v7348 = vpop.f32.mrf.mxu0
        %v7349 = vadd.f32 %v7308, %v7348
        %v7350 = vpop.f32.mrf.mxu0
        %v7351 = vadd.f32 %v7310, %v7350
        %v7352 = vpop.f32.mrf.mxu0
        %v7353 = vpop.f32.mrf.mxu0
        %7354 = vdwg.mxu0
        %7355 = vmatprep.subr.bf16.mxu0 %v6400
        %7356 = vmatpush1.bf16.msra.mxu0 %v6399
        %7357 = vmatprep.subr.bf16.mxu0 %v6392
        %7358 = vmatpush1.bf16.msra.mxu0 %v6391
        %7359 = vmatprep.subr.bf16.mxu0 %v6384
        %7360 = vmatpush1.bf16.msra.mxu0 %v6383
        %7361 = vmatprep.subr.bf16.mxu0 %v6376
        %7362 = vmatpush1.bf16.msra.mxu0 %v6375
        %7363 = vmatprep.subr.bf16.mxu0 %v6368
        %7364 = vmatpush1.bf16.msra.mxu0 %v6367
        %7365 = vmatprep.subr.bf16.mxu0 %v6360
        %7366 = vmatpush1.bf16.msra.mxu0 %v6359
        %7367 = vmatprep.subr.bf16.mxu0 %v6352
        %7368 = vmatpush1.bf16.msra.mxu0 %v6351
        %7369 = vmatprep.subr.bf16.mxu0 %v6344
        %7370 = vmatpush1.bf16.msra.mxu0 %v6343
        %7371 = vmatprep.subr.bf16.mxu0 %v6464
        %7372 = vmatpush2.bf16.msra.mxu0 %v6463
        %7373 = vmatprep.subr.bf16.mxu0 %v6456
        %7374 = vmatpush2.bf16.msra.mxu0 %v6455
        %7375 = vmatprep.subr.bf16.mxu0 %v6448
        %7376 = vmatpush2.bf16.msra.mxu0 %v6447
        %7377 = vmatprep.subr.bf16.mxu0 %v6440
        %7378 = vmatpush2.bf16.msra.mxu0 %v6439
        %7379 = vmatprep.subr.bf16.mxu0 %v6432
        %7380 = vmatpush2.bf16.msra.mxu0 %v6431
        %7381 = vmatprep.subr.bf16.mxu0 %v6424
        %7382 = vmatpush2.bf16.msra.mxu0 %v6423
        %7383 = vmatprep.subr.bf16.mxu0 %v6416
        %7384 = vmatpush2.bf16.msra.mxu0 %v6415
        %7385 = vmatprep.subr.bf16.mxu0 %v6408
        %7386 = vmatpush2.bf16.msra.mxu0 %v6407
        %7387 = vmatprep.mubr.bf16.mxu0 %v4034
        %7388 = vmatmul.mubr.bf16.gmra.mxu0 %v4033
        %v7389 = vpop.f32.mrf.mxu0
        %v7390 = vadd.f32 %v7349, %v7389
        %v7391 = vpop.f32.mrf.mxu0
        %v7392 = vadd.f32 %v7351, %v7391
        %v7393 = vpop.f32.mrf.mxu0
        %v7394 = vpop.f32.mrf.mxu0
        %7395 = vdwg.mxu0
        %7396 = vmatprep.subr.bf16.mxu0 %v6528
        %7397 = vmatpush1.bf16.msra.mxu0 %v6527
        %7398 = vmatprep.subr.bf16.mxu0 %v6520
        %7399 = vmatpush1.bf16.msra.mxu0 %v6519
        %7400 = vmatprep.subr.bf16.mxu0 %v6512
        %7401 = vmatpush1.bf16.msra.mxu0 %v6511
        %7402 = vmatprep.subr.bf16.mxu0 %v6504
        %7403 = vmatpush1.bf16.msra.mxu0 %v6503
        %7404 = vmatprep.subr.bf16.mxu0 %v6496
        %7405 = vmatpush1.bf16.msra.mxu0 %v6495
        %7406 = vmatprep.subr.bf16.mxu0 %v6488
        %7407 = vmatpush1.bf16.msra.mxu0 %v6487
        %7408 = vmatprep.subr.bf16.mxu0 %v6480
        %7409 = vmatpush1.bf16.msra.mxu0 %v6479
        %7410 = vmatprep.subr.bf16.mxu0 %v6472
        %7411 = vmatpush1.bf16.msra.mxu0 %v6471
        %7412 = vmatprep.subr.bf16.mxu0 %v6592
        %7413 = vmatpush2.bf16.msra.mxu0 %v6591
        %7414 = vmatprep.subr.bf16.mxu0 %v6584
        %7415 = vmatpush2.bf16.msra.mxu0 %v6583
        %7416 = vmatprep.subr.bf16.mxu0 %v6576
        %7417 = vmatpush2.bf16.msra.mxu0 %v6575
        %7418 = vmatprep.subr.bf16.mxu0 %v6568
        %7419 = vmatpush2.bf16.msra.mxu0 %v6567
        %7420 = vmatprep.subr.bf16.mxu0 %v6560
        %7421 = vmatpush2.bf16.msra.mxu0 %v6559
        %7422 = vmatprep.subr.bf16.mxu0 %v6552
        %7423 = vmatpush2.bf16.msra.mxu0 %v6551
        %7424 = vmatprep.subr.bf16.mxu0 %v6544
        %7425 = vmatpush2.bf16.msra.mxu0 %v6543
        %7426 = vmatprep.subr.bf16.mxu0 %v6536
        %7427 = vmatpush2.bf16.msra.mxu0 %v6535
        %7428 = vmatprep.mubr.bf16.mxu0 %v4036
        %7429 = vmatmul.mubr.bf16.gmra.mxu0 %v4035
        %v7430 = vpop.f32.mrf.mxu0
        %v7431 = vadd.f32 %v7390, %v7430
        %v7432 = vpop.f32.mrf.mxu0
        %v7433 = vadd.f32 %v7392, %v7432
        %v7434 = vpop.f32.mrf.mxu0
        %v7435 = vpop.f32.mrf.mxu0
        %7436 = vdwg.mxu0
        %7437 = vmatprep.subr.bf16.mxu0 %v6146
        %7438 = vmatpush1.bf16.msra.mxu0 %v6145
        %7439 = vmatprep.subr.bf16.mxu0 %v6138
        %7440 = vmatpush1.bf16.msra.mxu0 %v6137
        %7441 = vmatprep.subr.bf16.mxu0 %v6130
        %7442 = vmatpush1.bf16.msra.mxu0 %v6129
        %7443 = vmatprep.subr.bf16.mxu0 %v6122
        %7444 = vmatpush1.bf16.msra.mxu0 %v6121
        %7445 = vmatprep.subr.bf16.mxu0 %v6114
        %7446 = vmatpush1.bf16.msra.mxu0 %v6113
        %7447 = vmatprep.subr.bf16.mxu0 %v6106
        %7448 = vmatpush1.bf16.msra.mxu0 %v6105
        %7449 = vmatprep.subr.bf16.mxu0 %v6098
        %7450 = vmatpush1.bf16.msra.mxu0 %v6097
        %7451 = vmatprep.subr.bf16.mxu0 %v6090
        %7452 = vmatpush1.bf16.msra.mxu0 %v6089
        %7453 = vmatprep.subr.bf16.mxu0 %v6210
        %7454 = vmatpush2.bf16.msra.mxu0 %v6209
        %7455 = vmatprep.subr.bf16.mxu0 %v6202
        %7456 = vmatpush2.bf16.msra.mxu0 %v6201
        %7457 = vmatprep.subr.bf16.mxu0 %v6194
        %7458 = vmatpush2.bf16.msra.mxu0 %v6193
        %7459 = vmatprep.subr.bf16.mxu0 %v6186
        %7460 = vmatpush2.bf16.msra.mxu0 %v6185
        %7461 = vmatprep.subr.bf16.mxu0 %v6178
        %7462 = vmatpush2.bf16.msra.mxu0 %v6177
        %7463 = vmatprep.subr.bf16.mxu0 %v6170
        %7464 = vmatpush2.bf16.msra.mxu0 %v6169
        %7465 = vmatprep.subr.bf16.mxu0 %v6162
        %7466 = vmatpush2.bf16.msra.mxu0 %v6161
        %7467 = vmatprep.subr.bf16.mxu0 %v6154
        %7468 = vmatpush2.bf16.msra.mxu0 %v6153
        %7469 = vmatprep.mubr.bf16.mxu0 %v4030
        %7470 = vmatmul.mubr.bf16.gmra.mxu0 %v4029
        %v7471 = vpop.f32.mrf.mxu0
        %v7472 = vadd.f32 0.0, %v7471
        %v7473 = vpop.f32.mrf.mxu0
        %v7474 = vadd.f32 0.0, %v7473
        %v7475 = vpop.f32.mrf.mxu0
        %v7476 = vpop.f32.mrf.mxu0
        %7477 = vdwg.mxu0
        %7478 = vmatprep.subr.bf16.mxu0 %v6274
        %7479 = vmatpush1.bf16.msra.mxu0 %v6273
        %7480 = vmatprep.subr.bf16.mxu0 %v6266
        %7481 = vmatpush1.bf16.msra.mxu0 %v6265
        %7482 = vmatprep.subr.bf16.mxu0 %v6258
        %7483 = vmatpush1.bf16.msra.mxu0 %v6257
        %7484 = vmatprep.subr.bf16.mxu0 %v6250
        %7485 = vmatpush1.bf16.msra.mxu0 %v6249
        %7486 = vmatprep.subr.bf16.mxu0 %v6242
        %7487 = vmatpush1.bf16.msra.mxu0 %v6241
        %7488 = vmatprep.subr.bf16.mxu0 %v6234
        %7489 = vmatpush1.bf16.msra.mxu0 %v6233
        %7490 = vmatprep.subr.bf16.mxu0 %v6226
        %7491 = vmatpush1.bf16.msra.mxu0 %v6225
        %7492 = vmatprep.subr.bf16.mxu0 %v6218
        %7493 = vmatpush1.bf16.msra.mxu0 %v6217
        %7494 = vmatprep.subr.bf16.mxu0 %v6338
        %7495 = vmatpush2.bf16.msra.mxu0 %v6337
        %7496 = vmatprep.subr.bf16.mxu0 %v6330
        %7497 = vmatpush2.bf16.msra.mxu0 %v6329
        %7498 = vmatprep.subr.bf16.mxu0 %v6322
        %7499 = vmatpush2.bf16.msra.mxu0 %v6321
        %7500 = vmatprep.subr.bf16.mxu0 %v6314
        %7501 = vmatpush2.bf16.msra.mxu0 %v6313
        %7502 = vmatprep.subr.bf16.mxu0 %v6306
        %7503 = vmatpush2.bf16.msra.mxu0 %v6305
        %7504 = vmatprep.subr.bf16.mxu0 %v6298
        %7505 = vmatpush2.bf16.msra.mxu0 %v6297
        %7506 = vmatprep.subr.bf16.mxu0 %v6290
        %7507 = vmatpush2.bf16.msra.mxu0 %v6289
        %7508 = vmatprep.subr.bf16.mxu0 %v6282
        %7509 = vmatpush2.bf16.msra.mxu0 %v6281
        %7510 = vmatprep.mubr.bf16.mxu0 %v4032
        %7511 = vmatmul.mubr.bf16.gmra.mxu0 %v4031
        %v7512 = vpop.f32.mrf.mxu0
        %v7513 = vadd.f32 %v7472, %v7512
        %v7514 = vpop.f32.mrf.mxu0
        %v7515 = vadd.f32 %v7474, %v7514
        %v7516 = vpop.f32.mrf.mxu0
        %v7517 = vpop.f32.mrf.mxu0
        %7518 = vdwg.mxu0
        %7519 = vmatprep.subr.bf16.mxu0 %v6402
        %7520 = vmatpush1.bf16.msra.mxu0 %v6401
        %7521 = vmatprep.subr.bf16.mxu0 %v6394
        %7522 = vmatpush1.bf16.msra.mxu0 %v6393
        %7523 = vmatprep.subr.bf16.mxu0 %v6386
        %7524 = vmatpush1.bf16.msra.mxu0 %v6385
        %7525 = vmatprep.subr.bf16.mxu0 %v6378
        %7526 = vmatpush1.bf16.msra.mxu0 %v6377
        %7527 = vmatprep.subr.bf16.mxu0 %v6370
        %7528 = vmatpush1.bf16.msra.mxu0 %v6369
        %7529 = vmatprep.subr.bf16.mxu0 %v6362
        %7530 = vmatpush1.bf16.msra.mxu0 %v6361
        %7531 = vmatprep.subr.bf16.mxu0 %v6354
        %7532 = vmatpush1.bf16.msra.mxu0 %v6353
        %7533 = vmatprep.subr.bf16.mxu0 %v6346
        %7534 = vmatpush1.bf16.msra.mxu0 %v6345
        %7535 = vmatprep.subr.bf16.mxu0 %v6466
        %7536 = vmatpush2.bf16.msra.mxu0 %v6465
        %7537 = vmatprep.subr.bf16.mxu0 %v6458
        %7538 = vmatpush2.bf16.msra.mxu0 %v6457
        %7539 = vmatprep.subr.bf16.mxu0 %v6450
        %7540 = vmatpush2.bf16.msra.mxu0 %v6449
        %7541 = vmatprep.subr.bf16.mxu0 %v6442
        %7542 = vmatpush2.bf16.msra.mxu0 %v6441
        %7543 = vmatprep.subr.bf16.mxu0 %v6434
        %7544 = vmatpush2.bf16.msra.mxu0 %v6433
        %7545 = vmatprep.subr.bf16.mxu0 %v6426
        %7546 = vmatpush2.bf16.msra.mxu0 %v6425
        %7547 = vmatprep.subr.bf16.mxu0 %v6418
        %7548 = vmatpush2.bf16.msra.mxu0 %v6417
        %7549 = vmatprep.subr.bf16.mxu0 %v6410
        %7550 = vmatpush2.bf16.msra.mxu0 %v6409
        %7551 = vmatprep.mubr.bf16.mxu0 %v4034
        %7552 = vmatmul.mubr.bf16.gmra.mxu0 %v4033
        %v7553 = vpop.f32.mrf.mxu0
        %v7554 = vadd.f32 %v7513, %v7553
        %v7555 = vpop.f32.mrf.mxu0
        %v7556 = vadd.f32 %v7515, %v7555
        %v7557 = vpop.f32.mrf.mxu0
        %v7558 = vpop.f32.mrf.mxu0
        %7559 = vdwg.mxu0
        %7560 = vmatprep.subr.bf16.mxu0 %v6530
        %7561 = vmatpush1.bf16.msra.mxu0 %v6529
        %7562 = vmatprep.subr.bf16.mxu0 %v6522
        %7563 = vmatpush1.bf16.msra.mxu0 %v6521
        %7564 = vmatprep.subr.bf16.mxu0 %v6514
        %7565 = vmatpush1.bf16.msra.mxu0 %v6513
        %7566 = vmatprep.subr.bf16.mxu0 %v6506
        %7567 = vmatpush1.bf16.msra.mxu0 %v6505
        %7568 = vmatprep.subr.bf16.mxu0 %v6498
        %7569 = vmatpush1.bf16.msra.mxu0 %v6497
        %7570 = vmatprep.subr.bf16.mxu0 %v6490
        %7571 = vmatpush1.bf16.msra.mxu0 %v6489
        %7572 = vmatprep.subr.bf16.mxu0 %v6482
        %7573 = vmatpush1.bf16.msra.mxu0 %v6481
        %7574 = vmatprep.subr.bf16.mxu0 %v6474
        %7575 = vmatpush1.bf16.msra.mxu0 %v6473
        %7576 = vmatprep.subr.bf16.mxu0 %v6594
        %7577 = vmatpush2.bf16.msra.mxu0 %v6593
        %7578 = vmatprep.subr.bf16.mxu0 %v6586
        %7579 = vmatpush2.bf16.msra.mxu0 %v6585
        %7580 = vmatprep.subr.bf16.mxu0 %v6578
        %7581 = vmatpush2.bf16.msra.mxu0 %v6577
        %7582 = vmatprep.subr.bf16.mxu0 %v6570
        %7583 = vmatpush2.bf16.msra.mxu0 %v6569
        %7584 = vmatprep.subr.bf16.mxu0 %v6562
        %7585 = vmatpush2.bf16.msra.mxu0 %v6561
        %7586 = vmatprep.subr.bf16.mxu0 %v6554
        %7587 = vmatpush2.bf16.msra.mxu0 %v6553
        %7588 = vmatprep.subr.bf16.mxu0 %v6546
        %7589 = vmatpush2.bf16.msra.mxu0 %v6545
        %7590 = vmatprep.subr.bf16.mxu0 %v6538
        %7591 = vmatpush2.bf16.msra.mxu0 %v6537
        %7592 = vmatprep.mubr.bf16.mxu0 %v4036
        %7593 = vmatmul.mubr.bf16.gmra.mxu0 %v4035
        %v7594 = vpop.f32.mrf.mxu0
        %v7595 = vadd.f32 %v7554, %v7594
        %v7596 = vpop.f32.mrf.mxu0
        %v7597 = vadd.f32 %v7556, %v7596
        %v7598 = vpop.f32.mrf.mxu0
        %v7599 = vpop.f32.mrf.mxu0
        %7600 = vdwg.mxu0
        %7601 = vmatprep.subr.bf16.mxu0 %v6148
        %7602 = vmatpush1.bf16.msra.mxu0 %v6147
        %7603 = vmatprep.subr.bf16.mxu0 %v6140
        %7604 = vmatpush1.bf16.msra.mxu0 %v6139
        %7605 = vmatprep.subr.bf16.mxu0 %v6132
        %7606 = vmatpush1.bf16.msra.mxu0 %v6131
        %7607 = vmatprep.subr.bf16.mxu0 %v6124
        %7608 = vmatpush1.bf16.msra.mxu0 %v6123
        %7609 = vmatprep.subr.bf16.mxu0 %v6116
        %7610 = vmatpush1.bf16.msra.mxu0 %v6115
        %7611 = vmatprep.subr.bf16.mxu0 %v6108
        %7612 = vmatpush1.bf16.msra.mxu0 %v6107
        %7613 = vmatprep.subr.bf16.mxu0 %v6100
        %7614 = vmatpush1.bf16.msra.mxu0 %v6099
        %7615 = vmatprep.subr.bf16.mxu0 %v6092
        %7616 = vmatpush1.bf16.msra.mxu0 %v6091
        %7617 = vmatprep.subr.bf16.mxu0 %v6212
        %7618 = vmatpush2.bf16.msra.mxu0 %v6211
        %7619 = vmatprep.subr.bf16.mxu0 %v6204
        %7620 = vmatpush2.bf16.msra.mxu0 %v6203
        %7621 = vmatprep.subr.bf16.mxu0 %v6196
        %7622 = vmatpush2.bf16.msra.mxu0 %v6195
        %7623 = vmatprep.subr.bf16.mxu0 %v6188
        %7624 = vmatpush2.bf16.msra.mxu0 %v6187
        %7625 = vmatprep.subr.bf16.mxu0 %v6180
        %7626 = vmatpush2.bf16.msra.mxu0 %v6179
        %7627 = vmatprep.subr.bf16.mxu0 %v6172
        %7628 = vmatpush2.bf16.msra.mxu0 %v6171
        %7629 = vmatprep.subr.bf16.mxu0 %v6164
        %7630 = vmatpush2.bf16.msra.mxu0 %v6163
        %7631 = vmatprep.subr.bf16.mxu0 %v6156
        %7632 = vmatpush2.bf16.msra.mxu0 %v6155
        %7633 = vmatprep.mubr.bf16.mxu0 %v4030
        %7634 = vmatmul.mubr.bf16.gmra.mxu0 %v4029
        %v7635 = vpop.f32.mrf.mxu0
        %v7636 = vadd.f32 0.0, %v7635
        %v7637 = vpop.f32.mrf.mxu0
        %v7638 = vadd.f32 0.0, %v7637
        %v7639 = vpop.f32.mrf.mxu0
        %v7640 = vpop.f32.mrf.mxu0
        %7641 = vdwg.mxu0
        %7642 = vmatprep.subr.bf16.mxu0 %v6276
        %7643 = vmatpush1.bf16.msra.mxu0 %v6275
        %7644 = vmatprep.subr.bf16.mxu0 %v6268
        %7645 = vmatpush1.bf16.msra.mxu0 %v6267
        %7646 = vmatprep.subr.bf16.mxu0 %v6260
        %7647 = vmatpush1.bf16.msra.mxu0 %v6259
        %7648 = vmatprep.subr.bf16.mxu0 %v6252
        %7649 = vmatpush1.bf16.msra.mxu0 %v6251
        %7650 = vmatprep.subr.bf16.mxu0 %v6244
        %7651 = vmatpush1.bf16.msra.mxu0 %v6243
        %7652 = vmatprep.subr.bf16.mxu0 %v6236
        %7653 = vmatpush1.bf16.msra.mxu0 %v6235
        %7654 = vmatprep.subr.bf16.mxu0 %v6228
        %7655 = vmatpush1.bf16.msra.mxu0 %v6227
        %7656 = vmatprep.subr.bf16.mxu0 %v6220
        %7657 = vmatpush1.bf16.msra.mxu0 %v6219
        %7658 = vmatprep.subr.bf16.mxu0 %v6340
        %7659 = vmatpush2.bf16.msra.mxu0 %v6339
        %7660 = vmatprep.subr.bf16.mxu0 %v6332
        %7661 = vmatpush2.bf16.msra.mxu0 %v6331
        %7662 = vmatprep.subr.bf16.mxu0 %v6324
        %7663 = vmatpush2.bf16.msra.mxu0 %v6323
        %7664 = vmatprep.subr.bf16.mxu0 %v6316
        %7665 = vmatpush2.bf16.msra.mxu0 %v6315
        %7666 = vmatprep.subr.bf16.mxu0 %v6308
        %7667 = vmatpush2.bf16.msra.mxu0 %v6307
        %7668 = vmatprep.subr.bf16.mxu0 %v6300
        %7669 = vmatpush2.bf16.msra.mxu0 %v6299
        %7670 = vmatprep.subr.bf16.mxu0 %v6292
        %7671 = vmatpush2.bf16.msra.mxu0 %v6291
        %7672 = vmatprep.subr.bf16.mxu0 %v6284
        %7673 = vmatpush2.bf16.msra.mxu0 %v6283
        %7674 = vmatprep.mubr.bf16.mxu0 %v4032
        %7675 = vmatmul.mubr.bf16.gmra.mxu0 %v4031
        %v7676 = vpop.f32.mrf.mxu0
        %v7677 = vadd.f32 %v7636, %v7676
        %v7678 = vpop.f32.mrf.mxu0
        %v7679 = vadd.f32 %v7638, %v7678
        %v7680 = vpop.f32.mrf.mxu0
        %v7681 = vpop.f32.mrf.mxu0
        %7682 = vdwg.mxu0
        %7683 = vmatprep.subr.bf16.mxu0 %v6404
        %7684 = vmatpush1.bf16.msra.mxu0 %v6403
        %7685 = vmatprep.subr.bf16.mxu0 %v6396
        %7686 = vmatpush1.bf16.msra.mxu0 %v6395
        %7687 = vmatprep.subr.bf16.mxu0 %v6388
        %7688 = vmatpush1.bf16.msra.mxu0 %v6387
        %7689 = vmatprep.subr.bf16.mxu0 %v6380
        %7690 = vmatpush1.bf16.msra.mxu0 %v6379
        %7691 = vmatprep.subr.bf16.mxu0 %v6372
        %7692 = vmatpush1.bf16.msra.mxu0 %v6371
        %7693 = vmatprep.subr.bf16.mxu0 %v6364
        %7694 = vmatpush1.bf16.msra.mxu0 %v6363
        %7695 = vmatprep.subr.bf16.mxu0 %v6356
        %7696 = vmatpush1.bf16.msra.mxu0 %v6355
        %7697 = vmatprep.subr.bf16.mxu0 %v6348
        %7698 = vmatpush1.bf16.msra.mxu0 %v6347
        %7699 = vmatprep.subr.bf16.mxu0 %v6468
        %7700 = vmatpush2.bf16.msra.mxu0 %v6467
        %7701 = vmatprep.subr.bf16.mxu0 %v6460
        %7702 = vmatpush2.bf16.msra.mxu0 %v6459
        %7703 = vmatprep.subr.bf16.mxu0 %v6452
        %7704 = vmatpush2.bf16.msra.mxu0 %v6451
        %7705 = vmatprep.subr.bf16.mxu0 %v6444
        %7706 = vmatpush2.bf16.msra.mxu0 %v6443
        %7707 = vmatprep.subr.bf16.mxu0 %v6436
        %7708 = vmatpush2.bf16.msra.mxu0 %v6435
        %7709 = vmatprep.subr.bf16.mxu0 %v6428
        %7710 = vmatpush2.bf16.msra.mxu0 %v6427
        %7711 = vmatprep.subr.bf16.mxu0 %v6420
        %7712 = vmatpush2.bf16.msra.mxu0 %v6419
        %7713 = vmatprep.subr.bf16.mxu0 %v6412
        %7714 = vmatpush2.bf16.msra.mxu0 %v6411
        %7715 = vmatprep.mubr.bf16.mxu0 %v4034
        %7716 = vmatmul.mubr.bf16.gmra.mxu0 %v4033
        %v7717 = vpop.f32.mrf.mxu0
        %v7718 = vadd.f32 %v7677, %v7717
        %v7719 = vpop.f32.mrf.mxu0
        %v7720 = vadd.f32 %v7679, %v7719
        %v7721 = vpop.f32.mrf.mxu0
        %v7722 = vpop.f32.mrf.mxu0
        %7723 = vdwg.mxu0
        %7724 = vmatprep.subr.bf16.mxu0 %v6532
        %7725 = vmatpush1.bf16.msra.mxu0 %v6531
        %7726 = vmatprep.subr.bf16.mxu0 %v6524
        %7727 = vmatpush1.bf16.msra.mxu0 %v6523
        %7728 = vmatprep.subr.bf16.mxu0 %v6516
        %7729 = vmatpush1.bf16.msra.mxu0 %v6515
        %7730 = vmatprep.subr.bf16.mxu0 %v6508
        %7731 = vmatpush1.bf16.msra.mxu0 %v6507
        %7732 = vmatprep.subr.bf16.mxu0 %v6500
        %7733 = vmatpush1.bf16.msra.mxu0 %v6499
        %7734 = vmatprep.subr.bf16.mxu0 %v6492
        %7735 = vmatpush1.bf16.msra.mxu0 %v6491
        %7736 = vmatprep.subr.bf16.mxu0 %v6484
        %7737 = vmatpush1.bf16.msra.mxu0 %v6483
        %7738 = vmatprep.subr.bf16.mxu0 %v6476
        %7739 = vmatpush1.bf16.msra.mxu0 %v6475
        %7740 = vmatprep.subr.bf16.mxu0 %v6596
        %7741 = vmatpush2.bf16.msra.mxu0 %v6595
        %7742 = vmatprep.subr.bf16.mxu0 %v6588
        %7743 = vmatpush2.bf16.msra.mxu0 %v6587
        %7744 = vmatprep.subr.bf16.mxu0 %v6580
        %7745 = vmatpush2.bf16.msra.mxu0 %v6579
        %7746 = vmatprep.subr.bf16.mxu0 %v6572
        %7747 = vmatpush2.bf16.msra.mxu0 %v6571
        %7748 = vmatprep.subr.bf16.mxu0 %v6564
        %7749 = vmatpush2.bf16.msra.mxu0 %v6563
        %7750 = vmatprep.subr.bf16.mxu0 %v6556
        %7751 = vmatpush2.bf16.msra.mxu0 %v6555
        %7752 = vmatprep.subr.bf16.mxu0 %v6548
        %7753 = vmatpush2.bf16.msra.mxu0 %v6547
        %7754 = vmatprep.subr.bf16.mxu0 %v6540
        %7755 = vmatpush2.bf16.msra.mxu0 %v6539
        %7756 = vmatprep.mubr.bf16.mxu0 %v4036
        %7757 = vmatmul.mubr.bf16.gmra.mxu0 %v4035
        %v7758 = vpop.f32.mrf.mxu0
        %v7759 = vadd.f32 %v7718, %v7758
        %v7760 = vpop.f32.mrf.mxu0
        %v7761 = vadd.f32 %v7720, %v7760
        %v7762 = vpop.f32.mrf.mxu0
        %v7763 = vpop.f32.mrf.mxu0
        %7764 = vdwg.mxu0
        %v7765 = vld [vmem:[%s710] sm:$0xff]
        %v7767 = vlaneseq
        %v7768 = vshrl.u32 %v7767, 7
        %v7769 = vsub.s32 0, %v7768
        %v7770 = vrot.slane %v7765, %v7769
        %v7771 = vlaneseq
        %v7772 = vshrl.u32 %v7771, 7
        %v7773 = vsub.s32 1, %v7772
        %v7774 = vrot.slane %v7765, %v7773
        %v7775 = vlaneseq
        %v7776 = vshrl.u32 %v7775, 7
        %v7777 = vsub.s32 2, %v7776
        %v7778 = vrot.slane %v7765, %v7777
        %v7779 = vlaneseq
        %v7780 = vshrl.u32 %v7779, 7
        %v7781 = vsub.s32 3, %v7780
        %v7782 = vrot.slane %v7765, %v7781
        %v7783 = vlaneseq
        %v7784 = vshrl.u32 %v7783, 7
        %v7785 = vsub.s32 4, %v7784
        %v7786 = vrot.slane %v7765, %v7785
        %v7787 = vlaneseq
        %v7788 = vshrl.u32 %v7787, 7
        %v7789 = vsub.s32 5, %v7788
        %v7790 = vrot.slane %v7765, %v7789
        %v7791 = vlaneseq
        %v7792 = vshrl.u32 %v7791, 7
        %v7793 = vsub.s32 6, %v7792
        %v7794 = vrot.slane %v7765, %v7793
        %v7795 = vlaneseq
        %v7796 = vshrl.u32 %v7795, 7
        %v7797 = vsub.s32 7, %v7796
        %v7798 = vrot.slane %v7765, %v7797
        %v7807 = vmul.f32 %v7267, %v7770
        %v7808 = vmul.f32 %v7269, %v7774
        %v7809 = vmul.f32 %v7431, %v7778
        %v7810 = vmul.f32 %v7433, %v7782
        %v7811 = vmul.f32 %v7595, %v7786
        %v7812 = vmul.f32 %v7597, %v7790
        %v7813 = vmul.f32 %v7759, %v7794
        %v7814 = vmul.f32 %v7761, %v7798
        %v7815 = vld [vmem:[%s719] sm:$0xff]
        %v7817 = vlaneseq
        %v7818 = vshrl.u32 %v7817, 7
        %v7819 = vsub.s32 0, %v7818
        %v7820 = vrot.slane %v7815, %v7819
        %v7821 = vlaneseq
        %v7822 = vshrl.u32 %v7821, 7
        %v7823 = vsub.s32 1, %v7822
        %v7824 = vrot.slane %v7815, %v7823
        %v7825 = vlaneseq
        %v7826 = vshrl.u32 %v7825, 7
        %v7827 = vsub.s32 2, %v7826
        %v7828 = vrot.slane %v7815, %v7827
        %v7829 = vlaneseq
        %v7830 = vshrl.u32 %v7829, 7
        %v7831 = vsub.s32 3, %v7830
        %v7832 = vrot.slane %v7815, %v7831
        %v7833 = vlaneseq
        %v7834 = vshrl.u32 %v7833, 7
        %v7835 = vsub.s32 4, %v7834
        %v7836 = vrot.slane %v7815, %v7835
        %v7837 = vlaneseq
        %v7838 = vshrl.u32 %v7837, 7
        %v7839 = vsub.s32 5, %v7838
        %v7840 = vrot.slane %v7815, %v7839
        %v7841 = vlaneseq
        %v7842 = vshrl.u32 %v7841, 7
        %v7843 = vsub.s32 6, %v7842
        %v7844 = vrot.slane %v7815, %v7843
        %v7845 = vlaneseq
        %v7846 = vshrl.u32 %v7845, 7
        %v7847 = vsub.s32 7, %v7846
        %v7848 = vrot.slane %v7815, %v7847
        %v7857 = vadd.f32 %v7807, %v7820
        %v7858 = vadd.f32 %v7808, %v7824
        %v7859 = vadd.f32 %v7809, %v7828
        %v7860 = vadd.f32 %v7810, %v7832
        %v7861 = vadd.f32 %v7811, %v7836
        %v7862 = vadd.f32 %v7812, %v7840
        %v7863 = vadd.f32 %v7813, %v7844
        %v7864 = vadd.f32 %v7814, %v7848
        %v7865 = vmax.f32 %v7857, 0.0
        %v7866 = vmax.f32 %v7858, 0.0
        %v7867 = vmax.f32 %v7859, 0.0
        %v7868 = vmax.f32 %v7860, 0.0
        %v7869 = vmax.f32 %v7861, 0.0
        %v7870 = vmax.f32 %v7862, 0.0
        %v7871 = vmax.f32 %v7863, 0.0
        %v7872 = vmax.f32 %v7864, 0.0
        %v7873 = vpack.c.bf16 %v7865, %v7865
        %v7874 = vpack.c.bf16 %v7866, %v7866
        %v7875 = vpack.c.bf16 %v7867, %v7867
        %v7876 = vpack.c.bf16 %v7868, %v7868
        %v7877 = vpack.c.bf16 %v7869, %v7869
        %v7878 = vpack.c.bf16 %v7870, %v7870
        %v7879 = vpack.c.bf16 %v7871, %v7871
        %v7880 = vpack.c.bf16 %v7872, %v7872
        %v7881 = vld [vmem:[%s728] sm:$0xff]
        %v7882 = vld [vmem:[%s728 + $0x8] sm:$0xff]
        %v7883 = vld [vmem:[%s728 + $0x10] sm:$0xff]
        %v7884 = vld [vmem:[%s728 + $0x18] sm:$0xff]
        %v7885 = vld [vmem:[%s728 + $0x20] sm:$0xff]
        %v7886 = vld [vmem:[%s728 + $0x28] sm:$0xff]
        %v7887 = vld [vmem:[%s728 + $0x30] sm:$0xff]
        %v7888 = vld [vmem:[%s728 + $0x38] sm:$0xff]
        %v7889 = vld [vmem:[%s728 + $0x40] sm:$0xff]
        %v7890 = vld [vmem:[%s728 + $0x48] sm:$0xff]
        %v7891 = vld [vmem:[%s728 + $0x50] sm:$0xff]
        %v7892 = vld [vmem:[%s728 + $0x58] sm:$0xff]
        %v7893 = vld [vmem:[%s728 + $0x60] sm:$0xff]
        %v7894 = vld [vmem:[%s728 + $0x68] sm:$0xff]
        %v7895 = vld [vmem:[%s728 + $0x70] sm:$0xff]
        %v7896 = vld [vmem:[%s728 + $0x78] sm:$0xff]
        %v7897 = vld [vmem:[%s728 + $0x80] sm:$0xff]
        %v7898 = vld [vmem:[%s728 + $0x88] sm:$0xff]
        %v7899 = vld [vmem:[%s728 + $0x90] sm:$0xff]
        %v7900 = vld [vmem:[%s728 + $0x98] sm:$0xff]
        %v7901 = vld [vmem:[%s728 + $0xa0] sm:$0xff]
        %v7902 = vld [vmem:[%s728 + $0xa8] sm:$0xff]
        %v7903 = vld [vmem:[%s728 + $0xb0] sm:$0xff]
        %v7904 = vld [vmem:[%s728 + $0xb8] sm:$0xff]
        %v7905 = vld [vmem:[%s728 + $0xc0] sm:$0xff]
        %v7906 = vld [vmem:[%s728 + $0xc8] sm:$0xff]
        %v7907 = vld [vmem:[%s728 + $0xd0] sm:$0xff]
        %v7908 = vld [vmem:[%s728 + $0xd8] sm:$0xff]
        %v7909 = vld [vmem:[%s728 + $0xe0] sm:$0xff]
        %v7910 = vld [vmem:[%s728 + $0xe8] sm:$0xff]
        %v7911 = vld [vmem:[%s728 + $0xf0] sm:$0xff]
        %v7912 = vld [vmem:[%s728 + $0xf8] sm:$0xff]
        %v7913 = vld [vmem:[%s728 + $0x100] sm:$0xff]
        %v7914 = vld [vmem:[%s728 + $0x108] sm:$0xff]
        %v7915 = vld [vmem:[%s728 + $0x110] sm:$0xff]
        %v7916 = vld [vmem:[%s728 + $0x118] sm:$0xff]
        %v7917 = vld [vmem:[%s728 + $0x120] sm:$0xff]
        %v7918 = vld [vmem:[%s728 + $0x128] sm:$0xff]
        %v7919 = vld [vmem:[%s728 + $0x130] sm:$0xff]
        %v7920 = vld [vmem:[%s728 + $0x138] sm:$0xff]
        %v7921 = vld [vmem:[%s728 + $0x140] sm:$0xff]
        %v7922 = vld [vmem:[%s728 + $0x148] sm:$0xff]
        %v7923 = vld [vmem:[%s728 + $0x150] sm:$0xff]
        %v7924 = vld [vmem:[%s728 + $0x158] sm:$0xff]
        %v7925 = vld [vmem:[%s728 + $0x160] sm:$0xff]
        %v7926 = vld [vmem:[%s728 + $0x168] sm:$0xff]
        %v7927 = vld [vmem:[%s728 + $0x170] sm:$0xff]
        %v7928 = vld [vmem:[%s728 + $0x178] sm:$0xff]
        %v7929 = vld [vmem:[%s728 + $0x180] sm:$0xff]
        %v7930 = vld [vmem:[%s728 + $0x188] sm:$0xff]
        %v7931 = vld [vmem:[%s728 + $0x190] sm:$0xff]
        %v7932 = vld [vmem:[%s728 + $0x198] sm:$0xff]
        %v7933 = vld [vmem:[%s728 + $0x1a0] sm:$0xff]
        %v7934 = vld [vmem:[%s728 + $0x1a8] sm:$0xff]
        %v7935 = vld [vmem:[%s728 + $0x1b0] sm:$0xff]
        %v7936 = vld [vmem:[%s728 + $0x1b8] sm:$0xff]
        %v7937 = vld [vmem:[%s728 + $0x1c0] sm:$0xff]
        %v7938 = vld [vmem:[%s728 + $0x1c8] sm:$0xff]
        %v7939 = vld [vmem:[%s728 + $0x1d0] sm:$0xff]
        %v7940 = vld [vmem:[%s728 + $0x1d8] sm:$0xff]
        %v7941 = vld [vmem:[%s728 + $0x1e0] sm:$0xff]
        %v7942 = vld [vmem:[%s728 + $0x1e8] sm:$0xff]
        %v7943 = vld [vmem:[%s728 + $0x1f0] sm:$0xff]
        %v7944 = vld [vmem:[%s728 + $0x1f8] sm:$0xff]
        %v7945 = vld [vmem:[%s728 + $0x200] sm:$0xff]
        %v7946 = vld [vmem:[%s728 + $0x208] sm:$0xff]
        %v7947 = vld [vmem:[%s728 + $0x210] sm:$0xff]
        %v7948 = vld [vmem:[%s728 + $0x218] sm:$0xff]
        %v7949 = vld [vmem:[%s728 + $0x220] sm:$0xff]
        %v7950 = vld [vmem:[%s728 + $0x228] sm:$0xff]
        %v7951 = vld [vmem:[%s728 + $0x230] sm:$0xff]
        %v7952 = vld [vmem:[%s728 + $0x238] sm:$0xff]
        %v7953 = vld [vmem:[%s728 + $0x240] sm:$0xff]
        %v7954 = vld [vmem:[%s728 + $0x248] sm:$0xff]
        %v7955 = vld [vmem:[%s728 + $0x250] sm:$0xff]
        %v7956 = vld [vmem:[%s728 + $0x258] sm:$0xff]
        %v7957 = vld [vmem:[%s728 + $0x260] sm:$0xff]
        %v7958 = vld [vmem:[%s728 + $0x268] sm:$0xff]
        %v7959 = vld [vmem:[%s728 + $0x270] sm:$0xff]
        %v7960 = vld [vmem:[%s728 + $0x278] sm:$0xff]
        %v7961 = vld [vmem:[%s728 + $0x280] sm:$0xff]
        %v7962 = vld [vmem:[%s728 + $0x288] sm:$0xff]
        %v7963 = vld [vmem:[%s728 + $0x290] sm:$0xff]
        %v7964 = vld [vmem:[%s728 + $0x298] sm:$0xff]
        %v7965 = vld [vmem:[%s728 + $0x2a0] sm:$0xff]
        %v7966 = vld [vmem:[%s728 + $0x2a8] sm:$0xff]
        %v7967 = vld [vmem:[%s728 + $0x2b0] sm:$0xff]
        %v7968 = vld [vmem:[%s728 + $0x2b8] sm:$0xff]
        %v7969 = vld [vmem:[%s728 + $0x2c0] sm:$0xff]
        %v7970 = vld [vmem:[%s728 + $0x2c8] sm:$0xff]
        %v7971 = vld [vmem:[%s728 + $0x2d0] sm:$0xff]
        %v7972 = vld [vmem:[%s728 + $0x2d8] sm:$0xff]
        %v7973 = vld [vmem:[%s728 + $0x2e0] sm:$0xff]
        %v7974 = vld [vmem:[%s728 + $0x2e8] sm:$0xff]
        %v7975 = vld [vmem:[%s728 + $0x2f0] sm:$0xff]
        %v7976 = vld [vmem:[%s728 + $0x2f8] sm:$0xff]
        %v7977 = vld [vmem:[%s728 + $0x300] sm:$0xff]
        %v7978 = vld [vmem:[%s728 + $0x308] sm:$0xff]
        %v7979 = vld [vmem:[%s728 + $0x310] sm:$0xff]
        %v7980 = vld [vmem:[%s728 + $0x318] sm:$0xff]
        %v7981 = vld [vmem:[%s728 + $0x320] sm:$0xff]
        %v7982 = vld [vmem:[%s728 + $0x328] sm:$0xff]
        %v7983 = vld [vmem:[%s728 + $0x330] sm:$0xff]
        %v7984 = vld [vmem:[%s728 + $0x338] sm:$0xff]
        %v7985 = vld [vmem:[%s728 + $0x340] sm:$0xff]
        %v7986 = vld [vmem:[%s728 + $0x348] sm:$0xff]
        %v7987 = vld [vmem:[%s728 + $0x350] sm:$0xff]
        %v7988 = vld [vmem:[%s728 + $0x358] sm:$0xff]
        %v7989 = vld [vmem:[%s728 + $0x360] sm:$0xff]
        %v7990 = vld [vmem:[%s728 + $0x368] sm:$0xff]
        %v7991 = vld [vmem:[%s728 + $0x370] sm:$0xff]
        %v7992 = vld [vmem:[%s728 + $0x378] sm:$0xff]
        %v7993 = vld [vmem:[%s728 + $0x380] sm:$0xff]
        %v7994 = vld [vmem:[%s728 + $0x388] sm:$0xff]
        %v7995 = vld [vmem:[%s728 + $0x390] sm:$0xff]
        %v7996 = vld [vmem:[%s728 + $0x398] sm:$0xff]
        %v7997 = vld [vmem:[%s728 + $0x3a0] sm:$0xff]
        %v7998 = vld [vmem:[%s728 + $0x3a8] sm:$0xff]
        %v7999 = vld [vmem:[%s728 + $0x3b0] sm:$0xff]
        %v8000 = vld [vmem:[%s728 + $0x3b8] sm:$0xff]
        %v8001 = vld [vmem:[%s728 + $0x3c0] sm:$0xff]
        %v8002 = vld [vmem:[%s728 + $0x3c8] sm:$0xff]
        %v8003 = vld [vmem:[%s728 + $0x3d0] sm:$0xff]
        %v8004 = vld [vmem:[%s728 + $0x3d8] sm:$0xff]
        %v8005 = vld [vmem:[%s728 + $0x3e0] sm:$0xff]
        %v8006 = vld [vmem:[%s728 + $0x3e8] sm:$0xff]
        %v8007 = vld [vmem:[%s728 + $0x3f0] sm:$0xff]
        %v8008 = vld [vmem:[%s728 + $0x3f8] sm:$0xff]
        %v8009 = vld [vmem:[%s728 + $0x400] sm:$0xff]
        %v8010 = vld [vmem:[%s728 + $0x408] sm:$0xff]
        %v8011 = vld [vmem:[%s728 + $0x410] sm:$0xff]
        %v8012 = vld [vmem:[%s728 + $0x418] sm:$0xff]
        %v8013 = vld [vmem:[%s728 + $0x420] sm:$0xff]
        %v8014 = vld [vmem:[%s728 + $0x428] sm:$0xff]
        %v8015 = vld [vmem:[%s728 + $0x430] sm:$0xff]
        %v8016 = vld [vmem:[%s728 + $0x438] sm:$0xff]
        %v8017 = vld [vmem:[%s728 + $0x440] sm:$0xff]
        %v8018 = vld [vmem:[%s728 + $0x448] sm:$0xff]
        %v8019 = vld [vmem:[%s728 + $0x450] sm:$0xff]
        %v8020 = vld [vmem:[%s728 + $0x458] sm:$0xff]
        %v8021 = vld [vmem:[%s728 + $0x460] sm:$0xff]
        %v8022 = vld [vmem:[%s728 + $0x468] sm:$0xff]
        %v8023 = vld [vmem:[%s728 + $0x470] sm:$0xff]
        %v8024 = vld [vmem:[%s728 + $0x478] sm:$0xff]
        %v8025 = vld [vmem:[%s728 + $0x480] sm:$0xff]
        %v8026 = vld [vmem:[%s728 + $0x488] sm:$0xff]
        %v8027 = vld [vmem:[%s728 + $0x490] sm:$0xff]
        %v8028 = vld [vmem:[%s728 + $0x498] sm:$0xff]
        %v8029 = vld [vmem:[%s728 + $0x4a0] sm:$0xff]
        %v8030 = vld [vmem:[%s728 + $0x4a8] sm:$0xff]
        %v8031 = vld [vmem:[%s728 + $0x4b0] sm:$0xff]
        %v8032 = vld [vmem:[%s728 + $0x4b8] sm:$0xff]
        %v8033 = vld [vmem:[%s728 + $0x4c0] sm:$0xff]
        %v8034 = vld [vmem:[%s728 + $0x4c8] sm:$0xff]
        %v8035 = vld [vmem:[%s728 + $0x4d0] sm:$0xff]
        %v8036 = vld [vmem:[%s728 + $0x4d8] sm:$0xff]
        %v8037 = vld [vmem:[%s728 + $0x4e0] sm:$0xff]
        %v8038 = vld [vmem:[%s728 + $0x4e8] sm:$0xff]
        %v8039 = vld [vmem:[%s728 + $0x4f0] sm:$0xff]
        %v8040 = vld [vmem:[%s728 + $0x4f8] sm:$0xff]
        %v8041 = vld [vmem:[%s728 + $0x500] sm:$0xff]
        %v8042 = vld [vmem:[%s728 + $0x508] sm:$0xff]
        %v8043 = vld [vmem:[%s728 + $0x510] sm:$0xff]
        %v8044 = vld [vmem:[%s728 + $0x518] sm:$0xff]
        %v8045 = vld [vmem:[%s728 + $0x520] sm:$0xff]
        %v8046 = vld [vmem:[%s728 + $0x528] sm:$0xff]
        %v8047 = vld [vmem:[%s728 + $0x530] sm:$0xff]
        %v8048 = vld [vmem:[%s728 + $0x538] sm:$0xff]
        %v8049 = vld [vmem:[%s728 + $0x540] sm:$0xff]
        %v8050 = vld [vmem:[%s728 + $0x548] sm:$0xff]
        %v8051 = vld [vmem:[%s728 + $0x550] sm:$0xff]
        %v8052 = vld [vmem:[%s728 + $0x558] sm:$0xff]
        %v8053 = vld [vmem:[%s728 + $0x560] sm:$0xff]
        %v8054 = vld [vmem:[%s728 + $0x568] sm:$0xff]
        %v8055 = vld [vmem:[%s728 + $0x570] sm:$0xff]
        %v8056 = vld [vmem:[%s728 + $0x578] sm:$0xff]
        %v8057 = vld [vmem:[%s728 + $0x580] sm:$0xff]
        %v8058 = vld [vmem:[%s728 + $0x588] sm:$0xff]
        %v8059 = vld [vmem:[%s728 + $0x590] sm:$0xff]
        %v8060 = vld [vmem:[%s728 + $0x598] sm:$0xff]
        %v8061 = vld [vmem:[%s728 + $0x5a0] sm:$0xff]
        %v8062 = vld [vmem:[%s728 + $0x5a8] sm:$0xff]
        %v8063 = vld [vmem:[%s728 + $0x5b0] sm:$0xff]
        %v8064 = vld [vmem:[%s728 + $0x5b8] sm:$0xff]
        %v8065 = vld [vmem:[%s728 + $0x5c0] sm:$0xff]
        %v8066 = vld [vmem:[%s728 + $0x5c8] sm:$0xff]
        %v8067 = vld [vmem:[%s728 + $0x5d0] sm:$0xff]
        %v8068 = vld [vmem:[%s728 + $0x5d8] sm:$0xff]
        %v8069 = vld [vmem:[%s728 + $0x5e0] sm:$0xff]
        %v8070 = vld [vmem:[%s728 + $0x5e8] sm:$0xff]
        %v8071 = vld [vmem:[%s728 + $0x5f0] sm:$0xff]
        %v8072 = vld [vmem:[%s728 + $0x5f8] sm:$0xff]
        %v8073 = vld [vmem:[%s728 + $0x600] sm:$0xff]
        %v8074 = vld [vmem:[%s728 + $0x608] sm:$0xff]
        %v8075 = vld [vmem:[%s728 + $0x610] sm:$0xff]
        %v8076 = vld [vmem:[%s728 + $0x618] sm:$0xff]
        %v8077 = vld [vmem:[%s728 + $0x620] sm:$0xff]
        %v8078 = vld [vmem:[%s728 + $0x628] sm:$0xff]
        %v8079 = vld [vmem:[%s728 + $0x630] sm:$0xff]
        %v8080 = vld [vmem:[%s728 + $0x638] sm:$0xff]
        %v8081 = vld [vmem:[%s728 + $0x640] sm:$0xff]
        %v8082 = vld [vmem:[%s728 + $0x648] sm:$0xff]
        %v8083 = vld [vmem:[%s728 + $0x650] sm:$0xff]
        %v8084 = vld [vmem:[%s728 + $0x658] sm:$0xff]
        %v8085 = vld [vmem:[%s728 + $0x660] sm:$0xff]
        %v8086 = vld [vmem:[%s728 + $0x668] sm:$0xff]
        %v8087 = vld [vmem:[%s728 + $0x670] sm:$0xff]
        %v8088 = vld [vmem:[%s728 + $0x678] sm:$0xff]
        %v8089 = vld [vmem:[%s728 + $0x680] sm:$0xff]
        %v8090 = vld [vmem:[%s728 + $0x688] sm:$0xff]
        %v8091 = vld [vmem:[%s728 + $0x690] sm:$0xff]
        %v8092 = vld [vmem:[%s728 + $0x698] sm:$0xff]
        %v8093 = vld [vmem:[%s728 + $0x6a0] sm:$0xff]
        %v8094 = vld [vmem:[%s728 + $0x6a8] sm:$0xff]
        %v8095 = vld [vmem:[%s728 + $0x6b0] sm:$0xff]
        %v8096 = vld [vmem:[%s728 + $0x6b8] sm:$0xff]
        %v8097 = vld [vmem:[%s728 + $0x6c0] sm:$0xff]
        %v8098 = vld [vmem:[%s728 + $0x6c8] sm:$0xff]
        %v8099 = vld [vmem:[%s728 + $0x6d0] sm:$0xff]
        %v8100 = vld [vmem:[%s728 + $0x6d8] sm:$0xff]
        %v8101 = vld [vmem:[%s728 + $0x6e0] sm:$0xff]
        %v8102 = vld [vmem:[%s728 + $0x6e8] sm:$0xff]
        %v8103 = vld [vmem:[%s728 + $0x6f0] sm:$0xff]
        %v8104 = vld [vmem:[%s728 + $0x6f8] sm:$0xff]
        %v8105 = vld [vmem:[%s728 + $0x700] sm:$0xff]
        %v8106 = vld [vmem:[%s728 + $0x708] sm:$0xff]
        %v8107 = vld [vmem:[%s728 + $0x710] sm:$0xff]
        %v8108 = vld [vmem:[%s728 + $0x718] sm:$0xff]
        %v8109 = vld [vmem:[%s728 + $0x720] sm:$0xff]
        %v8110 = vld [vmem:[%s728 + $0x728] sm:$0xff]
        %v8111 = vld [vmem:[%s728 + $0x730] sm:$0xff]
        %v8112 = vld [vmem:[%s728 + $0x738] sm:$0xff]
        %v8113 = vld [vmem:[%s728 + $0x740] sm:$0xff]
        %v8114 = vld [vmem:[%s728 + $0x748] sm:$0xff]
        %v8115 = vld [vmem:[%s728 + $0x750] sm:$0xff]
        %v8116 = vld [vmem:[%s728 + $0x758] sm:$0xff]
        %v8117 = vld [vmem:[%s728 + $0x760] sm:$0xff]
        %v8118 = vld [vmem:[%s728 + $0x768] sm:$0xff]
        %v8119 = vld [vmem:[%s728 + $0x770] sm:$0xff]
        %v8120 = vld [vmem:[%s728 + $0x778] sm:$0xff]
        %v8121 = vld [vmem:[%s728 + $0x780] sm:$0xff]
        %v8122 = vld [vmem:[%s728 + $0x788] sm:$0xff]
        %v8123 = vld [vmem:[%s728 + $0x790] sm:$0xff]
        %v8124 = vld [vmem:[%s728 + $0x798] sm:$0xff]
        %v8125 = vld [vmem:[%s728 + $0x7a0] sm:$0xff]
        %v8126 = vld [vmem:[%s728 + $0x7a8] sm:$0xff]
        %v8127 = vld [vmem:[%s728 + $0x7b0] sm:$0xff]
        %v8128 = vld [vmem:[%s728 + $0x7b8] sm:$0xff]
        %v8129 = vld [vmem:[%s728 + $0x7c0] sm:$0xff]
        %v8130 = vld [vmem:[%s728 + $0x7c8] sm:$0xff]
        %v8131 = vld [vmem:[%s728 + $0x7d0] sm:$0xff]
        %v8132 = vld [vmem:[%s728 + $0x7d8] sm:$0xff]
        %v8133 = vld [vmem:[%s728 + $0x7e0] sm:$0xff]
        %v8134 = vld [vmem:[%s728 + $0x7e8] sm:$0xff]
        %v8135 = vld [vmem:[%s728 + $0x7f0] sm:$0xff]
        %v8136 = vld [vmem:[%s728 + $0x7f8] sm:$0xff]
        %v8137 = vld [vmem:[%s728 + $0x800] sm:$0xff]
        %v8138 = vld [vmem:[%s728 + $0x808] sm:$0xff]
        %v8139 = vld [vmem:[%s728 + $0x810] sm:$0xff]
        %v8140 = vld [vmem:[%s728 + $0x818] sm:$0xff]
        %v8141 = vld [vmem:[%s728 + $0x820] sm:$0xff]
        %v8142 = vld [vmem:[%s728 + $0x828] sm:$0xff]
        %v8143 = vld [vmem:[%s728 + $0x830] sm:$0xff]
        %v8144 = vld [vmem:[%s728 + $0x838] sm:$0xff]
        %v8145 = vld [vmem:[%s728 + $0x840] sm:$0xff]
        %v8146 = vld [vmem:[%s728 + $0x848] sm:$0xff]
        %v8147 = vld [vmem:[%s728 + $0x850] sm:$0xff]
        %v8148 = vld [vmem:[%s728 + $0x858] sm:$0xff]
        %v8149 = vld [vmem:[%s728 + $0x860] sm:$0xff]
        %v8150 = vld [vmem:[%s728 + $0x868] sm:$0xff]
        %v8151 = vld [vmem:[%s728 + $0x870] sm:$0xff]
        %v8152 = vld [vmem:[%s728 + $0x878] sm:$0xff]
        %v8153 = vld [vmem:[%s728 + $0x880] sm:$0xff]
        %v8154 = vld [vmem:[%s728 + $0x888] sm:$0xff]
        %v8155 = vld [vmem:[%s728 + $0x890] sm:$0xff]
        %v8156 = vld [vmem:[%s728 + $0x898] sm:$0xff]
        %v8157 = vld [vmem:[%s728 + $0x8a0] sm:$0xff]
        %v8158 = vld [vmem:[%s728 + $0x8a8] sm:$0xff]
        %v8159 = vld [vmem:[%s728 + $0x8b0] sm:$0xff]
        %v8160 = vld [vmem:[%s728 + $0x8b8] sm:$0xff]
        %v8161 = vld [vmem:[%s728 + $0x8c0] sm:$0xff]
        %v8162 = vld [vmem:[%s728 + $0x8c8] sm:$0xff]
        %v8163 = vld [vmem:[%s728 + $0x8d0] sm:$0xff]
        %v8164 = vld [vmem:[%s728 + $0x8d8] sm:$0xff]
        %v8165 = vld [vmem:[%s728 + $0x8e0] sm:$0xff]
        %v8166 = vld [vmem:[%s728 + $0x8e8] sm:$0xff]
        %v8167 = vld [vmem:[%s728 + $0x8f0] sm:$0xff]
        %v8168 = vld [vmem:[%s728 + $0x8f8] sm:$0xff]
        %v8169 = vld [vmem:[%s728 + $0x900] sm:$0xff]
        %v8170 = vld [vmem:[%s728 + $0x908] sm:$0xff]
        %v8171 = vld [vmem:[%s728 + $0x910] sm:$0xff]
        %v8172 = vld [vmem:[%s728 + $0x918] sm:$0xff]
        %v8173 = vld [vmem:[%s728 + $0x920] sm:$0xff]
        %v8174 = vld [vmem:[%s728 + $0x928] sm:$0xff]
        %v8175 = vld [vmem:[%s728 + $0x930] sm:$0xff]
        %v8176 = vld [vmem:[%s728 + $0x938] sm:$0xff]
        %v8177 = vld [vmem:[%s728 + $0x940] sm:$0xff]
        %v8178 = vld [vmem:[%s728 + $0x948] sm:$0xff]
        %v8179 = vld [vmem:[%s728 + $0x950] sm:$0xff]
        %v8180 = vld [vmem:[%s728 + $0x958] sm:$0xff]
        %v8181 = vld [vmem:[%s728 + $0x960] sm:$0xff]
        %v8182 = vld [vmem:[%s728 + $0x968] sm:$0xff]
        %v8183 = vld [vmem:[%s728 + $0x970] sm:$0xff]
        %v8184 = vld [vmem:[%s728 + $0x978] sm:$0xff]
        %v8185 = vld [vmem:[%s728 + $0x980] sm:$0xff]
        %v8186 = vld [vmem:[%s728 + $0x988] sm:$0xff]
        %v8187 = vld [vmem:[%s728 + $0x990] sm:$0xff]
        %v8188 = vld [vmem:[%s728 + $0x998] sm:$0xff]
        %v8189 = vld [vmem:[%s728 + $0x9a0] sm:$0xff]
        %v8190 = vld [vmem:[%s728 + $0x9a8] sm:$0xff]
        %v8191 = vld [vmem:[%s728 + $0x9b0] sm:$0xff]
        %v8192 = vld [vmem:[%s728 + $0x9b8] sm:$0xff]
        %v8193 = vld [vmem:[%s728 + $0x9c0] sm:$0xff]
        %v8194 = vld [vmem:[%s728 + $0x9c8] sm:$0xff]
        %v8195 = vld [vmem:[%s728 + $0x9d0] sm:$0xff]
        %v8196 = vld [vmem:[%s728 + $0x9d8] sm:$0xff]
        %v8197 = vld [vmem:[%s728 + $0x9e0] sm:$0xff]
        %v8198 = vld [vmem:[%s728 + $0x9e8] sm:$0xff]
        %v8199 = vld [vmem:[%s728 + $0x9f0] sm:$0xff]
        %v8200 = vld [vmem:[%s728 + $0x9f8] sm:$0xff]
        %v8201 = vld [vmem:[%s728 + $0xa00] sm:$0xff]
        %v8202 = vld [vmem:[%s728 + $0xa08] sm:$0xff]
        %v8203 = vld [vmem:[%s728 + $0xa10] sm:$0xff]
        %v8204 = vld [vmem:[%s728 + $0xa18] sm:$0xff]
        %v8205 = vld [vmem:[%s728 + $0xa20] sm:$0xff]
        %v8206 = vld [vmem:[%s728 + $0xa28] sm:$0xff]
        %v8207 = vld [vmem:[%s728 + $0xa30] sm:$0xff]
        %v8208 = vld [vmem:[%s728 + $0xa38] sm:$0xff]
        %v8209 = vld [vmem:[%s728 + $0xa40] sm:$0xff]
        %v8210 = vld [vmem:[%s728 + $0xa48] sm:$0xff]
        %v8211 = vld [vmem:[%s728 + $0xa50] sm:$0xff]
        %v8212 = vld [vmem:[%s728 + $0xa58] sm:$0xff]
        %v8213 = vld [vmem:[%s728 + $0xa60] sm:$0xff]
        %v8214 = vld [vmem:[%s728 + $0xa68] sm:$0xff]
        %v8215 = vld [vmem:[%s728 + $0xa70] sm:$0xff]
        %v8216 = vld [vmem:[%s728 + $0xa78] sm:$0xff]
        %v8217 = vld [vmem:[%s728 + $0xa80] sm:$0xff]
        %v8218 = vld [vmem:[%s728 + $0xa88] sm:$0xff]
        %v8219 = vld [vmem:[%s728 + $0xa90] sm:$0xff]
        %v8220 = vld [vmem:[%s728 + $0xa98] sm:$0xff]
        %v8221 = vld [vmem:[%s728 + $0xaa0] sm:$0xff]
        %v8222 = vld [vmem:[%s728 + $0xaa8] sm:$0xff]
        %v8223 = vld [vmem:[%s728 + $0xab0] sm:$0xff]
        %v8224 = vld [vmem:[%s728 + $0xab8] sm:$0xff]
        %v8225 = vld [vmem:[%s728 + $0xac0] sm:$0xff]
        %v8226 = vld [vmem:[%s728 + $0xac8] sm:$0xff]
        %v8227 = vld [vmem:[%s728 + $0xad0] sm:$0xff]
        %v8228 = vld [vmem:[%s728 + $0xad8] sm:$0xff]
        %v8229 = vld [vmem:[%s728 + $0xae0] sm:$0xff]
        %v8230 = vld [vmem:[%s728 + $0xae8] sm:$0xff]
        %v8231 = vld [vmem:[%s728 + $0xaf0] sm:$0xff]
        %v8232 = vld [vmem:[%s728 + $0xaf8] sm:$0xff]
        %v8233 = vld [vmem:[%s728 + $0xb00] sm:$0xff]
        %v8234 = vld [vmem:[%s728 + $0xb08] sm:$0xff]
        %v8235 = vld [vmem:[%s728 + $0xb10] sm:$0xff]
        %v8236 = vld [vmem:[%s728 + $0xb18] sm:$0xff]
        %v8237 = vld [vmem:[%s728 + $0xb20] sm:$0xff]
        %v8238 = vld [vmem:[%s728 + $0xb28] sm:$0xff]
        %v8239 = vld [vmem:[%s728 + $0xb30] sm:$0xff]
        %v8240 = vld [vmem:[%s728 + $0xb38] sm:$0xff]
        %v8241 = vld [vmem:[%s728 + $0xb40] sm:$0xff]
        %v8242 = vld [vmem:[%s728 + $0xb48] sm:$0xff]
        %v8243 = vld [vmem:[%s728 + $0xb50] sm:$0xff]
        %v8244 = vld [vmem:[%s728 + $0xb58] sm:$0xff]
        %v8245 = vld [vmem:[%s728 + $0xb60] sm:$0xff]
        %v8246 = vld [vmem:[%s728 + $0xb68] sm:$0xff]
        %v8247 = vld [vmem:[%s728 + $0xb70] sm:$0xff]
        %v8248 = vld [vmem:[%s728 + $0xb78] sm:$0xff]
        %v8249 = vld [vmem:[%s728 + $0xb80] sm:$0xff]
        %v8250 = vld [vmem:[%s728 + $0xb88] sm:$0xff]
        %v8251 = vld [vmem:[%s728 + $0xb90] sm:$0xff]
        %v8252 = vld [vmem:[%s728 + $0xb98] sm:$0xff]
        %v8253 = vld [vmem:[%s728 + $0xba0] sm:$0xff]
        %v8254 = vld [vmem:[%s728 + $0xba8] sm:$0xff]
        %v8255 = vld [vmem:[%s728 + $0xbb0] sm:$0xff]
        %v8256 = vld [vmem:[%s728 + $0xbb8] sm:$0xff]
        %v8257 = vld [vmem:[%s728 + $0xbc0] sm:$0xff]
        %v8258 = vld [vmem:[%s728 + $0xbc8] sm:$0xff]
        %v8259 = vld [vmem:[%s728 + $0xbd0] sm:$0xff]
        %v8260 = vld [vmem:[%s728 + $0xbd8] sm:$0xff]
        %v8261 = vld [vmem:[%s728 + $0xbe0] sm:$0xff]
        %v8262 = vld [vmem:[%s728 + $0xbe8] sm:$0xff]
        %v8263 = vld [vmem:[%s728 + $0xbf0] sm:$0xff]
        %v8264 = vld [vmem:[%s728 + $0xbf8] sm:$0xff]
        %v8265 = vld [vmem:[%s728 + $0xc00] sm:$0xff]
        %v8266 = vld [vmem:[%s728 + $0xc08] sm:$0xff]
        %v8267 = vld [vmem:[%s728 + $0xc10] sm:$0xff]
        %v8268 = vld [vmem:[%s728 + $0xc18] sm:$0xff]
        %v8269 = vld [vmem:[%s728 + $0xc20] sm:$0xff]
        %v8270 = vld [vmem:[%s728 + $0xc28] sm:$0xff]
        %v8271 = vld [vmem:[%s728 + $0xc30] sm:$0xff]
        %v8272 = vld [vmem:[%s728 + $0xc38] sm:$0xff]
        %v8273 = vld [vmem:[%s728 + $0xc40] sm:$0xff]
        %v8274 = vld [vmem:[%s728 + $0xc48] sm:$0xff]
        %v8275 = vld [vmem:[%s728 + $0xc50] sm:$0xff]
        %v8276 = vld [vmem:[%s728 + $0xc58] sm:$0xff]
        %v8277 = vld [vmem:[%s728 + $0xc60] sm:$0xff]
        %v8278 = vld [vmem:[%s728 + $0xc68] sm:$0xff]
        %v8279 = vld [vmem:[%s728 + $0xc70] sm:$0xff]
        %v8280 = vld [vmem:[%s728 + $0xc78] sm:$0xff]
        %v8281 = vld [vmem:[%s728 + $0xc80] sm:$0xff]
        %v8282 = vld [vmem:[%s728 + $0xc88] sm:$0xff]
        %v8283 = vld [vmem:[%s728 + $0xc90] sm:$0xff]
        %v8284 = vld [vmem:[%s728 + $0xc98] sm:$0xff]
        %v8285 = vld [vmem:[%s728 + $0xca0] sm:$0xff]
        %v8286 = vld [vmem:[%s728 + $0xca8] sm:$0xff]
        %v8287 = vld [vmem:[%s728 + $0xcb0] sm:$0xff]
        %v8288 = vld [vmem:[%s728 + $0xcb8] sm:$0xff]
        %v8289 = vld [vmem:[%s728 + $0xcc0] sm:$0xff]
        %v8290 = vld [vmem:[%s728 + $0xcc8] sm:$0xff]
        %v8291 = vld [vmem:[%s728 + $0xcd0] sm:$0xff]
        %v8292 = vld [vmem:[%s728 + $0xcd8] sm:$0xff]
        %v8293 = vld [vmem:[%s728 + $0xce0] sm:$0xff]
        %v8294 = vld [vmem:[%s728 + $0xce8] sm:$0xff]
        %v8295 = vld [vmem:[%s728 + $0xcf0] sm:$0xff]
        %v8296 = vld [vmem:[%s728 + $0xcf8] sm:$0xff]
        %v8297 = vld [vmem:[%s728 + $0xd00] sm:$0xff]
        %v8298 = vld [vmem:[%s728 + $0xd08] sm:$0xff]
        %v8299 = vld [vmem:[%s728 + $0xd10] sm:$0xff]
        %v8300 = vld [vmem:[%s728 + $0xd18] sm:$0xff]
        %v8301 = vld [vmem:[%s728 + $0xd20] sm:$0xff]
        %v8302 = vld [vmem:[%s728 + $0xd28] sm:$0xff]
        %v8303 = vld [vmem:[%s728 + $0xd30] sm:$0xff]
        %v8304 = vld [vmem:[%s728 + $0xd38] sm:$0xff]
        %v8305 = vld [vmem:[%s728 + $0xd40] sm:$0xff]
        %v8306 = vld [vmem:[%s728 + $0xd48] sm:$0xff]
        %v8307 = vld [vmem:[%s728 + $0xd50] sm:$0xff]
        %v8308 = vld [vmem:[%s728 + $0xd58] sm:$0xff]
        %v8309 = vld [vmem:[%s728 + $0xd60] sm:$0xff]
        %v8310 = vld [vmem:[%s728 + $0xd68] sm:$0xff]
        %v8311 = vld [vmem:[%s728 + $0xd70] sm:$0xff]
        %v8312 = vld [vmem:[%s728 + $0xd78] sm:$0xff]
        %v8313 = vld [vmem:[%s728 + $0xd80] sm:$0xff]
        %v8314 = vld [vmem:[%s728 + $0xd88] sm:$0xff]
        %v8315 = vld [vmem:[%s728 + $0xd90] sm:$0xff]
        %v8316 = vld [vmem:[%s728 + $0xd98] sm:$0xff]
        %v8317 = vld [vmem:[%s728 + $0xda0] sm:$0xff]
        %v8318 = vld [vmem:[%s728 + $0xda8] sm:$0xff]
        %v8319 = vld [vmem:[%s728 + $0xdb0] sm:$0xff]
        %v8320 = vld [vmem:[%s728 + $0xdb8] sm:$0xff]
        %v8321 = vld [vmem:[%s728 + $0xdc0] sm:$0xff]
        %v8322 = vld [vmem:[%s728 + $0xdc8] sm:$0xff]
        %v8323 = vld [vmem:[%s728 + $0xdd0] sm:$0xff]
        %v8324 = vld [vmem:[%s728 + $0xdd8] sm:$0xff]
        %v8325 = vld [vmem:[%s728 + $0xde0] sm:$0xff]
        %v8326 = vld [vmem:[%s728 + $0xde8] sm:$0xff]
        %v8327 = vld [vmem:[%s728 + $0xdf0] sm:$0xff]
        %v8328 = vld [vmem:[%s728 + $0xdf8] sm:$0xff]
        %v8329 = vld [vmem:[%s728 + $0xe00] sm:$0xff]
        %v8330 = vld [vmem:[%s728 + $0xe08] sm:$0xff]
        %v8331 = vld [vmem:[%s728 + $0xe10] sm:$0xff]
        %v8332 = vld [vmem:[%s728 + $0xe18] sm:$0xff]
        %v8333 = vld [vmem:[%s728 + $0xe20] sm:$0xff]
        %v8334 = vld [vmem:[%s728 + $0xe28] sm:$0xff]
        %v8335 = vld [vmem:[%s728 + $0xe30] sm:$0xff]
        %v8336 = vld [vmem:[%s728 + $0xe38] sm:$0xff]
        %v8337 = vld [vmem:[%s728 + $0xe40] sm:$0xff]
        %v8338 = vld [vmem:[%s728 + $0xe48] sm:$0xff]
        %v8339 = vld [vmem:[%s728 + $0xe50] sm:$0xff]
        %v8340 = vld [vmem:[%s728 + $0xe58] sm:$0xff]
        %v8341 = vld [vmem:[%s728 + $0xe60] sm:$0xff]
        %v8342 = vld [vmem:[%s728 + $0xe68] sm:$0xff]
        %v8343 = vld [vmem:[%s728 + $0xe70] sm:$0xff]
        %v8344 = vld [vmem:[%s728 + $0xe78] sm:$0xff]
        %v8345 = vld [vmem:[%s728 + $0xe80] sm:$0xff]
        %v8346 = vld [vmem:[%s728 + $0xe88] sm:$0xff]
        %v8347 = vld [vmem:[%s728 + $0xe90] sm:$0xff]
        %v8348 = vld [vmem:[%s728 + $0xe98] sm:$0xff]
        %v8349 = vld [vmem:[%s728 + $0xea0] sm:$0xff]
        %v8350 = vld [vmem:[%s728 + $0xea8] sm:$0xff]
        %v8351 = vld [vmem:[%s728 + $0xeb0] sm:$0xff]
        %v8352 = vld [vmem:[%s728 + $0xeb8] sm:$0xff]
        %v8353 = vld [vmem:[%s728 + $0xec0] sm:$0xff]
        %v8354 = vld [vmem:[%s728 + $0xec8] sm:$0xff]
        %v8355 = vld [vmem:[%s728 + $0xed0] sm:$0xff]
        %v8356 = vld [vmem:[%s728 + $0xed8] sm:$0xff]
        %v8357 = vld [vmem:[%s728 + $0xee0] sm:$0xff]
        %v8358 = vld [vmem:[%s728 + $0xee8] sm:$0xff]
        %v8359 = vld [vmem:[%s728 + $0xef0] sm:$0xff]
        %v8360 = vld [vmem:[%s728 + $0xef8] sm:$0xff]
        %v8361 = vld [vmem:[%s728 + $0xf00] sm:$0xff]
        %v8362 = vld [vmem:[%s728 + $0xf08] sm:$0xff]
        %v8363 = vld [vmem:[%s728 + $0xf10] sm:$0xff]
        %v8364 = vld [vmem:[%s728 + $0xf18] sm:$0xff]
        %v8365 = vld [vmem:[%s728 + $0xf20] sm:$0xff]
        %v8366 = vld [vmem:[%s728 + $0xf28] sm:$0xff]
        %v8367 = vld [vmem:[%s728 + $0xf30] sm:$0xff]
        %v8368 = vld [vmem:[%s728 + $0xf38] sm:$0xff]
        %v8369 = vld [vmem:[%s728 + $0xf40] sm:$0xff]
        %v8370 = vld [vmem:[%s728 + $0xf48] sm:$0xff]
        %v8371 = vld [vmem:[%s728 + $0xf50] sm:$0xff]
        %v8372 = vld [vmem:[%s728 + $0xf58] sm:$0xff]
        %v8373 = vld [vmem:[%s728 + $0xf60] sm:$0xff]
        %v8374 = vld [vmem:[%s728 + $0xf68] sm:$0xff]
        %v8375 = vld [vmem:[%s728 + $0xf70] sm:$0xff]
        %v8376 = vld [vmem:[%s728 + $0xf78] sm:$0xff]
        %v8377 = vld [vmem:[%s728 + $0xf80] sm:$0xff]
        %v8378 = vld [vmem:[%s728 + $0xf88] sm:$0xff]
        %v8379 = vld [vmem:[%s728 + $0xf90] sm:$0xff]
        %v8380 = vld [vmem:[%s728 + $0xf98] sm:$0xff]
        %v8381 = vld [vmem:[%s728 + $0xfa0] sm:$0xff]
        %v8382 = vld [vmem:[%s728 + $0xfa8] sm:$0xff]
        %v8383 = vld [vmem:[%s728 + $0xfb0] sm:$0xff]
        %v8384 = vld [vmem:[%s728 + $0xfb8] sm:$0xff]
        %v8385 = vld [vmem:[%s728 + $0xfc0] sm:$0xff]
        %v8386 = vld [vmem:[%s728 + $0xfc8] sm:$0xff]
        %v8387 = vld [vmem:[%s728 + $0xfd0] sm:$0xff]
        %v8388 = vld [vmem:[%s728 + $0xfd8] sm:$0xff]
        %v8389 = vld [vmem:[%s728 + $0xfe0] sm:$0xff]
        %v8390 = vld [vmem:[%s728 + $0xfe8] sm:$0xff]
        %v8391 = vld [vmem:[%s728 + $0xff0] sm:$0xff]
        %v8392 = vld [vmem:[%s728 + $0xff8] sm:$0xff]
        %v8905 = vunpack.c.l.b16 %v7881
        %v8906 = vunpack.c.h.b16 %v7881
        %v8907 = vunpack.c.l.b16 %v7882
        %v8908 = vunpack.c.h.b16 %v7882
        %v8909 = vunpack.c.l.b16 %v7883
        %v8910 = vunpack.c.h.b16 %v7883
        %v8911 = vunpack.c.l.b16 %v7884
        %v8912 = vunpack.c.h.b16 %v7884
        %v8913 = vunpack.c.l.b16 %v7885
        %v8914 = vunpack.c.h.b16 %v7885
        %v8915 = vunpack.c.l.b16 %v7886
        %v8916 = vunpack.c.h.b16 %v7886
        %v8917 = vunpack.c.l.b16 %v7887
        %v8918 = vunpack.c.h.b16 %v7887
        %v8919 = vunpack.c.l.b16 %v7888
        %v8920 = vunpack.c.h.b16 %v7888
        %v8921 = vunpack.c.l.b16 %v7889
        %v8922 = vunpack.c.h.b16 %v7889
        %v8923 = vunpack.c.l.b16 %v7890
        %v8924 = vunpack.c.h.b16 %v7890
        %v8925 = vunpack.c.l.b16 %v7891
        %v8926 = vunpack.c.h.b16 %v7891
        %v8927 = vunpack.c.l.b16 %v7892
        %v8928 = vunpack.c.h.b16 %v7892
        %v8929 = vunpack.c.l.b16 %v7893
        %v8930 = vunpack.c.h.b16 %v7893
        %v8931 = vunpack.c.l.b16 %v7894
        %v8932 = vunpack.c.h.b16 %v7894
        %v8933 = vunpack.c.l.b16 %v7895
        %v8934 = vunpack.c.h.b16 %v7895
        %v8935 = vunpack.c.l.b16 %v7896
        %v8936 = vunpack.c.h.b16 %v7896
        %v8937 = vunpack.c.l.b16 %v7897
        %v8938 = vunpack.c.h.b16 %v7897
        %v8939 = vunpack.c.l.b16 %v7898
        %v8940 = vunpack.c.h.b16 %v7898
        %v8941 = vunpack.c.l.b16 %v7899
        %v8942 = vunpack.c.h.b16 %v7899
        %v8943 = vunpack.c.l.b16 %v7900
        %v8944 = vunpack.c.h.b16 %v7900
        %v8945 = vunpack.c.l.b16 %v7901
        %v8946 = vunpack.c.h.b16 %v7901
        %v8947 = vunpack.c.l.b16 %v7902
        %v8948 = vunpack.c.h.b16 %v7902
        %v8949 = vunpack.c.l.b16 %v7903
        %v8950 = vunpack.c.h.b16 %v7903
        %v8951 = vunpack.c.l.b16 %v7904
        %v8952 = vunpack.c.h.b16 %v7904
        %v8953 = vunpack.c.l.b16 %v7905
        %v8954 = vunpack.c.h.b16 %v7905
        %v8955 = vunpack.c.l.b16 %v7906
        %v8956 = vunpack.c.h.b16 %v7906
        %v8957 = vunpack.c.l.b16 %v7907
        %v8958 = vunpack.c.h.b16 %v7907
        %v8959 = vunpack.c.l.b16 %v7908
        %v8960 = vunpack.c.h.b16 %v7908
        %v8961 = vunpack.c.l.b16 %v7909
        %v8962 = vunpack.c.h.b16 %v7909
        %v8963 = vunpack.c.l.b16 %v7910
        %v8964 = vunpack.c.h.b16 %v7910
        %v8965 = vunpack.c.l.b16 %v7911
        %v8966 = vunpack.c.h.b16 %v7911
        %v8967 = vunpack.c.l.b16 %v7912
        %v8968 = vunpack.c.h.b16 %v7912
        %v8969 = vunpack.c.l.b16 %v7913
        %v8970 = vunpack.c.h.b16 %v7913
        %v8971 = vunpack.c.l.b16 %v7914
        %v8972 = vunpack.c.h.b16 %v7914
        %v8973 = vunpack.c.l.b16 %v7915
        %v8974 = vunpack.c.h.b16 %v7915
        %v8975 = vunpack.c.l.b16 %v7916
        %v8976 = vunpack.c.h.b16 %v7916
        %v8977 = vunpack.c.l.b16 %v7917
        %v8978 = vunpack.c.h.b16 %v7917
        %v8979 = vunpack.c.l.b16 %v7918
        %v8980 = vunpack.c.h.b16 %v7918
        %v8981 = vunpack.c.l.b16 %v7919
        %v8982 = vunpack.c.h.b16 %v7919
        %v8983 = vunpack.c.l.b16 %v7920
        %v8984 = vunpack.c.h.b16 %v7920
        %v8985 = vunpack.c.l.b16 %v7921
        %v8986 = vunpack.c.h.b16 %v7921
        %v8987 = vunpack.c.l.b16 %v7922
        %v8988 = vunpack.c.h.b16 %v7922
        %v8989 = vunpack.c.l.b16 %v7923
        %v8990 = vunpack.c.h.b16 %v7923
        %v8991 = vunpack.c.l.b16 %v7924
        %v8992 = vunpack.c.h.b16 %v7924
        %v8993 = vunpack.c.l.b16 %v7925
        %v8994 = vunpack.c.h.b16 %v7925
        %v8995 = vunpack.c.l.b16 %v7926
        %v8996 = vunpack.c.h.b16 %v7926
        %v8997 = vunpack.c.l.b16 %v7927
        %v8998 = vunpack.c.h.b16 %v7927
        %v8999 = vunpack.c.l.b16 %v7928
        %v9000 = vunpack.c.h.b16 %v7928
        %v9001 = vunpack.c.l.b16 %v7929
        %v9002 = vunpack.c.h.b16 %v7929
        %v9003 = vunpack.c.l.b16 %v7930
        %v9004 = vunpack.c.h.b16 %v7930
        %v9005 = vunpack.c.l.b16 %v7931
        %v9006 = vunpack.c.h.b16 %v7931
        %v9007 = vunpack.c.l.b16 %v7932
        %v9008 = vunpack.c.h.b16 %v7932
        %v9009 = vunpack.c.l.b16 %v7933
        %v9010 = vunpack.c.h.b16 %v7933
        %v9011 = vunpack.c.l.b16 %v7934
        %v9012 = vunpack.c.h.b16 %v7934
        %v9013 = vunpack.c.l.b16 %v7935
        %v9014 = vunpack.c.h.b16 %v7935
        %v9015 = vunpack.c.l.b16 %v7936
        %v9016 = vunpack.c.h.b16 %v7936
        %v9017 = vunpack.c.l.b16 %v7937
        %v9018 = vunpack.c.h.b16 %v7937
        %v9019 = vunpack.c.l.b16 %v7938
        %v9020 = vunpack.c.h.b16 %v7938
        %v9021 = vunpack.c.l.b16 %v7939
        %v9022 = vunpack.c.h.b16 %v7939
        %v9023 = vunpack.c.l.b16 %v7940
        %v9024 = vunpack.c.h.b16 %v7940
        %v9025 = vunpack.c.l.b16 %v7941
        %v9026 = vunpack.c.h.b16 %v7941
        %v9027 = vunpack.c.l.b16 %v7942
        %v9028 = vunpack.c.h.b16 %v7942
        %v9029 = vunpack.c.l.b16 %v7943
        %v9030 = vunpack.c.h.b16 %v7943
        %v9031 = vunpack.c.l.b16 %v7944
        %v9032 = vunpack.c.h.b16 %v7944
        %v9033 = vunpack.c.l.b16 %v7945
        %v9034 = vunpack.c.h.b16 %v7945
        %v9035 = vunpack.c.l.b16 %v7946
        %v9036 = vunpack.c.h.b16 %v7946
        %v9037 = vunpack.c.l.b16 %v7947
        %v9038 = vunpack.c.h.b16 %v7947
        %v9039 = vunpack.c.l.b16 %v7948
        %v9040 = vunpack.c.h.b16 %v7948
        %v9041 = vunpack.c.l.b16 %v7949
        %v9042 = vunpack.c.h.b16 %v7949
        %v9043 = vunpack.c.l.b16 %v7950
        %v9044 = vunpack.c.h.b16 %v7950
        %v9045 = vunpack.c.l.b16 %v7951
        %v9046 = vunpack.c.h.b16 %v7951
        %v9047 = vunpack.c.l.b16 %v7952
        %v9048 = vunpack.c.h.b16 %v7952
        %v9049 = vunpack.c.l.b16 %v7953
        %v9050 = vunpack.c.h.b16 %v7953
        %v9051 = vunpack.c.l.b16 %v7954
        %v9052 = vunpack.c.h.b16 %v7954
        %v9053 = vunpack.c.l.b16 %v7955
        %v9054 = vunpack.c.h.b16 %v7955
        %v9055 = vunpack.c.l.b16 %v7956
        %v9056 = vunpack.c.h.b16 %v7956
        %v9057 = vunpack.c.l.b16 %v7957
        %v9058 = vunpack.c.h.b16 %v7957
        %v9059 = vunpack.c.l.b16 %v7958
        %v9060 = vunpack.c.h.b16 %v7958
        %v9061 = vunpack.c.l.b16 %v7959
        %v9062 = vunpack.c.h.b16 %v7959
        %v9063 = vunpack.c.l.b16 %v7960
        %v9064 = vunpack.c.h.b16 %v7960
        %v9065 = vunpack.c.l.b16 %v7961
        %v9066 = vunpack.c.h.b16 %v7961
        %v9067 = vunpack.c.l.b16 %v7962
        %v9068 = vunpack.c.h.b16 %v7962
        %v9069 = vunpack.c.l.b16 %v7963
        %v9070 = vunpack.c.h.b16 %v7963
        %v9071 = vunpack.c.l.b16 %v7964
        %v9072 = vunpack.c.h.b16 %v7964
        %v9073 = vunpack.c.l.b16 %v7965
        %v9074 = vunpack.c.h.b16 %v7965
        %v9075 = vunpack.c.l.b16 %v7966
        %v9076 = vunpack.c.h.b16 %v7966
        %v9077 = vunpack.c.l.b16 %v7967
        %v9078 = vunpack.c.h.b16 %v7967
        %v9079 = vunpack.c.l.b16 %v7968
        %v9080 = vunpack.c.h.b16 %v7968
        %v9081 = vunpack.c.l.b16 %v7969
        %v9082 = vunpack.c.h.b16 %v7969
        %v9083 = vunpack.c.l.b16 %v7970
        %v9084 = vunpack.c.h.b16 %v7970
        %v9085 = vunpack.c.l.b16 %v7971
        %v9086 = vunpack.c.h.b16 %v7971
        %v9087 = vunpack.c.l.b16 %v7972
        %v9088 = vunpack.c.h.b16 %v7972
        %v9089 = vunpack.c.l.b16 %v7973
        %v9090 = vunpack.c.h.b16 %v7973
        %v9091 = vunpack.c.l.b16 %v7974
        %v9092 = vunpack.c.h.b16 %v7974
        %v9093 = vunpack.c.l.b16 %v7975
        %v9094 = vunpack.c.h.b16 %v7975
        %v9095 = vunpack.c.l.b16 %v7976
        %v9096 = vunpack.c.h.b16 %v7976
        %v9097 = vunpack.c.l.b16 %v7977
        %v9098 = vunpack.c.h.b16 %v7977
        %v9099 = vunpack.c.l.b16 %v7978
        %v9100 = vunpack.c.h.b16 %v7978
        %v9101 = vunpack.c.l.b16 %v7979
        %v9102 = vunpack.c.h.b16 %v7979
        %v9103 = vunpack.c.l.b16 %v7980
        %v9104 = vunpack.c.h.b16 %v7980
        %v9105 = vunpack.c.l.b16 %v7981
        %v9106 = vunpack.c.h.b16 %v7981
        %v9107 = vunpack.c.l.b16 %v7982
        %v9108 = vunpack.c.h.b16 %v7982
        %v9109 = vunpack.c.l.b16 %v7983
        %v9110 = vunpack.c.h.b16 %v7983
        %v9111 = vunpack.c.l.b16 %v7984
        %v9112 = vunpack.c.h.b16 %v7984
        %v9113 = vunpack.c.l.b16 %v7985
        %v9114 = vunpack.c.h.b16 %v7985
        %v9115 = vunpack.c.l.b16 %v7986
        %v9116 = vunpack.c.h.b16 %v7986
        %v9117 = vunpack.c.l.b16 %v7987
        %v9118 = vunpack.c.h.b16 %v7987
        %v9119 = vunpack.c.l.b16 %v7988
        %v9120 = vunpack.c.h.b16 %v7988
        %v9121 = vunpack.c.l.b16 %v7989
        %v9122 = vunpack.c.h.b16 %v7989
        %v9123 = vunpack.c.l.b16 %v7990
        %v9124 = vunpack.c.h.b16 %v7990
        %v9125 = vunpack.c.l.b16 %v7991
        %v9126 = vunpack.c.h.b16 %v7991
        %v9127 = vunpack.c.l.b16 %v7992
        %v9128 = vunpack.c.h.b16 %v7992
        %v9129 = vunpack.c.l.b16 %v7993
        %v9130 = vunpack.c.h.b16 %v7993
        %v9131 = vunpack.c.l.b16 %v7994
        %v9132 = vunpack.c.h.b16 %v7994
        %v9133 = vunpack.c.l.b16 %v7995
        %v9134 = vunpack.c.h.b16 %v7995
        %v9135 = vunpack.c.l.b16 %v7996
        %v9136 = vunpack.c.h.b16 %v7996
        %v9137 = vunpack.c.l.b16 %v7997
        %v9138 = vunpack.c.h.b16 %v7997
        %v9139 = vunpack.c.l.b16 %v7998
        %v9140 = vunpack.c.h.b16 %v7998
        %v9141 = vunpack.c.l.b16 %v7999
        %v9142 = vunpack.c.h.b16 %v7999
        %v9143 = vunpack.c.l.b16 %v8000
        %v9144 = vunpack.c.h.b16 %v8000
        %v9145 = vunpack.c.l.b16 %v8001
        %v9146 = vunpack.c.h.b16 %v8001
        %v9147 = vunpack.c.l.b16 %v8002
        %v9148 = vunpack.c.h.b16 %v8002
        %v9149 = vunpack.c.l.b16 %v8003
        %v9150 = vunpack.c.h.b16 %v8003
        %v9151 = vunpack.c.l.b16 %v8004
        %v9152 = vunpack.c.h.b16 %v8004
        %v9153 = vunpack.c.l.b16 %v8005
        %v9154 = vunpack.c.h.b16 %v8005
        %v9155 = vunpack.c.l.b16 %v8006
        %v9156 = vunpack.c.h.b16 %v8006
        %v9157 = vunpack.c.l.b16 %v8007
        %v9158 = vunpack.c.h.b16 %v8007
        %v9159 = vunpack.c.l.b16 %v8008
        %v9160 = vunpack.c.h.b16 %v8008
        %v9161 = vunpack.c.l.b16 %v8009
        %v9162 = vunpack.c.h.b16 %v8009
        %v9163 = vunpack.c.l.b16 %v8010
        %v9164 = vunpack.c.h.b16 %v8010
        %v9165 = vunpack.c.l.b16 %v8011
        %v9166 = vunpack.c.h.b16 %v8011
        %v9167 = vunpack.c.l.b16 %v8012
        %v9168 = vunpack.c.h.b16 %v8012
        %v9169 = vunpack.c.l.b16 %v8013
        %v9170 = vunpack.c.h.b16 %v8013
        %v9171 = vunpack.c.l.b16 %v8014
        %v9172 = vunpack.c.h.b16 %v8014
        %v9173 = vunpack.c.l.b16 %v8015
        %v9174 = vunpack.c.h.b16 %v8015
        %v9175 = vunpack.c.l.b16 %v8016
        %v9176 = vunpack.c.h.b16 %v8016
        %v9177 = vunpack.c.l.b16 %v8017
        %v9178 = vunpack.c.h.b16 %v8017
        %v9179 = vunpack.c.l.b16 %v8018
        %v9180 = vunpack.c.h.b16 %v8018
        %v9181 = vunpack.c.l.b16 %v8019
        %v9182 = vunpack.c.h.b16 %v8019
        %v9183 = vunpack.c.l.b16 %v8020
        %v9184 = vunpack.c.h.b16 %v8020
        %v9185 = vunpack.c.l.b16 %v8021
        %v9186 = vunpack.c.h.b16 %v8021
        %v9187 = vunpack.c.l.b16 %v8022
        %v9188 = vunpack.c.h.b16 %v8022
        %v9189 = vunpack.c.l.b16 %v8023
        %v9190 = vunpack.c.h.b16 %v8023
        %v9191 = vunpack.c.l.b16 %v8024
        %v9192 = vunpack.c.h.b16 %v8024
        %v9193 = vunpack.c.l.b16 %v8025
        %v9194 = vunpack.c.h.b16 %v8025
        %v9195 = vunpack.c.l.b16 %v8026
        %v9196 = vunpack.c.h.b16 %v8026
        %v9197 = vunpack.c.l.b16 %v8027
        %v9198 = vunpack.c.h.b16 %v8027
        %v9199 = vunpack.c.l.b16 %v8028
        %v9200 = vunpack.c.h.b16 %v8028
        %v9201 = vunpack.c.l.b16 %v8029
        %v9202 = vunpack.c.h.b16 %v8029
        %v9203 = vunpack.c.l.b16 %v8030
        %v9204 = vunpack.c.h.b16 %v8030
        %v9205 = vunpack.c.l.b16 %v8031
        %v9206 = vunpack.c.h.b16 %v8031
        %v9207 = vunpack.c.l.b16 %v8032
        %v9208 = vunpack.c.h.b16 %v8032
        %v9209 = vunpack.c.l.b16 %v8033
        %v9210 = vunpack.c.h.b16 %v8033
        %v9211 = vunpack.c.l.b16 %v8034
        %v9212 = vunpack.c.h.b16 %v8034
        %v9213 = vunpack.c.l.b16 %v8035
        %v9214 = vunpack.c.h.b16 %v8035
        %v9215 = vunpack.c.l.b16 %v8036
        %v9216 = vunpack.c.h.b16 %v8036
        %v9217 = vunpack.c.l.b16 %v8037
        %v9218 = vunpack.c.h.b16 %v8037
        %v9219 = vunpack.c.l.b16 %v8038
        %v9220 = vunpack.c.h.b16 %v8038
        %v9221 = vunpack.c.l.b16 %v8039
        %v9222 = vunpack.c.h.b16 %v8039
        %v9223 = vunpack.c.l.b16 %v8040
        %v9224 = vunpack.c.h.b16 %v8040
        %v9225 = vunpack.c.l.b16 %v8041
        %v9226 = vunpack.c.h.b16 %v8041
        %v9227 = vunpack.c.l.b16 %v8042
        %v9228 = vunpack.c.h.b16 %v8042
        %v9229 = vunpack.c.l.b16 %v8043
        %v9230 = vunpack.c.h.b16 %v8043
        %v9231 = vunpack.c.l.b16 %v8044
        %v9232 = vunpack.c.h.b16 %v8044
        %v9233 = vunpack.c.l.b16 %v8045
        %v9234 = vunpack.c.h.b16 %v8045
        %v9235 = vunpack.c.l.b16 %v8046
        %v9236 = vunpack.c.h.b16 %v8046
        %v9237 = vunpack.c.l.b16 %v8047
        %v9238 = vunpack.c.h.b16 %v8047
        %v9239 = vunpack.c.l.b16 %v8048
        %v9240 = vunpack.c.h.b16 %v8048
        %v9241 = vunpack.c.l.b16 %v8049
        %v9242 = vunpack.c.h.b16 %v8049
        %v9243 = vunpack.c.l.b16 %v8050
        %v9244 = vunpack.c.h.b16 %v8050
        %v9245 = vunpack.c.l.b16 %v8051
        %v9246 = vunpack.c.h.b16 %v8051
        %v9247 = vunpack.c.l.b16 %v8052
        %v9248 = vunpack.c.h.b16 %v8052
        %v9249 = vunpack.c.l.b16 %v8053
        %v9250 = vunpack.c.h.b16 %v8053
        %v9251 = vunpack.c.l.b16 %v8054
        %v9252 = vunpack.c.h.b16 %v8054
        %v9253 = vunpack.c.l.b16 %v8055
        %v9254 = vunpack.c.h.b16 %v8055
        %v9255 = vunpack.c.l.b16 %v8056
        %v9256 = vunpack.c.h.b16 %v8056
        %v9257 = vunpack.c.l.b16 %v8057
        %v9258 = vunpack.c.h.b16 %v8057
        %v9259 = vunpack.c.l.b16 %v8058
        %v9260 = vunpack.c.h.b16 %v8058
        %v9261 = vunpack.c.l.b16 %v8059
        %v9262 = vunpack.c.h.b16 %v8059
        %v9263 = vunpack.c.l.b16 %v8060
        %v9264 = vunpack.c.h.b16 %v8060
        %v9265 = vunpack.c.l.b16 %v8061
        %v9266 = vunpack.c.h.b16 %v8061
        %v9267 = vunpack.c.l.b16 %v8062
        %v9268 = vunpack.c.h.b16 %v8062
        %v9269 = vunpack.c.l.b16 %v8063
        %v9270 = vunpack.c.h.b16 %v8063
        %v9271 = vunpack.c.l.b16 %v8064
        %v9272 = vunpack.c.h.b16 %v8064
        %v9273 = vunpack.c.l.b16 %v8065
        %v9274 = vunpack.c.h.b16 %v8065
        %v9275 = vunpack.c.l.b16 %v8066
        %v9276 = vunpack.c.h.b16 %v8066
        %v9277 = vunpack.c.l.b16 %v8067
        %v9278 = vunpack.c.h.b16 %v8067
        %v9279 = vunpack.c.l.b16 %v8068
        %v9280 = vunpack.c.h.b16 %v8068
        %v9281 = vunpack.c.l.b16 %v8069
        %v9282 = vunpack.c.h.b16 %v8069
        %v9283 = vunpack.c.l.b16 %v8070
        %v9284 = vunpack.c.h.b16 %v8070
        %v9285 = vunpack.c.l.b16 %v8071
        %v9286 = vunpack.c.h.b16 %v8071
        %v9287 = vunpack.c.l.b16 %v8072
        %v9288 = vunpack.c.h.b16 %v8072
        %v9289 = vunpack.c.l.b16 %v8073
        %v9290 = vunpack.c.h.b16 %v8073
        %v9291 = vunpack.c.l.b16 %v8074
        %v9292 = vunpack.c.h.b16 %v8074
        %v9293 = vunpack.c.l.b16 %v8075
        %v9294 = vunpack.c.h.b16 %v8075
        %v9295 = vunpack.c.l.b16 %v8076
        %v9296 = vunpack.c.h.b16 %v8076
        %v9297 = vunpack.c.l.b16 %v8077
        %v9298 = vunpack.c.h.b16 %v8077
        %v9299 = vunpack.c.l.b16 %v8078
        %v9300 = vunpack.c.h.b16 %v8078
        %v9301 = vunpack.c.l.b16 %v8079
        %v9302 = vunpack.c.h.b16 %v8079
        %v9303 = vunpack.c.l.b16 %v8080
        %v9304 = vunpack.c.h.b16 %v8080
        %v9305 = vunpack.c.l.b16 %v8081
        %v9306 = vunpack.c.h.b16 %v8081
        %v9307 = vunpack.c.l.b16 %v8082
        %v9308 = vunpack.c.h.b16 %v8082
        %v9309 = vunpack.c.l.b16 %v8083
        %v9310 = vunpack.c.h.b16 %v8083
        %v9311 = vunpack.c.l.b16 %v8084
        %v9312 = vunpack.c.h.b16 %v8084
        %v9313 = vunpack.c.l.b16 %v8085
        %v9314 = vunpack.c.h.b16 %v8085
        %v9315 = vunpack.c.l.b16 %v8086
        %v9316 = vunpack.c.h.b16 %v8086
        %v9317 = vunpack.c.l.b16 %v8087
        %v9318 = vunpack.c.h.b16 %v8087
        %v9319 = vunpack.c.l.b16 %v8088
        %v9320 = vunpack.c.h.b16 %v8088
        %v9321 = vunpack.c.l.b16 %v8089
        %v9322 = vunpack.c.h.b16 %v8089
        %v9323 = vunpack.c.l.b16 %v8090
        %v9324 = vunpack.c.h.b16 %v8090
        %v9325 = vunpack.c.l.b16 %v8091
        %v9326 = vunpack.c.h.b16 %v8091
        %v9327 = vunpack.c.l.b16 %v8092
        %v9328 = vunpack.c.h.b16 %v8092
        %v9329 = vunpack.c.l.b16 %v8093
        %v9330 = vunpack.c.h.b16 %v8093
        %v9331 = vunpack.c.l.b16 %v8094
        %v9332 = vunpack.c.h.b16 %v8094
        %v9333 = vunpack.c.l.b16 %v8095
        %v9334 = vunpack.c.h.b16 %v8095
        %v9335 = vunpack.c.l.b16 %v8096
        %v9336 = vunpack.c.h.b16 %v8096
        %v9337 = vunpack.c.l.b16 %v8097
        %v9338 = vunpack.c.h.b16 %v8097
        %v9339 = vunpack.c.l.b16 %v8098
        %v9340 = vunpack.c.h.b16 %v8098
        %v9341 = vunpack.c.l.b16 %v8099
        %v9342 = vunpack.c.h.b16 %v8099
        %v9343 = vunpack.c.l.b16 %v8100
        %v9344 = vunpack.c.h.b16 %v8100
        %v9345 = vunpack.c.l.b16 %v8101
        %v9346 = vunpack.c.h.b16 %v8101
        %v9347 = vunpack.c.l.b16 %v8102
        %v9348 = vunpack.c.h.b16 %v8102
        %v9349 = vunpack.c.l.b16 %v8103
        %v9350 = vunpack.c.h.b16 %v8103
        %v9351 = vunpack.c.l.b16 %v8104
        %v9352 = vunpack.c.h.b16 %v8104
        %v9353 = vunpack.c.l.b16 %v8105
        %v9354 = vunpack.c.h.b16 %v8105
        %v9355 = vunpack.c.l.b16 %v8106
        %v9356 = vunpack.c.h.b16 %v8106
        %v9357 = vunpack.c.l.b16 %v8107
        %v9358 = vunpack.c.h.b16 %v8107
        %v9359 = vunpack.c.l.b16 %v8108
        %v9360 = vunpack.c.h.b16 %v8108
        %v9361 = vunpack.c.l.b16 %v8109
        %v9362 = vunpack.c.h.b16 %v8109
        %v9363 = vunpack.c.l.b16 %v8110
        %v9364 = vunpack.c.h.b16 %v8110
        %v9365 = vunpack.c.l.b16 %v8111
        %v9366 = vunpack.c.h.b16 %v8111
        %v9367 = vunpack.c.l.b16 %v8112
        %v9368 = vunpack.c.h.b16 %v8112
        %v9369 = vunpack.c.l.b16 %v8113
        %v9370 = vunpack.c.h.b16 %v8113
        %v9371 = vunpack.c.l.b16 %v8114
        %v9372 = vunpack.c.h.b16 %v8114
        %v9373 = vunpack.c.l.b16 %v8115
        %v9374 = vunpack.c.h.b16 %v8115
        %v9375 = vunpack.c.l.b16 %v8116
        %v9376 = vunpack.c.h.b16 %v8116
        %v9377 = vunpack.c.l.b16 %v8117
        %v9378 = vunpack.c.h.b16 %v8117
        %v9379 = vunpack.c.l.b16 %v8118
        %v9380 = vunpack.c.h.b16 %v8118
        %v9381 = vunpack.c.l.b16 %v8119
        %v9382 = vunpack.c.h.b16 %v8119
        %v9383 = vunpack.c.l.b16 %v8120
        %v9384 = vunpack.c.h.b16 %v8120
        %v9385 = vunpack.c.l.b16 %v8121
        %v9386 = vunpack.c.h.b16 %v8121
        %v9387 = vunpack.c.l.b16 %v8122
        %v9388 = vunpack.c.h.b16 %v8122
        %v9389 = vunpack.c.l.b16 %v8123
        %v9390 = vunpack.c.h.b16 %v8123
        %v9391 = vunpack.c.l.b16 %v8124
        %v9392 = vunpack.c.h.b16 %v8124
        %v9393 = vunpack.c.l.b16 %v8125
        %v9394 = vunpack.c.h.b16 %v8125
        %v9395 = vunpack.c.l.b16 %v8126
        %v9396 = vunpack.c.h.b16 %v8126
        %v9397 = vunpack.c.l.b16 %v8127
        %v9398 = vunpack.c.h.b16 %v8127
        %v9399 = vunpack.c.l.b16 %v8128
        %v9400 = vunpack.c.h.b16 %v8128
        %v9401 = vunpack.c.l.b16 %v8129
        %v9402 = vunpack.c.h.b16 %v8129
        %v9403 = vunpack.c.l.b16 %v8130
        %v9404 = vunpack.c.h.b16 %v8130
        %v9405 = vunpack.c.l.b16 %v8131
        %v9406 = vunpack.c.h.b16 %v8131
        %v9407 = vunpack.c.l.b16 %v8132
        %v9408 = vunpack.c.h.b16 %v8132
        %v9409 = vunpack.c.l.b16 %v8133
        %v9410 = vunpack.c.h.b16 %v8133
        %v9411 = vunpack.c.l.b16 %v8134
        %v9412 = vunpack.c.h.b16 %v8134
        %v9413 = vunpack.c.l.b16 %v8135
        %v9414 = vunpack.c.h.b16 %v8135
        %v9415 = vunpack.c.l.b16 %v8136
        %v9416 = vunpack.c.h.b16 %v8136
        %v9417 = vunpack.c.l.b16 %v8137
        %v9418 = vunpack.c.h.b16 %v8137
        %v9419 = vunpack.c.l.b16 %v8138
        %v9420 = vunpack.c.h.b16 %v8138
        %v9421 = vunpack.c.l.b16 %v8139
        %v9422 = vunpack.c.h.b16 %v8139
        %v9423 = vunpack.c.l.b16 %v8140
        %v9424 = vunpack.c.h.b16 %v8140
        %v9425 = vunpack.c.l.b16 %v8141
        %v9426 = vunpack.c.h.b16 %v8141
        %v9427 = vunpack.c.l.b16 %v8142
        %v9428 = vunpack.c.h.b16 %v8142
        %v9429 = vunpack.c.l.b16 %v8143
        %v9430 = vunpack.c.h.b16 %v8143
        %v9431 = vunpack.c.l.b16 %v8144
        %v9432 = vunpack.c.h.b16 %v8144
        %v9433 = vunpack.c.l.b16 %v8145
        %v9434 = vunpack.c.h.b16 %v8145
        %v9435 = vunpack.c.l.b16 %v8146
        %v9436 = vunpack.c.h.b16 %v8146
        %v9437 = vunpack.c.l.b16 %v8147
        %v9438 = vunpack.c.h.b16 %v8147
        %v9439 = vunpack.c.l.b16 %v8148
        %v9440 = vunpack.c.h.b16 %v8148
        %v9441 = vunpack.c.l.b16 %v8149
        %v9442 = vunpack.c.h.b16 %v8149
        %v9443 = vunpack.c.l.b16 %v8150
        %v9444 = vunpack.c.h.b16 %v8150
        %v9445 = vunpack.c.l.b16 %v8151
        %v9446 = vunpack.c.h.b16 %v8151
        %v9447 = vunpack.c.l.b16 %v8152
        %v9448 = vunpack.c.h.b16 %v8152
        %v9449 = vunpack.c.l.b16 %v8153
        %v9450 = vunpack.c.h.b16 %v8153
        %v9451 = vunpack.c.l.b16 %v8154
        %v9452 = vunpack.c.h.b16 %v8154
        %v9453 = vunpack.c.l.b16 %v8155
        %v9454 = vunpack.c.h.b16 %v8155
        %v9455 = vunpack.c.l.b16 %v8156
        %v9456 = vunpack.c.h.b16 %v8156
        %v9457 = vunpack.c.l.b16 %v8157
        %v9458 = vunpack.c.h.b16 %v8157
        %v9459 = vunpack.c.l.b16 %v8158
        %v9460 = vunpack.c.h.b16 %v8158
        %v9461 = vunpack.c.l.b16 %v8159
        %v9462 = vunpack.c.h.b16 %v8159
        %v9463 = vunpack.c.l.b16 %v8160
        %v9464 = vunpack.c.h.b16 %v8160
        %v9465 = vunpack.c.l.b16 %v8161
        %v9466 = vunpack.c.h.b16 %v8161
        %v9467 = vunpack.c.l.b16 %v8162
        %v9468 = vunpack.c.h.b16 %v8162
        %v9469 = vunpack.c.l.b16 %v8163
        %v9470 = vunpack.c.h.b16 %v8163
        %v9471 = vunpack.c.l.b16 %v8164
        %v9472 = vunpack.c.h.b16 %v8164
        %v9473 = vunpack.c.l.b16 %v8165
        %v9474 = vunpack.c.h.b16 %v8165
        %v9475 = vunpack.c.l.b16 %v8166
        %v9476 = vunpack.c.h.b16 %v8166
        %v9477 = vunpack.c.l.b16 %v8167
        %v9478 = vunpack.c.h.b16 %v8167
        %v9479 = vunpack.c.l.b16 %v8168
        %v9480 = vunpack.c.h.b16 %v8168
        %v9481 = vunpack.c.l.b16 %v8169
        %v9482 = vunpack.c.h.b16 %v8169
        %v9483 = vunpack.c.l.b16 %v8170
        %v9484 = vunpack.c.h.b16 %v8170
        %v9485 = vunpack.c.l.b16 %v8171
        %v9486 = vunpack.c.h.b16 %v8171
        %v9487 = vunpack.c.l.b16 %v8172
        %v9488 = vunpack.c.h.b16 %v8172
        %v9489 = vunpack.c.l.b16 %v8173
        %v9490 = vunpack.c.h.b16 %v8173
        %v9491 = vunpack.c.l.b16 %v8174
        %v9492 = vunpack.c.h.b16 %v8174
        %v9493 = vunpack.c.l.b16 %v8175
        %v9494 = vunpack.c.h.b16 %v8175
        %v9495 = vunpack.c.l.b16 %v8176
        %v9496 = vunpack.c.h.b16 %v8176
        %v9497 = vunpack.c.l.b16 %v8177
        %v9498 = vunpack.c.h.b16 %v8177
        %v9499 = vunpack.c.l.b16 %v8178
        %v9500 = vunpack.c.h.b16 %v8178
        %v9501 = vunpack.c.l.b16 %v8179
        %v9502 = vunpack.c.h.b16 %v8179
        %v9503 = vunpack.c.l.b16 %v8180
        %v9504 = vunpack.c.h.b16 %v8180
        %v9505 = vunpack.c.l.b16 %v8181
        %v9506 = vunpack.c.h.b16 %v8181
        %v9507 = vunpack.c.l.b16 %v8182
        %v9508 = vunpack.c.h.b16 %v8182
        %v9509 = vunpack.c.l.b16 %v8183
        %v9510 = vunpack.c.h.b16 %v8183
        %v9511 = vunpack.c.l.b16 %v8184
        %v9512 = vunpack.c.h.b16 %v8184
        %v9513 = vunpack.c.l.b16 %v8185
        %v9514 = vunpack.c.h.b16 %v8185
        %v9515 = vunpack.c.l.b16 %v8186
        %v9516 = vunpack.c.h.b16 %v8186
        %v9517 = vunpack.c.l.b16 %v8187
        %v9518 = vunpack.c.h.b16 %v8187
        %v9519 = vunpack.c.l.b16 %v8188
        %v9520 = vunpack.c.h.b16 %v8188
        %v9521 = vunpack.c.l.b16 %v8189
        %v9522 = vunpack.c.h.b16 %v8189
        %v9523 = vunpack.c.l.b16 %v8190
        %v9524 = vunpack.c.h.b16 %v8190
        %v9525 = vunpack.c.l.b16 %v8191
        %v9526 = vunpack.c.h.b16 %v8191
        %v9527 = vunpack.c.l.b16 %v8192
        %v9528 = vunpack.c.h.b16 %v8192
        %v9529 = vunpack.c.l.b16 %v8193
        %v9530 = vunpack.c.h.b16 %v8193
        %v9531 = vunpack.c.l.b16 %v8194
        %v9532 = vunpack.c.h.b16 %v8194
        %v9533 = vunpack.c.l.b16 %v8195
        %v9534 = vunpack.c.h.b16 %v8195
        %v9535 = vunpack.c.l.b16 %v8196
        %v9536 = vunpack.c.h.b16 %v8196
        %v9537 = vunpack.c.l.b16 %v8197
        %v9538 = vunpack.c.h.b16 %v8197
        %v9539 = vunpack.c.l.b16 %v8198
        %v9540 = vunpack.c.h.b16 %v8198
        %v9541 = vunpack.c.l.b16 %v8199
        %v9542 = vunpack.c.h.b16 %v8199
        %v9543 = vunpack.c.l.b16 %v8200
        %v9544 = vunpack.c.h.b16 %v8200
        %v9545 = vunpack.c.l.b16 %v8201
        %v9546 = vunpack.c.h.b16 %v8201
        %v9547 = vunpack.c.l.b16 %v8202
        %v9548 = vunpack.c.h.b16 %v8202
        %v9549 = vunpack.c.l.b16 %v8203
        %v9550 = vunpack.c.h.b16 %v8203
        %v9551 = vunpack.c.l.b16 %v8204
        %v9552 = vunpack.c.h.b16 %v8204
        %v9553 = vunpack.c.l.b16 %v8205
        %v9554 = vunpack.c.h.b16 %v8205
        %v9555 = vunpack.c.l.b16 %v8206
        %v9556 = vunpack.c.h.b16 %v8206
        %v9557 = vunpack.c.l.b16 %v8207
        %v9558 = vunpack.c.h.b16 %v8207
        %v9559 = vunpack.c.l.b16 %v8208
        %v9560 = vunpack.c.h.b16 %v8208
        %v9561 = vunpack.c.l.b16 %v8209
        %v9562 = vunpack.c.h.b16 %v8209
        %v9563 = vunpack.c.l.b16 %v8210
        %v9564 = vunpack.c.h.b16 %v8210
        %v9565 = vunpack.c.l.b16 %v8211
        %v9566 = vunpack.c.h.b16 %v8211
        %v9567 = vunpack.c.l.b16 %v8212
        %v9568 = vunpack.c.h.b16 %v8212
        %v9569 = vunpack.c.l.b16 %v8213
        %v9570 = vunpack.c.h.b16 %v8213
        %v9571 = vunpack.c.l.b16 %v8214
        %v9572 = vunpack.c.h.b16 %v8214
        %v9573 = vunpack.c.l.b16 %v8215
        %v9574 = vunpack.c.h.b16 %v8215
        %v9575 = vunpack.c.l.b16 %v8216
        %v9576 = vunpack.c.h.b16 %v8216
        %v9577 = vunpack.c.l.b16 %v8217
        %v9578 = vunpack.c.h.b16 %v8217
        %v9579 = vunpack.c.l.b16 %v8218
        %v9580 = vunpack.c.h.b16 %v8218
        %v9581 = vunpack.c.l.b16 %v8219
        %v9582 = vunpack.c.h.b16 %v8219
        %v9583 = vunpack.c.l.b16 %v8220
        %v9584 = vunpack.c.h.b16 %v8220
        %v9585 = vunpack.c.l.b16 %v8221
        %v9586 = vunpack.c.h.b16 %v8221
        %v9587 = vunpack.c.l.b16 %v8222
        %v9588 = vunpack.c.h.b16 %v8222
        %v9589 = vunpack.c.l.b16 %v8223
        %v9590 = vunpack.c.h.b16 %v8223
        %v9591 = vunpack.c.l.b16 %v8224
        %v9592 = vunpack.c.h.b16 %v8224
        %v9593 = vunpack.c.l.b16 %v8225
        %v9594 = vunpack.c.h.b16 %v8225
        %v9595 = vunpack.c.l.b16 %v8226
        %v9596 = vunpack.c.h.b16 %v8226
        %v9597 = vunpack.c.l.b16 %v8227
        %v9598 = vunpack.c.h.b16 %v8227
        %v9599 = vunpack.c.l.b16 %v8228
        %v9600 = vunpack.c.h.b16 %v8228
        %v9601 = vunpack.c.l.b16 %v8229
        %v9602 = vunpack.c.h.b16 %v8229
        %v9603 = vunpack.c.l.b16 %v8230
        %v9604 = vunpack.c.h.b16 %v8230
        %v9605 = vunpack.c.l.b16 %v8231
        %v9606 = vunpack.c.h.b16 %v8231
        %v9607 = vunpack.c.l.b16 %v8232
        %v9608 = vunpack.c.h.b16 %v8232
        %v9609 = vunpack.c.l.b16 %v8233
        %v9610 = vunpack.c.h.b16 %v8233
        %v9611 = vunpack.c.l.b16 %v8234
        %v9612 = vunpack.c.h.b16 %v8234
        %v9613 = vunpack.c.l.b16 %v8235
        %v9614 = vunpack.c.h.b16 %v8235
        %v9615 = vunpack.c.l.b16 %v8236
        %v9616 = vunpack.c.h.b16 %v8236
        %v9617 = vunpack.c.l.b16 %v8237
        %v9618 = vunpack.c.h.b16 %v8237
        %v9619 = vunpack.c.l.b16 %v8238
        %v9620 = vunpack.c.h.b16 %v8238
        %v9621 = vunpack.c.l.b16 %v8239
        %v9622 = vunpack.c.h.b16 %v8239
        %v9623 = vunpack.c.l.b16 %v8240
        %v9624 = vunpack.c.h.b16 %v8240
        %v9625 = vunpack.c.l.b16 %v8241
        %v9626 = vunpack.c.h.b16 %v8241
        %v9627 = vunpack.c.l.b16 %v8242
        %v9628 = vunpack.c.h.b16 %v8242
        %v9629 = vunpack.c.l.b16 %v8243
        %v9630 = vunpack.c.h.b16 %v8243
        %v9631 = vunpack.c.l.b16 %v8244
        %v9632 = vunpack.c.h.b16 %v8244
        %v9633 = vunpack.c.l.b16 %v8245
        %v9634 = vunpack.c.h.b16 %v8245
        %v9635 = vunpack.c.l.b16 %v8246
        %v9636 = vunpack.c.h.b16 %v8246
        %v9637 = vunpack.c.l.b16 %v8247
        %v9638 = vunpack.c.h.b16 %v8247
        %v9639 = vunpack.c.l.b16 %v8248
        %v9640 = vunpack.c.h.b16 %v8248
        %v9641 = vunpack.c.l.b16 %v8249
        %v9642 = vunpack.c.h.b16 %v8249
        %v9643 = vunpack.c.l.b16 %v8250
        %v9644 = vunpack.c.h.b16 %v8250
        %v9645 = vunpack.c.l.b16 %v8251
        %v9646 = vunpack.c.h.b16 %v8251
        %v9647 = vunpack.c.l.b16 %v8252
        %v9648 = vunpack.c.h.b16 %v8252
        %v9649 = vunpack.c.l.b16 %v8253
        %v9650 = vunpack.c.h.b16 %v8253
        %v9651 = vunpack.c.l.b16 %v8254
        %v9652 = vunpack.c.h.b16 %v8254
        %v9653 = vunpack.c.l.b16 %v8255
        %v9654 = vunpack.c.h.b16 %v8255
        %v9655 = vunpack.c.l.b16 %v8256
        %v9656 = vunpack.c.h.b16 %v8256
        %v9657 = vunpack.c.l.b16 %v8257
        %v9658 = vunpack.c.h.b16 %v8257
        %v9659 = vunpack.c.l.b16 %v8258
        %v9660 = vunpack.c.h.b16 %v8258
        %v9661 = vunpack.c.l.b16 %v8259
        %v9662 = vunpack.c.h.b16 %v8259
        %v9663 = vunpack.c.l.b16 %v8260
        %v9664 = vunpack.c.h.b16 %v8260
        %v9665 = vunpack.c.l.b16 %v8261
        %v9666 = vunpack.c.h.b16 %v8261
        %v9667 = vunpack.c.l.b16 %v8262
        %v9668 = vunpack.c.h.b16 %v8262
        %v9669 = vunpack.c.l.b16 %v8263
        %v9670 = vunpack.c.h.b16 %v8263
        %v9671 = vunpack.c.l.b16 %v8264
        %v9672 = vunpack.c.h.b16 %v8264
        %v9673 = vunpack.c.l.b16 %v8265
        %v9674 = vunpack.c.h.b16 %v8265
        %v9675 = vunpack.c.l.b16 %v8266
        %v9676 = vunpack.c.h.b16 %v8266
        %v9677 = vunpack.c.l.b16 %v8267
        %v9678 = vunpack.c.h.b16 %v8267
        %v9679 = vunpack.c.l.b16 %v8268
        %v9680 = vunpack.c.h.b16 %v8268
        %v9681 = vunpack.c.l.b16 %v8269
        %v9682 = vunpack.c.h.b16 %v8269
        %v9683 = vunpack.c.l.b16 %v8270
        %v9684 = vunpack.c.h.b16 %v8270
        %v9685 = vunpack.c.l.b16 %v8271
        %v9686 = vunpack.c.h.b16 %v8271
        %v9687 = vunpack.c.l.b16 %v8272
        %v9688 = vunpack.c.h.b16 %v8272
        %v9689 = vunpack.c.l.b16 %v8273
        %v9690 = vunpack.c.h.b16 %v8273
        %v9691 = vunpack.c.l.b16 %v8274
        %v9692 = vunpack.c.h.b16 %v8274
        %v9693 = vunpack.c.l.b16 %v8275
        %v9694 = vunpack.c.h.b16 %v8275
        %v9695 = vunpack.c.l.b16 %v8276
        %v9696 = vunpack.c.h.b16 %v8276
        %v9697 = vunpack.c.l.b16 %v8277
        %v9698 = vunpack.c.h.b16 %v8277
        %v9699 = vunpack.c.l.b16 %v8278
        %v9700 = vunpack.c.h.b16 %v8278
        %v9701 = vunpack.c.l.b16 %v8279
        %v9702 = vunpack.c.h.b16 %v8279
        %v9703 = vunpack.c.l.b16 %v8280
        %v9704 = vunpack.c.h.b16 %v8280
        %v9705 = vunpack.c.l.b16 %v8281
        %v9706 = vunpack.c.h.b16 %v8281
        %v9707 = vunpack.c.l.b16 %v8282
        %v9708 = vunpack.c.h.b16 %v8282
        %v9709 = vunpack.c.l.b16 %v8283
        %v9710 = vunpack.c.h.b16 %v8283
        %v9711 = vunpack.c.l.b16 %v8284
        %v9712 = vunpack.c.h.b16 %v8284
        %v9713 = vunpack.c.l.b16 %v8285
        %v9714 = vunpack.c.h.b16 %v8285
        %v9715 = vunpack.c.l.b16 %v8286
        %v9716 = vunpack.c.h.b16 %v8286
        %v9717 = vunpack.c.l.b16 %v8287
        %v9718 = vunpack.c.h.b16 %v8287
        %v9719 = vunpack.c.l.b16 %v8288
        %v9720 = vunpack.c.h.b16 %v8288
        %v9721 = vunpack.c.l.b16 %v8289
        %v9722 = vunpack.c.h.b16 %v8289
        %v9723 = vunpack.c.l.b16 %v8290
        %v9724 = vunpack.c.h.b16 %v8290
        %v9725 = vunpack.c.l.b16 %v8291
        %v9726 = vunpack.c.h.b16 %v8291
        %v9727 = vunpack.c.l.b16 %v8292
        %v9728 = vunpack.c.h.b16 %v8292
        %v9729 = vunpack.c.l.b16 %v8293
        %v9730 = vunpack.c.h.b16 %v8293
        %v9731 = vunpack.c.l.b16 %v8294
        %v9732 = vunpack.c.h.b16 %v8294
        %v9733 = vunpack.c.l.b16 %v8295
        %v9734 = vunpack.c.h.b16 %v8295
        %v9735 = vunpack.c.l.b16 %v8296
        %v9736 = vunpack.c.h.b16 %v8296
        %v9737 = vunpack.c.l.b16 %v8297
        %v9738 = vunpack.c.h.b16 %v8297
        %v9739 = vunpack.c.l.b16 %v8298
        %v9740 = vunpack.c.h.b16 %v8298
        %v9741 = vunpack.c.l.b16 %v8299
        %v9742 = vunpack.c.h.b16 %v8299
        %v9743 = vunpack.c.l.b16 %v8300
        %v9744 = vunpack.c.h.b16 %v8300
        %v9745 = vunpack.c.l.b16 %v8301
        %v9746 = vunpack.c.h.b16 %v8301
        %v9747 = vunpack.c.l.b16 %v8302
        %v9748 = vunpack.c.h.b16 %v8302
        %v9749 = vunpack.c.l.b16 %v8303
        %v9750 = vunpack.c.h.b16 %v8303
        %v9751 = vunpack.c.l.b16 %v8304
        %v9752 = vunpack.c.h.b16 %v8304
        %v9753 = vunpack.c.l.b16 %v8305
        %v9754 = vunpack.c.h.b16 %v8305
        %v9755 = vunpack.c.l.b16 %v8306
        %v9756 = vunpack.c.h.b16 %v8306
        %v9757 = vunpack.c.l.b16 %v8307
        %v9758 = vunpack.c.h.b16 %v8307
        %v9759 = vunpack.c.l.b16 %v8308
        %v9760 = vunpack.c.h.b16 %v8308
        %v9761 = vunpack.c.l.b16 %v8309
        %v9762 = vunpack.c.h.b16 %v8309
        %v9763 = vunpack.c.l.b16 %v8310
        %v9764 = vunpack.c.h.b16 %v8310
        %v9765 = vunpack.c.l.b16 %v8311
        %v9766 = vunpack.c.h.b16 %v8311
        %v9767 = vunpack.c.l.b16 %v8312
        %v9768 = vunpack.c.h.b16 %v8312
        %v9769 = vunpack.c.l.b16 %v8313
        %v9770 = vunpack.c.h.b16 %v8313
        %v9771 = vunpack.c.l.b16 %v8314
        %v9772 = vunpack.c.h.b16 %v8314
        %v9773 = vunpack.c.l.b16 %v8315
        %v9774 = vunpack.c.h.b16 %v8315
        %v9775 = vunpack.c.l.b16 %v8316
        %v9776 = vunpack.c.h.b16 %v8316
        %v9777 = vunpack.c.l.b16 %v8317
        %v9778 = vunpack.c.h.b16 %v8317
        %v9779 = vunpack.c.l.b16 %v8318
        %v9780 = vunpack.c.h.b16 %v8318
        %v9781 = vunpack.c.l.b16 %v8319
        %v9782 = vunpack.c.h.b16 %v8319
        %v9783 = vunpack.c.l.b16 %v8320
        %v9784 = vunpack.c.h.b16 %v8320
        %v9785 = vunpack.c.l.b16 %v8321
        %v9786 = vunpack.c.h.b16 %v8321
        %v9787 = vunpack.c.l.b16 %v8322
        %v9788 = vunpack.c.h.b16 %v8322
        %v9789 = vunpack.c.l.b16 %v8323
        %v9790 = vunpack.c.h.b16 %v8323
        %v9791 = vunpack.c.l.b16 %v8324
        %v9792 = vunpack.c.h.b16 %v8324
        %v9793 = vunpack.c.l.b16 %v8325
        %v9794 = vunpack.c.h.b16 %v8325
        %v9795 = vunpack.c.l.b16 %v8326
        %v9796 = vunpack.c.h.b16 %v8326
        %v9797 = vunpack.c.l.b16 %v8327
        %v9798 = vunpack.c.h.b16 %v8327
        %v9799 = vunpack.c.l.b16 %v8328
        %v9800 = vunpack.c.h.b16 %v8328
        %v9801 = vunpack.c.l.b16 %v8329
        %v9802 = vunpack.c.h.b16 %v8329
        %v9803 = vunpack.c.l.b16 %v8330
        %v9804 = vunpack.c.h.b16 %v8330
        %v9805 = vunpack.c.l.b16 %v8331
        %v9806 = vunpack.c.h.b16 %v8331
        %v9807 = vunpack.c.l.b16 %v8332
        %v9808 = vunpack.c.h.b16 %v8332
        %v9809 = vunpack.c.l.b16 %v8333
        %v9810 = vunpack.c.h.b16 %v8333
        %v9811 = vunpack.c.l.b16 %v8334
        %v9812 = vunpack.c.h.b16 %v8334
        %v9813 = vunpack.c.l.b16 %v8335
        %v9814 = vunpack.c.h.b16 %v8335
        %v9815 = vunpack.c.l.b16 %v8336
        %v9816 = vunpack.c.h.b16 %v8336
        %v9817 = vunpack.c.l.b16 %v8337
        %v9818 = vunpack.c.h.b16 %v8337
        %v9819 = vunpack.c.l.b16 %v8338
        %v9820 = vunpack.c.h.b16 %v8338
        %v9821 = vunpack.c.l.b16 %v8339
        %v9822 = vunpack.c.h.b16 %v8339
        %v9823 = vunpack.c.l.b16 %v8340
        %v9824 = vunpack.c.h.b16 %v8340
        %v9825 = vunpack.c.l.b16 %v8341
        %v9826 = vunpack.c.h.b16 %v8341
        %v9827 = vunpack.c.l.b16 %v8342
        %v9828 = vunpack.c.h.b16 %v8342
        %v9829 = vunpack.c.l.b16 %v8343
        %v9830 = vunpack.c.h.b16 %v8343
        %v9831 = vunpack.c.l.b16 %v8344
        %v9832 = vunpack.c.h.b16 %v8344
        %v9833 = vunpack.c.l.b16 %v8345
        %v9834 = vunpack.c.h.b16 %v8345
        %v9835 = vunpack.c.l.b16 %v8346
        %v9836 = vunpack.c.h.b16 %v8346
        %v9837 = vunpack.c.l.b16 %v8347
        %v9838 = vunpack.c.h.b16 %v8347
        %v9839 = vunpack.c.l.b16 %v8348
        %v9840 = vunpack.c.h.b16 %v8348
        %v9841 = vunpack.c.l.b16 %v8349
        %v9842 = vunpack.c.h.b16 %v8349
        %v9843 = vunpack.c.l.b16 %v8350
        %v9844 = vunpack.c.h.b16 %v8350
        %v9845 = vunpack.c.l.b16 %v8351
        %v9846 = vunpack.c.h.b16 %v8351
        %v9847 = vunpack.c.l.b16 %v8352
        %v9848 = vunpack.c.h.b16 %v8352
        %v9849 = vunpack.c.l.b16 %v8353
        %v9850 = vunpack.c.h.b16 %v8353
        %v9851 = vunpack.c.l.b16 %v8354
        %v9852 = vunpack.c.h.b16 %v8354
        %v9853 = vunpack.c.l.b16 %v8355
        %v9854 = vunpack.c.h.b16 %v8355
        %v9855 = vunpack.c.l.b16 %v8356
        %v9856 = vunpack.c.h.b16 %v8356
        %v9857 = vunpack.c.l.b16 %v8357
        %v9858 = vunpack.c.h.b16 %v8357
        %v9859 = vunpack.c.l.b16 %v8358
        %v9860 = vunpack.c.h.b16 %v8358
        %v9861 = vunpack.c.l.b16 %v8359
        %v9862 = vunpack.c.h.b16 %v8359
        %v9863 = vunpack.c.l.b16 %v8360
        %v9864 = vunpack.c.h.b16 %v8360
        %v9865 = vunpack.c.l.b16 %v8361
        %v9866 = vunpack.c.h.b16 %v8361
        %v9867 = vunpack.c.l.b16 %v8362
        %v9868 = vunpack.c.h.b16 %v8362
        %v9869 = vunpack.c.l.b16 %v8363
        %v9870 = vunpack.c.h.b16 %v8363
        %v9871 = vunpack.c.l.b16 %v8364
        %v9872 = vunpack.c.h.b16 %v8364
        %v9873 = vunpack.c.l.b16 %v8365
        %v9874 = vunpack.c.h.b16 %v8365
        %v9875 = vunpack.c.l.b16 %v8366
        %v9876 = vunpack.c.h.b16 %v8366
        %v9877 = vunpack.c.l.b16 %v8367
        %v9878 = vunpack.c.h.b16 %v8367
        %v9879 = vunpack.c.l.b16 %v8368
        %v9880 = vunpack.c.h.b16 %v8368
        %v9881 = vunpack.c.l.b16 %v8369
        %v9882 = vunpack.c.h.b16 %v8369
        %v9883 = vunpack.c.l.b16 %v8370
        %v9884 = vunpack.c.h.b16 %v8370
        %v9885 = vunpack.c.l.b16 %v8371
        %v9886 = vunpack.c.h.b16 %v8371
        %v9887 = vunpack.c.l.b16 %v8372
        %v9888 = vunpack.c.h.b16 %v8372
        %v9889 = vunpack.c.l.b16 %v8373
        %v9890 = vunpack.c.h.b16 %v8373
        %v9891 = vunpack.c.l.b16 %v8374
        %v9892 = vunpack.c.h.b16 %v8374
        %v9893 = vunpack.c.l.b16 %v8375
        %v9894 = vunpack.c.h.b16 %v8375
        %v9895 = vunpack.c.l.b16 %v8376
        %v9896 = vunpack.c.h.b16 %v8376
        %v9897 = vunpack.c.l.b16 %v8377
        %v9898 = vunpack.c.h.b16 %v8377
        %v9899 = vunpack.c.l.b16 %v8378
        %v9900 = vunpack.c.h.b16 %v8378
        %v9901 = vunpack.c.l.b16 %v8379
        %v9902 = vunpack.c.h.b16 %v8379
        %v9903 = vunpack.c.l.b16 %v8380
        %v9904 = vunpack.c.h.b16 %v8380
        %v9905 = vunpack.c.l.b16 %v8381
        %v9906 = vunpack.c.h.b16 %v8381
        %v9907 = vunpack.c.l.b16 %v8382
        %v9908 = vunpack.c.h.b16 %v8382
        %v9909 = vunpack.c.l.b16 %v8383
        %v9910 = vunpack.c.h.b16 %v8383
        %v9911 = vunpack.c.l.b16 %v8384
        %v9912 = vunpack.c.h.b16 %v8384
        %v9913 = vunpack.c.l.b16 %v8385
        %v9914 = vunpack.c.h.b16 %v8385
        %v9915 = vunpack.c.l.b16 %v8386
        %v9916 = vunpack.c.h.b16 %v8386
        %v9917 = vunpack.c.l.b16 %v8387
        %v9918 = vunpack.c.h.b16 %v8387
        %v9919 = vunpack.c.l.b16 %v8388
        %v9920 = vunpack.c.h.b16 %v8388
        %v9921 = vunpack.c.l.b16 %v8389
        %v9922 = vunpack.c.h.b16 %v8389
        %v9923 = vunpack.c.l.b16 %v8390
        %v9924 = vunpack.c.h.b16 %v8390
        %v9925 = vunpack.c.l.b16 %v8391
        %v9926 = vunpack.c.h.b16 %v8391
        %v9927 = vunpack.c.l.b16 %v8392
        %v9928 = vunpack.c.h.b16 %v8392
        %v9929 = vpack.c.b16 %v8913, %v8905
        %v9930 = vpack.c.b16 %v8914, %v8906
        %v9931 = vpack.c.b16 %v8915, %v8907
        %v9932 = vpack.c.b16 %v8916, %v8908
        %v9933 = vpack.c.b16 %v8917, %v8909
        %v9934 = vpack.c.b16 %v8918, %v8910
        %v9935 = vpack.c.b16 %v8919, %v8911
        %v9936 = vpack.c.b16 %v8920, %v8912
        %v9937 = vpack.c.b16 %v8929, %v8921
        %v9938 = vpack.c.b16 %v8930, %v8922
        %v9939 = vpack.c.b16 %v8931, %v8923
        %v9940 = vpack.c.b16 %v8932, %v8924
        %v9941 = vpack.c.b16 %v8933, %v8925
        %v9942 = vpack.c.b16 %v8934, %v8926
        %v9943 = vpack.c.b16 %v8935, %v8927
        %v9944 = vpack.c.b16 %v8936, %v8928
        %v9945 = vpack.c.b16 %v8945, %v8937
        %v9946 = vpack.c.b16 %v8946, %v8938
        %v9947 = vpack.c.b16 %v8947, %v8939
        %v9948 = vpack.c.b16 %v8948, %v8940
        %v9949 = vpack.c.b16 %v8949, %v8941
        %v9950 = vpack.c.b16 %v8950, %v8942
        %v9951 = vpack.c.b16 %v8951, %v8943
        %v9952 = vpack.c.b16 %v8952, %v8944
        %v9953 = vpack.c.b16 %v8961, %v8953
        %v9954 = vpack.c.b16 %v8962, %v8954
        %v9955 = vpack.c.b16 %v8963, %v8955
        %v9956 = vpack.c.b16 %v8964, %v8956
        %v9957 = vpack.c.b16 %v8965, %v8957
        %v9958 = vpack.c.b16 %v8966, %v8958
        %v9959 = vpack.c.b16 %v8967, %v8959
        %v9960 = vpack.c.b16 %v8968, %v8960
        %v9961 = vpack.c.b16 %v8977, %v8969
        %v9962 = vpack.c.b16 %v8978, %v8970
        %v9963 = vpack.c.b16 %v8979, %v8971
        %v9964 = vpack.c.b16 %v8980, %v8972
        %v9965 = vpack.c.b16 %v8981, %v8973
        %v9966 = vpack.c.b16 %v8982, %v8974
        %v9967 = vpack.c.b16 %v8983, %v8975
        %v9968 = vpack.c.b16 %v8984, %v8976
        %v9969 = vpack.c.b16 %v8993, %v8985
        %v9970 = vpack.c.b16 %v8994, %v8986
        %v9971 = vpack.c.b16 %v8995, %v8987
        %v9972 = vpack.c.b16 %v8996, %v8988
        %v9973 = vpack.c.b16 %v8997, %v8989
        %v9974 = vpack.c.b16 %v8998, %v8990
        %v9975 = vpack.c.b16 %v8999, %v8991
        %v9976 = vpack.c.b16 %v9000, %v8992
        %v9977 = vpack.c.b16 %v9009, %v9001
        %v9978 = vpack.c.b16 %v9010, %v9002
        %v9979 = vpack.c.b16 %v9011, %v9003
        %v9980 = vpack.c.b16 %v9012, %v9004
        %v9981 = vpack.c.b16 %v9013, %v9005
        %v9982 = vpack.c.b16 %v9014, %v9006
        %v9983 = vpack.c.b16 %v9015, %v9007
        %v9984 = vpack.c.b16 %v9016, %v9008
        %v9985 = vpack.c.b16 %v9025, %v9017
        %v9986 = vpack.c.b16 %v9026, %v9018
        %v9987 = vpack.c.b16 %v9027, %v9019
        %v9988 = vpack.c.b16 %v9028, %v9020
        %v9989 = vpack.c.b16 %v9029, %v9021
        %v9990 = vpack.c.b16 %v9030, %v9022
        %v9991 = vpack.c.b16 %v9031, %v9023
        %v9992 = vpack.c.b16 %v9032, %v9024
        %v9993 = vpack.c.b16 %v9041, %v9033
        %v9994 = vpack.c.b16 %v9042, %v9034
        %v9995 = vpack.c.b16 %v9043, %v9035
        %v9996 = vpack.c.b16 %v9044, %v9036
        %v9997 = vpack.c.b16 %v9045, %v9037
        %v9998 = vpack.c.b16 %v9046, %v9038
        %v9999 = vpack.c.b16 %v9047, %v9039
        %v10000 = vpack.c.b16 %v9048, %v9040
        %v10001 = vpack.c.b16 %v9057, %v9049
        %v10002 = vpack.c.b16 %v9058, %v9050
        %v10003 = vpack.c.b16 %v9059, %v9051
        %v10004 = vpack.c.b16 %v9060, %v9052
        %v10005 = vpack.c.b16 %v9061, %v9053
        %v10006 = vpack.c.b16 %v9062, %v9054
        %v10007 = vpack.c.b16 %v9063, %v9055
        %v10008 = vpack.c.b16 %v9064, %v9056
        %v10009 = vpack.c.b16 %v9073, %v9065
        %v10010 = vpack.c.b16 %v9074, %v9066
        %v10011 = vpack.c.b16 %v9075, %v9067
        %v10012 = vpack.c.b16 %v9076, %v9068
        %v10013 = vpack.c.b16 %v9077, %v9069
        %v10014 = vpack.c.b16 %v9078, %v9070
        %v10015 = vpack.c.b16 %v9079, %v9071
        %v10016 = vpack.c.b16 %v9080, %v9072
        %v10017 = vpack.c.b16 %v9089, %v9081
        %v10018 = vpack.c.b16 %v9090, %v9082
        %v10019 = vpack.c.b16 %v9091, %v9083
        %v10020 = vpack.c.b16 %v9092, %v9084
        %v10021 = vpack.c.b16 %v9093, %v9085
        %v10022 = vpack.c.b16 %v9094, %v9086
        %v10023 = vpack.c.b16 %v9095, %v9087
        %v10024 = vpack.c.b16 %v9096, %v9088
        %v10025 = vpack.c.b16 %v9105, %v9097
        %v10026 = vpack.c.b16 %v9106, %v9098
        %v10027 = vpack.c.b16 %v9107, %v9099
        %v10028 = vpack.c.b16 %v9108, %v9100
        %v10029 = vpack.c.b16 %v9109, %v9101
        %v10030 = vpack.c.b16 %v9110, %v9102
        %v10031 = vpack.c.b16 %v9111, %v9103
        %v10032 = vpack.c.b16 %v9112, %v9104
        %v10033 = vpack.c.b16 %v9121, %v9113
        %v10034 = vpack.c.b16 %v9122, %v9114
        %v10035 = vpack.c.b16 %v9123, %v9115
        %v10036 = vpack.c.b16 %v9124, %v9116
        %v10037 = vpack.c.b16 %v9125, %v9117
        %v10038 = vpack.c.b16 %v9126, %v9118
        %v10039 = vpack.c.b16 %v9127, %v9119
        %v10040 = vpack.c.b16 %v9128, %v9120
        %v10041 = vpack.c.b16 %v9137, %v9129
        %v10042 = vpack.c.b16 %v9138, %v9130
        %v10043 = vpack.c.b16 %v9139, %v9131
        %v10044 = vpack.c.b16 %v9140, %v9132
        %v10045 = vpack.c.b16 %v9141, %v9133
        %v10046 = vpack.c.b16 %v9142, %v9134
        %v10047 = vpack.c.b16 %v9143, %v9135
        %v10048 = vpack.c.b16 %v9144, %v9136
        %v10049 = vpack.c.b16 %v9153, %v9145
        %v10050 = vpack.c.b16 %v9154, %v9146
        %v10051 = vpack.c.b16 %v9155, %v9147
        %v10052 = vpack.c.b16 %v9156, %v9148
        %v10053 = vpack.c.b16 %v9157, %v9149
        %v10054 = vpack.c.b16 %v9158, %v9150
        %v10055 = vpack.c.b16 %v9159, %v9151
        %v10056 = vpack.c.b16 %v9160, %v9152
        %v10057 = vpack.c.b16 %v9169, %v9161
        %v10058 = vpack.c.b16 %v9170, %v9162
        %v10059 = vpack.c.b16 %v9171, %v9163
        %v10060 = vpack.c.b16 %v9172, %v9164
        %v10061 = vpack.c.b16 %v9173, %v9165
        %v10062 = vpack.c.b16 %v9174, %v9166
        %v10063 = vpack.c.b16 %v9175, %v9167
        %v10064 = vpack.c.b16 %v9176, %v9168
        %v10065 = vpack.c.b16 %v9185, %v9177
        %v10066 = vpack.c.b16 %v9186, %v9178
        %v10067 = vpack.c.b16 %v9187, %v9179
        %v10068 = vpack.c.b16 %v9188, %v9180
        %v10069 = vpack.c.b16 %v9189, %v9181
        %v10070 = vpack.c.b16 %v9190, %v9182
        %v10071 = vpack.c.b16 %v9191, %v9183
        %v10072 = vpack.c.b16 %v9192, %v9184
        %v10073 = vpack.c.b16 %v9201, %v9193
        %v10074 = vpack.c.b16 %v9202, %v9194
        %v10075 = vpack.c.b16 %v9203, %v9195
        %v10076 = vpack.c.b16 %v9204, %v9196
        %v10077 = vpack.c.b16 %v9205, %v9197
        %v10078 = vpack.c.b16 %v9206, %v9198
        %v10079 = vpack.c.b16 %v9207, %v9199
        %v10080 = vpack.c.b16 %v9208, %v9200
        %v10081 = vpack.c.b16 %v9217, %v9209
        %v10082 = vpack.c.b16 %v9218, %v9210
        %v10083 = vpack.c.b16 %v9219, %v9211
        %v10084 = vpack.c.b16 %v9220, %v9212
        %v10085 = vpack.c.b16 %v9221, %v9213
        %v10086 = vpack.c.b16 %v9222, %v9214
        %v10087 = vpack.c.b16 %v9223, %v9215
        %v10088 = vpack.c.b16 %v9224, %v9216
        %v10089 = vpack.c.b16 %v9233, %v9225
        %v10090 = vpack.c.b16 %v9234, %v9226
        %v10091 = vpack.c.b16 %v9235, %v9227
        %v10092 = vpack.c.b16 %v9236, %v9228
        %v10093 = vpack.c.b16 %v9237, %v9229
        %v10094 = vpack.c.b16 %v9238, %v9230
        %v10095 = vpack.c.b16 %v9239, %v9231
        %v10096 = vpack.c.b16 %v9240, %v9232
        %v10097 = vpack.c.b16 %v9249, %v9241
        %v10098 = vpack.c.b16 %v9250, %v9242
        %v10099 = vpack.c.b16 %v9251, %v9243
        %v10100 = vpack.c.b16 %v9252, %v9244
        %v10101 = vpack.c.b16 %v9253, %v9245
        %v10102 = vpack.c.b16 %v9254, %v9246
        %v10103 = vpack.c.b16 %v9255, %v9247
        %v10104 = vpack.c.b16 %v9256, %v9248
        %v10105 = vpack.c.b16 %v9265, %v9257
        %v10106 = vpack.c.b16 %v9266, %v9258
        %v10107 = vpack.c.b16 %v9267, %v9259
        %v10108 = vpack.c.b16 %v9268, %v9260
        %v10109 = vpack.c.b16 %v9269, %v9261
        %v10110 = vpack.c.b16 %v9270, %v9262
        %v10111 = vpack.c.b16 %v9271, %v9263
        %v10112 = vpack.c.b16 %v9272, %v9264
        %v10113 = vpack.c.b16 %v9281, %v9273
        %v10114 = vpack.c.b16 %v9282, %v9274
        %v10115 = vpack.c.b16 %v9283, %v9275
        %v10116 = vpack.c.b16 %v9284, %v9276
        %v10117 = vpack.c.b16 %v9285, %v9277
        %v10118 = vpack.c.b16 %v9286, %v9278
        %v10119 = vpack.c.b16 %v9287, %v9279
        %v10120 = vpack.c.b16 %v9288, %v9280
        %v10121 = vpack.c.b16 %v9297, %v9289
        %v10122 = vpack.c.b16 %v9298, %v9290
        %v10123 = vpack.c.b16 %v9299, %v9291
        %v10124 = vpack.c.b16 %v9300, %v9292
        %v10125 = vpack.c.b16 %v9301, %v9293
        %v10126 = vpack.c.b16 %v9302, %v9294
        %v10127 = vpack.c.b16 %v9303, %v9295
        %v10128 = vpack.c.b16 %v9304, %v9296
        %v10129 = vpack.c.b16 %v9313, %v9305
        %v10130 = vpack.c.b16 %v9314, %v9306
        %v10131 = vpack.c.b16 %v9315, %v9307
        %v10132 = vpack.c.b16 %v9316, %v9308
        %v10133 = vpack.c.b16 %v9317, %v9309
        %v10134 = vpack.c.b16 %v9318, %v9310
        %v10135 = vpack.c.b16 %v9319, %v9311
        %v10136 = vpack.c.b16 %v9320, %v9312
        %v10137 = vpack.c.b16 %v9329, %v9321
        %v10138 = vpack.c.b16 %v9330, %v9322
        %v10139 = vpack.c.b16 %v9331, %v9323
        %v10140 = vpack.c.b16 %v9332, %v9324
        %v10141 = vpack.c.b16 %v9333, %v9325
        %v10142 = vpack.c.b16 %v9334, %v9326
        %v10143 = vpack.c.b16 %v9335, %v9327
        %v10144 = vpack.c.b16 %v9336, %v9328
        %v10145 = vpack.c.b16 %v9345, %v9337
        %v10146 = vpack.c.b16 %v9346, %v9338
        %v10147 = vpack.c.b16 %v9347, %v9339
        %v10148 = vpack.c.b16 %v9348, %v9340
        %v10149 = vpack.c.b16 %v9349, %v9341
        %v10150 = vpack.c.b16 %v9350, %v9342
        %v10151 = vpack.c.b16 %v9351, %v9343
        %v10152 = vpack.c.b16 %v9352, %v9344
        %v10153 = vpack.c.b16 %v9361, %v9353
        %v10154 = vpack.c.b16 %v9362, %v9354
        %v10155 = vpack.c.b16 %v9363, %v9355
        %v10156 = vpack.c.b16 %v9364, %v9356
        %v10157 = vpack.c.b16 %v9365, %v9357
        %v10158 = vpack.c.b16 %v9366, %v9358
        %v10159 = vpack.c.b16 %v9367, %v9359
        %v10160 = vpack.c.b16 %v9368, %v9360
        %v10161 = vpack.c.b16 %v9377, %v9369
        %v10162 = vpack.c.b16 %v9378, %v9370
        %v10163 = vpack.c.b16 %v9379, %v9371
        %v10164 = vpack.c.b16 %v9380, %v9372
        %v10165 = vpack.c.b16 %v9381, %v9373
        %v10166 = vpack.c.b16 %v9382, %v9374
        %v10167 = vpack.c.b16 %v9383, %v9375
        %v10168 = vpack.c.b16 %v9384, %v9376
        %v10169 = vpack.c.b16 %v9393, %v9385
        %v10170 = vpack.c.b16 %v9394, %v9386
        %v10171 = vpack.c.b16 %v9395, %v9387
        %v10172 = vpack.c.b16 %v9396, %v9388
        %v10173 = vpack.c.b16 %v9397, %v9389
        %v10174 = vpack.c.b16 %v9398, %v9390
        %v10175 = vpack.c.b16 %v9399, %v9391
        %v10176 = vpack.c.b16 %v9400, %v9392
        %v10177 = vpack.c.b16 %v9409, %v9401
        %v10178 = vpack.c.b16 %v9410, %v9402
        %v10179 = vpack.c.b16 %v9411, %v9403
        %v10180 = vpack.c.b16 %v9412, %v9404
        %v10181 = vpack.c.b16 %v9413, %v9405
        %v10182 = vpack.c.b16 %v9414, %v9406
        %v10183 = vpack.c.b16 %v9415, %v9407
        %v10184 = vpack.c.b16 %v9416, %v9408
        %v10185 = vpack.c.b16 %v9425, %v9417
        %v10186 = vpack.c.b16 %v9426, %v9418
        %v10187 = vpack.c.b16 %v9427, %v9419
        %v10188 = vpack.c.b16 %v9428, %v9420
        %v10189 = vpack.c.b16 %v9429, %v9421
        %v10190 = vpack.c.b16 %v9430, %v9422
        %v10191 = vpack.c.b16 %v9431, %v9423
        %v10192 = vpack.c.b16 %v9432, %v9424
        %v10193 = vpack.c.b16 %v9441, %v9433
        %v10194 = vpack.c.b16 %v9442, %v9434
        %v10195 = vpack.c.b16 %v9443, %v9435
        %v10196 = vpack.c.b16 %v9444, %v9436
        %v10197 = vpack.c.b16 %v9445, %v9437
        %v10198 = vpack.c.b16 %v9446, %v9438
        %v10199 = vpack.c.b16 %v9447, %v9439
        %v10200 = vpack.c.b16 %v9448, %v9440
        %v10201 = vpack.c.b16 %v9457, %v9449
        %v10202 = vpack.c.b16 %v9458, %v9450
        %v10203 = vpack.c.b16 %v9459, %v9451
        %v10204 = vpack.c.b16 %v9460, %v9452
        %v10205 = vpack.c.b16 %v9461, %v9453
        %v10206 = vpack.c.b16 %v9462, %v9454
        %v10207 = vpack.c.b16 %v9463, %v9455
        %v10208 = vpack.c.b16 %v9464, %v9456
        %v10209 = vpack.c.b16 %v9473, %v9465
        %v10210 = vpack.c.b16 %v9474, %v9466
        %v10211 = vpack.c.b16 %v9475, %v9467
        %v10212 = vpack.c.b16 %v9476, %v9468
        %v10213 = vpack.c.b16 %v9477, %v9469
        %v10214 = vpack.c.b16 %v9478, %v9470
        %v10215 = vpack.c.b16 %v9479, %v9471
        %v10216 = vpack.c.b16 %v9480, %v9472
        %v10217 = vpack.c.b16 %v9489, %v9481
        %v10218 = vpack.c.b16 %v9490, %v9482
        %v10219 = vpack.c.b16 %v9491, %v9483
        %v10220 = vpack.c.b16 %v9492, %v9484
        %v10221 = vpack.c.b16 %v9493, %v9485
        %v10222 = vpack.c.b16 %v9494, %v9486
        %v10223 = vpack.c.b16 %v9495, %v9487
        %v10224 = vpack.c.b16 %v9496, %v9488
        %v10225 = vpack.c.b16 %v9505, %v9497
        %v10226 = vpack.c.b16 %v9506, %v9498
        %v10227 = vpack.c.b16 %v9507, %v9499
        %v10228 = vpack.c.b16 %v9508, %v9500
        %v10229 = vpack.c.b16 %v9509, %v9501
        %v10230 = vpack.c.b16 %v9510, %v9502
        %v10231 = vpack.c.b16 %v9511, %v9503
        %v10232 = vpack.c.b16 %v9512, %v9504
        %v10233 = vpack.c.b16 %v9521, %v9513
        %v10234 = vpack.c.b16 %v9522, %v9514
        %v10235 = vpack.c.b16 %v9523, %v9515
        %v10236 = vpack.c.b16 %v9524, %v9516
        %v10237 = vpack.c.b16 %v9525, %v9517
        %v10238 = vpack.c.b16 %v9526, %v9518
        %v10239 = vpack.c.b16 %v9527, %v9519
        %v10240 = vpack.c.b16 %v9528, %v9520
        %v10241 = vpack.c.b16 %v9537, %v9529
        %v10242 = vpack.c.b16 %v9538, %v9530
        %v10243 = vpack.c.b16 %v9539, %v9531
        %v10244 = vpack.c.b16 %v9540, %v9532
        %v10245 = vpack.c.b16 %v9541, %v9533
        %v10246 = vpack.c.b16 %v9542, %v9534
        %v10247 = vpack.c.b16 %v9543, %v9535
        %v10248 = vpack.c.b16 %v9544, %v9536
        %v10249 = vpack.c.b16 %v9553, %v9545
        %v10250 = vpack.c.b16 %v9554, %v9546
        %v10251 = vpack.c.b16 %v9555, %v9547
        %v10252 = vpack.c.b16 %v9556, %v9548
        %v10253 = vpack.c.b16 %v9557, %v9549
        %v10254 = vpack.c.b16 %v9558, %v9550
        %v10255 = vpack.c.b16 %v9559, %v9551
        %v10256 = vpack.c.b16 %v9560, %v9552
        %v10257 = vpack.c.b16 %v9569, %v9561
        %v10258 = vpack.c.b16 %v9570, %v9562
        %v10259 = vpack.c.b16 %v9571, %v9563
        %v10260 = vpack.c.b16 %v9572, %v9564
        %v10261 = vpack.c.b16 %v9573, %v9565
        %v10262 = vpack.c.b16 %v9574, %v9566
        %v10263 = vpack.c.b16 %v9575, %v9567
        %v10264 = vpack.c.b16 %v9576, %v9568
        %v10265 = vpack.c.b16 %v9585, %v9577
        %v10266 = vpack.c.b16 %v9586, %v9578
        %v10267 = vpack.c.b16 %v9587, %v9579
        %v10268 = vpack.c.b16 %v9588, %v9580
        %v10269 = vpack.c.b16 %v9589, %v9581
        %v10270 = vpack.c.b16 %v9590, %v9582
        %v10271 = vpack.c.b16 %v9591, %v9583
        %v10272 = vpack.c.b16 %v9592, %v9584
        %v10273 = vpack.c.b16 %v9601, %v9593
        %v10274 = vpack.c.b16 %v9602, %v9594
        %v10275 = vpack.c.b16 %v9603, %v9595
        %v10276 = vpack.c.b16 %v9604, %v9596
        %v10277 = vpack.c.b16 %v9605, %v9597
        %v10278 = vpack.c.b16 %v9606, %v9598
        %v10279 = vpack.c.b16 %v9607, %v9599
        %v10280 = vpack.c.b16 %v9608, %v9600
        %v10281 = vpack.c.b16 %v9617, %v9609
        %v10282 = vpack.c.b16 %v9618, %v9610
        %v10283 = vpack.c.b16 %v9619, %v9611
        %v10284 = vpack.c.b16 %v9620, %v9612
        %v10285 = vpack.c.b16 %v9621, %v9613
        %v10286 = vpack.c.b16 %v9622, %v9614
        %v10287 = vpack.c.b16 %v9623, %v9615
        %v10288 = vpack.c.b16 %v9624, %v9616
        %v10289 = vpack.c.b16 %v9633, %v9625
        %v10290 = vpack.c.b16 %v9634, %v9626
        %v10291 = vpack.c.b16 %v9635, %v9627
        %v10292 = vpack.c.b16 %v9636, %v9628
        %v10293 = vpack.c.b16 %v9637, %v9629
        %v10294 = vpack.c.b16 %v9638, %v9630
        %v10295 = vpack.c.b16 %v9639, %v9631
        %v10296 = vpack.c.b16 %v9640, %v9632
        %v10297 = vpack.c.b16 %v9649, %v9641
        %v10298 = vpack.c.b16 %v9650, %v9642
        %v10299 = vpack.c.b16 %v9651, %v9643
        %v10300 = vpack.c.b16 %v9652, %v9644
        %v10301 = vpack.c.b16 %v9653, %v9645
        %v10302 = vpack.c.b16 %v9654, %v9646
        %v10303 = vpack.c.b16 %v9655, %v9647
        %v10304 = vpack.c.b16 %v9656, %v9648
        %v10305 = vpack.c.b16 %v9665, %v9657
        %v10306 = vpack.c.b16 %v9666, %v9658
        %v10307 = vpack.c.b16 %v9667, %v9659
        %v10308 = vpack.c.b16 %v9668, %v9660
        %v10309 = vpack.c.b16 %v9669, %v9661
        %v10310 = vpack.c.b16 %v9670, %v9662
        %v10311 = vpack.c.b16 %v9671, %v9663
        %v10312 = vpack.c.b16 %v9672, %v9664
        %v10313 = vpack.c.b16 %v9681, %v9673
        %v10314 = vpack.c.b16 %v9682, %v9674
        %v10315 = vpack.c.b16 %v9683, %v9675
        %v10316 = vpack.c.b16 %v9684, %v9676
        %v10317 = vpack.c.b16 %v9685, %v9677
        %v10318 = vpack.c.b16 %v9686, %v9678
        %v10319 = vpack.c.b16 %v9687, %v9679
        %v10320 = vpack.c.b16 %v9688, %v9680
        %v10321 = vpack.c.b16 %v9697, %v9689
        %v10322 = vpack.c.b16 %v9698, %v9690
        %v10323 = vpack.c.b16 %v9699, %v9691
        %v10324 = vpack.c.b16 %v9700, %v9692
        %v10325 = vpack.c.b16 %v9701, %v9693
        %v10326 = vpack.c.b16 %v9702, %v9694
        %v10327 = vpack.c.b16 %v9703, %v9695
        %v10328 = vpack.c.b16 %v9704, %v9696
        %v10329 = vpack.c.b16 %v9713, %v9705
        %v10330 = vpack.c.b16 %v9714, %v9706
        %v10331 = vpack.c.b16 %v9715, %v9707
        %v10332 = vpack.c.b16 %v9716, %v9708
        %v10333 = vpack.c.b16 %v9717, %v9709
        %v10334 = vpack.c.b16 %v9718, %v9710
        %v10335 = vpack.c.b16 %v9719, %v9711
        %v10336 = vpack.c.b16 %v9720, %v9712
        %v10337 = vpack.c.b16 %v9729, %v9721
        %v10338 = vpack.c.b16 %v9730, %v9722
        %v10339 = vpack.c.b16 %v9731, %v9723
        %v10340 = vpack.c.b16 %v9732, %v9724
        %v10341 = vpack.c.b16 %v9733, %v9725
        %v10342 = vpack.c.b16 %v9734, %v9726
        %v10343 = vpack.c.b16 %v9735, %v9727
        %v10344 = vpack.c.b16 %v9736, %v9728
        %v10345 = vpack.c.b16 %v9745, %v9737
        %v10346 = vpack.c.b16 %v9746, %v9738
        %v10347 = vpack.c.b16 %v9747, %v9739
        %v10348 = vpack.c.b16 %v9748, %v9740
        %v10349 = vpack.c.b16 %v9749, %v9741
        %v10350 = vpack.c.b16 %v9750, %v9742
        %v10351 = vpack.c.b16 %v9751, %v9743
        %v10352 = vpack.c.b16 %v9752, %v9744
        %v10353 = vpack.c.b16 %v9761, %v9753
        %v10354 = vpack.c.b16 %v9762, %v9754
        %v10355 = vpack.c.b16 %v9763, %v9755
        %v10356 = vpack.c.b16 %v9764, %v9756
        %v10357 = vpack.c.b16 %v9765, %v9757
        %v10358 = vpack.c.b16 %v9766, %v9758
        %v10359 = vpack.c.b16 %v9767, %v9759
        %v10360 = vpack.c.b16 %v9768, %v9760
        %v10361 = vpack.c.b16 %v9777, %v9769
        %v10362 = vpack.c.b16 %v9778, %v9770
        %v10363 = vpack.c.b16 %v9779, %v9771
        %v10364 = vpack.c.b16 %v9780, %v9772
        %v10365 = vpack.c.b16 %v9781, %v9773
        %v10366 = vpack.c.b16 %v9782, %v9774
        %v10367 = vpack.c.b16 %v9783, %v9775
        %v10368 = vpack.c.b16 %v9784, %v9776
        %v10369 = vpack.c.b16 %v9793, %v9785
        %v10370 = vpack.c.b16 %v9794, %v9786
        %v10371 = vpack.c.b16 %v9795, %v9787
        %v10372 = vpack.c.b16 %v9796, %v9788
        %v10373 = vpack.c.b16 %v9797, %v9789
        %v10374 = vpack.c.b16 %v9798, %v9790
        %v10375 = vpack.c.b16 %v9799, %v9791
        %v10376 = vpack.c.b16 %v9800, %v9792
        %v10377 = vpack.c.b16 %v9809, %v9801
        %v10378 = vpack.c.b16 %v9810, %v9802
        %v10379 = vpack.c.b16 %v9811, %v9803
        %v10380 = vpack.c.b16 %v9812, %v9804
        %v10381 = vpack.c.b16 %v9813, %v9805
        %v10382 = vpack.c.b16 %v9814, %v9806
        %v10383 = vpack.c.b16 %v9815, %v9807
        %v10384 = vpack.c.b16 %v9816, %v9808
        %v10385 = vpack.c.b16 %v9825, %v9817
        %v10386 = vpack.c.b16 %v9826, %v9818
        %v10387 = vpack.c.b16 %v9827, %v9819
        %v10388 = vpack.c.b16 %v9828, %v9820
        %v10389 = vpack.c.b16 %v9829, %v9821
        %v10390 = vpack.c.b16 %v9830, %v9822
        %v10391 = vpack.c.b16 %v9831, %v9823
        %v10392 = vpack.c.b16 %v9832, %v9824
        %v10393 = vpack.c.b16 %v9841, %v9833
        %v10394 = vpack.c.b16 %v9842, %v9834
        %v10395 = vpack.c.b16 %v9843, %v9835
        %v10396 = vpack.c.b16 %v9844, %v9836
        %v10397 = vpack.c.b16 %v9845, %v9837
        %v10398 = vpack.c.b16 %v9846, %v9838
        %v10399 = vpack.c.b16 %v9847, %v9839
        %v10400 = vpack.c.b16 %v9848, %v9840
        %v10401 = vpack.c.b16 %v9857, %v9849
        %v10402 = vpack.c.b16 %v9858, %v9850
        %v10403 = vpack.c.b16 %v9859, %v9851
        %v10404 = vpack.c.b16 %v9860, %v9852
        %v10405 = vpack.c.b16 %v9861, %v9853
        %v10406 = vpack.c.b16 %v9862, %v9854
        %v10407 = vpack.c.b16 %v9863, %v9855
        %v10408 = vpack.c.b16 %v9864, %v9856
        %v10409 = vpack.c.b16 %v9873, %v9865
        %v10410 = vpack.c.b16 %v9874, %v9866
        %v10411 = vpack.c.b16 %v9875, %v9867
        %v10412 = vpack.c.b16 %v9876, %v9868
        %v10413 = vpack.c.b16 %v9877, %v9869
        %v10414 = vpack.c.b16 %v9878, %v9870
        %v10415 = vpack.c.b16 %v9879, %v9871
        %v10416 = vpack.c.b16 %v9880, %v9872
        %v10417 = vpack.c.b16 %v9889, %v9881
        %v10418 = vpack.c.b16 %v9890, %v9882
        %v10419 = vpack.c.b16 %v9891, %v9883
        %v10420 = vpack.c.b16 %v9892, %v9884
        %v10421 = vpack.c.b16 %v9893, %v9885
        %v10422 = vpack.c.b16 %v9894, %v9886
        %v10423 = vpack.c.b16 %v9895, %v9887
        %v10424 = vpack.c.b16 %v9896, %v9888
        %v10425 = vpack.c.b16 %v9905, %v9897
        %v10426 = vpack.c.b16 %v9906, %v9898
        %v10427 = vpack.c.b16 %v9907, %v9899
        %v10428 = vpack.c.b16 %v9908, %v9900
        %v10429 = vpack.c.b16 %v9909, %v9901
        %v10430 = vpack.c.b16 %v9910, %v9902
        %v10431 = vpack.c.b16 %v9911, %v9903
        %v10432 = vpack.c.b16 %v9912, %v9904
        %v10433 = vpack.c.b16 %v9921, %v9913
        %v10434 = vpack.c.b16 %v9922, %v9914
        %v10435 = vpack.c.b16 %v9923, %v9915
        %v10436 = vpack.c.b16 %v9924, %v9916
        %v10437 = vpack.c.b16 %v9925, %v9917
        %v10438 = vpack.c.b16 %v9926, %v9918
        %v10439 = vpack.c.b16 %v9927, %v9919
        %v10440 = vpack.c.b16 %v9928, %v9920
        %10953 = vmatprep.subr.bf16.mxu0 %v9986
        %10954 = vmatpush1.bf16.msra.mxu0 %v9985
        %10955 = vmatprep.subr.bf16.mxu0 %v9978
        %10956 = vmatpush1.bf16.msra.mxu0 %v9977
        %10957 = vmatprep.subr.bf16.mxu0 %v9970
        %10958 = vmatpush1.bf16.msra.mxu0 %v9969
        %10959 = vmatprep.subr.bf16.mxu0 %v9962
        %10960 = vmatpush1.bf16.msra.mxu0 %v9961
        %10961 = vmatprep.subr.bf16.mxu0 %v9954
        %10962 = vmatpush1.bf16.msra.mxu0 %v9953
        %10963 = vmatprep.subr.bf16.mxu0 %v9946
        %10964 = vmatpush1.bf16.msra.mxu0 %v9945
        %10965 = vmatprep.subr.bf16.mxu0 %v9938
        %10966 = vmatpush1.bf16.msra.mxu0 %v9937
        %10967 = vmatprep.subr.bf16.mxu0 %v9930
        %10968 = vmatpush1.bf16.msra.mxu0 %v9929
        %10969 = vmatprep.subr.bf16.mxu0 %v10050
        %10970 = vmatpush2.bf16.msra.mxu0 %v10049
        %10971 = vmatprep.subr.bf16.mxu0 %v10042
        %10972 = vmatpush2.bf16.msra.mxu0 %v10041
        %10973 = vmatprep.subr.bf16.mxu0 %v10034
        %10974 = vmatpush2.bf16.msra.mxu0 %v10033
        %10975 = vmatprep.subr.bf16.mxu0 %v10026
        %10976 = vmatpush2.bf16.msra.mxu0 %v10025
        %10977 = vmatprep.subr.bf16.mxu0 %v10018
        %10978 = vmatpush2.bf16.msra.mxu0 %v10017
        %10979 = vmatprep.subr.bf16.mxu0 %v10010
        %10980 = vmatpush2.bf16.msra.mxu0 %v10009
        %10981 = vmatprep.subr.bf16.mxu0 %v10002
        %10982 = vmatpush2.bf16.msra.mxu0 %v10001
        %10983 = vmatprep.subr.bf16.mxu0 %v9994
        %10984 = vmatpush2.bf16.msra.mxu0 %v9993
        %10985 = vmatprep.mubr.bf16.mxu0 %v7874
        %10986 = vmatmul.mubr.bf16.gmra.mxu0 %v7873
        %v10987 = vpop.f32.mrf.mxu0
        %v10988 = vadd.f32 0.0, %v10987
        %v10989 = vpop.f32.mrf.mxu0
        %v10990 = vadd.f32 0.0, %v10989
        %v10991 = vpop.f32.mrf.mxu0
        %v10992 = vpop.f32.mrf.mxu0
        %10993 = vdwg.mxu0
        %10994 = vmatprep.subr.bf16.mxu0 %v10114
        %10995 = vmatpush1.bf16.msra.mxu0 %v10113
        %10996 = vmatprep.subr.bf16.mxu0 %v10106
        %10997 = vmatpush1.bf16.msra.mxu0 %v10105
        %10998 = vmatprep.subr.bf16.mxu0 %v10098
        %10999 = vmatpush1.bf16.msra.mxu0 %v10097
        %11000 = vmatprep.subr.bf16.mxu0 %v10090
        %11001 = vmatpush1.bf16.msra.mxu0 %v10089
        %11002 = vmatprep.subr.bf16.mxu0 %v10082
        %11003 = vmatpush1.bf16.msra.mxu0 %v10081
        %11004 = vmatprep.subr.bf16.mxu0 %v10074
        %11005 = vmatpush1.bf16.msra.mxu0 %v10073
        %11006 = vmatprep.subr.bf16.mxu0 %v10066
        %11007 = vmatpush1.bf16.msra.mxu0 %v10065
        %11008 = vmatprep.subr.bf16.mxu0 %v10058
        %11009 = vmatpush1.bf16.msra.mxu0 %v10057
        %11010 = vmatprep.subr.bf16.mxu0 %v10178
        %11011 = vmatpush2.bf16.msra.mxu0 %v10177
        %11012 = vmatprep.subr.bf16.mxu0 %v10170
        %11013 = vmatpush2.bf16.msra.mxu0 %v10169
        %11014 = vmatprep.subr.bf16.mxu0 %v10162
        %11015 = vmatpush2.bf16.msra.mxu0 %v10161
        %11016 = vmatprep.subr.bf16.mxu0 %v10154
        %11017 = vmatpush2.bf16.msra.mxu0 %v10153
        %11018 = vmatprep.subr.bf16.mxu0 %v10146
        %11019 = vmatpush2.bf16.msra.mxu0 %v10145
        %11020 = vmatprep.subr.bf16.mxu0 %v10138
        %11021 = vmatpush2.bf16.msra.mxu0 %v10137
        %11022 = vmatprep.subr.bf16.mxu0 %v10130
        %11023 = vmatpush2.bf16.msra.mxu0 %v10129
        %11024 = vmatprep.subr.bf16.mxu0 %v10122
        %11025 = vmatpush2.bf16.msra.mxu0 %v10121
        %11026 = vmatprep.mubr.bf16.mxu0 %v7876
        %11027 = vmatmul.mubr.bf16.gmra.mxu0 %v7875
        %v11028 = vpop.f32.mrf.mxu0
        %v11029 = vadd.f32 %v10988, %v11028
        %v11030 = vpop.f32.mrf.mxu0
        %v11031 = vadd.f32 %v10990, %v11030
        %v11032 = vpop.f32.mrf.mxu0
        %v11033 = vpop.f32.mrf.mxu0
        %11034 = vdwg.mxu0
        %11035 = vmatprep.subr.bf16.mxu0 %v10242
        %11036 = vmatpush1.bf16.msra.mxu0 %v10241
        %11037 = vmatprep.subr.bf16.mxu0 %v10234
        %11038 = vmatpush1.bf16.msra.mxu0 %v10233
        %11039 = vmatprep.subr.bf16.mxu0 %v10226
        %11040 = vmatpush1.bf16.msra.mxu0 %v10225
        %11041 = vmatprep.subr.bf16.mxu0 %v10218
        %11042 = vmatpush1.bf16.msra.mxu0 %v10217
        %11043 = vmatprep.subr.bf16.mxu0 %v10210
        %11044 = vmatpush1.bf16.msra.mxu0 %v10209
        %11045 = vmatprep.subr.bf16.mxu0 %v10202
        %11046 = vmatpush1.bf16.msra.mxu0 %v10201
        %11047 = vmatprep.subr.bf16.mxu0 %v10194
        %11048 = vmatpush1.bf16.msra.mxu0 %v10193
        %11049 = vmatprep.subr.bf16.mxu0 %v10186
        %11050 = vmatpush1.bf16.msra.mxu0 %v10185
        %11051 = vmatprep.subr.bf16.mxu0 %v10306
        %11052 = vmatpush2.bf16.msra.mxu0 %v10305
        %11053 = vmatprep.subr.bf16.mxu0 %v10298
        %11054 = vmatpush2.bf16.msra.mxu0 %v10297
        %11055 = vmatprep.subr.bf16.mxu0 %v10290
        %11056 = vmatpush2.bf16.msra.mxu0 %v10289
        %11057 = vmatprep.subr.bf16.mxu0 %v10282
        %11058 = vmatpush2.bf16.msra.mxu0 %v10281
        %11059 = vmatprep.subr.bf16.mxu0 %v10274
        %11060 = vmatpush2.bf16.msra.mxu0 %v10273
        %11061 = vmatprep.subr.bf16.mxu0 %v10266
        %11062 = vmatpush2.bf16.msra.mxu0 %v10265
        %11063 = vmatprep.subr.bf16.mxu0 %v10258
        %11064 = vmatpush2.bf16.msra.mxu0 %v10257
        %11065 = vmatprep.subr.bf16.mxu0 %v10250
        %11066 = vmatpush2.bf16.msra.mxu0 %v10249
        %11067 = vmatprep.mubr.bf16.mxu0 %v7878
        %11068 = vmatmul.mubr.bf16.gmra.mxu0 %v7877
        %v11069 = vpop.f32.mrf.mxu0
        %v11070 = vadd.f32 %v11029, %v11069
        %v11071 = vpop.f32.mrf.mxu0
        %v11072 = vadd.f32 %v11031, %v11071
        %v11073 = vpop.f32.mrf.mxu0
        %v11074 = vpop.f32.mrf.mxu0
        %11075 = vdwg.mxu0
        %11076 = vmatprep.subr.bf16.mxu0 %v10370
        %11077 = vmatpush1.bf16.msra.mxu0 %v10369
        %11078 = vmatprep.subr.bf16.mxu0 %v10362
        %11079 = vmatpush1.bf16.msra.mxu0 %v10361
        %11080 = vmatprep.subr.bf16.mxu0 %v10354
        %11081 = vmatpush1.bf16.msra.mxu0 %v10353
        %11082 = vmatprep.subr.bf16.mxu0 %v10346
        %11083 = vmatpush1.bf16.msra.mxu0 %v10345
        %11084 = vmatprep.subr.bf16.mxu0 %v10338
        %11085 = vmatpush1.bf16.msra.mxu0 %v10337
        %11086 = vmatprep.subr.bf16.mxu0 %v10330
        %11087 = vmatpush1.bf16.msra.mxu0 %v10329
        %11088 = vmatprep.subr.bf16.mxu0 %v10322
        %11089 = vmatpush1.bf16.msra.mxu0 %v10321
        %11090 = vmatprep.subr.bf16.mxu0 %v10314
        %11091 = vmatpush1.bf16.msra.mxu0 %v10313
        %11092 = vmatprep.subr.bf16.mxu0 %v10434
        %11093 = vmatpush2.bf16.msra.mxu0 %v10433
        %11094 = vmatprep.subr.bf16.mxu0 %v10426
        %11095 = vmatpush2.bf16.msra.mxu0 %v10425
        %11096 = vmatprep.subr.bf16.mxu0 %v10418
        %11097 = vmatpush2.bf16.msra.mxu0 %v10417
        %11098 = vmatprep.subr.bf16.mxu0 %v10410
        %11099 = vmatpush2.bf16.msra.mxu0 %v10409
        %11100 = vmatprep.subr.bf16.mxu0 %v10402
        %11101 = vmatpush2.bf16.msra.mxu0 %v10401
        %11102 = vmatprep.subr.bf16.mxu0 %v10394
        %11103 = vmatpush2.bf16.msra.mxu0 %v10393
        %11104 = vmatprep.subr.bf16.mxu0 %v10386
        %11105 = vmatpush2.bf16.msra.mxu0 %v10385
        %11106 = vmatprep.subr.bf16.mxu0 %v10378
        %11107 = vmatpush2.bf16.msra.mxu0 %v10377
        %11108 = vmatprep.mubr.bf16.mxu0 %v7880
        %11109 = vmatmul.mubr.bf16.gmra.mxu0 %v7879
        %v11110 = vpop.f32.mrf.mxu0
        %v11111 = vadd.f32 %v11070, %v11110
        %v11112 = vpop.f32.mrf.mxu0
        %v11113 = vadd.f32 %v11072, %v11112
        %v11114 = vpop.f32.mrf.mxu0
        %v11115 = vpop.f32.mrf.mxu0
        %11116 = vdwg.mxu0
        %11117 = vmatprep.subr.bf16.mxu0 %v9988
        %11118 = vmatpush1.bf16.msra.mxu0 %v9987
        %11119 = vmatprep.subr.bf16.mxu0 %v9980
        %11120 = vmatpush1.bf16.msra.mxu0 %v9979
        %11121 = vmatprep.subr.bf16.mxu0 %v9972
        %11122 = vmatpush1.bf16.msra.mxu0 %v9971
        %11123 = vmatprep.subr.bf16.mxu0 %v9964
        %11124 = vmatpush1.bf16.msra.mxu0 %v9963
        %11125 = vmatprep.subr.bf16.mxu0 %v9956
        %11126 = vmatpush1.bf16.msra.mxu0 %v9955
        %11127 = vmatprep.subr.bf16.mxu0 %v9948
        %11128 = vmatpush1.bf16.msra.mxu0 %v9947
        %11129 = vmatprep.subr.bf16.mxu0 %v9940
        %11130 = vmatpush1.bf16.msra.mxu0 %v9939
        %11131 = vmatprep.subr.bf16.mxu0 %v9932
        %11132 = vmatpush1.bf16.msra.mxu0 %v9931
        %11133 = vmatprep.subr.bf16.mxu0 %v10052
        %11134 = vmatpush2.bf16.msra.mxu0 %v10051
        %11135 = vmatprep.subr.bf16.mxu0 %v10044
        %11136 = vmatpush2.bf16.msra.mxu0 %v10043
        %11137 = vmatprep.subr.bf16.mxu0 %v10036
        %11138 = vmatpush2.bf16.msra.mxu0 %v10035
        %11139 = vmatprep.subr.bf16.mxu0 %v10028
        %11140 = vmatpush2.bf16.msra.mxu0 %v10027
        %11141 = vmatprep.subr.bf16.mxu0 %v10020
        %11142 = vmatpush2.bf16.msra.mxu0 %v10019
        %11143 = vmatprep.subr.bf16.mxu0 %v10012
        %11144 = vmatpush2.bf16.msra.mxu0 %v10011
        %11145 = vmatprep.subr.bf16.mxu0 %v10004
        %11146 = vmatpush2.bf16.msra.mxu0 %v10003
        %11147 = vmatprep.subr.bf16.mxu0 %v9996
        %11148 = vmatpush2.bf16.msra.mxu0 %v9995
        %11149 = vmatprep.mubr.bf16.mxu0 %v7874
        %11150 = vmatmul.mubr.bf16.gmra.mxu0 %v7873
        %v11151 = vpop.f32.mrf.mxu0
        %v11152 = vadd.f32 0.0, %v11151
        %v11153 = vpop.f32.mrf.mxu0
        %v11154 = vadd.f32 0.0, %v11153
        %v11155 = vpop.f32.mrf.mxu0
        %v11156 = vpop.f32.mrf.mxu0
        %11157 = vdwg.mxu0
        %11158 = vmatprep.subr.bf16.mxu0 %v10116
        %11159 = vmatpush1.bf16.msra.mxu0 %v10115
        %11160 = vmatprep.subr.bf16.mxu0 %v10108
        %11161 = vmatpush1.bf16.msra.mxu0 %v10107
        %11162 = vmatprep.subr.bf16.mxu0 %v10100
        %11163 = vmatpush1.bf16.msra.mxu0 %v10099
        %11164 = vmatprep.subr.bf16.mxu0 %v10092
        %11165 = vmatpush1.bf16.msra.mxu0 %v10091
        %11166 = vmatprep.subr.bf16.mxu0 %v10084
        %11167 = vmatpush1.bf16.msra.mxu0 %v10083
        %11168 = vmatprep.subr.bf16.mxu0 %v10076
        %11169 = vmatpush1.bf16.msra.mxu0 %v10075
        %11170 = vmatprep.subr.bf16.mxu0 %v10068
        %11171 = vmatpush1.bf16.msra.mxu0 %v10067
        %11172 = vmatprep.subr.bf16.mxu0 %v10060
        %11173 = vmatpush1.bf16.msra.mxu0 %v10059
        %11174 = vmatprep.subr.bf16.mxu0 %v10180
        %11175 = vmatpush2.bf16.msra.mxu0 %v10179
        %11176 = vmatprep.subr.bf16.mxu0 %v10172
        %11177 = vmatpush2.bf16.msra.mxu0 %v10171
        %11178 = vmatprep.subr.bf16.mxu0 %v10164
        %11179 = vmatpush2.bf16.msra.mxu0 %v10163
        %11180 = vmatprep.subr.bf16.mxu0 %v10156
        %11181 = vmatpush2.bf16.msra.mxu0 %v10155
        %11182 = vmatprep.subr.bf16.mxu0 %v10148
        %11183 = vmatpush2.bf16.msra.mxu0 %v10147
        %11184 = vmatprep.subr.bf16.mxu0 %v10140
        %11185 = vmatpush2.bf16.msra.mxu0 %v10139
        %11186 = vmatprep.subr.bf16.mxu0 %v10132
        %11187 = vmatpush2.bf16.msra.mxu0 %v10131
        %11188 = vmatprep.subr.bf16.mxu0 %v10124
        %11189 = vmatpush2.bf16.msra.mxu0 %v10123
        %11190 = vmatprep.mubr.bf16.mxu0 %v7876
        %11191 = vmatmul.mubr.bf16.gmra.mxu0 %v7875
        %v11192 = vpop.f32.mrf.mxu0
        %v11193 = vadd.f32 %v11152, %v11192
        %v11194 = vpop.f32.mrf.mxu0
        %v11195 = vadd.f32 %v11154, %v11194
        %v11196 = vpop.f32.mrf.mxu0
        %v11197 = vpop.f32.mrf.mxu0
        %11198 = vdwg.mxu0
        %11199 = vmatprep.subr.bf16.mxu0 %v10244
        %11200 = vmatpush1.bf16.msra.mxu0 %v10243
        %11201 = vmatprep.subr.bf16.mxu0 %v10236
        %11202 = vmatpush1.bf16.msra.mxu0 %v10235
        %11203 = vmatprep.subr.bf16.mxu0 %v10228
        %11204 = vmatpush1.bf16.msra.mxu0 %v10227
        %11205 = vmatprep.subr.bf16.mxu0 %v10220
        %11206 = vmatpush1.bf16.msra.mxu0 %v10219
        %11207 = vmatprep.subr.bf16.mxu0 %v10212
        %11208 = vmatpush1.bf16.msra.mxu0 %v10211
        %11209 = vmatprep.subr.bf16.mxu0 %v10204
        %11210 = vmatpush1.bf16.msra.mxu0 %v10203
        %11211 = vmatprep.subr.bf16.mxu0 %v10196
        %11212 = vmatpush1.bf16.msra.mxu0 %v10195
        %11213 = vmatprep.subr.bf16.mxu0 %v10188
        %11214 = vmatpush1.bf16.msra.mxu0 %v10187
        %11215 = vmatprep.subr.bf16.mxu0 %v10308
        %11216 = vmatpush2.bf16.msra.mxu0 %v10307
        %11217 = vmatprep.subr.bf16.mxu0 %v10300
        %11218 = vmatpush2.bf16.msra.mxu0 %v10299
        %11219 = vmatprep.subr.bf16.mxu0 %v10292
        %11220 = vmatpush2.bf16.msra.mxu0 %v10291
        %11221 = vmatprep.subr.bf16.mxu0 %v10284
        %11222 = vmatpush2.bf16.msra.mxu0 %v10283
        %11223 = vmatprep.subr.bf16.mxu0 %v10276
        %11224 = vmatpush2.bf16.msra.mxu0 %v10275
        %11225 = vmatprep.subr.bf16.mxu0 %v10268
        %11226 = vmatpush2.bf16.msra.mxu0 %v10267
        %11227 = vmatprep.subr.bf16.mxu0 %v10260
        %11228 = vmatpush2.bf16.msra.mxu0 %v10259
        %11229 = vmatprep.subr.bf16.mxu0 %v10252
        %11230 = vmatpush2.bf16.msra.mxu0 %v10251
        %11231 = vmatprep.mubr.bf16.mxu0 %v7878
        %11232 = vmatmul.mubr.bf16.gmra.mxu0 %v7877
        %v11233 = vpop.f32.mrf.mxu0
        %v11234 = vadd.f32 %v11193, %v11233
        %v11235 = vpop.f32.mrf.mxu0
        %v11236 = vadd.f32 %v11195, %v11235
        %v11237 = vpop.f32.mrf.mxu0
        %v11238 = vpop.f32.mrf.mxu0
        %11239 = vdwg.mxu0
        %11240 = vmatprep.subr.bf16.mxu0 %v10372
        %11241 = vmatpush1.bf16.msra.mxu0 %v10371
        %11242 = vmatprep.subr.bf16.mxu0 %v10364
        %11243 = vmatpush1.bf16.msra.mxu0 %v10363
        %11244 = vmatprep.subr.bf16.mxu0 %v10356
        %11245 = vmatpush1.bf16.msra.mxu0 %v10355
        %11246 = vmatprep.subr.bf16.mxu0 %v10348
        %11247 = vmatpush1.bf16.msra.mxu0 %v10347
        %11248 = vmatprep.subr.bf16.mxu0 %v10340
        %11249 = vmatpush1.bf16.msra.mxu0 %v10339
        %11250 = vmatprep.subr.bf16.mxu0 %v10332
        %11251 = vmatpush1.bf16.msra.mxu0 %v10331
        %11252 = vmatprep.subr.bf16.mxu0 %v10324
        %11253 = vmatpush1.bf16.msra.mxu0 %v10323
        %11254 = vmatprep.subr.bf16.mxu0 %v10316
        %11255 = vmatpush1.bf16.msra.mxu0 %v10315
        %11256 = vmatprep.subr.bf16.mxu0 %v10436
        %11257 = vmatpush2.bf16.msra.mxu0 %v10435
        %11258 = vmatprep.subr.bf16.mxu0 %v10428
        %11259 = vmatpush2.bf16.msra.mxu0 %v10427
        %11260 = vmatprep.subr.bf16.mxu0 %v10420
        %11261 = vmatpush2.bf16.msra.mxu0 %v10419
        %11262 = vmatprep.subr.bf16.mxu0 %v10412
        %11263 = vmatpush2.bf16.msra.mxu0 %v10411
        %11264 = vmatprep.subr.bf16.mxu0 %v10404
        %11265 = vmatpush2.bf16.msra.mxu0 %v10403
        %11266 = vmatprep.subr.bf16.mxu0 %v10396
        %11267 = vmatpush2.bf16.msra.mxu0 %v10395
        %11268 = vmatprep.subr.bf16.mxu0 %v10388
        %11269 = vmatpush2.bf16.msra.mxu0 %v10387
        %11270 = vmatprep.subr.bf16.mxu0 %v10380
        %11271 = vmatpush2.bf16.msra.mxu0 %v10379
        %11272 = vmatprep.mubr.bf16.mxu0 %v7880
        %11273 = vmatmul.mubr.bf16.gmra.mxu0 %v7879
        %v11274 = vpop.f32.mrf.mxu0
        %v11275 = vadd.f32 %v11234, %v11274
        %v11276 = vpop.f32.mrf.mxu0
        %v11277 = vadd.f32 %v11236, %v11276
        %v11278 = vpop.f32.mrf.mxu0
        %v11279 = vpop.f32.mrf.mxu0
        %11280 = vdwg.mxu0
        %11281 = vmatprep.subr.bf16.mxu0 %v9990
        %11282 = vmatpush1.bf16.msra.mxu0 %v9989
        %11283 = vmatprep.subr.bf16.mxu0 %v9982
        %11284 = vmatpush1.bf16.msra.mxu0 %v9981
        %11285 = vmatprep.subr.bf16.mxu0 %v9974
        %11286 = vmatpush1.bf16.msra.mxu0 %v9973
        %11287 = vmatprep.subr.bf16.mxu0 %v9966
        %11288 = vmatpush1.bf16.msra.mxu0 %v9965
        %11289 = vmatprep.subr.bf16.mxu0 %v9958
        %11290 = vmatpush1.bf16.msra.mxu0 %v9957
        %11291 = vmatprep.subr.bf16.mxu0 %v9950
        %11292 = vmatpush1.bf16.msra.mxu0 %v9949
        %11293 = vmatprep.subr.bf16.mxu0 %v9942
        %11294 = vmatpush1.bf16.msra.mxu0 %v9941
        %11295 = vmatprep.subr.bf16.mxu0 %v9934
        %11296 = vmatpush1.bf16.msra.mxu0 %v9933
        %11297 = vmatprep.subr.bf16.mxu0 %v10054
        %11298 = vmatpush2.bf16.msra.mxu0 %v10053
        %11299 = vmatprep.subr.bf16.mxu0 %v10046
        %11300 = vmatpush2.bf16.msra.mxu0 %v10045
        %11301 = vmatprep.subr.bf16.mxu0 %v10038
        %11302 = vmatpush2.bf16.msra.mxu0 %v10037
        %11303 = vmatprep.subr.bf16.mxu0 %v10030
        %11304 = vmatpush2.bf16.msra.mxu0 %v10029
        %11305 = vmatprep.subr.bf16.mxu0 %v10022
        %11306 = vmatpush2.bf16.msra.mxu0 %v10021
        %11307 = vmatprep.subr.bf16.mxu0 %v10014
        %11308 = vmatpush2.bf16.msra.mxu0 %v10013
        %11309 = vmatprep.subr.bf16.mxu0 %v10006
        %11310 = vmatpush2.bf16.msra.mxu0 %v10005
        %11311 = vmatprep.subr.bf16.mxu0 %v9998
        %11312 = vmatpush2.bf16.msra.mxu0 %v9997
        %11313 = vmatprep.mubr.bf16.mxu0 %v7874
        %11314 = vmatmul.mubr.bf16.gmra.mxu0 %v7873
        %v11315 = vpop.f32.mrf.mxu0
        %v11316 = vadd.f32 0.0, %v11315
        %v11317 = vpop.f32.mrf.mxu0
        %v11318 = vadd.f32 0.0, %v11317
        %v11319 = vpop.f32.mrf.mxu0
        %v11320 = vpop.f32.mrf.mxu0
        %11321 = vdwg.mxu0
        %11322 = vmatprep.subr.bf16.mxu0 %v10118
        %11323 = vmatpush1.bf16.msra.mxu0 %v10117
        %11324 = vmatprep.subr.bf16.mxu0 %v10110
        %11325 = vmatpush1.bf16.msra.mxu0 %v10109
        %11326 = vmatprep.subr.bf16.mxu0 %v10102
        %11327 = vmatpush1.bf16.msra.mxu0 %v10101
        %11328 = vmatprep.subr.bf16.mxu0 %v10094
        %11329 = vmatpush1.bf16.msra.mxu0 %v10093
        %11330 = vmatprep.subr.bf16.mxu0 %v10086
        %11331 = vmatpush1.bf16.msra.mxu0 %v10085
        %11332 = vmatprep.subr.bf16.mxu0 %v10078
        %11333 = vmatpush1.bf16.msra.mxu0 %v10077
        %11334 = vmatprep.subr.bf16.mxu0 %v10070
        %11335 = vmatpush1.bf16.msra.mxu0 %v10069
        %11336 = vmatprep.subr.bf16.mxu0 %v10062
        %11337 = vmatpush1.bf16.msra.mxu0 %v10061
        %11338 = vmatprep.subr.bf16.mxu0 %v10182
        %11339 = vmatpush2.bf16.msra.mxu0 %v10181
        %11340 = vmatprep.subr.bf16.mxu0 %v10174
        %11341 = vmatpush2.bf16.msra.mxu0 %v10173
        %11342 = vmatprep.subr.bf16.mxu0 %v10166
        %11343 = vmatpush2.bf16.msra.mxu0 %v10165
        %11344 = vmatprep.subr.bf16.mxu0 %v10158
        %11345 = vmatpush2.bf16.msra.mxu0 %v10157
        %11346 = vmatprep.subr.bf16.mxu0 %v10150
        %11347 = vmatpush2.bf16.msra.mxu0 %v10149
        %11348 = vmatprep.subr.bf16.mxu0 %v10142
        %11349 = vmatpush2.bf16.msra.mxu0 %v10141
        %11350 = vmatprep.subr.bf16.mxu0 %v10134
        %11351 = vmatpush2.bf16.msra.mxu0 %v10133
        %11352 = vmatprep.subr.bf16.mxu0 %v10126
        %11353 = vmatpush2.bf16.msra.mxu0 %v10125
        %11354 = vmatprep.mubr.bf16.mxu0 %v7876
        %11355 = vmatmul.mubr.bf16.gmra.mxu0 %v7875
        %v11356 = vpop.f32.mrf.mxu0
        %v11357 = vadd.f32 %v11316, %v11356
        %v11358 = vpop.f32.mrf.mxu0
        %v11359 = vadd.f32 %v11318, %v11358
        %v11360 = vpop.f32.mrf.mxu0
        %v11361 = vpop.f32.mrf.mxu0
        %11362 = vdwg.mxu0
        %11363 = vmatprep.subr.bf16.mxu0 %v10246
        %11364 = vmatpush1.bf16.msra.mxu0 %v10245
        %11365 = vmatprep.subr.bf16.mxu0 %v10238
        %11366 = vmatpush1.bf16.msra.mxu0 %v10237
        %11367 = vmatprep.subr.bf16.mxu0 %v10230
        %11368 = vmatpush1.bf16.msra.mxu0 %v10229
        %11369 = vmatprep.subr.bf16.mxu0 %v10222
        %11370 = vmatpush1.bf16.msra.mxu0 %v10221
        %11371 = vmatprep.subr.bf16.mxu0 %v10214
        %11372 = vmatpush1.bf16.msra.mxu0 %v10213
        %11373 = vmatprep.subr.bf16.mxu0 %v10206
        %11374 = vmatpush1.bf16.msra.mxu0 %v10205
        %11375 = vmatprep.subr.bf16.mxu0 %v10198
        %11376 = vmatpush1.bf16.msra.mxu0 %v10197
        %11377 = vmatprep.subr.bf16.mxu0 %v10190
        %11378 = vmatpush1.bf16.msra.mxu0 %v10189
        %11379 = vmatprep.subr.bf16.mxu0 %v10310
        %11380 = vmatpush2.bf16.msra.mxu0 %v10309
        %11381 = vmatprep.subr.bf16.mxu0 %v10302
        %11382 = vmatpush2.bf16.msra.mxu0 %v10301
        %11383 = vmatprep.subr.bf16.mxu0 %v10294
        %11384 = vmatpush2.bf16.msra.mxu0 %v10293
        %11385 = vmatprep.subr.bf16.mxu0 %v10286
        %11386 = vmatpush2.bf16.msra.mxu0 %v10285
        %11387 = vmatprep.subr.bf16.mxu0 %v10278
        %11388 = vmatpush2.bf16.msra.mxu0 %v10277
        %11389 = vmatprep.subr.bf16.mxu0 %v10270
        %11390 = vmatpush2.bf16.msra.mxu0 %v10269
        %11391 = vmatprep.subr.bf16.mxu0 %v10262
        %11392 = vmatpush2.bf16.msra.mxu0 %v10261
        %11393 = vmatprep.subr.bf16.mxu0 %v10254
        %11394 = vmatpush2.bf16.msra.mxu0 %v10253
        %11395 = vmatprep.mubr.bf16.mxu0 %v7878
        %11396 = vmatmul.mubr.bf16.gmra.mxu0 %v7877
        %v11397 = vpop.f32.mrf.mxu0
        %v11398 = vadd.f32 %v11357, %v11397
        %v11399 = vpop.f32.mrf.mxu0
        %v11400 = vadd.f32 %v11359, %v11399
        %v11401 = vpop.f32.mrf.mxu0
        %v11402 = vpop.f32.mrf.mxu0
        %11403 = vdwg.mxu0
        %11404 = vmatprep.subr.bf16.mxu0 %v10374
        %11405 = vmatpush1.bf16.msra.mxu0 %v10373
        %11406 = vmatprep.subr.bf16.mxu0 %v10366
        %11407 = vmatpush1.bf16.msra.mxu0 %v10365
        %11408 = vmatprep.subr.bf16.mxu0 %v10358
        %11409 = vmatpush1.bf16.msra.mxu0 %v10357
        %11410 = vmatprep.subr.bf16.mxu0 %v10350
        %11411 = vmatpush1.bf16.msra.mxu0 %v10349
        %11412 = vmatprep.subr.bf16.mxu0 %v10342
        %11413 = vmatpush1.bf16.msra.mxu0 %v10341
        %11414 = vmatprep.subr.bf16.mxu0 %v10334
        %11415 = vmatpush1.bf16.msra.mxu0 %v10333
        %11416 = vmatprep.subr.bf16.mxu0 %v10326
        %11417 = vmatpush1.bf16.msra.mxu0 %v10325
        %11418 = vmatprep.subr.bf16.mxu0 %v10318
        %11419 = vmatpush1.bf16.msra.mxu0 %v10317
        %11420 = vmatprep.subr.bf16.mxu0 %v10438
        %11421 = vmatpush2.bf16.msra.mxu0 %v10437
        %11422 = vmatprep.subr.bf16.mxu0 %v10430
        %11423 = vmatpush2.bf16.msra.mxu0 %v10429
        %11424 = vmatprep.subr.bf16.mxu0 %v10422
        %11425 = vmatpush2.bf16.msra.mxu0 %v10421
        %11426 = vmatprep.subr.bf16.mxu0 %v10414
        %11427 = vmatpush2.bf16.msra.mxu0 %v10413
        %11428 = vmatprep.subr.bf16.mxu0 %v10406
        %11429 = vmatpush2.bf16.msra.mxu0 %v10405
        %11430 = vmatprep.subr.bf16.mxu0 %v10398
        %11431 = vmatpush2.bf16.msra.mxu0 %v10397
        %11432 = vmatprep.subr.bf16.mxu0 %v10390
        %11433 = vmatpush2.bf16.msra.mxu0 %v10389
        %11434 = vmatprep.subr.bf16.mxu0 %v10382
        %11435 = vmatpush2.bf16.msra.mxu0 %v10381
        %11436 = vmatprep.mubr.bf16.mxu0 %v7880
        %11437 = vmatmul.mubr.bf16.gmra.mxu0 %v7879
        %v11438 = vpop.f32.mrf.mxu0
        %v11439 = vadd.f32 %v11398, %v11438
        %v11440 = vpop.f32.mrf.mxu0
        %v11441 = vadd.f32 %v11400, %v11440
        %v11442 = vpop.f32.mrf.mxu0
        %v11443 = vpop.f32.mrf.mxu0
        %11444 = vdwg.mxu0
        %11445 = vmatprep.subr.bf16.mxu0 %v9992
        %11446 = vmatpush1.bf16.msra.mxu0 %v9991
        %11447 = vmatprep.subr.bf16.mxu0 %v9984
        %11448 = vmatpush1.bf16.msra.mxu0 %v9983
        %11449 = vmatprep.subr.bf16.mxu0 %v9976
        %11450 = vmatpush1.bf16.msra.mxu0 %v9975
        %11451 = vmatprep.subr.bf16.mxu0 %v9968
        %11452 = vmatpush1.bf16.msra.mxu0 %v9967
        %11453 = vmatprep.subr.bf16.mxu0 %v9960
        %11454 = vmatpush1.bf16.msra.mxu0 %v9959
        %11455 = vmatprep.subr.bf16.mxu0 %v9952
        %11456 = vmatpush1.bf16.msra.mxu0 %v9951
        %11457 = vmatprep.subr.bf16.mxu0 %v9944
        %11458 = vmatpush1.bf16.msra.mxu0 %v9943
        %11459 = vmatprep.subr.bf16.mxu0 %v9936
        %11460 = vmatpush1.bf16.msra.mxu0 %v9935
        %11461 = vmatprep.subr.bf16.mxu0 %v10056
        %11462 = vmatpush2.bf16.msra.mxu0 %v10055
        %11463 = vmatprep.subr.bf16.mxu0 %v10048
        %11464 = vmatpush2.bf16.msra.mxu0 %v10047
        %11465 = vmatprep.subr.bf16.mxu0 %v10040
        %11466 = vmatpush2.bf16.msra.mxu0 %v10039
        %11467 = vmatprep.subr.bf16.mxu0 %v10032
        %11468 = vmatpush2.bf16.msra.mxu0 %v10031
        %11469 = vmatprep.subr.bf16.mxu0 %v10024
        %11470 = vmatpush2.bf16.msra.mxu0 %v10023
        %11471 = vmatprep.subr.bf16.mxu0 %v10016
        %11472 = vmatpush2.bf16.msra.mxu0 %v10015
        %11473 = vmatprep.subr.bf16.mxu0 %v10008
        %11474 = vmatpush2.bf16.msra.mxu0 %v10007
        %11475 = vmatprep.subr.bf16.mxu0 %v10000
        %11476 = vmatpush2.bf16.msra.mxu0 %v9999
        %11477 = vmatprep.mubr.bf16.mxu0 %v7874
        %11478 = vmatmul.mubr.bf16.gmra.mxu0 %v7873
        %v11479 = vpop.f32.mrf.mxu0
        %v11480 = vadd.f32 0.0, %v11479
        %v11481 = vpop.f32.mrf.mxu0
        %v11482 = vadd.f32 0.0, %v11481
        %v11483 = vpop.f32.mrf.mxu0
        %v11484 = vpop.f32.mrf.mxu0
        %11485 = vdwg.mxu0
        %11486 = vmatprep.subr.bf16.mxu0 %v10120
        %11487 = vmatpush1.bf16.msra.mxu0 %v10119
        %11488 = vmatprep.subr.bf16.mxu0 %v10112
        %11489 = vmatpush1.bf16.msra.mxu0 %v10111
        %11490 = vmatprep.subr.bf16.mxu0 %v10104
        %11491 = vmatpush1.bf16.msra.mxu0 %v10103
        %11492 = vmatprep.subr.bf16.mxu0 %v10096
        %11493 = vmatpush1.bf16.msra.mxu0 %v10095
        %11494 = vmatprep.subr.bf16.mxu0 %v10088
        %11495 = vmatpush1.bf16.msra.mxu0 %v10087
        %11496 = vmatprep.subr.bf16.mxu0 %v10080
        %11497 = vmatpush1.bf16.msra.mxu0 %v10079
        %11498 = vmatprep.subr.bf16.mxu0 %v10072
        %11499 = vmatpush1.bf16.msra.mxu0 %v10071
        %11500 = vmatprep.subr.bf16.mxu0 %v10064
        %11501 = vmatpush1.bf16.msra.mxu0 %v10063
        %11502 = vmatprep.subr.bf16.mxu0 %v10184
        %11503 = vmatpush2.bf16.msra.mxu0 %v10183
        %11504 = vmatprep.subr.bf16.mxu0 %v10176
        %11505 = vmatpush2.bf16.msra.mxu0 %v10175
        %11506 = vmatprep.subr.bf16.mxu0 %v10168
        %11507 = vmatpush2.bf16.msra.mxu0 %v10167
        %11508 = vmatprep.subr.bf16.mxu0 %v10160
        %11509 = vmatpush2.bf16.msra.mxu0 %v10159
        %11510 = vmatprep.subr.bf16.mxu0 %v10152
        %11511 = vmatpush2.bf16.msra.mxu0 %v10151
        %11512 = vmatprep.subr.bf16.mxu0 %v10144
        %11513 = vmatpush2.bf16.msra.mxu0 %v10143
        %11514 = vmatprep.subr.bf16.mxu0 %v10136
        %11515 = vmatpush2.bf16.msra.mxu0 %v10135
        %11516 = vmatprep.subr.bf16.mxu0 %v10128
        %11517 = vmatpush2.bf16.msra.mxu0 %v10127
        %11518 = vmatprep.mubr.bf16.mxu0 %v7876
        %11519 = vmatmul.mubr.bf16.gmra.mxu0 %v7875
        %v11520 = vpop.f32.mrf.mxu0
        %v11521 = vadd.f32 %v11480, %v11520
        %v11522 = vpop.f32.mrf.mxu0
        %v11523 = vadd.f32 %v11482, %v11522
        %v11524 = vpop.f32.mrf.mxu0
        %v11525 = vpop.f32.mrf.mxu0
        %11526 = vdwg.mxu0
        %11527 = vmatprep.subr.bf16.mxu0 %v10248
        %11528 = vmatpush1.bf16.msra.mxu0 %v10247
        %11529 = vmatprep.subr.bf16.mxu0 %v10240
        %11530 = vmatpush1.bf16.msra.mxu0 %v10239
        %11531 = vmatprep.subr.bf16.mxu0 %v10232
        %11532 = vmatpush1.bf16.msra.mxu0 %v10231
        %11533 = vmatprep.subr.bf16.mxu0 %v10224
        %11534 = vmatpush1.bf16.msra.mxu0 %v10223
        %11535 = vmatprep.subr.bf16.mxu0 %v10216
        %11536 = vmatpush1.bf16.msra.mxu0 %v10215
        %11537 = vmatprep.subr.bf16.mxu0 %v10208
        %11538 = vmatpush1.bf16.msra.mxu0 %v10207
        %11539 = vmatprep.subr.bf16.mxu0 %v10200
        %11540 = vmatpush1.bf16.msra.mxu0 %v10199
        %11541 = vmatprep.subr.bf16.mxu0 %v10192
        %11542 = vmatpush1.bf16.msra.mxu0 %v10191
        %11543 = vmatprep.subr.bf16.mxu0 %v10312
        %11544 = vmatpush2.bf16.msra.mxu0 %v10311
        %11545 = vmatprep.subr.bf16.mxu0 %v10304
        %11546 = vmatpush2.bf16.msra.mxu0 %v10303
        %11547 = vmatprep.subr.bf16.mxu0 %v10296
        %11548 = vmatpush2.bf16.msra.mxu0 %v10295
        %11549 = vmatprep.subr.bf16.mxu0 %v10288
        %11550 = vmatpush2.bf16.msra.mxu0 %v10287
        %11551 = vmatprep.subr.bf16.mxu0 %v10280
        %11552 = vmatpush2.bf16.msra.mxu0 %v10279
        %11553 = vmatprep.subr.bf16.mxu0 %v10272
        %11554 = vmatpush2.bf16.msra.mxu0 %v10271
        %11555 = vmatprep.subr.bf16.mxu0 %v10264
        %11556 = vmatpush2.bf16.msra.mxu0 %v10263
        %11557 = vmatprep.subr.bf16.mxu0 %v10256
        %11558 = vmatpush2.bf16.msra.mxu0 %v10255
        %11559 = vmatprep.mubr.bf16.mxu0 %v7878
        %11560 = vmatmul.mubr.bf16.gmra.mxu0 %v7877
        %v11561 = vpop.f32.mrf.mxu0
        %v11562 = vadd.f32 %v11521, %v11561
        %v11563 = vpop.f32.mrf.mxu0
        %v11564 = vadd.f32 %v11523, %v11563
        %v11565 = vpop.f32.mrf.mxu0
        %v11566 = vpop.f32.mrf.mxu0
        %11567 = vdwg.mxu0
        %11568 = vmatprep.subr.bf16.mxu0 %v10376
        %11569 = vmatpush1.bf16.msra.mxu0 %v10375
        %11570 = vmatprep.subr.bf16.mxu0 %v10368
        %11571 = vmatpush1.bf16.msra.mxu0 %v10367
        %11572 = vmatprep.subr.bf16.mxu0 %v10360
        %11573 = vmatpush1.bf16.msra.mxu0 %v10359
        %11574 = vmatprep.subr.bf16.mxu0 %v10352
        %11575 = vmatpush1.bf16.msra.mxu0 %v10351
        %11576 = vmatprep.subr.bf16.mxu0 %v10344
        %11577 = vmatpush1.bf16.msra.mxu0 %v10343
        %11578 = vmatprep.subr.bf16.mxu0 %v10336
        %11579 = vmatpush1.bf16.msra.mxu0 %v10335
        %11580 = vmatprep.subr.bf16.mxu0 %v10328
        %11581 = vmatpush1.bf16.msra.mxu0 %v10327
        %11582 = vmatprep.subr.bf16.mxu0 %v10320
        %11583 = vmatpush1.bf16.msra.mxu0 %v10319
        %11584 = vmatprep.subr.bf16.mxu0 %v10440
        %11585 = vmatpush2.bf16.msra.mxu0 %v10439
        %11586 = vmatprep.subr.bf16.mxu0 %v10432
        %11587 = vmatpush2.bf16.msra.mxu0 %v10431
        %11588 = vmatprep.subr.bf16.mxu0 %v10424
        %11589 = vmatpush2.bf16.msra.mxu0 %v10423
        %11590 = vmatprep.subr.bf16.mxu0 %v10416
        %11591 = vmatpush2.bf16.msra.mxu0 %v10415
        %11592 = vmatprep.subr.bf16.mxu0 %v10408
        %11593 = vmatpush2.bf16.msra.mxu0 %v10407
        %11594 = vmatprep.subr.bf16.mxu0 %v10400
        %11595 = vmatpush2.bf16.msra.mxu0 %v10399
        %11596 = vmatprep.subr.bf16.mxu0 %v10392
        %11597 = vmatpush2.bf16.msra.mxu0 %v10391
        %11598 = vmatprep.subr.bf16.mxu0 %v10384
        %11599 = vmatpush2.bf16.msra.mxu0 %v10383
        %11600 = vmatprep.mubr.bf16.mxu0 %v7880
        %11601 = vmatmul.mubr.bf16.gmra.mxu0 %v7879
        %v11602 = vpop.f32.mrf.mxu0
        %v11603 = vadd.f32 %v11562, %v11602
        %v11604 = vpop.f32.mrf.mxu0
        %v11605 = vadd.f32 %v11564, %v11604
        %v11606 = vpop.f32.mrf.mxu0
        %v11607 = vpop.f32.mrf.mxu0
        %11608 = vdwg.mxu0
        %v11609 = vld [vmem:[%s737] sm:$0xff]
        %v11611 = vlaneseq
        %v11612 = vshrl.u32 %v11611, 7
        %v11613 = vsub.s32 0, %v11612
        %v11614 = vrot.slane %v11609, %v11613
        %v11615 = vlaneseq
        %v11616 = vshrl.u32 %v11615, 7
        %v11617 = vsub.s32 1, %v11616
        %v11618 = vrot.slane %v11609, %v11617
        %v11619 = vlaneseq
        %v11620 = vshrl.u32 %v11619, 7
        %v11621 = vsub.s32 2, %v11620
        %v11622 = vrot.slane %v11609, %v11621
        %v11623 = vlaneseq
        %v11624 = vshrl.u32 %v11623, 7
        %v11625 = vsub.s32 3, %v11624
        %v11626 = vrot.slane %v11609, %v11625
        %v11627 = vlaneseq
        %v11628 = vshrl.u32 %v11627, 7
        %v11629 = vsub.s32 4, %v11628
        %v11630 = vrot.slane %v11609, %v11629
        %v11631 = vlaneseq
        %v11632 = vshrl.u32 %v11631, 7
        %v11633 = vsub.s32 5, %v11632
        %v11634 = vrot.slane %v11609, %v11633
        %v11635 = vlaneseq
        %v11636 = vshrl.u32 %v11635, 7
        %v11637 = vsub.s32 6, %v11636
        %v11638 = vrot.slane %v11609, %v11637
        %v11639 = vlaneseq
        %v11640 = vshrl.u32 %v11639, 7
        %v11641 = vsub.s32 7, %v11640
        %v11642 = vrot.slane %v11609, %v11641
        %v11651 = vmul.f32 %v11111, %v11614
        %v11652 = vmul.f32 %v11113, %v11618
        %v11653 = vmul.f32 %v11275, %v11622
        %v11654 = vmul.f32 %v11277, %v11626
        %v11655 = vmul.f32 %v11439, %v11630
        %v11656 = vmul.f32 %v11441, %v11634
        %v11657 = vmul.f32 %v11603, %v11638
        %v11658 = vmul.f32 %v11605, %v11642
        %v11659 = vld [vmem:[%s746] sm:$0xff]
        %v11661 = vlaneseq
        %v11662 = vshrl.u32 %v11661, 7
        %v11663 = vsub.s32 0, %v11662
        %v11664 = vrot.slane %v11659, %v11663
        %v11665 = vlaneseq
        %v11666 = vshrl.u32 %v11665, 7
        %v11667 = vsub.s32 1, %v11666
        %v11668 = vrot.slane %v11659, %v11667
        %v11669 = vlaneseq
        %v11670 = vshrl.u32 %v11669, 7
        %v11671 = vsub.s32 2, %v11670
        %v11672 = vrot.slane %v11659, %v11671
        %v11673 = vlaneseq
        %v11674 = vshrl.u32 %v11673, 7
        %v11675 = vsub.s32 3, %v11674
        %v11676 = vrot.slane %v11659, %v11675
        %v11677 = vlaneseq
        %v11678 = vshrl.u32 %v11677, 7
        %v11679 = vsub.s32 4, %v11678
        %v11680 = vrot.slane %v11659, %v11679
        %v11681 = vlaneseq
        %v11682 = vshrl.u32 %v11681, 7
        %v11683 = vsub.s32 5, %v11682
        %v11684 = vrot.slane %v11659, %v11683
        %v11685 = vlaneseq
        %v11686 = vshrl.u32 %v11685, 7
        %v11687 = vsub.s32 6, %v11686
        %v11688 = vrot.slane %v11659, %v11687
        %v11689 = vlaneseq
        %v11690 = vshrl.u32 %v11689, 7
        %v11691 = vsub.s32 7, %v11690
        %v11692 = vrot.slane %v11659, %v11691
        %v11701 = vadd.f32 %v11651, %v11664
        %v11702 = vadd.f32 %v11652, %v11668
        %v11703 = vadd.f32 %v11653, %v11672
        %v11704 = vadd.f32 %v11654, %v11676
        %v11705 = vadd.f32 %v11655, %v11680
        %v11706 = vadd.f32 %v11656, %v11684
        %v11707 = vadd.f32 %v11657, %v11688
        %v11708 = vadd.f32 %v11658, %v11692
        %v11709 = vmax.f32 %v11701, 0.0
        %v11710 = vmax.f32 %v11702, 0.0
        %v11711 = vmax.f32 %v11703, 0.0
        %v11712 = vmax.f32 %v11704, 0.0
        %v11713 = vmax.f32 %v11705, 0.0
        %v11714 = vmax.f32 %v11706, 0.0
        %v11715 = vmax.f32 %v11707, 0.0
        %v11716 = vmax.f32 %v11708, 0.0
        %v11717 = vpack.c.bf16 %v11709, %v11709
        %v11718 = vpack.c.bf16 %v11710, %v11710
        %v11719 = vpack.c.bf16 %v11711, %v11711
        %v11720 = vpack.c.bf16 %v11712, %v11712
        %v11721 = vpack.c.bf16 %v11713, %v11713
        %v11722 = vpack.c.bf16 %v11714, %v11714
        %v11723 = vpack.c.bf16 %v11715, %v11715
        %v11724 = vpack.c.bf16 %v11716, %v11716
        %v11725 = vld [vmem:[%s755] sm:$0xf]
        %v11726 = vld [vmem:[%s755 + $0x4] sm:$0xf]
        %v11727 = vld [vmem:[%s755 + $0x8] sm:$0xf]
        %v11728 = vld [vmem:[%s755 + $0xc] sm:$0xf]
        %v11729 = vld [vmem:[%s755 + $0x10] sm:$0xf]
        %v11730 = vld [vmem:[%s755 + $0x14] sm:$0xf]
        %v11731 = vld [vmem:[%s755 + $0x18] sm:$0xf]
        %v11732 = vld [vmem:[%s755 + $0x1c] sm:$0xf]
        %v11733 = vld [vmem:[%s755 + $0x20] sm:$0xf]
        %v11734 = vld [vmem:[%s755 + $0x24] sm:$0xf]
        %v11735 = vld [vmem:[%s755 + $0x28] sm:$0xf]
        %v11736 = vld [vmem:[%s755 + $0x2c] sm:$0xf]
        %v11737 = vld [vmem:[%s755 + $0x30] sm:$0xf]
        %v11738 = vld [vmem:[%s755 + $0x34] sm:$0xf]
        %v11739 = vld [vmem:[%s755 + $0x38] sm:$0xf]
        %v11740 = vld [vmem:[%s755 + $0x3c] sm:$0xf]
        %v11741 = vld [vmem:[%s755 + $0x40] sm:$0xf]
        %v11742 = vld [vmem:[%s755 + $0x44] sm:$0xf]
        %v11743 = vld [vmem:[%s755 + $0x48] sm:$0xf]
        %v11744 = vld [vmem:[%s755 + $0x4c] sm:$0xf]
        %v11745 = vld [vmem:[%s755 + $0x50] sm:$0xf]
        %v11746 = vld [vmem:[%s755 + $0x54] sm:$0xf]
        %v11747 = vld [vmem:[%s755 + $0x58] sm:$0xf]
        %v11748 = vld [vmem:[%s755 + $0x5c] sm:$0xf]
        %v11749 = vld [vmem:[%s755 + $0x60] sm:$0xf]
        %v11750 = vld [vmem:[%s755 + $0x64] sm:$0xf]
        %v11751 = vld [vmem:[%s755 + $0x68] sm:$0xf]
        %v11752 = vld [vmem:[%s755 + $0x6c] sm:$0xf]
        %v11753 = vld [vmem:[%s755 + $0x70] sm:$0xf]
        %v11754 = vld [vmem:[%s755 + $0x74] sm:$0xf]
        %v11755 = vld [vmem:[%s755 + $0x78] sm:$0xf]
        %v11756 = vld [vmem:[%s755 + $0x7c] sm:$0xf]
        %v11757 = vld [vmem:[%s755 + $0x80] sm:$0xf]
        %v11758 = vld [vmem:[%s755 + $0x84] sm:$0xf]
        %v11759 = vld [vmem:[%s755 + $0x88] sm:$0xf]
        %v11760 = vld [vmem:[%s755 + $0x8c] sm:$0xf]
        %v11761 = vld [vmem:[%s755 + $0x90] sm:$0xf]
        %v11762 = vld [vmem:[%s755 + $0x94] sm:$0xf]
        %v11763 = vld [vmem:[%s755 + $0x98] sm:$0xf]
        %v11764 = vld [vmem:[%s755 + $0x9c] sm:$0xf]
        %v11765 = vld [vmem:[%s755 + $0xa0] sm:$0xf]
        %v11766 = vld [vmem:[%s755 + $0xa4] sm:$0xf]
        %v11767 = vld [vmem:[%s755 + $0xa8] sm:$0xf]
        %v11768 = vld [vmem:[%s755 + $0xac] sm:$0xf]
        %v11769 = vld [vmem:[%s755 + $0xb0] sm:$0xf]
        %v11770 = vld [vmem:[%s755 + $0xb4] sm:$0xf]
        %v11771 = vld [vmem:[%s755 + $0xb8] sm:$0xf]
        %v11772 = vld [vmem:[%s755 + $0xbc] sm:$0xf]
        %v11773 = vld [vmem:[%s755 + $0xc0] sm:$0xf]
        %v11774 = vld [vmem:[%s755 + $0xc4] sm:$0xf]
        %v11775 = vld [vmem:[%s755 + $0xc8] sm:$0xf]
        %v11776 = vld [vmem:[%s755 + $0xcc] sm:$0xf]
        %v11777 = vld [vmem:[%s755 + $0xd0] sm:$0xf]
        %v11778 = vld [vmem:[%s755 + $0xd4] sm:$0xf]
        %v11779 = vld [vmem:[%s755 + $0xd8] sm:$0xf]
        %v11780 = vld [vmem:[%s755 + $0xdc] sm:$0xf]
        %v11781 = vld [vmem:[%s755 + $0xe0] sm:$0xf]
        %v11782 = vld [vmem:[%s755 + $0xe4] sm:$0xf]
        %v11783 = vld [vmem:[%s755 + $0xe8] sm:$0xf]
        %v11784 = vld [vmem:[%s755 + $0xec] sm:$0xf]
        %v11785 = vld [vmem:[%s755 + $0xf0] sm:$0xf]
        %v11786 = vld [vmem:[%s755 + $0xf4] sm:$0xf]
        %v11787 = vld [vmem:[%s755 + $0xf8] sm:$0xf]
        %v11788 = vld [vmem:[%s755 + $0xfc] sm:$0xf]
        %v11789 = vld [vmem:[%s755 + $0x100] sm:$0xf]
        %v11790 = vld [vmem:[%s755 + $0x104] sm:$0xf]
        %v11791 = vld [vmem:[%s755 + $0x108] sm:$0xf]
        %v11792 = vld [vmem:[%s755 + $0x10c] sm:$0xf]
        %v11793 = vld [vmem:[%s755 + $0x110] sm:$0xf]
        %v11794 = vld [vmem:[%s755 + $0x114] sm:$0xf]
        %v11795 = vld [vmem:[%s755 + $0x118] sm:$0xf]
        %v11796 = vld [vmem:[%s755 + $0x11c] sm:$0xf]
        %v11797 = vld [vmem:[%s755 + $0x120] sm:$0xf]
        %v11798 = vld [vmem:[%s755 + $0x124] sm:$0xf]
        %v11799 = vld [vmem:[%s755 + $0x128] sm:$0xf]
        %v11800 = vld [vmem:[%s755 + $0x12c] sm:$0xf]
        %v11801 = vld [vmem:[%s755 + $0x130] sm:$0xf]
        %v11802 = vld [vmem:[%s755 + $0x134] sm:$0xf]
        %v11803 = vld [vmem:[%s755 + $0x138] sm:$0xf]
        %v11804 = vld [vmem:[%s755 + $0x13c] sm:$0xf]
        %v11805 = vld [vmem:[%s755 + $0x140] sm:$0xf]
        %v11806 = vld [vmem:[%s755 + $0x144] sm:$0xf]
        %v11807 = vld [vmem:[%s755 + $0x148] sm:$0xf]
        %v11808 = vld [vmem:[%s755 + $0x14c] sm:$0xf]
        %v11809 = vld [vmem:[%s755 + $0x150] sm:$0xf]
        %v11810 = vld [vmem:[%s755 + $0x154] sm:$0xf]
        %v11811 = vld [vmem:[%s755 + $0x158] sm:$0xf]
        %v11812 = vld [vmem:[%s755 + $0x15c] sm:$0xf]
        %v11813 = vld [vmem:[%s755 + $0x160] sm:$0xf]
        %v11814 = vld [vmem:[%s755 + $0x164] sm:$0xf]
        %v11815 = vld [vmem:[%s755 + $0x168] sm:$0xf]
        %v11816 = vld [vmem:[%s755 + $0x16c] sm:$0xf]
        %v11817 = vld [vmem:[%s755 + $0x170] sm:$0xf]
        %v11818 = vld [vmem:[%s755 + $0x174] sm:$0xf]
        %v11819 = vld [vmem:[%s755 + $0x178] sm:$0xf]
        %v11820 = vld [vmem:[%s755 + $0x17c] sm:$0xf]
        %v11821 = vld [vmem:[%s755 + $0x180] sm:$0xf]
        %v11822 = vld [vmem:[%s755 + $0x184] sm:$0xf]
        %v11823 = vld [vmem:[%s755 + $0x188] sm:$0xf]
        %v11824 = vld [vmem:[%s755 + $0x18c] sm:$0xf]
        %v11825 = vld [vmem:[%s755 + $0x190] sm:$0xf]
        %v11826 = vld [vmem:[%s755 + $0x194] sm:$0xf]
        %v11827 = vld [vmem:[%s755 + $0x198] sm:$0xf]
        %v11828 = vld [vmem:[%s755 + $0x19c] sm:$0xf]
        %v11829 = vld [vmem:[%s755 + $0x1a0] sm:$0xf]
        %v11830 = vld [vmem:[%s755 + $0x1a4] sm:$0xf]
        %v11831 = vld [vmem:[%s755 + $0x1a8] sm:$0xf]
        %v11832 = vld [vmem:[%s755 + $0x1ac] sm:$0xf]
        %v11833 = vld [vmem:[%s755 + $0x1b0] sm:$0xf]
        %v11834 = vld [vmem:[%s755 + $0x1b4] sm:$0xf]
        %v11835 = vld [vmem:[%s755 + $0x1b8] sm:$0xf]
        %v11836 = vld [vmem:[%s755 + $0x1bc] sm:$0xf]
        %v11837 = vld [vmem:[%s755 + $0x1c0] sm:$0xf]
        %v11838 = vld [vmem:[%s755 + $0x1c4] sm:$0xf]
        %v11839 = vld [vmem:[%s755 + $0x1c8] sm:$0xf]
        %v11840 = vld [vmem:[%s755 + $0x1cc] sm:$0xf]
        %v11841 = vld [vmem:[%s755 + $0x1d0] sm:$0xf]
        %v11842 = vld [vmem:[%s755 + $0x1d4] sm:$0xf]
        %v11843 = vld [vmem:[%s755 + $0x1d8] sm:$0xf]
        %v11844 = vld [vmem:[%s755 + $0x1dc] sm:$0xf]
        %v11845 = vld [vmem:[%s755 + $0x1e0] sm:$0xf]
        %v11846 = vld [vmem:[%s755 + $0x1e4] sm:$0xf]
        %v11847 = vld [vmem:[%s755 + $0x1e8] sm:$0xf]
        %v11848 = vld [vmem:[%s755 + $0x1ec] sm:$0xf]
        %v11849 = vld [vmem:[%s755 + $0x1f0] sm:$0xf]
        %v11850 = vld [vmem:[%s755 + $0x1f4] sm:$0xf]
        %v11851 = vld [vmem:[%s755 + $0x1f8] sm:$0xf]
        %v11852 = vld [vmem:[%s755 + $0x1fc] sm:$0xf]
        %v11981 = vunpack.c.l.b16 %v11725
        %v11982 = vunpack.c.l.b16 %v11726
        %v11983 = vunpack.c.l.b16 %v11727
        %v11984 = vunpack.c.l.b16 %v11728
        %v11985 = vunpack.c.l.b16 %v11729
        %v11986 = vunpack.c.l.b16 %v11730
        %v11987 = vunpack.c.l.b16 %v11731
        %v11988 = vunpack.c.l.b16 %v11732
        %v11989 = vunpack.c.l.b16 %v11733
        %v11990 = vunpack.c.l.b16 %v11734
        %v11991 = vunpack.c.l.b16 %v11735
        %v11992 = vunpack.c.l.b16 %v11736
        %v11993 = vunpack.c.l.b16 %v11737
        %v11994 = vunpack.c.l.b16 %v11738
        %v11995 = vunpack.c.l.b16 %v11739
        %v11996 = vunpack.c.l.b16 %v11740
        %v11997 = vunpack.c.l.b16 %v11741
        %v11998 = vunpack.c.l.b16 %v11742
        %v11999 = vunpack.c.l.b16 %v11743
        %v12000 = vunpack.c.l.b16 %v11744
        %v12001 = vunpack.c.l.b16 %v11745
        %v12002 = vunpack.c.l.b16 %v11746
        %v12003 = vunpack.c.l.b16 %v11747
        %v12004 = vunpack.c.l.b16 %v11748
        %v12005 = vunpack.c.l.b16 %v11749
        %v12006 = vunpack.c.l.b16 %v11750
        %v12007 = vunpack.c.l.b16 %v11751
        %v12008 = vunpack.c.l.b16 %v11752
        %v12009 = vunpack.c.l.b16 %v11753
        %v12010 = vunpack.c.l.b16 %v11754
        %v12011 = vunpack.c.l.b16 %v11755
        %v12012 = vunpack.c.l.b16 %v11756
        %v12013 = vunpack.c.l.b16 %v11757
        %v12014 = vunpack.c.l.b16 %v11758
        %v12015 = vunpack.c.l.b16 %v11759
        %v12016 = vunpack.c.l.b16 %v11760
        %v12017 = vunpack.c.l.b16 %v11761
        %v12018 = vunpack.c.l.b16 %v11762
        %v12019 = vunpack.c.l.b16 %v11763
        %v12020 = vunpack.c.l.b16 %v11764
        %v12021 = vunpack.c.l.b16 %v11765
        %v12022 = vunpack.c.l.b16 %v11766
        %v12023 = vunpack.c.l.b16 %v11767
        %v12024 = vunpack.c.l.b16 %v11768
        %v12025 = vunpack.c.l.b16 %v11769
        %v12026 = vunpack.c.l.b16 %v11770
        %v12027 = vunpack.c.l.b16 %v11771
        %v12028 = vunpack.c.l.b16 %v11772
        %v12029 = vunpack.c.l.b16 %v11773
        %v12030 = vunpack.c.l.b16 %v11774
        %v12031 = vunpack.c.l.b16 %v11775
        %v12032 = vunpack.c.l.b16 %v11776
        %v12033 = vunpack.c.l.b16 %v11777
        %v12034 = vunpack.c.l.b16 %v11778
        %v12035 = vunpack.c.l.b16 %v11779
        %v12036 = vunpack.c.l.b16 %v11780
        %v12037 = vunpack.c.l.b16 %v11781
        %v12038 = vunpack.c.l.b16 %v11782
        %v12039 = vunpack.c.l.b16 %v11783
        %v12040 = vunpack.c.l.b16 %v11784
        %v12041 = vunpack.c.l.b16 %v11785
        %v12042 = vunpack.c.l.b16 %v11786
        %v12043 = vunpack.c.l.b16 %v11787
        %v12044 = vunpack.c.l.b16 %v11788
        %v12045 = vunpack.c.l.b16 %v11789
        %v12046 = vunpack.c.l.b16 %v11790
        %v12047 = vunpack.c.l.b16 %v11791
        %v12048 = vunpack.c.l.b16 %v11792
        %v12049 = vunpack.c.l.b16 %v11793
        %v12050 = vunpack.c.l.b16 %v11794
        %v12051 = vunpack.c.l.b16 %v11795
        %v12052 = vunpack.c.l.b16 %v11796
        %v12053 = vunpack.c.l.b16 %v11797
        %v12054 = vunpack.c.l.b16 %v11798
        %v12055 = vunpack.c.l.b16 %v11799
        %v12056 = vunpack.c.l.b16 %v11800
        %v12057 = vunpack.c.l.b16 %v11801
        %v12058 = vunpack.c.l.b16 %v11802
        %v12059 = vunpack.c.l.b16 %v11803
        %v12060 = vunpack.c.l.b16 %v11804
        %v12061 = vunpack.c.l.b16 %v11805
        %v12062 = vunpack.c.l.b16 %v11806
        %v12063 = vunpack.c.l.b16 %v11807
        %v12064 = vunpack.c.l.b16 %v11808
        %v12065 = vunpack.c.l.b16 %v11809
        %v12066 = vunpack.c.l.b16 %v11810
        %v12067 = vunpack.c.l.b16 %v11811
        %v12068 = vunpack.c.l.b16 %v11812
        %v12069 = vunpack.c.l.b16 %v11813
        %v12070 = vunpack.c.l.b16 %v11814
        %v12071 = vunpack.c.l.b16 %v11815
        %v12072 = vunpack.c.l.b16 %v11816
        %v12073 = vunpack.c.l.b16 %v11817
        %v12074 = vunpack.c.l.b16 %v11818
        %v12075 = vunpack.c.l.b16 %v11819
        %v12076 = vunpack.c.l.b16 %v11820
        %v12077 = vunpack.c.l.b16 %v11821
        %v12078 = vunpack.c.l.b16 %v11822
        %v12079 = vunpack.c.l.b16 %v11823
        %v12080 = vunpack.c.l.b16 %v11824
        %v12081 = vunpack.c.l.b16 %v11825
        %v12082 = vunpack.c.l.b16 %v11826
        %v12083 = vunpack.c.l.b16 %v11827
        %v12084 = vunpack.c.l.b16 %v11828
        %v12085 = vunpack.c.l.b16 %v11829
        %v12086 = vunpack.c.l.b16 %v11830
        %v12087 = vunpack.c.l.b16 %v11831
        %v12088 = vunpack.c.l.b16 %v11832
        %v12089 = vunpack.c.l.b16 %v11833
        %v12090 = vunpack.c.l.b16 %v11834
        %v12091 = vunpack.c.l.b16 %v11835
        %v12092 = vunpack.c.l.b16 %v11836
        %v12093 = vunpack.c.l.b16 %v11837
        %v12094 = vunpack.c.l.b16 %v11838
        %v12095 = vunpack.c.l.b16 %v11839
        %v12096 = vunpack.c.l.b16 %v11840
        %v12097 = vunpack.c.l.b16 %v11841
        %v12098 = vunpack.c.l.b16 %v11842
        %v12099 = vunpack.c.l.b16 %v11843
        %v12100 = vunpack.c.l.b16 %v11844
        %v12101 = vunpack.c.l.b16 %v11845
        %v12102 = vunpack.c.l.b16 %v11846
        %v12103 = vunpack.c.l.b16 %v11847
        %v12104 = vunpack.c.l.b16 %v11848
        %v12105 = vunpack.c.l.b16 %v11849
        %v12106 = vunpack.c.l.b16 %v11850
        %v12107 = vunpack.c.l.b16 %v11851
        %v12108 = vunpack.c.l.b16 %v11852
        %v12109 = vpack.c.b16 %v11982, %v11981
        %v12110 = vpack.c.b16 %v11984, %v11983
        %v12111 = vpack.c.b16 %v11986, %v11985
        %v12112 = vpack.c.b16 %v11988, %v11987
        %v12113 = vpack.c.b16 %v11990, %v11989
        %v12114 = vpack.c.b16 %v11992, %v11991
        %v12115 = vpack.c.b16 %v11994, %v11993
        %v12116 = vpack.c.b16 %v11996, %v11995
        %v12117 = vpack.c.b16 %v11998, %v11997
        %v12118 = vpack.c.b16 %v12000, %v11999
        %v12119 = vpack.c.b16 %v12002, %v12001
        %v12120 = vpack.c.b16 %v12004, %v12003
        %v12121 = vpack.c.b16 %v12006, %v12005
        %v12122 = vpack.c.b16 %v12008, %v12007
        %v12123 = vpack.c.b16 %v12010, %v12009
        %v12124 = vpack.c.b16 %v12012, %v12011
        %v12125 = vpack.c.b16 %v12014, %v12013
        %v12126 = vpack.c.b16 %v12016, %v12015
        %v12127 = vpack.c.b16 %v12018, %v12017
        %v12128 = vpack.c.b16 %v12020, %v12019
        %v12129 = vpack.c.b16 %v12022, %v12021
        %v12130 = vpack.c.b16 %v12024, %v12023
        %v12131 = vpack.c.b16 %v12026, %v12025
        %v12132 = vpack.c.b16 %v12028, %v12027
        %v12133 = vpack.c.b16 %v12030, %v12029
        %v12134 = vpack.c.b16 %v12032, %v12031
        %v12135 = vpack.c.b16 %v12034, %v12033
        %v12136 = vpack.c.b16 %v12036, %v12035
        %v12137 = vpack.c.b16 %v12038, %v12037
        %v12138 = vpack.c.b16 %v12040, %v12039
        %v12139 = vpack.c.b16 %v12042, %v12041
        %v12140 = vpack.c.b16 %v12044, %v12043
        %v12141 = vpack.c.b16 %v12046, %v12045
        %v12142 = vpack.c.b16 %v12048, %v12047
        %v12143 = vpack.c.b16 %v12050, %v12049
        %v12144 = vpack.c.b16 %v12052, %v12051
        %v12145 = vpack.c.b16 %v12054, %v12053
        %v12146 = vpack.c.b16 %v12056, %v12055
        %v12147 = vpack.c.b16 %v12058, %v12057
        %v12148 = vpack.c.b16 %v12060, %v12059
        %v12149 = vpack.c.b16 %v12062, %v12061
        %v12150 = vpack.c.b16 %v12064, %v12063
        %v12151 = vpack.c.b16 %v12066, %v12065
        %v12152 = vpack.c.b16 %v12068, %v12067
        %v12153 = vpack.c.b16 %v12070, %v12069
        %v12154 = vpack.c.b16 %v12072, %v12071
        %v12155 = vpack.c.b16 %v12074, %v12073
        %v12156 = vpack.c.b16 %v12076, %v12075
        %v12157 = vpack.c.b16 %v12078, %v12077
        %v12158 = vpack.c.b16 %v12080, %v12079
        %v12159 = vpack.c.b16 %v12082, %v12081
        %v12160 = vpack.c.b16 %v12084, %v12083
        %v12161 = vpack.c.b16 %v12086, %v12085
        %v12162 = vpack.c.b16 %v12088, %v12087
        %v12163 = vpack.c.b16 %v12090, %v12089
        %v12164 = vpack.c.b16 %v12092, %v12091
        %v12165 = vpack.c.b16 %v12094, %v12093
        %v12166 = vpack.c.b16 %v12096, %v12095
        %v12167 = vpack.c.b16 %v12098, %v12097
        %v12168 = vpack.c.b16 %v12100, %v12099
        %v12169 = vpack.c.b16 %v12102, %v12101
        %v12170 = vpack.c.b16 %v12104, %v12103
        %v12171 = vpack.c.b16 %v12106, %v12105
        %v12172 = vpack.c.b16 %v12108, %v12107
        %12237 = vmatprep.subr.bf16.mxu0 0
        %12238 = vmatpush1.bf16.msra.mxu0 %v12116
        %12239 = vmatprep.subr.bf16.mxu0 0
        %12240 = vmatpush1.bf16.msra.mxu0 %v12115
        %12241 = vmatprep.subr.bf16.mxu0 0
        %12242 = vmatpush1.bf16.msra.mxu0 %v12114
        %12243 = vmatprep.subr.bf16.mxu0 0
        %12244 = vmatpush1.bf16.msra.mxu0 %v12113
        %12245 = vmatprep.subr.bf16.mxu0 0
        %12246 = vmatpush1.bf16.msra.mxu0 %v12112
        %12247 = vmatprep.subr.bf16.mxu0 0
        %12248 = vmatpush1.bf16.msra.mxu0 %v12111
        %12249 = vmatprep.subr.bf16.mxu0 0
        %12250 = vmatpush1.bf16.msra.mxu0 %v12110
        %12251 = vmatprep.subr.bf16.mxu0 0
        %12252 = vmatpush1.bf16.msra.mxu0 %v12109
        %12253 = vmatprep.subr.bf16.mxu0 0
        %12254 = vmatpush2.bf16.msra.mxu0 %v12124
        %12255 = vmatprep.subr.bf16.mxu0 0
        %12256 = vmatpush2.bf16.msra.mxu0 %v12123
        %12257 = vmatprep.subr.bf16.mxu0 0
        %12258 = vmatpush2.bf16.msra.mxu0 %v12122
        %12259 = vmatprep.subr.bf16.mxu0 0
        %12260 = vmatpush2.bf16.msra.mxu0 %v12121
        %12261 = vmatprep.subr.bf16.mxu0 0
        %12262 = vmatpush2.bf16.msra.mxu0 %v12120
        %12263 = vmatprep.subr.bf16.mxu0 0
        %12264 = vmatpush2.bf16.msra.mxu0 %v12119
        %12265 = vmatprep.subr.bf16.mxu0 0
        %12266 = vmatpush2.bf16.msra.mxu0 %v12118
        %12267 = vmatprep.subr.bf16.mxu0 0
        %12268 = vmatpush2.bf16.msra.mxu0 %v12117
        %12269 = vmatprep.mubr.bf16.mxu0 %v11718
        %12270 = vmatmul.mubr.bf16.gmra.mxu0 %v11717
        %v12271 = vpop.f32.mrf.mxu0
        %v12272 = vadd.f32 0.0, %v12271
        %v12273 = vpop.f32.mrf.mxu0
        %v12274 = vpop.f32.mrf.mxu0
        %v12275 = vpop.f32.mrf.mxu0
        %12276 = vdwg.mxu0
        %12277 = vmatprep.subr.bf16.mxu0 0
        %12278 = vmatpush1.bf16.msra.mxu0 %v12132
        %12279 = vmatprep.subr.bf16.mxu0 0
        %12280 = vmatpush1.bf16.msra.mxu0 %v12131
        %12281 = vmatprep.subr.bf16.mxu0 0
        %12282 = vmatpush1.bf16.msra.mxu0 %v12130
        %12283 = vmatprep.subr.bf16.mxu0 0
        %12284 = vmatpush1.bf16.msra.mxu0 %v12129
        %12285 = vmatprep.subr.bf16.mxu0 0
        %12286 = vmatpush1.bf16.msra.mxu0 %v12128
        %12287 = vmatprep.subr.bf16.mxu0 0
        %12288 = vmatpush1.bf16.msra.mxu0 %v12127
        %12289 = vmatprep.subr.bf16.mxu0 0
        %12290 = vmatpush1.bf16.msra.mxu0 %v12126
        %12291 = vmatprep.subr.bf16.mxu0 0
        %12292 = vmatpush1.bf16.msra.mxu0 %v12125
        %12293 = vmatprep.subr.bf16.mxu0 0
        %12294 = vmatpush2.bf16.msra.mxu0 %v12140
        %12295 = vmatprep.subr.bf16.mxu0 0
        %12296 = vmatpush2.bf16.msra.mxu0 %v12139
        %12297 = vmatprep.subr.bf16.mxu0 0
        %12298 = vmatpush2.bf16.msra.mxu0 %v12138
        %12299 = vmatprep.subr.bf16.mxu0 0
        %12300 = vmatpush2.bf16.msra.mxu0 %v12137
        %12301 = vmatprep.subr.bf16.mxu0 0
        %12302 = vmatpush2.bf16.msra.mxu0 %v12136
        %12303 = vmatprep.subr.bf16.mxu0 0
        %12304 = vmatpush2.bf16.msra.mxu0 %v12135
        %12305 = vmatprep.subr.bf16.mxu0 0
        %12306 = vmatpush2.bf16.msra.mxu0 %v12134
        %12307 = vmatprep.subr.bf16.mxu0 0
        %12308 = vmatpush2.bf16.msra.mxu0 %v12133
        %12309 = vmatprep.mubr.bf16.mxu0 %v11720
        %12310 = vmatmul.mubr.bf16.gmra.mxu0 %v11719
        %v12311 = vpop.f32.mrf.mxu0
        %v12312 = vadd.f32 %v12272, %v12311
        %v12313 = vpop.f32.mrf.mxu0
        %v12314 = vpop.f32.mrf.mxu0
        %v12315 = vpop.f32.mrf.mxu0
        %12316 = vdwg.mxu0
        %12317 = vmatprep.subr.bf16.mxu0 0
        %12318 = vmatpush1.bf16.msra.mxu0 %v12148
        %12319 = vmatprep.subr.bf16.mxu0 0
        %12320 = vmatpush1.bf16.msra.mxu0 %v12147
        %12321 = vmatprep.subr.bf16.mxu0 0
        %12322 = vmatpush1.bf16.msra.mxu0 %v12146
        %12323 = vmatprep.subr.bf16.mxu0 0
        %12324 = vmatpush1.bf16.msra.mxu0 %v12145
        %12325 = vmatprep.subr.bf16.mxu0 0
        %12326 = vmatpush1.bf16.msra.mxu0 %v12144
        %12327 = vmatprep.subr.bf16.mxu0 0
        %12328 = vmatpush1.bf16.msra.mxu0 %v12143
        %12329 = vmatprep.subr.bf16.mxu0 0
        %12330 = vmatpush1.bf16.msra.mxu0 %v12142
        %12331 = vmatprep.subr.bf16.mxu0 0
        %12332 = vmatpush1.bf16.msra.mxu0 %v12141
        %12333 = vmatprep.subr.bf16.mxu0 0
        %12334 = vmatpush2.bf16.msra.mxu0 %v12156
        %12335 = vmatprep.subr.bf16.mxu0 0
        %12336 = vmatpush2.bf16.msra.mxu0 %v12155
        %12337 = vmatprep.subr.bf16.mxu0 0
        %12338 = vmatpush2.bf16.msra.mxu0 %v12154
        %12339 = vmatprep.subr.bf16.mxu0 0
        %12340 = vmatpush2.bf16.msra.mxu0 %v12153
        %12341 = vmatprep.subr.bf16.mxu0 0
        %12342 = vmatpush2.bf16.msra.mxu0 %v12152
        %12343 = vmatprep.subr.bf16.mxu0 0
        %12344 = vmatpush2.bf16.msra.mxu0 %v12151
        %12345 = vmatprep.subr.bf16.mxu0 0
        %12346 = vmatpush2.bf16.msra.mxu0 %v12150
        %12347 = vmatprep.subr.bf16.mxu0 0
        %12348 = vmatpush2.bf16.msra.mxu0 %v12149
        %12349 = vmatprep.mubr.bf16.mxu0 %v11722
        %12350 = vmatmul.mubr.bf16.gmra.mxu0 %v11721
        %v12351 = vpop.f32.mrf.mxu0
        %v12352 = vadd.f32 %v12312, %v12351
        %v12353 = vpop.f32.mrf.mxu0
        %v12354 = vpop.f32.mrf.mxu0
        %v12355 = vpop.f32.mrf.mxu0
        %12356 = vdwg.mxu0
        %12357 = vmatprep.subr.bf16.mxu0 0
        %12358 = vmatpush1.bf16.msra.mxu0 %v12164
        %12359 = vmatprep.subr.bf16.mxu0 0
        %12360 = vmatpush1.bf16.msra.mxu0 %v12163
        %12361 = vmatprep.subr.bf16.mxu0 0
        %12362 = vmatpush1.bf16.msra.mxu0 %v12162
        %12363 = vmatprep.subr.bf16.mxu0 0
        %12364 = vmatpush1.bf16.msra.mxu0 %v12161
        %12365 = vmatprep.subr.bf16.mxu0 0
        %12366 = vmatpush1.bf16.msra.mxu0 %v12160
        %12367 = vmatprep.subr.bf16.mxu0 0
        %12368 = vmatpush1.bf16.msra.mxu0 %v12159
        %12369 = vmatprep.subr.bf16.mxu0 0
        %12370 = vmatpush1.bf16.msra.mxu0 %v12158
        %12371 = vmatprep.subr.bf16.mxu0 0
        %12372 = vmatpush1.bf16.msra.mxu0 %v12157
        %12373 = vmatprep.subr.bf16.mxu0 0
        %12374 = vmatpush2.bf16.msra.mxu0 %v12172
        %12375 = vmatprep.subr.bf16.mxu0 0
        %12376 = vmatpush2.bf16.msra.mxu0 %v12171
        %12377 = vmatprep.subr.bf16.mxu0 0
        %12378 = vmatpush2.bf16.msra.mxu0 %v12170
        %12379 = vmatprep.subr.bf16.mxu0 0
        %12380 = vmatpush2.bf16.msra.mxu0 %v12169
        %12381 = vmatprep.subr.bf16.mxu0 0
        %12382 = vmatpush2.bf16.msra.mxu0 %v12168
        %12383 = vmatprep.subr.bf16.mxu0 0
        %12384 = vmatpush2.bf16.msra.mxu0 %v12167
        %12385 = vmatprep.subr.bf16.mxu0 0
        %12386 = vmatpush2.bf16.msra.mxu0 %v12166
        %12387 = vmatprep.subr.bf16.mxu0 0
        %12388 = vmatpush2.bf16.msra.mxu0 %v12165
        %12389 = vmatprep.mubr.bf16.mxu0 %v11724
        %12390 = vmatmul.mubr.bf16.gmra.mxu0 %v11723
        %v12391 = vpop.f32.mrf.mxu0
        %v12392 = vadd.f32 %v12352, %v12391
        %v12393 = vpop.f32.mrf.mxu0
        %v12394 = vpop.f32.mrf.mxu0
        %v12395 = vpop.f32.mrf.mxu0
        %12396 = vdwg.mxu0
        %v12397 = vld [vmem:[%s763] sm:$0x1]
        %v12399 = vlaneseq
        %v12400 = vshrl.u32 %v12399, 7
        %v12401 = vsub.s32 0, %v12400
        %v12402 = vrot.slane %v12397, %v12401
        %v12404 = vmul.f32 %v12392, %v12402
        %v12405 = vld [vmem:[%s771] sm:$0x1]
        %v12407 = vlaneseq
        %v12408 = vshrl.u32 %v12407, 7
        %v12409 = vsub.s32 0, %v12408
        %v12410 = vrot.slane %v12405, %v12409
        %v12412 = vadd.f32 %v12404, %v12410
        %v12413 = vmax.f32 %v12412, 0.0
        %12414 = vst [vmem:[%s879] sm:$0xff] %v12413
        %p12415 = scmp.lt.s32.totalorder %s45, 1
        %s12416 = scalar_select %p12415, %s45, 1
        %s12417 = smul.addr %s12416, 8
        %s12418 = scalar_lea.vmem %s13, %s12417
        // Predicated region
        $region121: #{mvcln_forward.1} parent=71 // pred_check
          %p12419 = pneg %p401
        $region122: #{mvcln_forward.1} parent=71 // pred_check_branch
          %12421 = sbr.rel (%p12419) target = $region124
        $region123: #{mvcln_forward.1} parent=71 // pred_region
          _
        $region124: #{mvcln_forward.1} parent=71 // pred_fallthru
          _
      $region72: #{mvcln_forward.1} parent=5 // pred_fallthru
        _
      %p12422 = scmp.le.s32.totalorder 2, %s40
      // Predicated region
      $region125: #{mvcln_forward.1} parent=5 // pred_check
        %p12423 = pneg %p12422
      $region126: #{mvcln_forward.1} parent=5 // pred_check_branch
        %12425 = sbr.rel (%p12423) target = $region128
      $region127: #{mvcln_forward.1} parent=5 // pred_region
        %s12426 = ssub.s32 %s40, 2
        // Predicated region
        $region129: #{mvcln_forward.1} parent=127 // pred_check
          %p12427 = pneg %p407
        $region130: #{mvcln_forward.1} parent=127 // pred_check_branch
          %12429 = sbr.rel (%p12427) target = $region132
        $region131: #{mvcln_forward.1} parent=127 // pred_region
          %p12430 = scmp.lt.s32.totalorder %s46, 1
          %s12431 = scalar_select %p12430, %s46, 1
          %s12432 = smul.addr %s12431, 8
          %s12433 = scalar_lea.vmem %s13, %s12432
        $region132: #{mvcln_forward.1} parent=127 // pred_fallthru
          _
      $region128: #{mvcln_forward.1} parent=5 // pred_fallthru
        _
    $region6: #{mvcln_forward.1} parent=1 // loop_footer
      %s44 = sadd.s32 1, %s40
    $region7: #{mvcln_forward.1} parent=1 // loop_footer_branch
      %39 = sbr.rel target = $region3
    $region8: #{mvcln_forward.1} parent=1 // loop_exit
      _
    %12434 = vsyncpa [#allocation3], 1
    %s12435 = scalar_lea.sflag [#allocation3], 1
    %12436 = vsyncpa %s12435, 1
    %12437 = vsyncpa [#allocation5], 1
    %s12438 = scalar_lea.sflag [#allocation5], 1
    %12439 = vsyncpa %s12438, 1
    %12440 = vsyncpa [#allocation8], 1
    %s12441 = scalar_lea.sflag [#allocation8], 1
    %12442 = vsyncpa %s12441, 1
    %12443 = vsyncpa [#allocation11], 1
    %s12444 = scalar_lea.sflag [#allocation11], 1
    %12445 = vsyncpa %s12444, 1
    %12446 = vsyncpa [#allocation14], 1
    %s12447 = scalar_lea.sflag [#allocation14], 1
    %12448 = vsyncpa %s12447, 1
    %12449 = vsyncpa [#allocation17], 1
    %s12450 = scalar_lea.sflag [#allocation17], 1
    %12451 = vsyncpa %s12450, 1
    %12452 = vsyncpa [#allocation20], 1
    %s12453 = scalar_lea.sflag [#allocation20], 1
    %12454 = vsyncpa %s12453, 1

</llo_original>
